<compile_context>
chip_gen: v6e
topology: v6e:2x2x1
jax: 0.10.0
libtpu: 0.0.40
codegen_flags: <defaults>
</compile_context>

<pallas_src>
import functools

import jax
import jax.numpy as jnp
from jax.experimental import pallas as pl
from jax.experimental.pallas import tpu as pltpu


def _shuffle_kernel(x_ref, o_ref, *, sd, sh, sw, H, W):
    """One grid step.

    x_ref: (cblk, group, dblk, H, W)     input block (group = sd*sh*sw)
    o_ref: (cblk, dblk, sd, H*sh, W*sw)  output block; the wrapper merges the
           (D, sd) dims afterwards (free reshape), so the depth interleave is
           pure placement here.
    """
    cblk = x_ref.shape[0]
    dblk = x_ref.shape[2]
    # TODO(synk): for 16-bit dtypes with sw == 2, the W-interleave below could be
    # replaced by a u16->u32 pack + pltpu.bitcast (VPU bit ops instead of a lane
    # shuffle); kept on the generic path to guarantee correct lowering.
    for i in range(sd):          # output-depth phase -> direct placement (no concat)
        rows = []
        for j in range(sh):      # output-height phase
            cols = [x_ref[:, i * sh * sw + j * sw + k] for k in range(sw)]
            # Lane (W) interleave: (cblk, dblk, H, W, sw) -> (cblk, dblk, H, W*sw)
            rows.append(jnp.stack(cols, axis=-1).reshape(cblk, dblk, H, W * sw))
        # Sublane (H) interleave: (cblk, dblk, H, sh, W*sw) -> (cblk, dblk, H*sh, W*sw)
        plane = jnp.stack(rows, axis=3).reshape(cblk, dblk, H * sh, W * sw)
        # Depth interleave == which plane of the output block we write.
        o_ref[:, :, i, :, :] = plane.astype(o_ref.dtype)


def _divisors_desc(n):
    return [d for d in range(n, 0, -1) if n % d == 0]


def _round_up(x, m):
    return -(-x // m) * m


def _choose_blocks(BN, D, per_depth_bytes, *, target_bytes=8 << 20, min_steps=4):
    """Pick (cblk, dblk): block over the flattened (B*n_out) axis and over depth.

    Targets ~target_bytes of padded (in + out) VMEM per grid step, folds channel
    groups when a full-depth group is still small, and keeps at least `min_steps`
    grid steps so v7x's two TensorCores both get work and pipelining has depth.
    """
    d_divs = _divisors_desc(D)
    c_divs = _divisors_desc(BN)
    dblk = next((d for d in d_divs if d * per_depth_bytes <= target_bytes), 1)
    cblk = 1
    if dblk == D:
        cblk = next((c for c in c_divs if c * D * per_depth_bytes <= target_bytes), 1)

    def steps(c, d):
        return (BN // c) * (D // d)

    while steps(cblk, dblk) < min_steps and (cblk > 1 or dblk > 1):
        if cblk > 1:
            cblk = next(c for c in c_divs if c < cblk)
        else:
            dblk = next(d for d in d_divs if d < dblk)
    return cblk, dblk


def pixel_shuffle_3d(x, scale_d=2, scale_h=2, scale_w=2):
    B, C, D, H, W = x.shape
    sd, sh, sw = scale_d, scale_h, scale_w
    group = sd * sh * sw
    assert C % group == 0, "channels must be divisible by scale_d*scale_h*scale_w"
    n_out = C // group
    BN = B * n_out
    H_out, W_out = H * sh, W * sw

    itemsize = jnp.dtype(x.dtype).itemsize
    sub = {4: 8, 2: 16, 1: 32}.get(itemsize, 8)   # sublane tile per dtype width

    # Padded (VMEM-resident) bytes contributed by one input-depth slice of one
    # (b, n) group: its input slab plus the sd output planes it produces.
    in_slab = group * _round_up(H, sub) * _round_up(W, 128)
    out_slab = sd * _round_up(H_out, sub) * _round_up(W_out, 128)
    per_depth_bytes = (in_slab + out_slab) * itemsize

    cblk, dblk = _choose_blocks(BN, D, per_depth_bytes)

    # Free row-major reshapes (split C into (n_out, group), merge (B, n_out)).
    x_view = x.reshape(BN, group, D, H, W)
    out_shape = jax.ShapeDtypeStruct((BN, D, sd, H_out, W_out), x.dtype)

    kernel = functools.partial(_shuffle_kernel, sd=sd, sh=sh, sw=sw, H=H, W=W)
    grid = (BN // cblk, D // dblk)

    # Last-two block dims equal the full array extents, so cblk/dblk sit on
    # leading dims and carry no (sublane, 128) divisibility constraint.
    in_spec = pl.BlockSpec((cblk, group, dblk, H, W), lambda c, d: (c, 0, d, 0, 0))
    out_spec = pl.BlockSpec(
        (cblk, dblk, sd, H_out, W_out), lambda c, d: (c, d, 0, 0, 0)
    )

    bytes_moved = 2 * x.size * itemsize  # pure streaming: read once, write once

    out = pl.pallas_call(
        kernel,
        out_shape=out_shape,
        grid_spec=pltpu.PrefetchScalarGridSpec(
            num_scalar_prefetch=0,
            grid=grid,
            in_specs=[in_spec],
            out_specs=out_spec,
        ),
        compiler_params=pltpu.CompilerParams(
            # Every output block is written exactly once -> all axes parallel.
            dimension_semantics=("parallel", "parallel"),
            # ~8 MiB in+out per step, double-buffered (~16 MiB) plus shuffle
            # intermediates: 48 MiB is safe even on v7x (64 MiB physical VMEM)
            # and gives v5e/v6e room for the larger tiles.
            vmem_limit_bytes=48 * 1024 * 1024,
        ),
        cost_estimate=pl.CostEstimate(
            flops=0, transcendentals=0, bytes_accessed=bytes_moved
        ),
    )(x_view)

    # Free reshape: (BN, D, sd, Ho, Wo) -> (B, n_out, D*sd, Ho, Wo);
    # out_depth index d*sd + i is exactly the row-major merge of (D, sd).
    return out.reshape(B, n_out, D * sd, H_out, W_out)


def _reference(x, sd, sh, sw):
    # Pure-JAX reference mirroring the PyTorch view/permute/view sequence.
    B, C, D, H, W = x.shape
    n_out = C // (sd * sh * sw)
    v = x.reshape(B, n_out, sd, sh, sw, D, H, W)
    v = jnp.transpose(v, (0, 1, 5, 2, 6, 3, 7, 4))
    return v.reshape(B, n_out, D * sd, H * sh, W * sw)


if __name__ == "__main__":
    key = jax.random.PRNGKey(0)
    # Small shapes: nOut = 16 // (2*2*2) = 2
    B, C, D, H, W = 2, 16, 4, 8, 8
    x = jax.random.normal(key, (B, C, D, H, W), dtype=jnp.float32)

    out = pixel_shuffle_3d(x, 2, 2, 2)
    out = jax.block_until_ready(out)

    ref = _reference(x, 2, 2, 2)
    assert out.shape == ref.shape, (out.shape, ref.shape)
    assert jnp.allclose(out, ref), "Pallas PixelShuffle3d mismatch vs reference"
    print("KERNEL_OK")
</pallas_src>

<mosaic_0001>
module attributes {stable_mosaic.version = 11 : i64} {
  func.func @_shuffle_kernel(%arg0: i32, %arg1: i32, %arg2: memref<1x8x4x8x8xf32, #tpu.memory_space<vmem>>, %arg3: memref<1x4x2x16x16xf32, #tpu.memory_space<vmem>>) attributes {dimension_semantics = [#tpu.dimension_semantics<parallel>, #tpu.dimension_semantics<parallel>], iteration_bounds = array<i64: 4, 1>, scalar_prefetch = 0 : i64, scratch_operands = 0 : i64, tpu.core_type = #tpu.core_type<tc>, window_params = [{transform_indices = @transform_0, window_bounds = array<i64: 1, 8, 4, 8, 8>}, {transform_indices = @transform_1, window_bounds = array<i64: 1, 4, 2, 16, 16>}]} {
    %c0 = arith.constant 0 : index
    %c0_0 = arith.constant 0 : index
    %c0_1 = arith.constant 0 : index
    %c0_2 = arith.constant 0 : index
    %c0_3 = arith.constant 0 : index
    %0 = vector.load %arg2[%c0, %c0_0, %c0_1, %c0_2, %c0_3] : memref<1x8x4x8x8xf32, #tpu.memory_space<vmem>>, vector<1x1x4x8x8xf32>
    %1 = vector.shape_cast %0 : vector<1x1x4x8x8xf32> to vector<1x4x8x8xf32>
    %c0_4 = arith.constant 0 : index
    %c1 = arith.constant 1 : index
    %c0_5 = arith.constant 0 : index
    %c0_6 = arith.constant 0 : index
    %c0_7 = arith.constant 0 : index
    %2 = vector.load %arg2[%c0_4, %c1, %c0_5, %c0_6, %c0_7] : memref<1x8x4x8x8xf32, #tpu.memory_space<vmem>>, vector<1x1x4x8x8xf32>
    %3 = vector.shape_cast %2 : vector<1x1x4x8x8xf32> to vector<1x4x8x8xf32>
    %4 = vector.shape_cast %1 : vector<1x4x8x8xf32> to vector<1x4x8x8x1xf32>
    %5 = vector.shape_cast %3 : vector<1x4x8x8xf32> to vector<1x4x8x8x1xf32>
    %6 = tpu.concatenate %4, %5 in 4 : vector<1x4x8x8x1xf32>, vector<1x4x8x8x1xf32> -> vector<1x4x8x8x2xf32>
    %7 = vector.shape_cast %6 : vector<1x4x8x8x2xf32> to vector<1x4x8x16xf32>
    %c0_8 = arith.constant 0 : index
    %c2 = arith.constant 2 : index
    %c0_9 = arith.constant 0 : index
    %c0_10 = arith.constant 0 : index
    %c0_11 = arith.constant 0 : index
    %8 = vector.load %arg2[%c0_8, %c2, %c0_9, %c0_10, %c0_11] : memref<1x8x4x8x8xf32, #tpu.memory_space<vmem>>, vector<1x1x4x8x8xf32>
    %9 = vector.shape_cast %8 : vector<1x1x4x8x8xf32> to vector<1x4x8x8xf32>
    %c0_12 = arith.constant 0 : index
    %c3 = arith.constant 3 : index
    %c0_13 = arith.constant 0 : index
    %c0_14 = arith.constant 0 : index
    %c0_15 = arith.constant 0 : index
    %10 = vector.load %arg2[%c0_12, %c3, %c0_13, %c0_14, %c0_15] : memref<1x8x4x8x8xf32, #tpu.memory_space<vmem>>, vector<1x1x4x8x8xf32>
    %11 = vector.shape_cast %10 : vector<1x1x4x8x8xf32> to vector<1x4x8x8xf32>
    %12 = vector.shape_cast %9 : vector<1x4x8x8xf32> to vector<1x4x8x8x1xf32>
    %13 = vector.shape_cast %11 : vector<1x4x8x8xf32> to vector<1x4x8x8x1xf32>
    %14 = tpu.concatenate %12, %13 in 4 : vector<1x4x8x8x1xf32>, vector<1x4x8x8x1xf32> -> vector<1x4x8x8x2xf32>
    %15 = vector.shape_cast %14 : vector<1x4x8x8x2xf32> to vector<1x4x8x16xf32>
    %16 = vector.shape_cast %7 : vector<1x4x8x16xf32> to vector<1x4x8x1x16xf32>
    %17 = vector.shape_cast %15 : vector<1x4x8x16xf32> to vector<1x4x8x1x16xf32>
    %18 = tpu.concatenate %16, %17 in 3 : vector<1x4x8x1x16xf32>, vector<1x4x8x1x16xf32> -> vector<1x4x8x2x16xf32>
    %19 = vector.shape_cast %18 : vector<1x4x8x2x16xf32> to vector<1x4x16x16xf32>
    %c0_16 = arith.constant 0 : index
    %c0_17 = arith.constant 0 : index
    %c0_18 = arith.constant 0 : index
    %c0_19 = arith.constant 0 : index
    %c0_20 = arith.constant 0 : index
    %20 = vector.load %arg3[%c0_16, %c0_17, %c0_18, %c0_19, %c0_20] : memref<1x4x2x16x16xf32, #tpu.memory_space<vmem>>, vector<1x4x1x16x16xf32>
    %21 = vector.shape_cast %20 : vector<1x4x1x16x16xf32> to vector<1x4x16x16xf32>
    %22 = vector.shape_cast %19 : vector<1x4x16x16xf32> to vector<1x4x1x16x16xf32>
    tpu.vector_store %arg3[%c0_16, %c0_17, %c0_18, %c0_19, %c0_20], %22 {strides = array<i32>} : memref<1x4x2x16x16xf32, #tpu.memory_space<vmem>>, vector<1x4x1x16x16xf32>,
    %c0_21 = arith.constant 0 : index
    %c4 = arith.constant 4 : index
    %c0_22 = arith.constant 0 : index
    %c0_23 = arith.constant 0 : index
    %c0_24 = arith.constant 0 : index
    %23 = vector.load %arg2[%c0_21, %c4, %c0_22, %c0_23, %c0_24] : memref<1x8x4x8x8xf32, #tpu.memory_space<vmem>>, vector<1x1x4x8x8xf32>
    %24 = vector.shape_cast %23 : vector<1x1x4x8x8xf32> to vector<1x4x8x8xf32>
    %c0_25 = arith.constant 0 : index
    %c5 = arith.constant 5 : index
    %c0_26 = arith.constant 0 : index
    %c0_27 = arith.constant 0 : index
    %c0_28 = arith.constant 0 : index
    %25 = vector.load %arg2[%c0_25, %c5, %c0_26, %c0_27, %c0_28] : memref<1x8x4x8x8xf32, #tpu.memory_space<vmem>>, vector<1x1x4x8x8xf32>
    %26 = vector.shape_cast %25 : vector<1x1x4x8x8xf32> to vector<1x4x8x8xf32>
    %27 = vector.shape_cast %24 : vector<1x4x8x8xf32> to vector<1x4x8x8x1xf32>
    %28 = vector.shape_cast %26 : vector<1x4x8x8xf32> to vector<1x4x8x8x1xf32>
    %29 = tpu.concatenate %27, %28 in 4 : vector<1x4x8x8x1xf32>, vector<1x4x8x8x1xf32> -> vector<1x4x8x8x2xf32>
    %30 = vector.shape_cast %29 : vector<1x4x8x8x2xf32> to vector<1x4x8x16xf32>
    %c0_29 = arith.constant 0 : index
    %c6 = arith.constant 6 : index
    %c0_30 = arith.constant 0 : index
    %c0_31 = arith.constant 0 : index
    %c0_32 = arith.constant 0 : index
    %31 = vector.load %arg2[%c0_29, %c6, %c0_30, %c0_31, %c0_32] : memref<1x8x4x8x8xf32, #tpu.memory_space<vmem>>, vector<1x1x4x8x8xf32>
    %32 = vector.shape_cast %31 : vector<1x1x4x8x8xf32> to vector<1x4x8x8xf32>
    %c0_33 = arith.constant 0 : index
    %c7 = arith.constant 7 : index
    %c0_34 = arith.constant 0 : index
    %c0_35 = arith.constant 0 : index
    %c0_36 = arith.constant 0 : index
    %33 = vector.load %arg2[%c0_33, %c7, %c0_34, %c0_35, %c0_36] : memref<1x8x4x8x8xf32, #tpu.memory_space<vmem>>, vector<1x1x4x8x8xf32>
    %34 = vector.shape_cast %33 : vector<1x1x4x8x8xf32> to vector<1x4x8x8xf32>
    %35 = vector.shape_cast %32 : vector<1x4x8x8xf32> to vector<1x4x8x8x1xf32>
    %36 = vector.shape_cast %34 : vector<1x4x8x8xf32> to vector<1x4x8x8x1xf32>
    %37 = tpu.concatenate %35, %36 in 4 : vector<1x4x8x8x1xf32>, vector<1x4x8x8x1xf32> -> vector<1x4x8x8x2xf32>
    %38 = vector.shape_cast %37 : vector<1x4x8x8x2xf32> to vector<1x4x8x16xf32>
    %39 = vector.shape_cast %30 : vector<1x4x8x16xf32> to vector<1x4x8x1x16xf32>
    %40 = vector.shape_cast %38 : vector<1x4x8x16xf32> to vector<1x4x8x1x16xf32>
    %41 = tpu.concatenate %39, %40 in 3 : vector<1x4x8x1x16xf32>, vector<1x4x8x1x16xf32> -> vector<1x4x8x2x16xf32>
    %42 = vector.shape_cast %41 : vector<1x4x8x2x16xf32> to vector<1x4x16x16xf32>
    %c0_37 = arith.constant 0 : index
    %c0_38 = arith.constant 0 : index
    %c1_39 = arith.constant 1 : index
    %c0_40 = arith.constant 0 : index
    %c0_41 = arith.constant 0 : index
    %43 = vector.load %arg3[%c0_37, %c0_38, %c1_39, %c0_40, %c0_41] : memref<1x4x2x16x16xf32, #tpu.memory_space<vmem>>, vector<1x4x1x16x16xf32>
    %44 = vector.shape_cast %43 : vector<1x4x1x16x16xf32> to vector<1x4x16x16xf32>
    %45 = vector.shape_cast %42 : vector<1x4x16x16xf32> to vector<1x4x1x16x16xf32>
    tpu.vector_store %arg3[%c0_37, %c0_38, %c1_39, %c0_40, %c0_41], %45 {strides = array<i32>} : memref<1x4x2x16x16xf32, #tpu.memory_space<vmem>>, vector<1x4x1x16x16xf32>,
    return
  }
  func.func @transform_0(%arg0: i32, %arg1: i32) -> (i32, i32, i32, i32, i32) {
    %c0_i32 = arith.constant 0 : i32
    %c0_i32_0 = arith.constant 0 : i32
    %c0_i32_1 = arith.constant 0 : i32
    %c0_i32_2 = arith.constant 0 : i32
    return %arg0, %c0_i32, %arg1, %c0_i32_0, %c0_i32_1 : i32, i32, i32, i32, i32
  }
  func.func @transform_1(%arg0: i32, %arg1: i32) -> (i32, i32, i32, i32, i32) {
    %c0_i32 = arith.constant 0 : i32
    %c0_i32_0 = arith.constant 0 : i32
    %c0_i32_1 = arith.constant 0 : i32
    %c0_i32_2 = arith.constant 0 : i32
    return %arg0, %arg1, %c0_i32, %c0_i32_0, %c0_i32_1 : i32, i32, i32, i32, i32
  }
}

</mosaic_0001>

<llo_original>
// kernel: tpu_custom_call.1
$region0: #{tpu_custom_call.1}
  #allocation0 [shape = 'u32[]', space=smem, size = 0x4, offset = 0x4, fixed_abs, tag = 'smem constant byte address 0x4 - core index']
  #allocation1 [shape = 'u32[144,128]{1,0:T(1,128)}', space=vmem, size = 0x12000, scoped, tag = 'internal scratch']
  %s0 = inlined_call_operand.hbm [shape: f32[4,8,4,8,8], index: 0, kind: input, shape index: {}]
  %s1 = inlined_call_operand.hbm [shape: f32[4,4,2,16,16], index: 1, kind: output, shape index: {}]
  %s2 = sld [smem:[#allocation0]]
  $region41: #{tpu_custom_call.1} parent=0
    _
  %s4 = ssub.s32 1, %s2
  %s5 = scalar_select 0, %s4, %s2
  $region1: #{tpu_custom_call.1} parent=0
    #allocation2 [shape = 'u8[262144]{0}', space=vmem, size = 0x40000, scoped, tag = 'input window, operand 0']
    #allocation3 [shape = 's32[2]{0}', space=sflag, size = 0x8, scoped, tag = 'scoped memory for tpu_custom_call.1']
    #allocation4 [shape = 's32[2]{0}', space=sflag, size = 0x8, scoped, tag = 'scoped memory for tpu_custom_call.1']
    #allocation5 [shape = 'u8[131072]{0}', space=vmem, size = 0x20000, scoped, tag = 'output window, operand 0']
    %6 = vsyncpa [#allocation3], 0
    %s7 = scalar_lea.sflag [#allocation3], 1
    %8 = vsyncpa %s7, 0
    %9 = vsyncpa [#allocation4], 0
    %s10 = scalar_lea.sflag [#allocation4], 1
    %11 = vsyncpa %s10, 0
    loop: start=0, step=1, limit=6
    $region2: #{tpu_custom_call.1} parent=1 // loop_pre_header
      _
    $region3: #{tpu_custom_call.1} parent=1 // loop_header
      %s13 = sphi 0, %s17
      %p14 = scmp.ge.s32.totalorder %s13, 6
      %s20 = sphi 0, %s32
      %s21 = sphi 0, %s28
      %s22 = sphi 0, %s20
      %s23 = sphi 0, %s21
      %s24 = sphi 0, %s22
      %s25 = sphi 0, %s23
      %s37 = sphi 0, %s39
      %s40 = sphi 0, %s37
      %s41 = sphi 0, %s40
      %s57 = sphi 0, %s41
      %s65 = sphi 0, %s67
      %s68 = sphi 0, %s65
      %s69 = sphi 0, %s68
      %s85 = sphi 0, %s69
    $region4: #{tpu_custom_call.1} parent=1 // loop_header_branch
      %16 = sbr.rel (%p14) target = $region8
    $region5: #{tpu_custom_call.1} parent=1 // loop_body
      %s18 = ssub.s32 %s13, 1
      %s19 = ssub.s32 %s13, 2
      %s26 = sadd.s32 1, %s21
      %p27 = scmp.ge.s32.totalorder %s26, 1
      %s28 = scalar_select %p27, 0, %s26
      %s29 = sadd.s32 1, %s20
      %s30 = scalar_select %p27, %s29, %s20
      %p31 = scmp.ge.s32.totalorder %s30, 4
      %s32 = scalar_select %p31, 0, %s30
      %s33 = ssub.s32 %s20, %s32
      %s34 = ssub.s32 %s21, %s28
      %s35 = sor.u32 %s33, %s34
      %p36 = scmp.eq.s32.totalorder %s35, 0
      %s38 = sadd.s32 %s37, 1
      %s39 = scalar_select %p36, %s37, %s38
      %p42 = pneg %p36
      %p43 = scmp.eq.s32.totalorder %s13, 3
      %p44 = por %p42, %p43
      %p45 = scmp.ne.s32.totalorder %s37, %s40
      %p46 = scmp.eq.s32.totalorder %s13, 0
      %p47 = por %p45, %p46
      %p48 = scmp.ne.s32.totalorder %s37, %s40
      %p49 = scmp.eq.s32.totalorder %s18, 3
      %p50 = por %p48, %p49
      %p51 = scmp.ne.s32.totalorder %s40, %s41
      %p52 = scmp.eq.s32.totalorder %s18, 0
      %p53 = por %p51, %p52
      %p54 = scmp.ne.s32.totalorder %s40, %s41
      %p55 = scmp.eq.s32.totalorder %s19, 3
      %p56 = por %p54, %p55
      %p58 = scmp.ne.s32.totalorder %s41, %s57
      %p59 = scmp.eq.s32.totalorder %s19, 0
      %p60 = por %p58, %p59
      %s61 = ssub.s32 %s20, %s32
      %s62 = ssub.s32 %s21, %s28
      %s63 = sor.u32 %s61, %s62
      %p64 = scmp.eq.s32.totalorder %s63, 0
      %s66 = sadd.s32 %s65, 1
      %s67 = scalar_select %p64, %s65, %s66
      %p70 = pneg %p64
      %p71 = scmp.eq.s32.totalorder %s13, 3
      %p72 = por %p70, %p71
      %p73 = scmp.ne.s32.totalorder %s65, %s68
      %p74 = scmp.eq.s32.totalorder %s13, 0
      %p75 = por %p73, %p74
      %p76 = scmp.ne.s32.totalorder %s65, %s68
      %p77 = scmp.eq.s32.totalorder %s18, 3
      %p78 = por %p76, %p77
      %p79 = scmp.ne.s32.totalorder %s68, %s69
      %p80 = scmp.eq.s32.totalorder %s18, 0
      %p81 = por %p79, %p80
      %p82 = scmp.ne.s32.totalorder %s68, %s69
      %p83 = scmp.eq.s32.totalorder %s19, 3
      %p84 = por %p82, %p83
      %p86 = scmp.ne.s32.totalorder %s69, %s85
      %p87 = scmp.eq.s32.totalorder %s19, 0
      %p88 = por %p86, %p87
      %p89 = scmp.le.s32.totalorder 1, %s13
      %p90 = scmp.lt.s32.totalorder %s13, 5
      %p91 = pnand %p89, %p90
      %p92 = pneg %p91
      // Predicated region
      $region9: #{tpu_custom_call.1} parent=5 // pred_check
        _
      $region10: #{tpu_custom_call.1} parent=5 // pred_check_branch
        %94 = sbr.rel (%p91) target = $region12
      $region11: #{tpu_custom_call.1} parent=5 // pred_region
        %s95 = ssub.s32 %s13, 1
      $region12: #{tpu_custom_call.1} parent=5 // pred_fallthru
        _
      %p96 = scmp.lt.s32.totalorder %s13, 4
      // Predicated region
      $region13: #{tpu_custom_call.1} parent=5 // pred_check
        %p97 = pneg %p96
      $region14: #{tpu_custom_call.1} parent=5 // pred_check_branch
        %99 = sbr.rel (%p97) target = $region16
      $region15: #{tpu_custom_call.1} parent=5 // pred_region
        // Predicated region
        $region17: #{tpu_custom_call.1} parent=15 // pred_check
          %p100 = pneg %p47
        $region18: #{tpu_custom_call.1} parent=15 // pred_check_branch
          %102 = sbr.rel (%p100) target = $region20
        $region19: #{tpu_custom_call.1} parent=15 // pred_region
          %s103 = sand.u32 %s37, 1
          %s104 = scalar_lea.sflag [#allocation3], %s103
          %s105 = sand.u32 %s37, 1
          %s106 = smul.addr %s105, 256
          %s107 = scalar_lea.vmem [#allocation2], %s106
          %s108 = smul.u32 4, %s21
          %s110 = ssub.s32 4096, 4096
          %111 = vsyncadd %s104, %s110
          %s112 = smul.addr %s20, 32
          %s113 = sadd.s32 %s108, %s112
          %s114 = smul.addr %s113, 128
          %s115 = scalar_lea.hbm %s0, %s114
          %s116 = sshll.u32 %s107, 4
          %s117 = int_to_ptr.vmem [resolvable:$true] %s116
          %122 = dma.hbm_to_vmem [thread:$0]  %s115, 4096, %s117, %s104, 128, 128, 8
        $region20: #{tpu_custom_call.1} parent=15 // pred_fallthru
          _
      $region16: #{tpu_custom_call.1} parent=5 // pred_fallthru
        _
      %p123 = scmp.le.s32.totalorder 1, %s13
      %p124 = scmp.lt.s32.totalorder %s13, 5
      %p125 = pnand %p123, %p124
      %p126 = pneg %p125
      // Predicated region
      $region21: #{tpu_custom_call.1} parent=5 // pred_check
        _
      $region22: #{tpu_custom_call.1} parent=5 // pred_check_branch
        %128 = sbr.rel (%p125) target = $region24
      $region23: #{tpu_custom_call.1} parent=5 // pred_region
        %s129 = ssub.s32 %s13, 1
        %s130 = sand.u32 %s40, 1
        %s131 = scalar_lea.sflag [#allocation3], %s130
        %s132 = sand.u32 %s40, 1
        %s133 = smul.addr %s132, 256
        %s134 = scalar_lea.vmem [#allocation2], %s133
        // Predicated region
        $region25: #{tpu_custom_call.1} parent=23 // pred_check
          %p135 = pneg %p53
        $region26: #{tpu_custom_call.1} parent=23 // pred_check_branch
          %137 = sbr.rel (%p135) target = $region28
        $region27: #{tpu_custom_call.1} parent=23 // pred_region
          %138 = dma.done %s131, 4096
        $region28: #{tpu_custom_call.1} parent=23 // pred_fallthru
          _
        %s139 = sand.u32 %s40, 1
        %s140 = scalar_lea.sflag [#allocation3], %s139
        %s141 = sand.u32 %s40, 1
        %s142 = smul.addr %s141, 256
        %s143 = scalar_lea.vmem [#allocation2], %s142
        %p144 = pneg %p53
        %p145 = pneg %p50
        %p146 = pneg %p81
        %p147 = pneg %p78
        %s148 = sand.u32 %s68, 1
        %s149 = scalar_lea.sflag [#allocation4], %s148
        %s150 = sand.u32 %s68, 1
        %s151 = smul.addr %s150, 128
        %s152 = scalar_lea.vmem [#allocation5], %s151
        %s153 = smul.u32 4, %s23
        %s154 = smul.u32 4, %s23
        %v155 = vld [vmem:[%s134] sm:$0xff]
        %v156 = vld [vmem:[%s134 + $0x8] sm:$0xff]
        %v157 = vld [vmem:[%s134 + $0x10] sm:$0xff]
        %v158 = vld [vmem:[%s134 + $0x18] sm:$0xff]
        %s159 = scalar_lea.vmem %s134, 32 [#allocation2]
        %v160 = vld [vmem:[%s159] sm:$0xff]
        %v161 = vld [vmem:[%s159 + $0x8] sm:$0xff]
        %v162 = vld [vmem:[%s159 + $0x10] sm:$0xff]
        %v163 = vld [vmem:[%s159 + $0x18] sm:$0xff]
        %v164 = vlaneseq
        %v165 = vshrl.u32 %v164, 7
        %v166 = vsub.s32 0, %v165
        %v167 = vrot.slane %v155, %v166
        %169 = vbcast.lane.b32.xlu0 %v167, 256
        %v170 = vpop.permute.xlu0 %169
        %v171 = vlaneseq
        %v172 = vshrl.u32 %v171, 7
        %v173 = vsub.s32 1, %v172
        %v174 = vrot.slane %v155, %v173
        %176 = vbcast.lane.b32.xlu0 %v174, 256
        %v177 = vpop.permute.xlu0 %176
        %v178 = vlaneseq
        %v179 = vshrl.u32 %v178, 7
        %v180 = vsub.s32 2, %v179
        %v181 = vrot.slane %v155, %v180
        %183 = vbcast.lane.b32.xlu0 %v181, 256
        %v184 = vpop.permute.xlu0 %183
        %v185 = vlaneseq
        %v186 = vshrl.u32 %v185, 7
        %v187 = vsub.s32 3, %v186
        %v188 = vrot.slane %v155, %v187
        %190 = vbcast.lane.b32.xlu0 %v188, 256
        %v191 = vpop.permute.xlu0 %190
        %v192 = vlaneseq
        %v193 = vshrl.u32 %v192, 7
        %v194 = vsub.s32 4, %v193
        %v195 = vrot.slane %v155, %v194
        %197 = vbcast.lane.b32.xlu0 %v195, 256
        %v198 = vpop.permute.xlu0 %197
        %v199 = vlaneseq
        %v200 = vshrl.u32 %v199, 7
        %v201 = vsub.s32 5, %v200
        %v202 = vrot.slane %v155, %v201
        %204 = vbcast.lane.b32.xlu0 %v202, 256
        %v205 = vpop.permute.xlu0 %204
        %v206 = vlaneseq
        %v207 = vshrl.u32 %v206, 7
        %v208 = vsub.s32 6, %v207
        %v209 = vrot.slane %v155, %v208
        %211 = vbcast.lane.b32.xlu0 %v209, 256
        %v212 = vpop.permute.xlu0 %211
        %v213 = vlaneseq
        %v214 = vshrl.u32 %v213, 7
        %v215 = vsub.s32 7, %v214
        %v216 = vrot.slane %v155, %v215
        %218 = vbcast.lane.b32.xlu0 %v216, 256
        %v219 = vpop.permute.xlu0 %218
        %v220 = vlaneseq
        %v221 = vshrl.u32 %v220, 7
        %v222 = vsub.s32 0, %v221
        %v223 = vrot.slane %v156, %v222
        %225 = vbcast.lane.b32.xlu0 %v223, 256
        %v226 = vpop.permute.xlu0 %225
        %v227 = vlaneseq
        %v228 = vshrl.u32 %v227, 7
        %v229 = vsub.s32 1, %v228
        %v230 = vrot.slane %v156, %v229
        %232 = vbcast.lane.b32.xlu0 %v230, 256
        %v233 = vpop.permute.xlu0 %232
        %v234 = vlaneseq
        %v235 = vshrl.u32 %v234, 7
        %v236 = vsub.s32 2, %v235
        %v237 = vrot.slane %v156, %v236
        %239 = vbcast.lane.b32.xlu0 %v237, 256
        %v240 = vpop.permute.xlu0 %239
        %v241 = vlaneseq
        %v242 = vshrl.u32 %v241, 7
        %v243 = vsub.s32 3, %v242
        %v244 = vrot.slane %v156, %v243
        %246 = vbcast.lane.b32.xlu0 %v244, 256
        %v247 = vpop.permute.xlu0 %246
        %v248 = vlaneseq
        %v249 = vshrl.u32 %v248, 7
        %v250 = vsub.s32 4, %v249
        %v251 = vrot.slane %v156, %v250
        %253 = vbcast.lane.b32.xlu0 %v251, 256
        %v254 = vpop.permute.xlu0 %253
        %v255 = vlaneseq
        %v256 = vshrl.u32 %v255, 7
        %v257 = vsub.s32 5, %v256
        %v258 = vrot.slane %v156, %v257
        %260 = vbcast.lane.b32.xlu0 %v258, 256
        %v261 = vpop.permute.xlu0 %260
        %v262 = vlaneseq
        %v263 = vshrl.u32 %v262, 7
        %v264 = vsub.s32 6, %v263
        %v265 = vrot.slane %v156, %v264
        %267 = vbcast.lane.b32.xlu0 %v265, 256
        %v268 = vpop.permute.xlu0 %267
        %v269 = vlaneseq
        %v270 = vshrl.u32 %v269, 7
        %v271 = vsub.s32 7, %v270
        %v272 = vrot.slane %v156, %v271
        %274 = vbcast.lane.b32.xlu0 %v272, 256
        %v275 = vpop.permute.xlu0 %274
        %v276 = vlaneseq
        %v277 = vshrl.u32 %v276, 7
        %v278 = vsub.s32 0, %v277
        %v279 = vrot.slane %v157, %v278
        %281 = vbcast.lane.b32.xlu0 %v279, 256
        %v282 = vpop.permute.xlu0 %281
        %v283 = vlaneseq
        %v284 = vshrl.u32 %v283, 7
        %v285 = vsub.s32 1, %v284
        %v286 = vrot.slane %v157, %v285
        %288 = vbcast.lane.b32.xlu0 %v286, 256
        %v289 = vpop.permute.xlu0 %288
        %v290 = vlaneseq
        %v291 = vshrl.u32 %v290, 7
        %v292 = vsub.s32 2, %v291
        %v293 = vrot.slane %v157, %v292
        %295 = vbcast.lane.b32.xlu0 %v293, 256
        %v296 = vpop.permute.xlu0 %295
        %v297 = vlaneseq
        %v298 = vshrl.u32 %v297, 7
        %v299 = vsub.s32 3, %v298
        %v300 = vrot.slane %v157, %v299
        %302 = vbcast.lane.b32.xlu0 %v300, 256
        %v303 = vpop.permute.xlu0 %302
        %v304 = vlaneseq
        %v305 = vshrl.u32 %v304, 7
        %v306 = vsub.s32 4, %v305
        %v307 = vrot.slane %v157, %v306
        %309 = vbcast.lane.b32.xlu0 %v307, 256
        %v310 = vpop.permute.xlu0 %309
        %v311 = vlaneseq
        %v312 = vshrl.u32 %v311, 7
        %v313 = vsub.s32 5, %v312
        %v314 = vrot.slane %v157, %v313
        %316 = vbcast.lane.b32.xlu0 %v314, 256
        %v317 = vpop.permute.xlu0 %316
        %v318 = vlaneseq
        %v319 = vshrl.u32 %v318, 7
        %v320 = vsub.s32 6, %v319
        %v321 = vrot.slane %v157, %v320
        %323 = vbcast.lane.b32.xlu0 %v321, 256
        %v324 = vpop.permute.xlu0 %323
        %v325 = vlaneseq
        %v326 = vshrl.u32 %v325, 7
        %v327 = vsub.s32 7, %v326
        %v328 = vrot.slane %v157, %v327
        %330 = vbcast.lane.b32.xlu0 %v328, 256
        %v331 = vpop.permute.xlu0 %330
        %v332 = vlaneseq
        %v333 = vshrl.u32 %v332, 7
        %v334 = vsub.s32 0, %v333
        %v335 = vrot.slane %v158, %v334
        %337 = vbcast.lane.b32.xlu0 %v335, 256
        %v338 = vpop.permute.xlu0 %337
        %v339 = vlaneseq
        %v340 = vshrl.u32 %v339, 7
        %v341 = vsub.s32 1, %v340
        %v342 = vrot.slane %v158, %v341
        %344 = vbcast.lane.b32.xlu0 %v342, 256
        %v345 = vpop.permute.xlu0 %344
        %v346 = vlaneseq
        %v347 = vshrl.u32 %v346, 7
        %v348 = vsub.s32 2, %v347
        %v349 = vrot.slane %v158, %v348
        %351 = vbcast.lane.b32.xlu0 %v349, 256
        %v352 = vpop.permute.xlu0 %351
        %v353 = vlaneseq
        %v354 = vshrl.u32 %v353, 7
        %v355 = vsub.s32 3, %v354
        %v356 = vrot.slane %v158, %v355
        %358 = vbcast.lane.b32.xlu0 %v356, 256
        %v359 = vpop.permute.xlu0 %358
        %v360 = vlaneseq
        %v361 = vshrl.u32 %v360, 7
        %v362 = vsub.s32 4, %v361
        %v363 = vrot.slane %v158, %v362
        %365 = vbcast.lane.b32.xlu0 %v363, 256
        %v366 = vpop.permute.xlu0 %365
        %v367 = vlaneseq
        %v368 = vshrl.u32 %v367, 7
        %v369 = vsub.s32 5, %v368
        %v370 = vrot.slane %v158, %v369
        %372 = vbcast.lane.b32.xlu0 %v370, 256
        %v373 = vpop.permute.xlu0 %372
        %v374 = vlaneseq
        %v375 = vshrl.u32 %v374, 7
        %v376 = vsub.s32 6, %v375
        %v377 = vrot.slane %v158, %v376
        %379 = vbcast.lane.b32.xlu0 %v377, 256
        %v380 = vpop.permute.xlu0 %379
        %v381 = vlaneseq
        %v382 = vshrl.u32 %v381, 7
        %v383 = vsub.s32 7, %v382
        %v384 = vrot.slane %v158, %v383
        %386 = vbcast.lane.b32.xlu0 %v384, 256
        %v387 = vpop.permute.xlu0 %386
        %v388 = vlaneseq
        %v389 = vshrl.u32 %v388, 7
        %v390 = vsub.s32 0, %v389
        %v391 = vrot.slane %v160, %v390
        %393 = vbcast.lane.b32.xlu0 %v391, 256
        %v394 = vpop.permute.xlu0 %393
        %v395 = vlaneseq
        %v396 = vshrl.u32 %v395, 7
        %v397 = vsub.s32 1, %v396
        %v398 = vrot.slane %v160, %v397
        %400 = vbcast.lane.b32.xlu0 %v398, 256
        %v401 = vpop.permute.xlu0 %400
        %v402 = vlaneseq
        %v403 = vshrl.u32 %v402, 7
        %v404 = vsub.s32 2, %v403
        %v405 = vrot.slane %v160, %v404
        %407 = vbcast.lane.b32.xlu0 %v405, 256
        %v408 = vpop.permute.xlu0 %407
        %v409 = vlaneseq
        %v410 = vshrl.u32 %v409, 7
        %v411 = vsub.s32 3, %v410
        %v412 = vrot.slane %v160, %v411
        %414 = vbcast.lane.b32.xlu0 %v412, 256
        %v415 = vpop.permute.xlu0 %414
        %v416 = vlaneseq
        %v417 = vshrl.u32 %v416, 7
        %v418 = vsub.s32 4, %v417
        %v419 = vrot.slane %v160, %v418
        %421 = vbcast.lane.b32.xlu0 %v419, 256
        %v422 = vpop.permute.xlu0 %421
        %v423 = vlaneseq
        %v424 = vshrl.u32 %v423, 7
        %v425 = vsub.s32 5, %v424
        %v426 = vrot.slane %v160, %v425
        %428 = vbcast.lane.b32.xlu0 %v426, 256
        %v429 = vpop.permute.xlu0 %428
        %v430 = vlaneseq
        %v431 = vshrl.u32 %v430, 7
        %v432 = vsub.s32 6, %v431
        %v433 = vrot.slane %v160, %v432
        %435 = vbcast.lane.b32.xlu0 %v433, 256
        %v436 = vpop.permute.xlu0 %435
        %v437 = vlaneseq
        %v438 = vshrl.u32 %v437, 7
        %v439 = vsub.s32 7, %v438
        %v440 = vrot.slane %v160, %v439
        %442 = vbcast.lane.b32.xlu0 %v440, 256
        %v443 = vpop.permute.xlu0 %442
        %v444 = vlaneseq
        %v445 = vshrl.u32 %v444, 7
        %v446 = vsub.s32 0, %v445
        %v447 = vrot.slane %v161, %v446
        %449 = vbcast.lane.b32.xlu0 %v447, 256
        %v450 = vpop.permute.xlu0 %449
        %v451 = vlaneseq
        %v452 = vshrl.u32 %v451, 7
        %v453 = vsub.s32 1, %v452
        %v454 = vrot.slane %v161, %v453
        %456 = vbcast.lane.b32.xlu0 %v454, 256
        %v457 = vpop.permute.xlu0 %456
        %v458 = vlaneseq
        %v459 = vshrl.u32 %v458, 7
        %v460 = vsub.s32 2, %v459
        %v461 = vrot.slane %v161, %v460
        %463 = vbcast.lane.b32.xlu0 %v461, 256
        %v464 = vpop.permute.xlu0 %463
        %v465 = vlaneseq
        %v466 = vshrl.u32 %v465, 7
        %v467 = vsub.s32 3, %v466
        %v468 = vrot.slane %v161, %v467
        %470 = vbcast.lane.b32.xlu0 %v468, 256
        %v471 = vpop.permute.xlu0 %470
        %v472 = vlaneseq
        %v473 = vshrl.u32 %v472, 7
        %v474 = vsub.s32 4, %v473
        %v475 = vrot.slane %v161, %v474
        %477 = vbcast.lane.b32.xlu0 %v475, 256
        %v478 = vpop.permute.xlu0 %477
        %v479 = vlaneseq
        %v480 = vshrl.u32 %v479, 7
        %v481 = vsub.s32 5, %v480
        %v482 = vrot.slane %v161, %v481
        %484 = vbcast.lane.b32.xlu0 %v482, 256
        %v485 = vpop.permute.xlu0 %484
        %v486 = vlaneseq
        %v487 = vshrl.u32 %v486, 7
        %v488 = vsub.s32 6, %v487
        %v489 = vrot.slane %v161, %v488
        %491 = vbcast.lane.b32.xlu0 %v489, 256
        %v492 = vpop.permute.xlu0 %491
        %v493 = vlaneseq
        %v494 = vshrl.u32 %v493, 7
        %v495 = vsub.s32 7, %v494
        %v496 = vrot.slane %v161, %v495
        %498 = vbcast.lane.b32.xlu0 %v496, 256
        %v499 = vpop.permute.xlu0 %498
        %v500 = vlaneseq
        %v501 = vshrl.u32 %v500, 7
        %v502 = vsub.s32 0, %v501
        %v503 = vrot.slane %v162, %v502
        %505 = vbcast.lane.b32.xlu0 %v503, 256
        %v506 = vpop.permute.xlu0 %505
        %v507 = vlaneseq
        %v508 = vshrl.u32 %v507, 7
        %v509 = vsub.s32 1, %v508
        %v510 = vrot.slane %v162, %v509
        %512 = vbcast.lane.b32.xlu0 %v510, 256
        %v513 = vpop.permute.xlu0 %512
        %v514 = vlaneseq
        %v515 = vshrl.u32 %v514, 7
        %v516 = vsub.s32 2, %v515
        %v517 = vrot.slane %v162, %v516
        %519 = vbcast.lane.b32.xlu0 %v517, 256
        %v520 = vpop.permute.xlu0 %519
        %v521 = vlaneseq
        %v522 = vshrl.u32 %v521, 7
        %v523 = vsub.s32 3, %v522
        %v524 = vrot.slane %v162, %v523
        %526 = vbcast.lane.b32.xlu0 %v524, 256
        %v527 = vpop.permute.xlu0 %526
        %v528 = vlaneseq
        %v529 = vshrl.u32 %v528, 7
        %v530 = vsub.s32 4, %v529
        %v531 = vrot.slane %v162, %v530
        %533 = vbcast.lane.b32.xlu0 %v531, 256
        %v534 = vpop.permute.xlu0 %533
        %v535 = vlaneseq
        %v536 = vshrl.u32 %v535, 7
        %v537 = vsub.s32 5, %v536
        %v538 = vrot.slane %v162, %v537
        %540 = vbcast.lane.b32.xlu0 %v538, 256
        %v541 = vpop.permute.xlu0 %540
        %v542 = vlaneseq
        %v543 = vshrl.u32 %v542, 7
        %v544 = vsub.s32 6, %v543
        %v545 = vrot.slane %v162, %v544
        %547 = vbcast.lane.b32.xlu0 %v545, 256
        %v548 = vpop.permute.xlu0 %547
        %v549 = vlaneseq
        %v550 = vshrl.u32 %v549, 7
        %v551 = vsub.s32 7, %v550
        %v552 = vrot.slane %v162, %v551
        %554 = vbcast.lane.b32.xlu0 %v552, 256
        %v555 = vpop.permute.xlu0 %554
        %v556 = vlaneseq
        %v557 = vshrl.u32 %v556, 7
        %v558 = vsub.s32 0, %v557
        %v559 = vrot.slane %v163, %v558
        %561 = vbcast.lane.b32.xlu0 %v559, 256
        %v562 = vpop.permute.xlu0 %561
        %v563 = vlaneseq
        %v564 = vshrl.u32 %v563, 7
        %v565 = vsub.s32 1, %v564
        %v566 = vrot.slane %v163, %v565
        %568 = vbcast.lane.b32.xlu0 %v566, 256
        %v569 = vpop.permute.xlu0 %568
        %v570 = vlaneseq
        %v571 = vshrl.u32 %v570, 7
        %v572 = vsub.s32 2, %v571
        %v573 = vrot.slane %v163, %v572
        %575 = vbcast.lane.b32.xlu0 %v573, 256
        %v576 = vpop.permute.xlu0 %575
        %v577 = vlaneseq
        %v578 = vshrl.u32 %v577, 7
        %v579 = vsub.s32 3, %v578
        %v580 = vrot.slane %v163, %v579
        %582 = vbcast.lane.b32.xlu0 %v580, 256
        %v583 = vpop.permute.xlu0 %582
        %v584 = vlaneseq
        %v585 = vshrl.u32 %v584, 7
        %v586 = vsub.s32 4, %v585
        %v587 = vrot.slane %v163, %v586
        %589 = vbcast.lane.b32.xlu0 %v587, 256
        %v590 = vpop.permute.xlu0 %589
        %v591 = vlaneseq
        %v592 = vshrl.u32 %v591, 7
        %v593 = vsub.s32 5, %v592
        %v594 = vrot.slane %v163, %v593
        %596 = vbcast.lane.b32.xlu0 %v594, 256
        %v597 = vpop.permute.xlu0 %596
        %v598 = vlaneseq
        %v599 = vshrl.u32 %v598, 7
        %v600 = vsub.s32 6, %v599
        %v601 = vrot.slane %v163, %v600
        %603 = vbcast.lane.b32.xlu0 %v601, 256
        %v604 = vpop.permute.xlu0 %603
        %v605 = vlaneseq
        %v606 = vshrl.u32 %v605, 7
        %v607 = vsub.s32 7, %v606
        %v608 = vrot.slane %v163, %v607
        %610 = vbcast.lane.b32.xlu0 %v608, 256
        %v611 = vpop.permute.xlu0 %610
        %vm612 = vcmask 7168
        %v613 = vsel %vm612, %v170, %v394
        %v614 = vsel %vm612, %v177, %v401
        %v615 = vsel %vm612, %v184, %v408
        %v616 = vsel %vm612, %v191, %v415
        %v617 = vsel %vm612, %v198, %v422
        %v618 = vsel %vm612, %v205, %v429
        %v619 = vsel %vm612, %v212, %v436
        %v620 = vsel %vm612, %v219, %v443
        %v621 = vsel %vm612, %v226, %v450
        %v622 = vsel %vm612, %v233, %v457
        %v623 = vsel %vm612, %v240, %v464
        %v624 = vsel %vm612, %v247, %v471
        %v625 = vsel %vm612, %v254, %v478
        %v626 = vsel %vm612, %v261, %v485
        %v627 = vsel %vm612, %v268, %v492
        %v628 = vsel %vm612, %v275, %v499
        %v629 = vsel %vm612, %v282, %v506
        %v630 = vsel %vm612, %v289, %v513
        %v631 = vsel %vm612, %v296, %v520
        %v632 = vsel %vm612, %v303, %v527
        %v633 = vsel %vm612, %v310, %v534
        %v634 = vsel %vm612, %v317, %v541
        %v635 = vsel %vm612, %v324, %v548
        %v636 = vsel %vm612, %v331, %v555
        %v637 = vsel %vm612, %v338, %v562
        %v638 = vsel %vm612, %v345, %v569
        %v639 = vsel %vm612, %v352, %v576
        %v640 = vsel %vm612, %v359, %v583
        %v641 = vsel %vm612, %v366, %v590
        %v642 = vsel %vm612, %v373, %v597
        %v643 = vsel %vm612, %v380, %v604
        %v644 = vsel %vm612, %v387, %v611
        %s645 = scalar_lea.vmem %s134, 64 [#allocation2]
        %v646 = vld [vmem:[%s645] sm:$0xff]
        %v647 = vld [vmem:[%s645 + $0x8] sm:$0xff]
        %v648 = vld [vmem:[%s645 + $0x10] sm:$0xff]
        %v649 = vld [vmem:[%s645 + $0x18] sm:$0xff]
        %s650 = scalar_lea.vmem %s134, 96 [#allocation2]
        %v651 = vld [vmem:[%s650] sm:$0xff]
        %v652 = vld [vmem:[%s650 + $0x8] sm:$0xff]
        %v653 = vld [vmem:[%s650 + $0x10] sm:$0xff]
        %v654 = vld [vmem:[%s650 + $0x18] sm:$0xff]
        %v655 = vlaneseq
        %v656 = vshrl.u32 %v655, 7
        %v657 = vsub.s32 0, %v656
        %v658 = vrot.slane %v646, %v657
        %660 = vbcast.lane.b32.xlu0 %v658, 256
        %v661 = vpop.permute.xlu0 %660
        %v662 = vlaneseq
        %v663 = vshrl.u32 %v662, 7
        %v664 = vsub.s32 1, %v663
        %v665 = vrot.slane %v646, %v664
        %667 = vbcast.lane.b32.xlu0 %v665, 256
        %v668 = vpop.permute.xlu0 %667
        %v669 = vlaneseq
        %v670 = vshrl.u32 %v669, 7
        %v671 = vsub.s32 2, %v670
        %v672 = vrot.slane %v646, %v671
        %674 = vbcast.lane.b32.xlu0 %v672, 256
        %v675 = vpop.permute.xlu0 %674
        %v676 = vlaneseq
        %v677 = vshrl.u32 %v676, 7
        %v678 = vsub.s32 3, %v677
        %v679 = vrot.slane %v646, %v678
        %681 = vbcast.lane.b32.xlu0 %v679, 256
        %v682 = vpop.permute.xlu0 %681
        %v683 = vlaneseq
        %v684 = vshrl.u32 %v683, 7
        %v685 = vsub.s32 4, %v684
        %v686 = vrot.slane %v646, %v685
        %688 = vbcast.lane.b32.xlu0 %v686, 256
        %v689 = vpop.permute.xlu0 %688
        %v690 = vlaneseq
        %v691 = vshrl.u32 %v690, 7
        %v692 = vsub.s32 5, %v691
        %v693 = vrot.slane %v646, %v692
        %695 = vbcast.lane.b32.xlu0 %v693, 256
        %v696 = vpop.permute.xlu0 %695
        %v697 = vlaneseq
        %v698 = vshrl.u32 %v697, 7
        %v699 = vsub.s32 6, %v698
        %v700 = vrot.slane %v646, %v699
        %702 = vbcast.lane.b32.xlu0 %v700, 256
        %v703 = vpop.permute.xlu0 %702
        %v704 = vlaneseq
        %v705 = vshrl.u32 %v704, 7
        %v706 = vsub.s32 7, %v705
        %v707 = vrot.slane %v646, %v706
        %709 = vbcast.lane.b32.xlu0 %v707, 256
        %v710 = vpop.permute.xlu0 %709
        %v711 = vlaneseq
        %v712 = vshrl.u32 %v711, 7
        %v713 = vsub.s32 0, %v712
        %v714 = vrot.slane %v647, %v713
        %716 = vbcast.lane.b32.xlu0 %v714, 256
        %v717 = vpop.permute.xlu0 %716
        %v718 = vlaneseq
        %v719 = vshrl.u32 %v718, 7
        %v720 = vsub.s32 1, %v719
        %v721 = vrot.slane %v647, %v720
        %723 = vbcast.lane.b32.xlu0 %v721, 256
        %v724 = vpop.permute.xlu0 %723
        %v725 = vlaneseq
        %v726 = vshrl.u32 %v725, 7
        %v727 = vsub.s32 2, %v726
        %v728 = vrot.slane %v647, %v727
        %730 = vbcast.lane.b32.xlu0 %v728, 256
        %v731 = vpop.permute.xlu0 %730
        %v732 = vlaneseq
        %v733 = vshrl.u32 %v732, 7
        %v734 = vsub.s32 3, %v733
        %v735 = vrot.slane %v647, %v734
        %737 = vbcast.lane.b32.xlu0 %v735, 256
        %v738 = vpop.permute.xlu0 %737
        %v739 = vlaneseq
        %v740 = vshrl.u32 %v739, 7
        %v741 = vsub.s32 4, %v740
        %v742 = vrot.slane %v647, %v741
        %744 = vbcast.lane.b32.xlu0 %v742, 256
        %v745 = vpop.permute.xlu0 %744
        %v746 = vlaneseq
        %v747 = vshrl.u32 %v746, 7
        %v748 = vsub.s32 5, %v747
        %v749 = vrot.slane %v647, %v748
        %751 = vbcast.lane.b32.xlu0 %v749, 256
        %v752 = vpop.permute.xlu0 %751
        %v753 = vlaneseq
        %v754 = vshrl.u32 %v753, 7
        %v755 = vsub.s32 6, %v754
        %v756 = vrot.slane %v647, %v755
        %758 = vbcast.lane.b32.xlu0 %v756, 256
        %v759 = vpop.permute.xlu0 %758
        %v760 = vlaneseq
        %v761 = vshrl.u32 %v760, 7
        %v762 = vsub.s32 7, %v761
        %v763 = vrot.slane %v647, %v762
        %765 = vbcast.lane.b32.xlu0 %v763, 256
        %v766 = vpop.permute.xlu0 %765
        %v767 = vlaneseq
        %v768 = vshrl.u32 %v767, 7
        %v769 = vsub.s32 0, %v768
        %v770 = vrot.slane %v648, %v769
        %772 = vbcast.lane.b32.xlu0 %v770, 256
        %v773 = vpop.permute.xlu0 %772
        %v774 = vlaneseq
        %v775 = vshrl.u32 %v774, 7
        %v776 = vsub.s32 1, %v775
        %v777 = vrot.slane %v648, %v776
        %779 = vbcast.lane.b32.xlu0 %v777, 256
        %v780 = vpop.permute.xlu0 %779
        %v781 = vlaneseq
        %v782 = vshrl.u32 %v781, 7
        %v783 = vsub.s32 2, %v782
        %v784 = vrot.slane %v648, %v783
        %786 = vbcast.lane.b32.xlu0 %v784, 256
        %v787 = vpop.permute.xlu0 %786
        %v788 = vlaneseq
        %v789 = vshrl.u32 %v788, 7
        %v790 = vsub.s32 3, %v789
        %v791 = vrot.slane %v648, %v790
        %793 = vbcast.lane.b32.xlu0 %v791, 256
        %v794 = vpop.permute.xlu0 %793
        %v795 = vlaneseq
        %v796 = vshrl.u32 %v795, 7
        %v797 = vsub.s32 4, %v796
        %v798 = vrot.slane %v648, %v797
        %800 = vbcast.lane.b32.xlu0 %v798, 256
        %v801 = vpop.permute.xlu0 %800
        %v802 = vlaneseq
        %v803 = vshrl.u32 %v802, 7
        %v804 = vsub.s32 5, %v803
        %v805 = vrot.slane %v648, %v804
        %807 = vbcast.lane.b32.xlu0 %v805, 256
        %v808 = vpop.permute.xlu0 %807
        %v809 = vlaneseq
        %v810 = vshrl.u32 %v809, 7
        %v811 = vsub.s32 6, %v810
        %v812 = vrot.slane %v648, %v811
        %814 = vbcast.lane.b32.xlu0 %v812, 256
        %v815 = vpop.permute.xlu0 %814
        %v816 = vlaneseq
        %v817 = vshrl.u32 %v816, 7
        %v818 = vsub.s32 7, %v817
        %v819 = vrot.slane %v648, %v818
        %821 = vbcast.lane.b32.xlu0 %v819, 256
        %v822 = vpop.permute.xlu0 %821
        %v823 = vlaneseq
        %v824 = vshrl.u32 %v823, 7
        %v825 = vsub.s32 0, %v824
        %v826 = vrot.slane %v649, %v825
        %828 = vbcast.lane.b32.xlu0 %v826, 256
        %v829 = vpop.permute.xlu0 %828
        %v830 = vlaneseq
        %v831 = vshrl.u32 %v830, 7
        %v832 = vsub.s32 1, %v831
        %v833 = vrot.slane %v649, %v832
        %835 = vbcast.lane.b32.xlu0 %v833, 256
        %v836 = vpop.permute.xlu0 %835
        %v837 = vlaneseq
        %v838 = vshrl.u32 %v837, 7
        %v839 = vsub.s32 2, %v838
        %v840 = vrot.slane %v649, %v839
        %842 = vbcast.lane.b32.xlu0 %v840, 256
        %v843 = vpop.permute.xlu0 %842
        %v844 = vlaneseq
        %v845 = vshrl.u32 %v844, 7
        %v846 = vsub.s32 3, %v845
        %v847 = vrot.slane %v649, %v846
        %849 = vbcast.lane.b32.xlu0 %v847, 256
        %v850 = vpop.permute.xlu0 %849
        %v851 = vlaneseq
        %v852 = vshrl.u32 %v851, 7
        %v853 = vsub.s32 4, %v852
        %v854 = vrot.slane %v649, %v853
        %856 = vbcast.lane.b32.xlu0 %v854, 256
        %v857 = vpop.permute.xlu0 %856
        %v858 = vlaneseq
        %v859 = vshrl.u32 %v858, 7
        %v860 = vsub.s32 5, %v859
        %v861 = vrot.slane %v649, %v860
        %863 = vbcast.lane.b32.xlu0 %v861, 256
        %v864 = vpop.permute.xlu0 %863
        %v865 = vlaneseq
        %v866 = vshrl.u32 %v865, 7
        %v867 = vsub.s32 6, %v866
        %v868 = vrot.slane %v649, %v867
        %870 = vbcast.lane.b32.xlu0 %v868, 256
        %v871 = vpop.permute.xlu0 %870
        %v872 = vlaneseq
        %v873 = vshrl.u32 %v872, 7
        %v874 = vsub.s32 7, %v873
        %v875 = vrot.slane %v649, %v874
        %877 = vbcast.lane.b32.xlu0 %v875, 256
        %v878 = vpop.permute.xlu0 %877
        %v879 = vlaneseq
        %v880 = vshrl.u32 %v879, 7
        %v881 = vsub.s32 0, %v880
        %v882 = vrot.slane %v651, %v881
        %884 = vbcast.lane.b32.xlu0 %v882, 256
        %v885 = vpop.permute.xlu0 %884
        %v886 = vlaneseq
        %v887 = vshrl.u32 %v886, 7
        %v888 = vsub.s32 1, %v887
        %v889 = vrot.slane %v651, %v888
        %891 = vbcast.lane.b32.xlu0 %v889, 256
        %v892 = vpop.permute.xlu0 %891
        %v893 = vlaneseq
        %v894 = vshrl.u32 %v893, 7
        %v895 = vsub.s32 2, %v894
        %v896 = vrot.slane %v651, %v895
        %898 = vbcast.lane.b32.xlu0 %v896, 256
        %v899 = vpop.permute.xlu0 %898
        %v900 = vlaneseq
        %v901 = vshrl.u32 %v900, 7
        %v902 = vsub.s32 3, %v901
        %v903 = vrot.slane %v651, %v902
        %905 = vbcast.lane.b32.xlu0 %v903, 256
        %v906 = vpop.permute.xlu0 %905
        %v907 = vlaneseq
        %v908 = vshrl.u32 %v907, 7
        %v909 = vsub.s32 4, %v908
        %v910 = vrot.slane %v651, %v909
        %912 = vbcast.lane.b32.xlu0 %v910, 256
        %v913 = vpop.permute.xlu0 %912
        %v914 = vlaneseq
        %v915 = vshrl.u32 %v914, 7
        %v916 = vsub.s32 5, %v915
        %v917 = vrot.slane %v651, %v916
        %919 = vbcast.lane.b32.xlu0 %v917, 256
        %v920 = vpop.permute.xlu0 %919
        %v921 = vlaneseq
        %v922 = vshrl.u32 %v921, 7
        %v923 = vsub.s32 6, %v922
        %v924 = vrot.slane %v651, %v923
        %926 = vbcast.lane.b32.xlu0 %v924, 256
        %v927 = vpop.permute.xlu0 %926
        %v928 = vlaneseq
        %v929 = vshrl.u32 %v928, 7
        %v930 = vsub.s32 7, %v929
        %v931 = vrot.slane %v651, %v930
        %933 = vbcast.lane.b32.xlu0 %v931, 256
        %v934 = vpop.permute.xlu0 %933
        %v935 = vlaneseq
        %v936 = vshrl.u32 %v935, 7
        %v937 = vsub.s32 0, %v936
        %v938 = vrot.slane %v652, %v937
        %940 = vbcast.lane.b32.xlu0 %v938, 256
        %v941 = vpop.permute.xlu0 %940
        %v942 = vlaneseq
        %v943 = vshrl.u32 %v942, 7
        %v944 = vsub.s32 1, %v943
        %v945 = vrot.slane %v652, %v944
        %947 = vbcast.lane.b32.xlu0 %v945, 256
        %v948 = vpop.permute.xlu0 %947
        %v949 = vlaneseq
        %v950 = vshrl.u32 %v949, 7
        %v951 = vsub.s32 2, %v950
        %v952 = vrot.slane %v652, %v951
        %954 = vbcast.lane.b32.xlu0 %v952, 256
        %v955 = vpop.permute.xlu0 %954
        %v956 = vlaneseq
        %v957 = vshrl.u32 %v956, 7
        %v958 = vsub.s32 3, %v957
        %v959 = vrot.slane %v652, %v958
        %961 = vbcast.lane.b32.xlu0 %v959, 256
        %v962 = vpop.permute.xlu0 %961
        %v963 = vlaneseq
        %v964 = vshrl.u32 %v963, 7
        %v965 = vsub.s32 4, %v964
        %v966 = vrot.slane %v652, %v965
        %968 = vbcast.lane.b32.xlu0 %v966, 256
        %v969 = vpop.permute.xlu0 %968
        %v970 = vlaneseq
        %v971 = vshrl.u32 %v970, 7
        %v972 = vsub.s32 5, %v971
        %v973 = vrot.slane %v652, %v972
        %975 = vbcast.lane.b32.xlu0 %v973, 256
        %v976 = vpop.permute.xlu0 %975
        %v977 = vlaneseq
        %v978 = vshrl.u32 %v977, 7
        %v979 = vsub.s32 6, %v978
        %v980 = vrot.slane %v652, %v979
        %982 = vbcast.lane.b32.xlu0 %v980, 256
        %v983 = vpop.permute.xlu0 %982
        %v984 = vlaneseq
        %v985 = vshrl.u32 %v984, 7
        %v986 = vsub.s32 7, %v985
        %v987 = vrot.slane %v652, %v986
        %989 = vbcast.lane.b32.xlu0 %v987, 256
        %v990 = vpop.permute.xlu0 %989
        %v991 = vlaneseq
        %v992 = vshrl.u32 %v991, 7
        %v993 = vsub.s32 0, %v992
        %v994 = vrot.slane %v653, %v993
        %996 = vbcast.lane.b32.xlu0 %v994, 256
        %v997 = vpop.permute.xlu0 %996
        %v998 = vlaneseq
        %v999 = vshrl.u32 %v998, 7
        %v1000 = vsub.s32 1, %v999
        %v1001 = vrot.slane %v653, %v1000
        %1003 = vbcast.lane.b32.xlu0 %v1001, 256
        %v1004 = vpop.permute.xlu0 %1003
        %v1005 = vlaneseq
        %v1006 = vshrl.u32 %v1005, 7
        %v1007 = vsub.s32 2, %v1006
        %v1008 = vrot.slane %v653, %v1007
        %1010 = vbcast.lane.b32.xlu0 %v1008, 256
        %v1011 = vpop.permute.xlu0 %1010
        %v1012 = vlaneseq
        %v1013 = vshrl.u32 %v1012, 7
        %v1014 = vsub.s32 3, %v1013
        %v1015 = vrot.slane %v653, %v1014
        %1017 = vbcast.lane.b32.xlu0 %v1015, 256
        %v1018 = vpop.permute.xlu0 %1017
        %v1019 = vlaneseq
        %v1020 = vshrl.u32 %v1019, 7
        %v1021 = vsub.s32 4, %v1020
        %v1022 = vrot.slane %v653, %v1021
        %1024 = vbcast.lane.b32.xlu0 %v1022, 256
        %v1025 = vpop.permute.xlu0 %1024
        %v1026 = vlaneseq
        %v1027 = vshrl.u32 %v1026, 7
        %v1028 = vsub.s32 5, %v1027
        %v1029 = vrot.slane %v653, %v1028
        %1031 = vbcast.lane.b32.xlu0 %v1029, 256
        %v1032 = vpop.permute.xlu0 %1031
        %v1033 = vlaneseq
        %v1034 = vshrl.u32 %v1033, 7
        %v1035 = vsub.s32 6, %v1034
        %v1036 = vrot.slane %v653, %v1035
        %1038 = vbcast.lane.b32.xlu0 %v1036, 256
        %v1039 = vpop.permute.xlu0 %1038
        %v1040 = vlaneseq
        %v1041 = vshrl.u32 %v1040, 7
        %v1042 = vsub.s32 7, %v1041
        %v1043 = vrot.slane %v653, %v1042
        %1045 = vbcast.lane.b32.xlu0 %v1043, 256
        %v1046 = vpop.permute.xlu0 %1045
        %v1047 = vlaneseq
        %v1048 = vshrl.u32 %v1047, 7
        %v1049 = vsub.s32 0, %v1048
        %v1050 = vrot.slane %v654, %v1049
        %1052 = vbcast.lane.b32.xlu0 %v1050, 256
        %v1053 = vpop.permute.xlu0 %1052
        %v1054 = vlaneseq
        %v1055 = vshrl.u32 %v1054, 7
        %v1056 = vsub.s32 1, %v1055
        %v1057 = vrot.slane %v654, %v1056
        %1059 = vbcast.lane.b32.xlu0 %v1057, 256
        %v1060 = vpop.permute.xlu0 %1059
        %v1061 = vlaneseq
        %v1062 = vshrl.u32 %v1061, 7
        %v1063 = vsub.s32 2, %v1062
        %v1064 = vrot.slane %v654, %v1063
        %1066 = vbcast.lane.b32.xlu0 %v1064, 256
        %v1067 = vpop.permute.xlu0 %1066
        %v1068 = vlaneseq
        %v1069 = vshrl.u32 %v1068, 7
        %v1070 = vsub.s32 3, %v1069
        %v1071 = vrot.slane %v654, %v1070
        %1073 = vbcast.lane.b32.xlu0 %v1071, 256
        %v1074 = vpop.permute.xlu0 %1073
        %v1075 = vlaneseq
        %v1076 = vshrl.u32 %v1075, 7
        %v1077 = vsub.s32 4, %v1076
        %v1078 = vrot.slane %v654, %v1077
        %1080 = vbcast.lane.b32.xlu0 %v1078, 256
        %v1081 = vpop.permute.xlu0 %1080
        %v1082 = vlaneseq
        %v1083 = vshrl.u32 %v1082, 7
        %v1084 = vsub.s32 5, %v1083
        %v1085 = vrot.slane %v654, %v1084
        %1087 = vbcast.lane.b32.xlu0 %v1085, 256
        %v1088 = vpop.permute.xlu0 %1087
        %v1089 = vlaneseq
        %v1090 = vshrl.u32 %v1089, 7
        %v1091 = vsub.s32 6, %v1090
        %v1092 = vrot.slane %v654, %v1091
        %1094 = vbcast.lane.b32.xlu0 %v1092, 256
        %v1095 = vpop.permute.xlu0 %1094
        %v1096 = vlaneseq
        %v1097 = vshrl.u32 %v1096, 7
        %v1098 = vsub.s32 7, %v1097
        %v1099 = vrot.slane %v654, %v1098
        %1101 = vbcast.lane.b32.xlu0 %v1099, 256
        %v1102 = vpop.permute.xlu0 %1101
        %v1103 = vsel %vm612, %v661, %v885
        %v1104 = vsel %vm612, %v668, %v892
        %v1105 = vsel %vm612, %v675, %v899
        %v1106 = vsel %vm612, %v682, %v906
        %v1107 = vsel %vm612, %v689, %v913
        %v1108 = vsel %vm612, %v696, %v920
        %v1109 = vsel %vm612, %v703, %v927
        %v1110 = vsel %vm612, %v710, %v934
        %v1111 = vsel %vm612, %v717, %v941
        %v1112 = vsel %vm612, %v724, %v948
        %v1113 = vsel %vm612, %v731, %v955
        %v1114 = vsel %vm612, %v738, %v962
        %v1115 = vsel %vm612, %v745, %v969
        %v1116 = vsel %vm612, %v752, %v976
        %v1117 = vsel %vm612, %v759, %v983
        %v1118 = vsel %vm612, %v766, %v990
        %v1119 = vsel %vm612, %v773, %v997
        %v1120 = vsel %vm612, %v780, %v1004
        %v1121 = vsel %vm612, %v787, %v1011
        %v1122 = vsel %vm612, %v794, %v1018
        %v1123 = vsel %vm612, %v801, %v1025
        %v1124 = vsel %vm612, %v808, %v1032
        %v1125 = vsel %vm612, %v815, %v1039
        %v1126 = vsel %vm612, %v822, %v1046
        %v1127 = vsel %vm612, %v829, %v1053
        %v1128 = vsel %vm612, %v836, %v1060
        %v1129 = vsel %vm612, %v843, %v1067
        %v1130 = vsel %vm612, %v850, %v1074
        %v1131 = vsel %vm612, %v857, %v1081
        %v1132 = vsel %vm612, %v864, %v1088
        %v1133 = vsel %vm612, %v871, %v1095
        %v1134 = vsel %vm612, %v878, %v1102
        %v1135 = vcombine.high %v613, 0.0
        %v1137 = vunpack.c.l.s4 1983009808
        %v1138 = vunpack.c.0.s8 %v1137
        %v1139 = vlaneseq
        %v1140 = vshrl.u32 %v1139, 7
        %v1141 = vsub.s32 %v1138, %v1140
        %v1142 = vrot.slane %v613, %v1141
        %v1144 = vunpack.c.l.s4 1983009808
        %v1145 = vunpack.c.0.s8 %v1144
        %v1146 = vlaneseq
        %v1147 = vshrl.u32 %v1146, 7
        %v1148 = vsub.s32 %v1145, %v1147
        %v1149 = vrot.slane %v1135, %v1148
        %v1150 = vcombine.high %v1142, 0.0
        %v1152 = vunpack.c.l.s4 1934713408
        %v1153 = vunpack.c.0.s8 %v1152
        %v1154 = vlaneseq
        %v1155 = vshrl.u32 %v1154, 7
        %v1156 = vsub.s32 %v1153, %v1155
        %v1157 = vrot.slane %v1142, %v1156
        %v1159 = vunpack.c.l.s4 1934713408
        %v1160 = vunpack.c.0.s8 %v1159
        %v1161 = vlaneseq
        %v1162 = vshrl.u32 %v1161, 7
        %v1163 = vsub.s32 %v1160, %v1162
        %v1164 = vrot.slane %v1150, %v1163
        %v1165 = vcombine.high %v1149, 0.0
        %v1167 = vunpack.c.l.s4 1934713408
        %v1168 = vunpack.c.0.s8 %v1167
        %v1169 = vlaneseq
        %v1170 = vshrl.u32 %v1169, 7
        %v1171 = vsub.s32 %v1168, %v1170
        %v1172 = vrot.slane %v1149, %v1171
        %v1174 = vunpack.c.l.s4 1934713408
        %v1175 = vunpack.c.0.s8 %v1174
        %v1176 = vlaneseq
        %v1177 = vshrl.u32 %v1176, 7
        %v1178 = vsub.s32 %v1175, %v1177
        %v1179 = vrot.slane %v1165, %v1178
        %v1180 = vcombine.high %v1157, 0.0
        %v1181 = vcombine.high %v1164, 0.0
        %v1182 = vcombine.high %v1172, 0.0
        %v1183 = vcombine.high %v1179, 0.0
        %v1184 = vcombine.high %v614, 0.0
        %v1186 = vunpack.c.l.s4 1983009808
        %v1187 = vunpack.c.0.s8 %v1186
        %v1188 = vlaneseq
        %v1189 = vshrl.u32 %v1188, 7
        %v1190 = vsub.s32 %v1187, %v1189
        %v1191 = vrot.slane %v614, %v1190
        %v1193 = vunpack.c.l.s4 1983009808
        %v1194 = vunpack.c.0.s8 %v1193
        %v1195 = vlaneseq
        %v1196 = vshrl.u32 %v1195, 7
        %v1197 = vsub.s32 %v1194, %v1196
        %v1198 = vrot.slane %v1184, %v1197
        %v1199 = vcombine.high %v1191, 0.0
        %v1201 = vunpack.c.l.s4 1934713408
        %v1202 = vunpack.c.0.s8 %v1201
        %v1203 = vlaneseq
        %v1204 = vshrl.u32 %v1203, 7
        %v1205 = vsub.s32 %v1202, %v1204
        %v1206 = vrot.slane %v1191, %v1205
        %v1208 = vunpack.c.l.s4 1934713408
        %v1209 = vunpack.c.0.s8 %v1208
        %v1210 = vlaneseq
        %v1211 = vshrl.u32 %v1210, 7
        %v1212 = vsub.s32 %v1209, %v1211
        %v1213 = vrot.slane %v1199, %v1212
        %v1214 = vcombine.high %v1198, 0.0
        %v1216 = vunpack.c.l.s4 1934713408
        %v1217 = vunpack.c.0.s8 %v1216
        %v1218 = vlaneseq
        %v1219 = vshrl.u32 %v1218, 7
        %v1220 = vsub.s32 %v1217, %v1219
        %v1221 = vrot.slane %v1198, %v1220
        %v1223 = vunpack.c.l.s4 1934713408
        %v1224 = vunpack.c.0.s8 %v1223
        %v1225 = vlaneseq
        %v1226 = vshrl.u32 %v1225, 7
        %v1227 = vsub.s32 %v1224, %v1226
        %v1228 = vrot.slane %v1214, %v1227
        %v1229 = vcombine.high %v1206, 0.0
        %v1230 = vcombine.high %v1213, 0.0
        %v1231 = vcombine.high %v1221, 0.0
        %v1232 = vcombine.high %v1228, 0.0
        %v1233 = vcombine.high %v615, 0.0
        %v1235 = vunpack.c.l.s4 1983009808
        %v1236 = vunpack.c.0.s8 %v1235
        %v1237 = vlaneseq
        %v1238 = vshrl.u32 %v1237, 7
        %v1239 = vsub.s32 %v1236, %v1238
        %v1240 = vrot.slane %v615, %v1239
        %v1242 = vunpack.c.l.s4 1983009808
        %v1243 = vunpack.c.0.s8 %v1242
        %v1244 = vlaneseq
        %v1245 = vshrl.u32 %v1244, 7
        %v1246 = vsub.s32 %v1243, %v1245
        %v1247 = vrot.slane %v1233, %v1246
        %v1248 = vcombine.high %v1240, 0.0
        %v1250 = vunpack.c.l.s4 1934713408
        %v1251 = vunpack.c.0.s8 %v1250
        %v1252 = vlaneseq
        %v1253 = vshrl.u32 %v1252, 7
        %v1254 = vsub.s32 %v1251, %v1253
        %v1255 = vrot.slane %v1240, %v1254
        %v1257 = vunpack.c.l.s4 1934713408
        %v1258 = vunpack.c.0.s8 %v1257
        %v1259 = vlaneseq
        %v1260 = vshrl.u32 %v1259, 7
        %v1261 = vsub.s32 %v1258, %v1260
        %v1262 = vrot.slane %v1248, %v1261
        %v1263 = vcombine.high %v1247, 0.0
        %v1265 = vunpack.c.l.s4 1934713408
        %v1266 = vunpack.c.0.s8 %v1265
        %v1267 = vlaneseq
        %v1268 = vshrl.u32 %v1267, 7
        %v1269 = vsub.s32 %v1266, %v1268
        %v1270 = vrot.slane %v1247, %v1269
        %v1272 = vunpack.c.l.s4 1934713408
        %v1273 = vunpack.c.0.s8 %v1272
        %v1274 = vlaneseq
        %v1275 = vshrl.u32 %v1274, 7
        %v1276 = vsub.s32 %v1273, %v1275
        %v1277 = vrot.slane %v1263, %v1276
        %v1278 = vcombine.high %v1255, 0.0
        %v1279 = vcombine.high %v1262, 0.0
        %v1280 = vcombine.high %v1270, 0.0
        %v1281 = vcombine.high %v1277, 0.0
        %v1282 = vcombine.high %v616, 0.0
        %v1284 = vunpack.c.l.s4 1983009808
        %v1285 = vunpack.c.0.s8 %v1284
        %v1286 = vlaneseq
        %v1287 = vshrl.u32 %v1286, 7
        %v1288 = vsub.s32 %v1285, %v1287
        %v1289 = vrot.slane %v616, %v1288
        %v1291 = vunpack.c.l.s4 1983009808
        %v1292 = vunpack.c.0.s8 %v1291
        %v1293 = vlaneseq
        %v1294 = vshrl.u32 %v1293, 7
        %v1295 = vsub.s32 %v1292, %v1294
        %v1296 = vrot.slane %v1282, %v1295
        %v1297 = vcombine.high %v1289, 0.0
        %v1299 = vunpack.c.l.s4 1934713408
        %v1300 = vunpack.c.0.s8 %v1299
        %v1301 = vlaneseq
        %v1302 = vshrl.u32 %v1301, 7
        %v1303 = vsub.s32 %v1300, %v1302
        %v1304 = vrot.slane %v1289, %v1303
        %v1306 = vunpack.c.l.s4 1934713408
        %v1307 = vunpack.c.0.s8 %v1306
        %v1308 = vlaneseq
        %v1309 = vshrl.u32 %v1308, 7
        %v1310 = vsub.s32 %v1307, %v1309
        %v1311 = vrot.slane %v1297, %v1310
        %v1312 = vcombine.high %v1296, 0.0
        %v1314 = vunpack.c.l.s4 1934713408
        %v1315 = vunpack.c.0.s8 %v1314
        %v1316 = vlaneseq
        %v1317 = vshrl.u32 %v1316, 7
        %v1318 = vsub.s32 %v1315, %v1317
        %v1319 = vrot.slane %v1296, %v1318
        %v1321 = vunpack.c.l.s4 1934713408
        %v1322 = vunpack.c.0.s8 %v1321
        %v1323 = vlaneseq
        %v1324 = vshrl.u32 %v1323, 7
        %v1325 = vsub.s32 %v1322, %v1324
        %v1326 = vrot.slane %v1312, %v1325
        %v1327 = vcombine.high %v1304, 0.0
        %v1328 = vcombine.high %v1311, 0.0
        %v1329 = vcombine.high %v1319, 0.0
        %v1330 = vcombine.high %v1326, 0.0
        %v1331 = vcombine.high %v617, 0.0
        %v1333 = vunpack.c.l.s4 1983009808
        %v1334 = vunpack.c.0.s8 %v1333
        %v1335 = vlaneseq
        %v1336 = vshrl.u32 %v1335, 7
        %v1337 = vsub.s32 %v1334, %v1336
        %v1338 = vrot.slane %v617, %v1337
        %v1340 = vunpack.c.l.s4 1983009808
        %v1341 = vunpack.c.0.s8 %v1340
        %v1342 = vlaneseq
        %v1343 = vshrl.u32 %v1342, 7
        %v1344 = vsub.s32 %v1341, %v1343
        %v1345 = vrot.slane %v1331, %v1344
        %v1346 = vcombine.high %v1338, 0.0
        %v1348 = vunpack.c.l.s4 1934713408
        %v1349 = vunpack.c.0.s8 %v1348
        %v1350 = vlaneseq
        %v1351 = vshrl.u32 %v1350, 7
        %v1352 = vsub.s32 %v1349, %v1351
        %v1353 = vrot.slane %v1338, %v1352
        %v1355 = vunpack.c.l.s4 1934713408
        %v1356 = vunpack.c.0.s8 %v1355
        %v1357 = vlaneseq
        %v1358 = vshrl.u32 %v1357, 7
        %v1359 = vsub.s32 %v1356, %v1358
        %v1360 = vrot.slane %v1346, %v1359
        %v1361 = vcombine.high %v1345, 0.0
        %v1363 = vunpack.c.l.s4 1934713408
        %v1364 = vunpack.c.0.s8 %v1363
        %v1365 = vlaneseq
        %v1366 = vshrl.u32 %v1365, 7
        %v1367 = vsub.s32 %v1364, %v1366
        %v1368 = vrot.slane %v1345, %v1367
        %v1370 = vunpack.c.l.s4 1934713408
        %v1371 = vunpack.c.0.s8 %v1370
        %v1372 = vlaneseq
        %v1373 = vshrl.u32 %v1372, 7
        %v1374 = vsub.s32 %v1371, %v1373
        %v1375 = vrot.slane %v1361, %v1374
        %v1376 = vcombine.high %v1353, 0.0
        %v1377 = vcombine.high %v1360, 0.0
        %v1378 = vcombine.high %v1368, 0.0
        %v1379 = vcombine.high %v1375, 0.0
        %v1380 = vcombine.high %v618, 0.0
        %v1382 = vunpack.c.l.s4 1983009808
        %v1383 = vunpack.c.0.s8 %v1382
        %v1384 = vlaneseq
        %v1385 = vshrl.u32 %v1384, 7
        %v1386 = vsub.s32 %v1383, %v1385
        %v1387 = vrot.slane %v618, %v1386
        %v1389 = vunpack.c.l.s4 1983009808
        %v1390 = vunpack.c.0.s8 %v1389
        %v1391 = vlaneseq
        %v1392 = vshrl.u32 %v1391, 7
        %v1393 = vsub.s32 %v1390, %v1392
        %v1394 = vrot.slane %v1380, %v1393
        %v1395 = vcombine.high %v1387, 0.0
        %v1397 = vunpack.c.l.s4 1934713408
        %v1398 = vunpack.c.0.s8 %v1397
        %v1399 = vlaneseq
        %v1400 = vshrl.u32 %v1399, 7
        %v1401 = vsub.s32 %v1398, %v1400
        %v1402 = vrot.slane %v1387, %v1401
        %v1404 = vunpack.c.l.s4 1934713408
        %v1405 = vunpack.c.0.s8 %v1404
        %v1406 = vlaneseq
        %v1407 = vshrl.u32 %v1406, 7
        %v1408 = vsub.s32 %v1405, %v1407
        %v1409 = vrot.slane %v1395, %v1408
        %v1410 = vcombine.high %v1394, 0.0
        %v1412 = vunpack.c.l.s4 1934713408
        %v1413 = vunpack.c.0.s8 %v1412
        %v1414 = vlaneseq
        %v1415 = vshrl.u32 %v1414, 7
        %v1416 = vsub.s32 %v1413, %v1415
        %v1417 = vrot.slane %v1394, %v1416
        %v1419 = vunpack.c.l.s4 1934713408
        %v1420 = vunpack.c.0.s8 %v1419
        %v1421 = vlaneseq
        %v1422 = vshrl.u32 %v1421, 7
        %v1423 = vsub.s32 %v1420, %v1422
        %v1424 = vrot.slane %v1410, %v1423
        %v1425 = vcombine.high %v1402, 0.0
        %v1426 = vcombine.high %v1409, 0.0
        %v1427 = vcombine.high %v1417, 0.0
        %v1428 = vcombine.high %v1424, 0.0
        %v1429 = vcombine.high %v619, 0.0
        %v1431 = vunpack.c.l.s4 1983009808
        %v1432 = vunpack.c.0.s8 %v1431
        %v1433 = vlaneseq
        %v1434 = vshrl.u32 %v1433, 7
        %v1435 = vsub.s32 %v1432, %v1434
        %v1436 = vrot.slane %v619, %v1435
        %v1438 = vunpack.c.l.s4 1983009808
        %v1439 = vunpack.c.0.s8 %v1438
        %v1440 = vlaneseq
        %v1441 = vshrl.u32 %v1440, 7
        %v1442 = vsub.s32 %v1439, %v1441
        %v1443 = vrot.slane %v1429, %v1442
        %v1444 = vcombine.high %v1436, 0.0
        %v1446 = vunpack.c.l.s4 1934713408
        %v1447 = vunpack.c.0.s8 %v1446
        %v1448 = vlaneseq
        %v1449 = vshrl.u32 %v1448, 7
        %v1450 = vsub.s32 %v1447, %v1449
        %v1451 = vrot.slane %v1436, %v1450
        %v1453 = vunpack.c.l.s4 1934713408
        %v1454 = vunpack.c.0.s8 %v1453
        %v1455 = vlaneseq
        %v1456 = vshrl.u32 %v1455, 7
        %v1457 = vsub.s32 %v1454, %v1456
        %v1458 = vrot.slane %v1444, %v1457
        %v1459 = vcombine.high %v1443, 0.0
        %v1461 = vunpack.c.l.s4 1934713408
        %v1462 = vunpack.c.0.s8 %v1461
        %v1463 = vlaneseq
        %v1464 = vshrl.u32 %v1463, 7
        %v1465 = vsub.s32 %v1462, %v1464
        %v1466 = vrot.slane %v1443, %v1465
        %v1468 = vunpack.c.l.s4 1934713408
        %v1469 = vunpack.c.0.s8 %v1468
        %v1470 = vlaneseq
        %v1471 = vshrl.u32 %v1470, 7
        %v1472 = vsub.s32 %v1469, %v1471
        %v1473 = vrot.slane %v1459, %v1472
        %v1474 = vcombine.high %v1451, 0.0
        %v1475 = vcombine.high %v1458, 0.0
        %v1476 = vcombine.high %v1466, 0.0
        %v1477 = vcombine.high %v1473, 0.0
        %v1478 = vcombine.high %v620, 0.0
        %v1480 = vunpack.c.l.s4 1983009808
        %v1481 = vunpack.c.0.s8 %v1480
        %v1482 = vlaneseq
        %v1483 = vshrl.u32 %v1482, 7
        %v1484 = vsub.s32 %v1481, %v1483
        %v1485 = vrot.slane %v620, %v1484
        %v1487 = vunpack.c.l.s4 1983009808
        %v1488 = vunpack.c.0.s8 %v1487
        %v1489 = vlaneseq
        %v1490 = vshrl.u32 %v1489, 7
        %v1491 = vsub.s32 %v1488, %v1490
        %v1492 = vrot.slane %v1478, %v1491
        %v1493 = vcombine.high %v1485, 0.0
        %v1495 = vunpack.c.l.s4 1934713408
        %v1496 = vunpack.c.0.s8 %v1495
        %v1497 = vlaneseq
        %v1498 = vshrl.u32 %v1497, 7
        %v1499 = vsub.s32 %v1496, %v1498
        %v1500 = vrot.slane %v1485, %v1499
        %v1502 = vunpack.c.l.s4 1934713408
        %v1503 = vunpack.c.0.s8 %v1502
        %v1504 = vlaneseq
        %v1505 = vshrl.u32 %v1504, 7
        %v1506 = vsub.s32 %v1503, %v1505
        %v1507 = vrot.slane %v1493, %v1506
        %v1508 = vcombine.high %v1492, 0.0
        %v1510 = vunpack.c.l.s4 1934713408
        %v1511 = vunpack.c.0.s8 %v1510
        %v1512 = vlaneseq
        %v1513 = vshrl.u32 %v1512, 7
        %v1514 = vsub.s32 %v1511, %v1513
        %v1515 = vrot.slane %v1492, %v1514
        %v1517 = vunpack.c.l.s4 1934713408
        %v1518 = vunpack.c.0.s8 %v1517
        %v1519 = vlaneseq
        %v1520 = vshrl.u32 %v1519, 7
        %v1521 = vsub.s32 %v1518, %v1520
        %v1522 = vrot.slane %v1508, %v1521
        %v1523 = vcombine.high %v1500, 0.0
        %v1524 = vcombine.high %v1507, 0.0
        %v1525 = vcombine.high %v1515, 0.0
        %v1526 = vcombine.high %v1522, 0.0
        %v1527 = vcombine.high %v621, 0.0
        %v1529 = vunpack.c.l.s4 1983009808
        %v1530 = vunpack.c.0.s8 %v1529
        %v1531 = vlaneseq
        %v1532 = vshrl.u32 %v1531, 7
        %v1533 = vsub.s32 %v1530, %v1532
        %v1534 = vrot.slane %v621, %v1533
        %v1536 = vunpack.c.l.s4 1983009808
        %v1537 = vunpack.c.0.s8 %v1536
        %v1538 = vlaneseq
        %v1539 = vshrl.u32 %v1538, 7
        %v1540 = vsub.s32 %v1537, %v1539
        %v1541 = vrot.slane %v1527, %v1540
        %v1542 = vcombine.high %v1534, 0.0
        %v1544 = vunpack.c.l.s4 1934713408
        %v1545 = vunpack.c.0.s8 %v1544
        %v1546 = vlaneseq
        %v1547 = vshrl.u32 %v1546, 7
        %v1548 = vsub.s32 %v1545, %v1547
        %v1549 = vrot.slane %v1534, %v1548
        %v1551 = vunpack.c.l.s4 1934713408
        %v1552 = vunpack.c.0.s8 %v1551
        %v1553 = vlaneseq
        %v1554 = vshrl.u32 %v1553, 7
        %v1555 = vsub.s32 %v1552, %v1554
        %v1556 = vrot.slane %v1542, %v1555
        %v1557 = vcombine.high %v1541, 0.0
        %v1559 = vunpack.c.l.s4 1934713408
        %v1560 = vunpack.c.0.s8 %v1559
        %v1561 = vlaneseq
        %v1562 = vshrl.u32 %v1561, 7
        %v1563 = vsub.s32 %v1560, %v1562
        %v1564 = vrot.slane %v1541, %v1563
        %v1566 = vunpack.c.l.s4 1934713408
        %v1567 = vunpack.c.0.s8 %v1566
        %v1568 = vlaneseq
        %v1569 = vshrl.u32 %v1568, 7
        %v1570 = vsub.s32 %v1567, %v1569
        %v1571 = vrot.slane %v1557, %v1570
        %v1572 = vcombine.high %v1549, 0.0
        %v1573 = vcombine.high %v1556, 0.0
        %v1574 = vcombine.high %v1564, 0.0
        %v1575 = vcombine.high %v1571, 0.0
        %v1576 = vcombine.high %v622, 0.0
        %v1578 = vunpack.c.l.s4 1983009808
        %v1579 = vunpack.c.0.s8 %v1578
        %v1580 = vlaneseq
        %v1581 = vshrl.u32 %v1580, 7
        %v1582 = vsub.s32 %v1579, %v1581
        %v1583 = vrot.slane %v622, %v1582
        %v1585 = vunpack.c.l.s4 1983009808
        %v1586 = vunpack.c.0.s8 %v1585
        %v1587 = vlaneseq
        %v1588 = vshrl.u32 %v1587, 7
        %v1589 = vsub.s32 %v1586, %v1588
        %v1590 = vrot.slane %v1576, %v1589
        %v1591 = vcombine.high %v1583, 0.0
        %v1593 = vunpack.c.l.s4 1934713408
        %v1594 = vunpack.c.0.s8 %v1593
        %v1595 = vlaneseq
        %v1596 = vshrl.u32 %v1595, 7
        %v1597 = vsub.s32 %v1594, %v1596
        %v1598 = vrot.slane %v1583, %v1597
        %v1600 = vunpack.c.l.s4 1934713408
        %v1601 = vunpack.c.0.s8 %v1600
        %v1602 = vlaneseq
        %v1603 = vshrl.u32 %v1602, 7
        %v1604 = vsub.s32 %v1601, %v1603
        %v1605 = vrot.slane %v1591, %v1604
        %v1606 = vcombine.high %v1590, 0.0
        %v1608 = vunpack.c.l.s4 1934713408
        %v1609 = vunpack.c.0.s8 %v1608
        %v1610 = vlaneseq
        %v1611 = vshrl.u32 %v1610, 7
        %v1612 = vsub.s32 %v1609, %v1611
        %v1613 = vrot.slane %v1590, %v1612
        %v1615 = vunpack.c.l.s4 1934713408
        %v1616 = vunpack.c.0.s8 %v1615
        %v1617 = vlaneseq
        %v1618 = vshrl.u32 %v1617, 7
        %v1619 = vsub.s32 %v1616, %v1618
        %v1620 = vrot.slane %v1606, %v1619
        %v1621 = vcombine.high %v1598, 0.0
        %v1622 = vcombine.high %v1605, 0.0
        %v1623 = vcombine.high %v1613, 0.0
        %v1624 = vcombine.high %v1620, 0.0
        %v1625 = vcombine.high %v623, 0.0
        %v1627 = vunpack.c.l.s4 1983009808
        %v1628 = vunpack.c.0.s8 %v1627
        %v1629 = vlaneseq
        %v1630 = vshrl.u32 %v1629, 7
        %v1631 = vsub.s32 %v1628, %v1630
        %v1632 = vrot.slane %v623, %v1631
        %v1634 = vunpack.c.l.s4 1983009808
        %v1635 = vunpack.c.0.s8 %v1634
        %v1636 = vlaneseq
        %v1637 = vshrl.u32 %v1636, 7
        %v1638 = vsub.s32 %v1635, %v1637
        %v1639 = vrot.slane %v1625, %v1638
        %v1640 = vcombine.high %v1632, 0.0
        %v1642 = vunpack.c.l.s4 1934713408
        %v1643 = vunpack.c.0.s8 %v1642
        %v1644 = vlaneseq
        %v1645 = vshrl.u32 %v1644, 7
        %v1646 = vsub.s32 %v1643, %v1645
        %v1647 = vrot.slane %v1632, %v1646
        %v1649 = vunpack.c.l.s4 1934713408
        %v1650 = vunpack.c.0.s8 %v1649
        %v1651 = vlaneseq
        %v1652 = vshrl.u32 %v1651, 7
        %v1653 = vsub.s32 %v1650, %v1652
        %v1654 = vrot.slane %v1640, %v1653
        %v1655 = vcombine.high %v1639, 0.0
        %v1657 = vunpack.c.l.s4 1934713408
        %v1658 = vunpack.c.0.s8 %v1657
        %v1659 = vlaneseq
        %v1660 = vshrl.u32 %v1659, 7
        %v1661 = vsub.s32 %v1658, %v1660
        %v1662 = vrot.slane %v1639, %v1661
        %v1664 = vunpack.c.l.s4 1934713408
        %v1665 = vunpack.c.0.s8 %v1664
        %v1666 = vlaneseq
        %v1667 = vshrl.u32 %v1666, 7
        %v1668 = vsub.s32 %v1665, %v1667
        %v1669 = vrot.slane %v1655, %v1668
        %v1670 = vcombine.high %v1647, 0.0
        %v1671 = vcombine.high %v1654, 0.0
        %v1672 = vcombine.high %v1662, 0.0
        %v1673 = vcombine.high %v1669, 0.0
        %v1674 = vcombine.high %v624, 0.0
        %v1676 = vunpack.c.l.s4 1983009808
        %v1677 = vunpack.c.0.s8 %v1676
        %v1678 = vlaneseq
        %v1679 = vshrl.u32 %v1678, 7
        %v1680 = vsub.s32 %v1677, %v1679
        %v1681 = vrot.slane %v624, %v1680
        %v1683 = vunpack.c.l.s4 1983009808
        %v1684 = vunpack.c.0.s8 %v1683
        %v1685 = vlaneseq
        %v1686 = vshrl.u32 %v1685, 7
        %v1687 = vsub.s32 %v1684, %v1686
        %v1688 = vrot.slane %v1674, %v1687
        %v1689 = vcombine.high %v1681, 0.0
        %v1691 = vunpack.c.l.s4 1934713408
        %v1692 = vunpack.c.0.s8 %v1691
        %v1693 = vlaneseq
        %v1694 = vshrl.u32 %v1693, 7
        %v1695 = vsub.s32 %v1692, %v1694
        %v1696 = vrot.slane %v1681, %v1695
        %v1698 = vunpack.c.l.s4 1934713408
        %v1699 = vunpack.c.0.s8 %v1698
        %v1700 = vlaneseq
        %v1701 = vshrl.u32 %v1700, 7
        %v1702 = vsub.s32 %v1699, %v1701
        %v1703 = vrot.slane %v1689, %v1702
        %v1704 = vcombine.high %v1688, 0.0
        %v1706 = vunpack.c.l.s4 1934713408
        %v1707 = vunpack.c.0.s8 %v1706
        %v1708 = vlaneseq
        %v1709 = vshrl.u32 %v1708, 7
        %v1710 = vsub.s32 %v1707, %v1709
        %v1711 = vrot.slane %v1688, %v1710
        %v1713 = vunpack.c.l.s4 1934713408
        %v1714 = vunpack.c.0.s8 %v1713
        %v1715 = vlaneseq
        %v1716 = vshrl.u32 %v1715, 7
        %v1717 = vsub.s32 %v1714, %v1716
        %v1718 = vrot.slane %v1704, %v1717
        %v1719 = vcombine.high %v1696, 0.0
        %v1720 = vcombine.high %v1703, 0.0
        %v1721 = vcombine.high %v1711, 0.0
        %v1722 = vcombine.high %v1718, 0.0
        %v1723 = vcombine.high %v625, 0.0
        %v1725 = vunpack.c.l.s4 1983009808
        %v1726 = vunpack.c.0.s8 %v1725
        %v1727 = vlaneseq
        %v1728 = vshrl.u32 %v1727, 7
        %v1729 = vsub.s32 %v1726, %v1728
        %v1730 = vrot.slane %v625, %v1729
        %v1732 = vunpack.c.l.s4 1983009808
        %v1733 = vunpack.c.0.s8 %v1732
        %v1734 = vlaneseq
        %v1735 = vshrl.u32 %v1734, 7
        %v1736 = vsub.s32 %v1733, %v1735
        %v1737 = vrot.slane %v1723, %v1736
        %v1738 = vcombine.high %v1730, 0.0
        %v1740 = vunpack.c.l.s4 1934713408
        %v1741 = vunpack.c.0.s8 %v1740
        %v1742 = vlaneseq
        %v1743 = vshrl.u32 %v1742, 7
        %v1744 = vsub.s32 %v1741, %v1743
        %v1745 = vrot.slane %v1730, %v1744
        %v1747 = vunpack.c.l.s4 1934713408
        %v1748 = vunpack.c.0.s8 %v1747
        %v1749 = vlaneseq
        %v1750 = vshrl.u32 %v1749, 7
        %v1751 = vsub.s32 %v1748, %v1750
        %v1752 = vrot.slane %v1738, %v1751
        %v1753 = vcombine.high %v1737, 0.0
        %v1755 = vunpack.c.l.s4 1934713408
        %v1756 = vunpack.c.0.s8 %v1755
        %v1757 = vlaneseq
        %v1758 = vshrl.u32 %v1757, 7
        %v1759 = vsub.s32 %v1756, %v1758
        %v1760 = vrot.slane %v1737, %v1759
        %v1762 = vunpack.c.l.s4 1934713408
        %v1763 = vunpack.c.0.s8 %v1762
        %v1764 = vlaneseq
        %v1765 = vshrl.u32 %v1764, 7
        %v1766 = vsub.s32 %v1763, %v1765
        %v1767 = vrot.slane %v1753, %v1766
        %v1768 = vcombine.high %v1745, 0.0
        %v1769 = vcombine.high %v1752, 0.0
        %v1770 = vcombine.high %v1760, 0.0
        %v1771 = vcombine.high %v1767, 0.0
        %v1772 = vcombine.high %v626, 0.0
        %v1774 = vunpack.c.l.s4 1983009808
        %v1775 = vunpack.c.0.s8 %v1774
        %v1776 = vlaneseq
        %v1777 = vshrl.u32 %v1776, 7
        %v1778 = vsub.s32 %v1775, %v1777
        %v1779 = vrot.slane %v626, %v1778
        %v1781 = vunpack.c.l.s4 1983009808
        %v1782 = vunpack.c.0.s8 %v1781
        %v1783 = vlaneseq
        %v1784 = vshrl.u32 %v1783, 7
        %v1785 = vsub.s32 %v1782, %v1784
        %v1786 = vrot.slane %v1772, %v1785
        %v1787 = vcombine.high %v1779, 0.0
        %v1789 = vunpack.c.l.s4 1934713408
        %v1790 = vunpack.c.0.s8 %v1789
        %v1791 = vlaneseq
        %v1792 = vshrl.u32 %v1791, 7
        %v1793 = vsub.s32 %v1790, %v1792
        %v1794 = vrot.slane %v1779, %v1793
        %v1796 = vunpack.c.l.s4 1934713408
        %v1797 = vunpack.c.0.s8 %v1796
        %v1798 = vlaneseq
        %v1799 = vshrl.u32 %v1798, 7
        %v1800 = vsub.s32 %v1797, %v1799
        %v1801 = vrot.slane %v1787, %v1800
        %v1802 = vcombine.high %v1786, 0.0
        %v1804 = vunpack.c.l.s4 1934713408
        %v1805 = vunpack.c.0.s8 %v1804
        %v1806 = vlaneseq
        %v1807 = vshrl.u32 %v1806, 7
        %v1808 = vsub.s32 %v1805, %v1807
        %v1809 = vrot.slane %v1786, %v1808
        %v1811 = vunpack.c.l.s4 1934713408
        %v1812 = vunpack.c.0.s8 %v1811
        %v1813 = vlaneseq
        %v1814 = vshrl.u32 %v1813, 7
        %v1815 = vsub.s32 %v1812, %v1814
        %v1816 = vrot.slane %v1802, %v1815
        %v1817 = vcombine.high %v1794, 0.0
        %v1818 = vcombine.high %v1801, 0.0
        %v1819 = vcombine.high %v1809, 0.0
        %v1820 = vcombine.high %v1816, 0.0
        %v1821 = vcombine.high %v627, 0.0
        %v1823 = vunpack.c.l.s4 1983009808
        %v1824 = vunpack.c.0.s8 %v1823
        %v1825 = vlaneseq
        %v1826 = vshrl.u32 %v1825, 7
        %v1827 = vsub.s32 %v1824, %v1826
        %v1828 = vrot.slane %v627, %v1827
        %v1830 = vunpack.c.l.s4 1983009808
        %v1831 = vunpack.c.0.s8 %v1830
        %v1832 = vlaneseq
        %v1833 = vshrl.u32 %v1832, 7
        %v1834 = vsub.s32 %v1831, %v1833
        %v1835 = vrot.slane %v1821, %v1834
        %v1836 = vcombine.high %v1828, 0.0
        %v1838 = vunpack.c.l.s4 1934713408
        %v1839 = vunpack.c.0.s8 %v1838
        %v1840 = vlaneseq
        %v1841 = vshrl.u32 %v1840, 7
        %v1842 = vsub.s32 %v1839, %v1841
        %v1843 = vrot.slane %v1828, %v1842
        %v1845 = vunpack.c.l.s4 1934713408
        %v1846 = vunpack.c.0.s8 %v1845
        %v1847 = vlaneseq
        %v1848 = vshrl.u32 %v1847, 7
        %v1849 = vsub.s32 %v1846, %v1848
        %v1850 = vrot.slane %v1836, %v1849
        %v1851 = vcombine.high %v1835, 0.0
        %v1853 = vunpack.c.l.s4 1934713408
        %v1854 = vunpack.c.0.s8 %v1853
        %v1855 = vlaneseq
        %v1856 = vshrl.u32 %v1855, 7
        %v1857 = vsub.s32 %v1854, %v1856
        %v1858 = vrot.slane %v1835, %v1857
        %v1860 = vunpack.c.l.s4 1934713408
        %v1861 = vunpack.c.0.s8 %v1860
        %v1862 = vlaneseq
        %v1863 = vshrl.u32 %v1862, 7
        %v1864 = vsub.s32 %v1861, %v1863
        %v1865 = vrot.slane %v1851, %v1864
        %v1866 = vcombine.high %v1843, 0.0
        %v1867 = vcombine.high %v1850, 0.0
        %v1868 = vcombine.high %v1858, 0.0
        %v1869 = vcombine.high %v1865, 0.0
        %v1870 = vcombine.high %v628, 0.0
        %v1872 = vunpack.c.l.s4 1983009808
        %v1873 = vunpack.c.0.s8 %v1872
        %v1874 = vlaneseq
        %v1875 = vshrl.u32 %v1874, 7
        %v1876 = vsub.s32 %v1873, %v1875
        %v1877 = vrot.slane %v628, %v1876
        %v1879 = vunpack.c.l.s4 1983009808
        %v1880 = vunpack.c.0.s8 %v1879
        %v1881 = vlaneseq
        %v1882 = vshrl.u32 %v1881, 7
        %v1883 = vsub.s32 %v1880, %v1882
        %v1884 = vrot.slane %v1870, %v1883
        %v1885 = vcombine.high %v1877, 0.0
        %v1887 = vunpack.c.l.s4 1934713408
        %v1888 = vunpack.c.0.s8 %v1887
        %v1889 = vlaneseq
        %v1890 = vshrl.u32 %v1889, 7
        %v1891 = vsub.s32 %v1888, %v1890
        %v1892 = vrot.slane %v1877, %v1891
        %v1894 = vunpack.c.l.s4 1934713408
        %v1895 = vunpack.c.0.s8 %v1894
        %v1896 = vlaneseq
        %v1897 = vshrl.u32 %v1896, 7
        %v1898 = vsub.s32 %v1895, %v1897
        %v1899 = vrot.slane %v1885, %v1898
        %v1900 = vcombine.high %v1884, 0.0
        %v1902 = vunpack.c.l.s4 1934713408
        %v1903 = vunpack.c.0.s8 %v1902
        %v1904 = vlaneseq
        %v1905 = vshrl.u32 %v1904, 7
        %v1906 = vsub.s32 %v1903, %v1905
        %v1907 = vrot.slane %v1884, %v1906
        %v1909 = vunpack.c.l.s4 1934713408
        %v1910 = vunpack.c.0.s8 %v1909
        %v1911 = vlaneseq
        %v1912 = vshrl.u32 %v1911, 7
        %v1913 = vsub.s32 %v1910, %v1912
        %v1914 = vrot.slane %v1900, %v1913
        %v1915 = vcombine.high %v1892, 0.0
        %v1916 = vcombine.high %v1899, 0.0
        %v1917 = vcombine.high %v1907, 0.0
        %v1918 = vcombine.high %v1914, 0.0
        %v1919 = vcombine.high %v629, 0.0
        %v1921 = vunpack.c.l.s4 1983009808
        %v1922 = vunpack.c.0.s8 %v1921
        %v1923 = vlaneseq
        %v1924 = vshrl.u32 %v1923, 7
        %v1925 = vsub.s32 %v1922, %v1924
        %v1926 = vrot.slane %v629, %v1925
        %v1928 = vunpack.c.l.s4 1983009808
        %v1929 = vunpack.c.0.s8 %v1928
        %v1930 = vlaneseq
        %v1931 = vshrl.u32 %v1930, 7
        %v1932 = vsub.s32 %v1929, %v1931
        %v1933 = vrot.slane %v1919, %v1932
        %v1934 = vcombine.high %v1926, 0.0
        %v1936 = vunpack.c.l.s4 1934713408
        %v1937 = vunpack.c.0.s8 %v1936
        %v1938 = vlaneseq
        %v1939 = vshrl.u32 %v1938, 7
        %v1940 = vsub.s32 %v1937, %v1939
        %v1941 = vrot.slane %v1926, %v1940
        %v1943 = vunpack.c.l.s4 1934713408
        %v1944 = vunpack.c.0.s8 %v1943
        %v1945 = vlaneseq
        %v1946 = vshrl.u32 %v1945, 7
        %v1947 = vsub.s32 %v1944, %v1946
        %v1948 = vrot.slane %v1934, %v1947
        %v1949 = vcombine.high %v1933, 0.0
        %v1951 = vunpack.c.l.s4 1934713408
        %v1952 = vunpack.c.0.s8 %v1951
        %v1953 = vlaneseq
        %v1954 = vshrl.u32 %v1953, 7
        %v1955 = vsub.s32 %v1952, %v1954
        %v1956 = vrot.slane %v1933, %v1955
        %v1958 = vunpack.c.l.s4 1934713408
        %v1959 = vunpack.c.0.s8 %v1958
        %v1960 = vlaneseq
        %v1961 = vshrl.u32 %v1960, 7
        %v1962 = vsub.s32 %v1959, %v1961
        %v1963 = vrot.slane %v1949, %v1962
        %v1964 = vcombine.high %v1941, 0.0
        %v1965 = vcombine.high %v1948, 0.0
        %v1966 = vcombine.high %v1956, 0.0
        %v1967 = vcombine.high %v1963, 0.0
        %v1968 = vcombine.high %v630, 0.0
        %v1970 = vunpack.c.l.s4 1983009808
        %v1971 = vunpack.c.0.s8 %v1970
        %v1972 = vlaneseq
        %v1973 = vshrl.u32 %v1972, 7
        %v1974 = vsub.s32 %v1971, %v1973
        %v1975 = vrot.slane %v630, %v1974
        %v1977 = vunpack.c.l.s4 1983009808
        %v1978 = vunpack.c.0.s8 %v1977
        %v1979 = vlaneseq
        %v1980 = vshrl.u32 %v1979, 7
        %v1981 = vsub.s32 %v1978, %v1980
        %v1982 = vrot.slane %v1968, %v1981
        %v1983 = vcombine.high %v1975, 0.0
        %v1985 = vunpack.c.l.s4 1934713408
        %v1986 = vunpack.c.0.s8 %v1985
        %v1987 = vlaneseq
        %v1988 = vshrl.u32 %v1987, 7
        %v1989 = vsub.s32 %v1986, %v1988
        %v1990 = vrot.slane %v1975, %v1989
        %v1992 = vunpack.c.l.s4 1934713408
        %v1993 = vunpack.c.0.s8 %v1992
        %v1994 = vlaneseq
        %v1995 = vshrl.u32 %v1994, 7
        %v1996 = vsub.s32 %v1993, %v1995
        %v1997 = vrot.slane %v1983, %v1996
        %v1998 = vcombine.high %v1982, 0.0
        %v2000 = vunpack.c.l.s4 1934713408
        %v2001 = vunpack.c.0.s8 %v2000
        %v2002 = vlaneseq
        %v2003 = vshrl.u32 %v2002, 7
        %v2004 = vsub.s32 %v2001, %v2003
        %v2005 = vrot.slane %v1982, %v2004
        %v2007 = vunpack.c.l.s4 1934713408
        %v2008 = vunpack.c.0.s8 %v2007
        %v2009 = vlaneseq
        %v2010 = vshrl.u32 %v2009, 7
        %v2011 = vsub.s32 %v2008, %v2010
        %v2012 = vrot.slane %v1998, %v2011
        %v2013 = vcombine.high %v1990, 0.0
        %v2014 = vcombine.high %v1997, 0.0
        %v2015 = vcombine.high %v2005, 0.0
        %v2016 = vcombine.high %v2012, 0.0
        %v2017 = vcombine.high %v631, 0.0
        %v2019 = vunpack.c.l.s4 1983009808
        %v2020 = vunpack.c.0.s8 %v2019
        %v2021 = vlaneseq
        %v2022 = vshrl.u32 %v2021, 7
        %v2023 = vsub.s32 %v2020, %v2022
        %v2024 = vrot.slane %v631, %v2023
        %v2026 = vunpack.c.l.s4 1983009808
        %v2027 = vunpack.c.0.s8 %v2026
        %v2028 = vlaneseq
        %v2029 = vshrl.u32 %v2028, 7
        %v2030 = vsub.s32 %v2027, %v2029
        %v2031 = vrot.slane %v2017, %v2030
        %v2032 = vcombine.high %v2024, 0.0
        %v2034 = vunpack.c.l.s4 1934713408
        %v2035 = vunpack.c.0.s8 %v2034
        %v2036 = vlaneseq
        %v2037 = vshrl.u32 %v2036, 7
        %v2038 = vsub.s32 %v2035, %v2037
        %v2039 = vrot.slane %v2024, %v2038
        %v2041 = vunpack.c.l.s4 1934713408
        %v2042 = vunpack.c.0.s8 %v2041
        %v2043 = vlaneseq
        %v2044 = vshrl.u32 %v2043, 7
        %v2045 = vsub.s32 %v2042, %v2044
        %v2046 = vrot.slane %v2032, %v2045
        %v2047 = vcombine.high %v2031, 0.0
        %v2049 = vunpack.c.l.s4 1934713408
        %v2050 = vunpack.c.0.s8 %v2049
        %v2051 = vlaneseq
        %v2052 = vshrl.u32 %v2051, 7
        %v2053 = vsub.s32 %v2050, %v2052
        %v2054 = vrot.slane %v2031, %v2053
        %v2056 = vunpack.c.l.s4 1934713408
        %v2057 = vunpack.c.0.s8 %v2056
        %v2058 = vlaneseq
        %v2059 = vshrl.u32 %v2058, 7
        %v2060 = vsub.s32 %v2057, %v2059
        %v2061 = vrot.slane %v2047, %v2060
        %v2062 = vcombine.high %v2039, 0.0
        %v2063 = vcombine.high %v2046, 0.0
        %v2064 = vcombine.high %v2054, 0.0
        %v2065 = vcombine.high %v2061, 0.0
        %v2066 = vcombine.high %v632, 0.0
        %v2068 = vunpack.c.l.s4 1983009808
        %v2069 = vunpack.c.0.s8 %v2068
        %v2070 = vlaneseq
        %v2071 = vshrl.u32 %v2070, 7
        %v2072 = vsub.s32 %v2069, %v2071
        %v2073 = vrot.slane %v632, %v2072
        %v2075 = vunpack.c.l.s4 1983009808
        %v2076 = vunpack.c.0.s8 %v2075
        %v2077 = vlaneseq
        %v2078 = vshrl.u32 %v2077, 7
        %v2079 = vsub.s32 %v2076, %v2078
        %v2080 = vrot.slane %v2066, %v2079
        %v2081 = vcombine.high %v2073, 0.0
        %v2083 = vunpack.c.l.s4 1934713408
        %v2084 = vunpack.c.0.s8 %v2083
        %v2085 = vlaneseq
        %v2086 = vshrl.u32 %v2085, 7
        %v2087 = vsub.s32 %v2084, %v2086
        %v2088 = vrot.slane %v2073, %v2087
        %v2090 = vunpack.c.l.s4 1934713408
        %v2091 = vunpack.c.0.s8 %v2090
        %v2092 = vlaneseq
        %v2093 = vshrl.u32 %v2092, 7
        %v2094 = vsub.s32 %v2091, %v2093
        %v2095 = vrot.slane %v2081, %v2094
        %v2096 = vcombine.high %v2080, 0.0
        %v2098 = vunpack.c.l.s4 1934713408
        %v2099 = vunpack.c.0.s8 %v2098
        %v2100 = vlaneseq
        %v2101 = vshrl.u32 %v2100, 7
        %v2102 = vsub.s32 %v2099, %v2101
        %v2103 = vrot.slane %v2080, %v2102
        %v2105 = vunpack.c.l.s4 1934713408
        %v2106 = vunpack.c.0.s8 %v2105
        %v2107 = vlaneseq
        %v2108 = vshrl.u32 %v2107, 7
        %v2109 = vsub.s32 %v2106, %v2108
        %v2110 = vrot.slane %v2096, %v2109
        %v2111 = vcombine.high %v2088, 0.0
        %v2112 = vcombine.high %v2095, 0.0
        %v2113 = vcombine.high %v2103, 0.0
        %v2114 = vcombine.high %v2110, 0.0
        %v2115 = vcombine.high %v633, 0.0
        %v2117 = vunpack.c.l.s4 1983009808
        %v2118 = vunpack.c.0.s8 %v2117
        %v2119 = vlaneseq
        %v2120 = vshrl.u32 %v2119, 7
        %v2121 = vsub.s32 %v2118, %v2120
        %v2122 = vrot.slane %v633, %v2121
        %v2124 = vunpack.c.l.s4 1983009808
        %v2125 = vunpack.c.0.s8 %v2124
        %v2126 = vlaneseq
        %v2127 = vshrl.u32 %v2126, 7
        %v2128 = vsub.s32 %v2125, %v2127
        %v2129 = vrot.slane %v2115, %v2128
        %v2130 = vcombine.high %v2122, 0.0
        %v2132 = vunpack.c.l.s4 1934713408
        %v2133 = vunpack.c.0.s8 %v2132
        %v2134 = vlaneseq
        %v2135 = vshrl.u32 %v2134, 7
        %v2136 = vsub.s32 %v2133, %v2135
        %v2137 = vrot.slane %v2122, %v2136
        %v2139 = vunpack.c.l.s4 1934713408
        %v2140 = vunpack.c.0.s8 %v2139
        %v2141 = vlaneseq
        %v2142 = vshrl.u32 %v2141, 7
        %v2143 = vsub.s32 %v2140, %v2142
        %v2144 = vrot.slane %v2130, %v2143
        %v2145 = vcombine.high %v2129, 0.0
        %v2147 = vunpack.c.l.s4 1934713408
        %v2148 = vunpack.c.0.s8 %v2147
        %v2149 = vlaneseq
        %v2150 = vshrl.u32 %v2149, 7
        %v2151 = vsub.s32 %v2148, %v2150
        %v2152 = vrot.slane %v2129, %v2151
        %v2154 = vunpack.c.l.s4 1934713408
        %v2155 = vunpack.c.0.s8 %v2154
        %v2156 = vlaneseq
        %v2157 = vshrl.u32 %v2156, 7
        %v2158 = vsub.s32 %v2155, %v2157
        %v2159 = vrot.slane %v2145, %v2158
        %v2160 = vcombine.high %v2137, 0.0
        %v2161 = vcombine.high %v2144, 0.0
        %v2162 = vcombine.high %v2152, 0.0
        %v2163 = vcombine.high %v2159, 0.0
        %v2164 = vcombine.high %v634, 0.0
        %v2166 = vunpack.c.l.s4 1983009808
        %v2167 = vunpack.c.0.s8 %v2166
        %v2168 = vlaneseq
        %v2169 = vshrl.u32 %v2168, 7
        %v2170 = vsub.s32 %v2167, %v2169
        %v2171 = vrot.slane %v634, %v2170
        %v2173 = vunpack.c.l.s4 1983009808
        %v2174 = vunpack.c.0.s8 %v2173
        %v2175 = vlaneseq
        %v2176 = vshrl.u32 %v2175, 7
        %v2177 = vsub.s32 %v2174, %v2176
        %v2178 = vrot.slane %v2164, %v2177
        %v2179 = vcombine.high %v2171, 0.0
        %v2181 = vunpack.c.l.s4 1934713408
        %v2182 = vunpack.c.0.s8 %v2181
        %v2183 = vlaneseq
        %v2184 = vshrl.u32 %v2183, 7
        %v2185 = vsub.s32 %v2182, %v2184
        %v2186 = vrot.slane %v2171, %v2185
        %v2188 = vunpack.c.l.s4 1934713408
        %v2189 = vunpack.c.0.s8 %v2188
        %v2190 = vlaneseq
        %v2191 = vshrl.u32 %v2190, 7
        %v2192 = vsub.s32 %v2189, %v2191
        %v2193 = vrot.slane %v2179, %v2192
        %v2194 = vcombine.high %v2178, 0.0
        %v2196 = vunpack.c.l.s4 1934713408
        %v2197 = vunpack.c.0.s8 %v2196
        %v2198 = vlaneseq
        %v2199 = vshrl.u32 %v2198, 7
        %v2200 = vsub.s32 %v2197, %v2199
        %v2201 = vrot.slane %v2178, %v2200
        %v2203 = vunpack.c.l.s4 1934713408
        %v2204 = vunpack.c.0.s8 %v2203
        %v2205 = vlaneseq
        %v2206 = vshrl.u32 %v2205, 7
        %v2207 = vsub.s32 %v2204, %v2206
        %v2208 = vrot.slane %v2194, %v2207
        %v2209 = vcombine.high %v2186, 0.0
        %v2210 = vcombine.high %v2193, 0.0
        %v2211 = vcombine.high %v2201, 0.0
        %v2212 = vcombine.high %v2208, 0.0
        %v2213 = vcombine.high %v635, 0.0
        %v2215 = vunpack.c.l.s4 1983009808
        %v2216 = vunpack.c.0.s8 %v2215
        %v2217 = vlaneseq
        %v2218 = vshrl.u32 %v2217, 7
        %v2219 = vsub.s32 %v2216, %v2218
        %v2220 = vrot.slane %v635, %v2219
        %v2222 = vunpack.c.l.s4 1983009808
        %v2223 = vunpack.c.0.s8 %v2222
        %v2224 = vlaneseq
        %v2225 = vshrl.u32 %v2224, 7
        %v2226 = vsub.s32 %v2223, %v2225
        %v2227 = vrot.slane %v2213, %v2226
        %v2228 = vcombine.high %v2220, 0.0
        %v2230 = vunpack.c.l.s4 1934713408
        %v2231 = vunpack.c.0.s8 %v2230
        %v2232 = vlaneseq
        %v2233 = vshrl.u32 %v2232, 7
        %v2234 = vsub.s32 %v2231, %v2233
        %v2235 = vrot.slane %v2220, %v2234
        %v2237 = vunpack.c.l.s4 1934713408
        %v2238 = vunpack.c.0.s8 %v2237
        %v2239 = vlaneseq
        %v2240 = vshrl.u32 %v2239, 7
        %v2241 = vsub.s32 %v2238, %v2240
        %v2242 = vrot.slane %v2228, %v2241
        %v2243 = vcombine.high %v2227, 0.0
        %v2245 = vunpack.c.l.s4 1934713408
        %v2246 = vunpack.c.0.s8 %v2245
        %v2247 = vlaneseq
        %v2248 = vshrl.u32 %v2247, 7
        %v2249 = vsub.s32 %v2246, %v2248
        %v2250 = vrot.slane %v2227, %v2249
        %v2252 = vunpack.c.l.s4 1934713408
        %v2253 = vunpack.c.0.s8 %v2252
        %v2254 = vlaneseq
        %v2255 = vshrl.u32 %v2254, 7
        %v2256 = vsub.s32 %v2253, %v2255
        %v2257 = vrot.slane %v2243, %v2256
        %v2258 = vcombine.high %v2235, 0.0
        %v2259 = vcombine.high %v2242, 0.0
        %v2260 = vcombine.high %v2250, 0.0
        %v2261 = vcombine.high %v2257, 0.0
        %v2262 = vcombine.high %v636, 0.0
        %v2264 = vunpack.c.l.s4 1983009808
        %v2265 = vunpack.c.0.s8 %v2264
        %v2266 = vlaneseq
        %v2267 = vshrl.u32 %v2266, 7
        %v2268 = vsub.s32 %v2265, %v2267
        %v2269 = vrot.slane %v636, %v2268
        %v2271 = vunpack.c.l.s4 1983009808
        %v2272 = vunpack.c.0.s8 %v2271
        %v2273 = vlaneseq
        %v2274 = vshrl.u32 %v2273, 7
        %v2275 = vsub.s32 %v2272, %v2274
        %v2276 = vrot.slane %v2262, %v2275
        %v2277 = vcombine.high %v2269, 0.0
        %v2279 = vunpack.c.l.s4 1934713408
        %v2280 = vunpack.c.0.s8 %v2279
        %v2281 = vlaneseq
        %v2282 = vshrl.u32 %v2281, 7
        %v2283 = vsub.s32 %v2280, %v2282
        %v2284 = vrot.slane %v2269, %v2283
        %v2286 = vunpack.c.l.s4 1934713408
        %v2287 = vunpack.c.0.s8 %v2286
        %v2288 = vlaneseq
        %v2289 = vshrl.u32 %v2288, 7
        %v2290 = vsub.s32 %v2287, %v2289
        %v2291 = vrot.slane %v2277, %v2290
        %v2292 = vcombine.high %v2276, 0.0
        %v2294 = vunpack.c.l.s4 1934713408
        %v2295 = vunpack.c.0.s8 %v2294
        %v2296 = vlaneseq
        %v2297 = vshrl.u32 %v2296, 7
        %v2298 = vsub.s32 %v2295, %v2297
        %v2299 = vrot.slane %v2276, %v2298
        %v2301 = vunpack.c.l.s4 1934713408
        %v2302 = vunpack.c.0.s8 %v2301
        %v2303 = vlaneseq
        %v2304 = vshrl.u32 %v2303, 7
        %v2305 = vsub.s32 %v2302, %v2304
        %v2306 = vrot.slane %v2292, %v2305
        %v2307 = vcombine.high %v2284, 0.0
        %v2308 = vcombine.high %v2291, 0.0
        %v2309 = vcombine.high %v2299, 0.0
        %v2310 = vcombine.high %v2306, 0.0
        %v2311 = vcombine.high %v637, 0.0
        %v2313 = vunpack.c.l.s4 1983009808
        %v2314 = vunpack.c.0.s8 %v2313
        %v2315 = vlaneseq
        %v2316 = vshrl.u32 %v2315, 7
        %v2317 = vsub.s32 %v2314, %v2316
        %v2318 = vrot.slane %v637, %v2317
        %v2320 = vunpack.c.l.s4 1983009808
        %v2321 = vunpack.c.0.s8 %v2320
        %v2322 = vlaneseq
        %v2323 = vshrl.u32 %v2322, 7
        %v2324 = vsub.s32 %v2321, %v2323
        %v2325 = vrot.slane %v2311, %v2324
        %v2326 = vcombine.high %v2318, 0.0
        %v2328 = vunpack.c.l.s4 1934713408
        %v2329 = vunpack.c.0.s8 %v2328
        %v2330 = vlaneseq
        %v2331 = vshrl.u32 %v2330, 7
        %v2332 = vsub.s32 %v2329, %v2331
        %v2333 = vrot.slane %v2318, %v2332
        %v2335 = vunpack.c.l.s4 1934713408
        %v2336 = vunpack.c.0.s8 %v2335
        %v2337 = vlaneseq
        %v2338 = vshrl.u32 %v2337, 7
        %v2339 = vsub.s32 %v2336, %v2338
        %v2340 = vrot.slane %v2326, %v2339
        %v2341 = vcombine.high %v2325, 0.0
        %v2343 = vunpack.c.l.s4 1934713408
        %v2344 = vunpack.c.0.s8 %v2343
        %v2345 = vlaneseq
        %v2346 = vshrl.u32 %v2345, 7
        %v2347 = vsub.s32 %v2344, %v2346
        %v2348 = vrot.slane %v2325, %v2347
        %v2350 = vunpack.c.l.s4 1934713408
        %v2351 = vunpack.c.0.s8 %v2350
        %v2352 = vlaneseq
        %v2353 = vshrl.u32 %v2352, 7
        %v2354 = vsub.s32 %v2351, %v2353
        %v2355 = vrot.slane %v2341, %v2354
        %v2356 = vcombine.high %v2333, 0.0
        %v2357 = vcombine.high %v2340, 0.0
        %v2358 = vcombine.high %v2348, 0.0
        %v2359 = vcombine.high %v2355, 0.0
        %v2360 = vcombine.high %v638, 0.0
        %v2362 = vunpack.c.l.s4 1983009808
        %v2363 = vunpack.c.0.s8 %v2362
        %v2364 = vlaneseq
        %v2365 = vshrl.u32 %v2364, 7
        %v2366 = vsub.s32 %v2363, %v2365
        %v2367 = vrot.slane %v638, %v2366
        %v2369 = vunpack.c.l.s4 1983009808
        %v2370 = vunpack.c.0.s8 %v2369
        %v2371 = vlaneseq
        %v2372 = vshrl.u32 %v2371, 7
        %v2373 = vsub.s32 %v2370, %v2372
        %v2374 = vrot.slane %v2360, %v2373
        %v2375 = vcombine.high %v2367, 0.0
        %v2377 = vunpack.c.l.s4 1934713408
        %v2378 = vunpack.c.0.s8 %v2377
        %v2379 = vlaneseq
        %v2380 = vshrl.u32 %v2379, 7
        %v2381 = vsub.s32 %v2378, %v2380
        %v2382 = vrot.slane %v2367, %v2381
        %v2384 = vunpack.c.l.s4 1934713408
        %v2385 = vunpack.c.0.s8 %v2384
        %v2386 = vlaneseq
        %v2387 = vshrl.u32 %v2386, 7
        %v2388 = vsub.s32 %v2385, %v2387
        %v2389 = vrot.slane %v2375, %v2388
        %v2390 = vcombine.high %v2374, 0.0
        %v2392 = vunpack.c.l.s4 1934713408
        %v2393 = vunpack.c.0.s8 %v2392
        %v2394 = vlaneseq
        %v2395 = vshrl.u32 %v2394, 7
        %v2396 = vsub.s32 %v2393, %v2395
        %v2397 = vrot.slane %v2374, %v2396
        %v2399 = vunpack.c.l.s4 1934713408
        %v2400 = vunpack.c.0.s8 %v2399
        %v2401 = vlaneseq
        %v2402 = vshrl.u32 %v2401, 7
        %v2403 = vsub.s32 %v2400, %v2402
        %v2404 = vrot.slane %v2390, %v2403
        %v2405 = vcombine.high %v2382, 0.0
        %v2406 = vcombine.high %v2389, 0.0
        %v2407 = vcombine.high %v2397, 0.0
        %v2408 = vcombine.high %v2404, 0.0
        %v2409 = vcombine.high %v639, 0.0
        %v2411 = vunpack.c.l.s4 1983009808
        %v2412 = vunpack.c.0.s8 %v2411
        %v2413 = vlaneseq
        %v2414 = vshrl.u32 %v2413, 7
        %v2415 = vsub.s32 %v2412, %v2414
        %v2416 = vrot.slane %v639, %v2415
        %v2418 = vunpack.c.l.s4 1983009808
        %v2419 = vunpack.c.0.s8 %v2418
        %v2420 = vlaneseq
        %v2421 = vshrl.u32 %v2420, 7
        %v2422 = vsub.s32 %v2419, %v2421
        %v2423 = vrot.slane %v2409, %v2422
        %v2424 = vcombine.high %v2416, 0.0
        %v2426 = vunpack.c.l.s4 1934713408
        %v2427 = vunpack.c.0.s8 %v2426
        %v2428 = vlaneseq
        %v2429 = vshrl.u32 %v2428, 7
        %v2430 = vsub.s32 %v2427, %v2429
        %v2431 = vrot.slane %v2416, %v2430
        %v2433 = vunpack.c.l.s4 1934713408
        %v2434 = vunpack.c.0.s8 %v2433
        %v2435 = vlaneseq
        %v2436 = vshrl.u32 %v2435, 7
        %v2437 = vsub.s32 %v2434, %v2436
        %v2438 = vrot.slane %v2424, %v2437
        %v2439 = vcombine.high %v2423, 0.0
        %v2441 = vunpack.c.l.s4 1934713408
        %v2442 = vunpack.c.0.s8 %v2441
        %v2443 = vlaneseq
        %v2444 = vshrl.u32 %v2443, 7
        %v2445 = vsub.s32 %v2442, %v2444
        %v2446 = vrot.slane %v2423, %v2445
        %v2448 = vunpack.c.l.s4 1934713408
        %v2449 = vunpack.c.0.s8 %v2448
        %v2450 = vlaneseq
        %v2451 = vshrl.u32 %v2450, 7
        %v2452 = vsub.s32 %v2449, %v2451
        %v2453 = vrot.slane %v2439, %v2452
        %v2454 = vcombine.high %v2431, 0.0
        %v2455 = vcombine.high %v2438, 0.0
        %v2456 = vcombine.high %v2446, 0.0
        %v2457 = vcombine.high %v2453, 0.0
        %v2458 = vcombine.high %v640, 0.0
        %v2460 = vunpack.c.l.s4 1983009808
        %v2461 = vunpack.c.0.s8 %v2460
        %v2462 = vlaneseq
        %v2463 = vshrl.u32 %v2462, 7
        %v2464 = vsub.s32 %v2461, %v2463
        %v2465 = vrot.slane %v640, %v2464
        %v2467 = vunpack.c.l.s4 1983009808
        %v2468 = vunpack.c.0.s8 %v2467
        %v2469 = vlaneseq
        %v2470 = vshrl.u32 %v2469, 7
        %v2471 = vsub.s32 %v2468, %v2470
        %v2472 = vrot.slane %v2458, %v2471
        %v2473 = vcombine.high %v2465, 0.0
        %v2475 = vunpack.c.l.s4 1934713408
        %v2476 = vunpack.c.0.s8 %v2475
        %v2477 = vlaneseq
        %v2478 = vshrl.u32 %v2477, 7
        %v2479 = vsub.s32 %v2476, %v2478
        %v2480 = vrot.slane %v2465, %v2479
        %v2482 = vunpack.c.l.s4 1934713408
        %v2483 = vunpack.c.0.s8 %v2482
        %v2484 = vlaneseq
        %v2485 = vshrl.u32 %v2484, 7
        %v2486 = vsub.s32 %v2483, %v2485
        %v2487 = vrot.slane %v2473, %v2486
        %v2488 = vcombine.high %v2472, 0.0
        %v2490 = vunpack.c.l.s4 1934713408
        %v2491 = vunpack.c.0.s8 %v2490
        %v2492 = vlaneseq
        %v2493 = vshrl.u32 %v2492, 7
        %v2494 = vsub.s32 %v2491, %v2493
        %v2495 = vrot.slane %v2472, %v2494
        %v2497 = vunpack.c.l.s4 1934713408
        %v2498 = vunpack.c.0.s8 %v2497
        %v2499 = vlaneseq
        %v2500 = vshrl.u32 %v2499, 7
        %v2501 = vsub.s32 %v2498, %v2500
        %v2502 = vrot.slane %v2488, %v2501
        %v2503 = vcombine.high %v2480, 0.0
        %v2504 = vcombine.high %v2487, 0.0
        %v2505 = vcombine.high %v2495, 0.0
        %v2506 = vcombine.high %v2502, 0.0
        %v2507 = vcombine.high %v641, 0.0
        %v2509 = vunpack.c.l.s4 1983009808
        %v2510 = vunpack.c.0.s8 %v2509
        %v2511 = vlaneseq
        %v2512 = vshrl.u32 %v2511, 7
        %v2513 = vsub.s32 %v2510, %v2512
        %v2514 = vrot.slane %v641, %v2513
        %v2516 = vunpack.c.l.s4 1983009808
        %v2517 = vunpack.c.0.s8 %v2516
        %v2518 = vlaneseq
        %v2519 = vshrl.u32 %v2518, 7
        %v2520 = vsub.s32 %v2517, %v2519
        %v2521 = vrot.slane %v2507, %v2520
        %v2522 = vcombine.high %v2514, 0.0
        %v2524 = vunpack.c.l.s4 1934713408
        %v2525 = vunpack.c.0.s8 %v2524
        %v2526 = vlaneseq
        %v2527 = vshrl.u32 %v2526, 7
        %v2528 = vsub.s32 %v2525, %v2527
        %v2529 = vrot.slane %v2514, %v2528
        %v2531 = vunpack.c.l.s4 1934713408
        %v2532 = vunpack.c.0.s8 %v2531
        %v2533 = vlaneseq
        %v2534 = vshrl.u32 %v2533, 7
        %v2535 = vsub.s32 %v2532, %v2534
        %v2536 = vrot.slane %v2522, %v2535
        %v2537 = vcombine.high %v2521, 0.0
        %v2539 = vunpack.c.l.s4 1934713408
        %v2540 = vunpack.c.0.s8 %v2539
        %v2541 = vlaneseq
        %v2542 = vshrl.u32 %v2541, 7
        %v2543 = vsub.s32 %v2540, %v2542
        %v2544 = vrot.slane %v2521, %v2543
        %v2546 = vunpack.c.l.s4 1934713408
        %v2547 = vunpack.c.0.s8 %v2546
        %v2548 = vlaneseq
        %v2549 = vshrl.u32 %v2548, 7
        %v2550 = vsub.s32 %v2547, %v2549
        %v2551 = vrot.slane %v2537, %v2550
        %v2552 = vcombine.high %v2529, 0.0
        %v2553 = vcombine.high %v2536, 0.0
        %v2554 = vcombine.high %v2544, 0.0
        %v2555 = vcombine.high %v2551, 0.0
        %v2556 = vcombine.high %v642, 0.0
        %v2558 = vunpack.c.l.s4 1983009808
        %v2559 = vunpack.c.0.s8 %v2558
        %v2560 = vlaneseq
        %v2561 = vshrl.u32 %v2560, 7
        %v2562 = vsub.s32 %v2559, %v2561
        %v2563 = vrot.slane %v642, %v2562
        %v2565 = vunpack.c.l.s4 1983009808
        %v2566 = vunpack.c.0.s8 %v2565
        %v2567 = vlaneseq
        %v2568 = vshrl.u32 %v2567, 7
        %v2569 = vsub.s32 %v2566, %v2568
        %v2570 = vrot.slane %v2556, %v2569
        %v2571 = vcombine.high %v2563, 0.0
        %v2573 = vunpack.c.l.s4 1934713408
        %v2574 = vunpack.c.0.s8 %v2573
        %v2575 = vlaneseq
        %v2576 = vshrl.u32 %v2575, 7
        %v2577 = vsub.s32 %v2574, %v2576
        %v2578 = vrot.slane %v2563, %v2577
        %v2580 = vunpack.c.l.s4 1934713408
        %v2581 = vunpack.c.0.s8 %v2580
        %v2582 = vlaneseq
        %v2583 = vshrl.u32 %v2582, 7
        %v2584 = vsub.s32 %v2581, %v2583
        %v2585 = vrot.slane %v2571, %v2584
        %v2586 = vcombine.high %v2570, 0.0
        %v2588 = vunpack.c.l.s4 1934713408
        %v2589 = vunpack.c.0.s8 %v2588
        %v2590 = vlaneseq
        %v2591 = vshrl.u32 %v2590, 7
        %v2592 = vsub.s32 %v2589, %v2591
        %v2593 = vrot.slane %v2570, %v2592
        %v2595 = vunpack.c.l.s4 1934713408
        %v2596 = vunpack.c.0.s8 %v2595
        %v2597 = vlaneseq
        %v2598 = vshrl.u32 %v2597, 7
        %v2599 = vsub.s32 %v2596, %v2598
        %v2600 = vrot.slane %v2586, %v2599
        %v2601 = vcombine.high %v2578, 0.0
        %v2602 = vcombine.high %v2585, 0.0
        %v2603 = vcombine.high %v2593, 0.0
        %v2604 = vcombine.high %v2600, 0.0
        %v2605 = vcombine.high %v643, 0.0
        %v2607 = vunpack.c.l.s4 1983009808
        %v2608 = vunpack.c.0.s8 %v2607
        %v2609 = vlaneseq
        %v2610 = vshrl.u32 %v2609, 7
        %v2611 = vsub.s32 %v2608, %v2610
        %v2612 = vrot.slane %v643, %v2611
        %v2614 = vunpack.c.l.s4 1983009808
        %v2615 = vunpack.c.0.s8 %v2614
        %v2616 = vlaneseq
        %v2617 = vshrl.u32 %v2616, 7
        %v2618 = vsub.s32 %v2615, %v2617
        %v2619 = vrot.slane %v2605, %v2618
        %v2620 = vcombine.high %v2612, 0.0
        %v2622 = vunpack.c.l.s4 1934713408
        %v2623 = vunpack.c.0.s8 %v2622
        %v2624 = vlaneseq
        %v2625 = vshrl.u32 %v2624, 7
        %v2626 = vsub.s32 %v2623, %v2625
        %v2627 = vrot.slane %v2612, %v2626
        %v2629 = vunpack.c.l.s4 1934713408
        %v2630 = vunpack.c.0.s8 %v2629
        %v2631 = vlaneseq
        %v2632 = vshrl.u32 %v2631, 7
        %v2633 = vsub.s32 %v2630, %v2632
        %v2634 = vrot.slane %v2620, %v2633
        %v2635 = vcombine.high %v2619, 0.0
        %v2637 = vunpack.c.l.s4 1934713408
        %v2638 = vunpack.c.0.s8 %v2637
        %v2639 = vlaneseq
        %v2640 = vshrl.u32 %v2639, 7
        %v2641 = vsub.s32 %v2638, %v2640
        %v2642 = vrot.slane %v2619, %v2641
        %v2644 = vunpack.c.l.s4 1934713408
        %v2645 = vunpack.c.0.s8 %v2644
        %v2646 = vlaneseq
        %v2647 = vshrl.u32 %v2646, 7
        %v2648 = vsub.s32 %v2645, %v2647
        %v2649 = vrot.slane %v2635, %v2648
        %v2650 = vcombine.high %v2627, 0.0
        %v2651 = vcombine.high %v2634, 0.0
        %v2652 = vcombine.high %v2642, 0.0
        %v2653 = vcombine.high %v2649, 0.0
        %v2654 = vcombine.high %v644, 0.0
        %v2656 = vunpack.c.l.s4 1983009808
        %v2657 = vunpack.c.0.s8 %v2656
        %v2658 = vlaneseq
        %v2659 = vshrl.u32 %v2658, 7
        %v2660 = vsub.s32 %v2657, %v2659
        %v2661 = vrot.slane %v644, %v2660
        %v2663 = vunpack.c.l.s4 1983009808
        %v2664 = vunpack.c.0.s8 %v2663
        %v2665 = vlaneseq
        %v2666 = vshrl.u32 %v2665, 7
        %v2667 = vsub.s32 %v2664, %v2666
        %v2668 = vrot.slane %v2654, %v2667
        %v2669 = vcombine.high %v2661, 0.0
        %v2671 = vunpack.c.l.s4 1934713408
        %v2672 = vunpack.c.0.s8 %v2671
        %v2673 = vlaneseq
        %v2674 = vshrl.u32 %v2673, 7
        %v2675 = vsub.s32 %v2672, %v2674
        %v2676 = vrot.slane %v2661, %v2675
        %v2678 = vunpack.c.l.s4 1934713408
        %v2679 = vunpack.c.0.s8 %v2678
        %v2680 = vlaneseq
        %v2681 = vshrl.u32 %v2680, 7
        %v2682 = vsub.s32 %v2679, %v2681
        %v2683 = vrot.slane %v2669, %v2682
        %v2684 = vcombine.high %v2668, 0.0
        %v2686 = vunpack.c.l.s4 1934713408
        %v2687 = vunpack.c.0.s8 %v2686
        %v2688 = vlaneseq
        %v2689 = vshrl.u32 %v2688, 7
        %v2690 = vsub.s32 %v2687, %v2689
        %v2691 = vrot.slane %v2668, %v2690
        %v2693 = vunpack.c.l.s4 1934713408
        %v2694 = vunpack.c.0.s8 %v2693
        %v2695 = vlaneseq
        %v2696 = vshrl.u32 %v2695, 7
        %v2697 = vsub.s32 %v2694, %v2696
        %v2698 = vrot.slane %v2684, %v2697
        %v2699 = vcombine.high %v2676, 0.0
        %v2700 = vcombine.high %v2683, 0.0
        %v2701 = vcombine.high %v2691, 0.0
        %v2702 = vcombine.high %v2698, 0.0
        %2735 = vrot.lane.b32.xlu0 %v1180, 2
        %v2736 = vpop.permute.xlu0 %2735
        %2737 = vrot.lane.b32.xlu0 %v1229, 2
        %v2738 = vpop.permute.xlu0 %2737
        %2739 = vrot.lane.b32.xlu0 %v1278, 2
        %v2740 = vpop.permute.xlu0 %2739
        %2741 = vrot.lane.b32.xlu0 %v1327, 2
        %v2742 = vpop.permute.xlu0 %2741
        %2743 = vrot.lane.b32.xlu0 %v1376, 2
        %v2744 = vpop.permute.xlu0 %2743
        %2745 = vrot.lane.b32.xlu0 %v1425, 2
        %v2746 = vpop.permute.xlu0 %2745
        %2747 = vrot.lane.b32.xlu0 %v1474, 2
        %v2748 = vpop.permute.xlu0 %2747
        %2749 = vrot.lane.b32.xlu0 %v1523, 2
        %v2750 = vpop.permute.xlu0 %2749
        %2751 = vrot.lane.b32.xlu0 %v1572, 2
        %v2752 = vpop.permute.xlu0 %2751
        %2753 = vrot.lane.b32.xlu0 %v1621, 2
        %v2754 = vpop.permute.xlu0 %2753
        %2755 = vrot.lane.b32.xlu0 %v1670, 2
        %v2756 = vpop.permute.xlu0 %2755
        %2757 = vrot.lane.b32.xlu0 %v1719, 2
        %v2758 = vpop.permute.xlu0 %2757
        %2759 = vrot.lane.b32.xlu0 %v1768, 2
        %v2760 = vpop.permute.xlu0 %2759
        %2761 = vrot.lane.b32.xlu0 %v1817, 2
        %v2762 = vpop.permute.xlu0 %2761
        %2763 = vrot.lane.b32.xlu0 %v1866, 2
        %v2764 = vpop.permute.xlu0 %2763
        %2765 = vrot.lane.b32.xlu0 %v1915, 2
        %v2766 = vpop.permute.xlu0 %2765
        %2767 = vrot.lane.b32.xlu0 %v1964, 2
        %v2768 = vpop.permute.xlu0 %2767
        %2769 = vrot.lane.b32.xlu0 %v2013, 2
        %v2770 = vpop.permute.xlu0 %2769
        %2771 = vrot.lane.b32.xlu0 %v2062, 2
        %v2772 = vpop.permute.xlu0 %2771
        %2773 = vrot.lane.b32.xlu0 %v2111, 2
        %v2774 = vpop.permute.xlu0 %2773
        %2775 = vrot.lane.b32.xlu0 %v2160, 2
        %v2776 = vpop.permute.xlu0 %2775
        %2777 = vrot.lane.b32.xlu0 %v2209, 2
        %v2778 = vpop.permute.xlu0 %2777
        %2779 = vrot.lane.b32.xlu0 %v2258, 2
        %v2780 = vpop.permute.xlu0 %2779
        %2781 = vrot.lane.b32.xlu0 %v2307, 2
        %v2782 = vpop.permute.xlu0 %2781
        %2783 = vrot.lane.b32.xlu0 %v2356, 2
        %v2784 = vpop.permute.xlu0 %2783
        %2785 = vrot.lane.b32.xlu0 %v2405, 2
        %v2786 = vpop.permute.xlu0 %2785
        %2787 = vrot.lane.b32.xlu0 %v2454, 2
        %v2788 = vpop.permute.xlu0 %2787
        %2789 = vrot.lane.b32.xlu0 %v2503, 2
        %v2790 = vpop.permute.xlu0 %2789
        %2791 = vrot.lane.b32.xlu0 %v2552, 2
        %v2792 = vpop.permute.xlu0 %2791
        %2793 = vrot.lane.b32.xlu0 %v2601, 2
        %v2794 = vpop.permute.xlu0 %2793
        %2795 = vrot.lane.b32.xlu0 %v2650, 2
        %v2796 = vpop.permute.xlu0 %2795
        %2797 = vrot.lane.b32.xlu0 %v2699, 2
        %v2798 = vpop.permute.xlu0 %2797
        %2863 = vrot.lane.b32.xlu0 %v1164, 4
        %v2864 = vpop.permute.xlu0 %2863
        %2865 = vrot.lane.b32.xlu0 %v1213, 4
        %v2866 = vpop.permute.xlu0 %2865
        %2867 = vrot.lane.b32.xlu0 %v1262, 4
        %v2868 = vpop.permute.xlu0 %2867
        %2869 = vrot.lane.b32.xlu0 %v1311, 4
        %v2870 = vpop.permute.xlu0 %2869
        %2871 = vrot.lane.b32.xlu0 %v1360, 4
        %v2872 = vpop.permute.xlu0 %2871
        %2873 = vrot.lane.b32.xlu0 %v1409, 4
        %v2874 = vpop.permute.xlu0 %2873
        %2875 = vrot.lane.b32.xlu0 %v1458, 4
        %v2876 = vpop.permute.xlu0 %2875
        %2877 = vrot.lane.b32.xlu0 %v1507, 4
        %v2878 = vpop.permute.xlu0 %2877
        %2879 = vrot.lane.b32.xlu0 %v1556, 4
        %v2880 = vpop.permute.xlu0 %2879
        %2881 = vrot.lane.b32.xlu0 %v1605, 4
        %v2882 = vpop.permute.xlu0 %2881
        %2883 = vrot.lane.b32.xlu0 %v1654, 4
        %v2884 = vpop.permute.xlu0 %2883
        %2885 = vrot.lane.b32.xlu0 %v1703, 4
        %v2886 = vpop.permute.xlu0 %2885
        %2887 = vrot.lane.b32.xlu0 %v1752, 4
        %v2888 = vpop.permute.xlu0 %2887
        %2889 = vrot.lane.b32.xlu0 %v1801, 4
        %v2890 = vpop.permute.xlu0 %2889
        %2891 = vrot.lane.b32.xlu0 %v1850, 4
        %v2892 = vpop.permute.xlu0 %2891
        %2893 = vrot.lane.b32.xlu0 %v1899, 4
        %v2894 = vpop.permute.xlu0 %2893
        %2895 = vrot.lane.b32.xlu0 %v1948, 4
        %v2896 = vpop.permute.xlu0 %2895
        %2897 = vrot.lane.b32.xlu0 %v1997, 4
        %v2898 = vpop.permute.xlu0 %2897
        %2899 = vrot.lane.b32.xlu0 %v2046, 4
        %v2900 = vpop.permute.xlu0 %2899
        %2901 = vrot.lane.b32.xlu0 %v2095, 4
        %v2902 = vpop.permute.xlu0 %2901
        %2903 = vrot.lane.b32.xlu0 %v2144, 4
        %v2904 = vpop.permute.xlu0 %2903
        %2905 = vrot.lane.b32.xlu0 %v2193, 4
        %v2906 = vpop.permute.xlu0 %2905
        %2907 = vrot.lane.b32.xlu0 %v2242, 4
        %v2908 = vpop.permute.xlu0 %2907
        %2909 = vrot.lane.b32.xlu0 %v2291, 4
        %v2910 = vpop.permute.xlu0 %2909
        %2911 = vrot.lane.b32.xlu0 %v2340, 4
        %v2912 = vpop.permute.xlu0 %2911
        %2913 = vrot.lane.b32.xlu0 %v2389, 4
        %v2914 = vpop.permute.xlu0 %2913
        %2915 = vrot.lane.b32.xlu0 %v2438, 4
        %v2916 = vpop.permute.xlu0 %2915
        %2917 = vrot.lane.b32.xlu0 %v2487, 4
        %v2918 = vpop.permute.xlu0 %2917
        %2919 = vrot.lane.b32.xlu0 %v2536, 4
        %v2920 = vpop.permute.xlu0 %2919
        %2921 = vrot.lane.b32.xlu0 %v2585, 4
        %v2922 = vpop.permute.xlu0 %2921
        %2923 = vrot.lane.b32.xlu0 %v2634, 4
        %v2924 = vpop.permute.xlu0 %2923
        %2925 = vrot.lane.b32.xlu0 %v2683, 4
        %v2926 = vpop.permute.xlu0 %2925
        %2991 = vrot.lane.b32.xlu0 %v1181, 6
        %v2992 = vpop.permute.xlu0 %2991
        %2993 = vrot.lane.b32.xlu0 %v1230, 6
        %v2994 = vpop.permute.xlu0 %2993
        %2995 = vrot.lane.b32.xlu0 %v1279, 6
        %v2996 = vpop.permute.xlu0 %2995
        %2997 = vrot.lane.b32.xlu0 %v1328, 6
        %v2998 = vpop.permute.xlu0 %2997
        %2999 = vrot.lane.b32.xlu0 %v1377, 6
        %v3000 = vpop.permute.xlu0 %2999
        %3001 = vrot.lane.b32.xlu0 %v1426, 6
        %v3002 = vpop.permute.xlu0 %3001
        %3003 = vrot.lane.b32.xlu0 %v1475, 6
        %v3004 = vpop.permute.xlu0 %3003
        %3005 = vrot.lane.b32.xlu0 %v1524, 6
        %v3006 = vpop.permute.xlu0 %3005
        %3007 = vrot.lane.b32.xlu0 %v1573, 6
        %v3008 = vpop.permute.xlu0 %3007
        %3009 = vrot.lane.b32.xlu0 %v1622, 6
        %v3010 = vpop.permute.xlu0 %3009
        %3011 = vrot.lane.b32.xlu0 %v1671, 6
        %v3012 = vpop.permute.xlu0 %3011
        %3013 = vrot.lane.b32.xlu0 %v1720, 6
        %v3014 = vpop.permute.xlu0 %3013
        %3015 = vrot.lane.b32.xlu0 %v1769, 6
        %v3016 = vpop.permute.xlu0 %3015
        %3017 = vrot.lane.b32.xlu0 %v1818, 6
        %v3018 = vpop.permute.xlu0 %3017
        %3019 = vrot.lane.b32.xlu0 %v1867, 6
        %v3020 = vpop.permute.xlu0 %3019
        %3021 = vrot.lane.b32.xlu0 %v1916, 6
        %v3022 = vpop.permute.xlu0 %3021
        %3023 = vrot.lane.b32.xlu0 %v1965, 6
        %v3024 = vpop.permute.xlu0 %3023
        %3025 = vrot.lane.b32.xlu0 %v2014, 6
        %v3026 = vpop.permute.xlu0 %3025
        %3027 = vrot.lane.b32.xlu0 %v2063, 6
        %v3028 = vpop.permute.xlu0 %3027
        %3029 = vrot.lane.b32.xlu0 %v2112, 6
        %v3030 = vpop.permute.xlu0 %3029
        %3031 = vrot.lane.b32.xlu0 %v2161, 6
        %v3032 = vpop.permute.xlu0 %3031
        %3033 = vrot.lane.b32.xlu0 %v2210, 6
        %v3034 = vpop.permute.xlu0 %3033
        %3035 = vrot.lane.b32.xlu0 %v2259, 6
        %v3036 = vpop.permute.xlu0 %3035
        %3037 = vrot.lane.b32.xlu0 %v2308, 6
        %v3038 = vpop.permute.xlu0 %3037
        %3039 = vrot.lane.b32.xlu0 %v2357, 6
        %v3040 = vpop.permute.xlu0 %3039
        %3041 = vrot.lane.b32.xlu0 %v2406, 6
        %v3042 = vpop.permute.xlu0 %3041
        %3043 = vrot.lane.b32.xlu0 %v2455, 6
        %v3044 = vpop.permute.xlu0 %3043
        %3045 = vrot.lane.b32.xlu0 %v2504, 6
        %v3046 = vpop.permute.xlu0 %3045
        %3047 = vrot.lane.b32.xlu0 %v2553, 6
        %v3048 = vpop.permute.xlu0 %3047
        %3049 = vrot.lane.b32.xlu0 %v2602, 6
        %v3050 = vpop.permute.xlu0 %3049
        %3051 = vrot.lane.b32.xlu0 %v2651, 6
        %v3052 = vpop.permute.xlu0 %3051
        %3053 = vrot.lane.b32.xlu0 %v2700, 6
        %v3054 = vpop.permute.xlu0 %3053
        %3119 = vrot.lane.b32.xlu0 %v1172, 8
        %v3120 = vpop.permute.xlu0 %3119
        %3121 = vrot.lane.b32.xlu0 %v1221, 8
        %v3122 = vpop.permute.xlu0 %3121
        %3123 = vrot.lane.b32.xlu0 %v1270, 8
        %v3124 = vpop.permute.xlu0 %3123
        %3125 = vrot.lane.b32.xlu0 %v1319, 8
        %v3126 = vpop.permute.xlu0 %3125
        %3127 = vrot.lane.b32.xlu0 %v1368, 8
        %v3128 = vpop.permute.xlu0 %3127
        %3129 = vrot.lane.b32.xlu0 %v1417, 8
        %v3130 = vpop.permute.xlu0 %3129
        %3131 = vrot.lane.b32.xlu0 %v1466, 8
        %v3132 = vpop.permute.xlu0 %3131
        %3133 = vrot.lane.b32.xlu0 %v1515, 8
        %v3134 = vpop.permute.xlu0 %3133
        %3135 = vrot.lane.b32.xlu0 %v1564, 8
        %v3136 = vpop.permute.xlu0 %3135
        %3137 = vrot.lane.b32.xlu0 %v1613, 8
        %v3138 = vpop.permute.xlu0 %3137
        %3139 = vrot.lane.b32.xlu0 %v1662, 8
        %v3140 = vpop.permute.xlu0 %3139
        %3141 = vrot.lane.b32.xlu0 %v1711, 8
        %v3142 = vpop.permute.xlu0 %3141
        %3143 = vrot.lane.b32.xlu0 %v1760, 8
        %v3144 = vpop.permute.xlu0 %3143
        %3145 = vrot.lane.b32.xlu0 %v1809, 8
        %v3146 = vpop.permute.xlu0 %3145
        %3147 = vrot.lane.b32.xlu0 %v1858, 8
        %v3148 = vpop.permute.xlu0 %3147
        %3149 = vrot.lane.b32.xlu0 %v1907, 8
        %v3150 = vpop.permute.xlu0 %3149
        %3151 = vrot.lane.b32.xlu0 %v1956, 8
        %v3152 = vpop.permute.xlu0 %3151
        %3153 = vrot.lane.b32.xlu0 %v2005, 8
        %v3154 = vpop.permute.xlu0 %3153
        %3155 = vrot.lane.b32.xlu0 %v2054, 8
        %v3156 = vpop.permute.xlu0 %3155
        %3157 = vrot.lane.b32.xlu0 %v2103, 8
        %v3158 = vpop.permute.xlu0 %3157
        %3159 = vrot.lane.b32.xlu0 %v2152, 8
        %v3160 = vpop.permute.xlu0 %3159
        %3161 = vrot.lane.b32.xlu0 %v2201, 8
        %v3162 = vpop.permute.xlu0 %3161
        %3163 = vrot.lane.b32.xlu0 %v2250, 8
        %v3164 = vpop.permute.xlu0 %3163
        %3165 = vrot.lane.b32.xlu0 %v2299, 8
        %v3166 = vpop.permute.xlu0 %3165
        %3167 = vrot.lane.b32.xlu0 %v2348, 8
        %v3168 = vpop.permute.xlu0 %3167
        %3169 = vrot.lane.b32.xlu0 %v2397, 8
        %v3170 = vpop.permute.xlu0 %3169
        %3171 = vrot.lane.b32.xlu0 %v2446, 8
        %v3172 = vpop.permute.xlu0 %3171
        %3173 = vrot.lane.b32.xlu0 %v2495, 8
        %v3174 = vpop.permute.xlu0 %3173
        %3175 = vrot.lane.b32.xlu0 %v2544, 8
        %v3176 = vpop.permute.xlu0 %3175
        %3177 = vrot.lane.b32.xlu0 %v2593, 8
        %v3178 = vpop.permute.xlu0 %3177
        %3179 = vrot.lane.b32.xlu0 %v2642, 8
        %v3180 = vpop.permute.xlu0 %3179
        %3181 = vrot.lane.b32.xlu0 %v2691, 8
        %v3182 = vpop.permute.xlu0 %3181
        %3247 = vrot.lane.b32.xlu0 %v1182, 10
        %v3248 = vpop.permute.xlu0 %3247
        %3249 = vrot.lane.b32.xlu0 %v1231, 10
        %v3250 = vpop.permute.xlu0 %3249
        %3251 = vrot.lane.b32.xlu0 %v1280, 10
        %v3252 = vpop.permute.xlu0 %3251
        %3253 = vrot.lane.b32.xlu0 %v1329, 10
        %v3254 = vpop.permute.xlu0 %3253
        %3255 = vrot.lane.b32.xlu0 %v1378, 10
        %v3256 = vpop.permute.xlu0 %3255
        %3257 = vrot.lane.b32.xlu0 %v1427, 10
        %v3258 = vpop.permute.xlu0 %3257
        %3259 = vrot.lane.b32.xlu0 %v1476, 10
        %v3260 = vpop.permute.xlu0 %3259
        %3261 = vrot.lane.b32.xlu0 %v1525, 10
        %v3262 = vpop.permute.xlu0 %3261
        %3263 = vrot.lane.b32.xlu0 %v1574, 10
        %v3264 = vpop.permute.xlu0 %3263
        %3265 = vrot.lane.b32.xlu0 %v1623, 10
        %v3266 = vpop.permute.xlu0 %3265
        %3267 = vrot.lane.b32.xlu0 %v1672, 10
        %v3268 = vpop.permute.xlu0 %3267
        %3269 = vrot.lane.b32.xlu0 %v1721, 10
        %v3270 = vpop.permute.xlu0 %3269
        %3271 = vrot.lane.b32.xlu0 %v1770, 10
        %v3272 = vpop.permute.xlu0 %3271
        %3273 = vrot.lane.b32.xlu0 %v1819, 10
        %v3274 = vpop.permute.xlu0 %3273
        %3275 = vrot.lane.b32.xlu0 %v1868, 10
        %v3276 = vpop.permute.xlu0 %3275
        %3277 = vrot.lane.b32.xlu0 %v1917, 10
        %v3278 = vpop.permute.xlu0 %3277
        %3279 = vrot.lane.b32.xlu0 %v1966, 10
        %v3280 = vpop.permute.xlu0 %3279
        %3281 = vrot.lane.b32.xlu0 %v2015, 10
        %v3282 = vpop.permute.xlu0 %3281
        %3283 = vrot.lane.b32.xlu0 %v2064, 10
        %v3284 = vpop.permute.xlu0 %3283
        %3285 = vrot.lane.b32.xlu0 %v2113, 10
        %v3286 = vpop.permute.xlu0 %3285
        %3287 = vrot.lane.b32.xlu0 %v2162, 10
        %v3288 = vpop.permute.xlu0 %3287
        %3289 = vrot.lane.b32.xlu0 %v2211, 10
        %v3290 = vpop.permute.xlu0 %3289
        %3291 = vrot.lane.b32.xlu0 %v2260, 10
        %v3292 = vpop.permute.xlu0 %3291
        %3293 = vrot.lane.b32.xlu0 %v2309, 10
        %v3294 = vpop.permute.xlu0 %3293
        %3295 = vrot.lane.b32.xlu0 %v2358, 10
        %v3296 = vpop.permute.xlu0 %3295
        %3297 = vrot.lane.b32.xlu0 %v2407, 10
        %v3298 = vpop.permute.xlu0 %3297
        %3299 = vrot.lane.b32.xlu0 %v2456, 10
        %v3300 = vpop.permute.xlu0 %3299
        %3301 = vrot.lane.b32.xlu0 %v2505, 10
        %v3302 = vpop.permute.xlu0 %3301
        %3303 = vrot.lane.b32.xlu0 %v2554, 10
        %v3304 = vpop.permute.xlu0 %3303
        %3305 = vrot.lane.b32.xlu0 %v2603, 10
        %v3306 = vpop.permute.xlu0 %3305
        %3307 = vrot.lane.b32.xlu0 %v2652, 10
        %v3308 = vpop.permute.xlu0 %3307
        %3309 = vrot.lane.b32.xlu0 %v2701, 10
        %v3310 = vpop.permute.xlu0 %3309
        %3375 = vrot.lane.b32.xlu0 %v1179, 12
        %v3376 = vpop.permute.xlu0 %3375
        %3377 = vrot.lane.b32.xlu0 %v1228, 12
        %v3378 = vpop.permute.xlu0 %3377
        %3379 = vrot.lane.b32.xlu0 %v1277, 12
        %v3380 = vpop.permute.xlu0 %3379
        %3381 = vrot.lane.b32.xlu0 %v1326, 12
        %v3382 = vpop.permute.xlu0 %3381
        %3383 = vrot.lane.b32.xlu0 %v1375, 12
        %v3384 = vpop.permute.xlu0 %3383
        %3385 = vrot.lane.b32.xlu0 %v1424, 12
        %v3386 = vpop.permute.xlu0 %3385
        %3387 = vrot.lane.b32.xlu0 %v1473, 12
        %v3388 = vpop.permute.xlu0 %3387
        %3389 = vrot.lane.b32.xlu0 %v1522, 12
        %v3390 = vpop.permute.xlu0 %3389
        %3391 = vrot.lane.b32.xlu0 %v1571, 12
        %v3392 = vpop.permute.xlu0 %3391
        %3393 = vrot.lane.b32.xlu0 %v1620, 12
        %v3394 = vpop.permute.xlu0 %3393
        %3395 = vrot.lane.b32.xlu0 %v1669, 12
        %v3396 = vpop.permute.xlu0 %3395
        %3397 = vrot.lane.b32.xlu0 %v1718, 12
        %v3398 = vpop.permute.xlu0 %3397
        %3399 = vrot.lane.b32.xlu0 %v1767, 12
        %v3400 = vpop.permute.xlu0 %3399
        %3401 = vrot.lane.b32.xlu0 %v1816, 12
        %v3402 = vpop.permute.xlu0 %3401
        %3403 = vrot.lane.b32.xlu0 %v1865, 12
        %v3404 = vpop.permute.xlu0 %3403
        %3405 = vrot.lane.b32.xlu0 %v1914, 12
        %v3406 = vpop.permute.xlu0 %3405
        %3407 = vrot.lane.b32.xlu0 %v1963, 12
        %v3408 = vpop.permute.xlu0 %3407
        %3409 = vrot.lane.b32.xlu0 %v2012, 12
        %v3410 = vpop.permute.xlu0 %3409
        %3411 = vrot.lane.b32.xlu0 %v2061, 12
        %v3412 = vpop.permute.xlu0 %3411
        %3413 = vrot.lane.b32.xlu0 %v2110, 12
        %v3414 = vpop.permute.xlu0 %3413
        %3415 = vrot.lane.b32.xlu0 %v2159, 12
        %v3416 = vpop.permute.xlu0 %3415
        %3417 = vrot.lane.b32.xlu0 %v2208, 12
        %v3418 = vpop.permute.xlu0 %3417
        %3419 = vrot.lane.b32.xlu0 %v2257, 12
        %v3420 = vpop.permute.xlu0 %3419
        %3421 = vrot.lane.b32.xlu0 %v2306, 12
        %v3422 = vpop.permute.xlu0 %3421
        %3423 = vrot.lane.b32.xlu0 %v2355, 12
        %v3424 = vpop.permute.xlu0 %3423
        %3425 = vrot.lane.b32.xlu0 %v2404, 12
        %v3426 = vpop.permute.xlu0 %3425
        %3427 = vrot.lane.b32.xlu0 %v2453, 12
        %v3428 = vpop.permute.xlu0 %3427
        %3429 = vrot.lane.b32.xlu0 %v2502, 12
        %v3430 = vpop.permute.xlu0 %3429
        %3431 = vrot.lane.b32.xlu0 %v2551, 12
        %v3432 = vpop.permute.xlu0 %3431
        %3433 = vrot.lane.b32.xlu0 %v2600, 12
        %v3434 = vpop.permute.xlu0 %3433
        %3435 = vrot.lane.b32.xlu0 %v2649, 12
        %v3436 = vpop.permute.xlu0 %3435
        %3437 = vrot.lane.b32.xlu0 %v2698, 12
        %v3438 = vpop.permute.xlu0 %3437
        %3503 = vrot.lane.b32.xlu0 %v1183, 14
        %v3504 = vpop.permute.xlu0 %3503
        %3505 = vrot.lane.b32.xlu0 %v1232, 14
        %v3506 = vpop.permute.xlu0 %3505
        %3507 = vrot.lane.b32.xlu0 %v1281, 14
        %v3508 = vpop.permute.xlu0 %3507
        %3509 = vrot.lane.b32.xlu0 %v1330, 14
        %v3510 = vpop.permute.xlu0 %3509
        %3511 = vrot.lane.b32.xlu0 %v1379, 14
        %v3512 = vpop.permute.xlu0 %3511
        %3513 = vrot.lane.b32.xlu0 %v1428, 14
        %v3514 = vpop.permute.xlu0 %3513
        %3515 = vrot.lane.b32.xlu0 %v1477, 14
        %v3516 = vpop.permute.xlu0 %3515
        %3517 = vrot.lane.b32.xlu0 %v1526, 14
        %v3518 = vpop.permute.xlu0 %3517
        %3519 = vrot.lane.b32.xlu0 %v1575, 14
        %v3520 = vpop.permute.xlu0 %3519
        %3521 = vrot.lane.b32.xlu0 %v1624, 14
        %v3522 = vpop.permute.xlu0 %3521
        %3523 = vrot.lane.b32.xlu0 %v1673, 14
        %v3524 = vpop.permute.xlu0 %3523
        %3525 = vrot.lane.b32.xlu0 %v1722, 14
        %v3526 = vpop.permute.xlu0 %3525
        %3527 = vrot.lane.b32.xlu0 %v1771, 14
        %v3528 = vpop.permute.xlu0 %3527
        %3529 = vrot.lane.b32.xlu0 %v1820, 14
        %v3530 = vpop.permute.xlu0 %3529
        %3531 = vrot.lane.b32.xlu0 %v1869, 14
        %v3532 = vpop.permute.xlu0 %3531
        %3533 = vrot.lane.b32.xlu0 %v1918, 14
        %v3534 = vpop.permute.xlu0 %3533
        %3535 = vrot.lane.b32.xlu0 %v1967, 14
        %v3536 = vpop.permute.xlu0 %3535
        %3537 = vrot.lane.b32.xlu0 %v2016, 14
        %v3538 = vpop.permute.xlu0 %3537
        %3539 = vrot.lane.b32.xlu0 %v2065, 14
        %v3540 = vpop.permute.xlu0 %3539
        %3541 = vrot.lane.b32.xlu0 %v2114, 14
        %v3542 = vpop.permute.xlu0 %3541
        %3543 = vrot.lane.b32.xlu0 %v2163, 14
        %v3544 = vpop.permute.xlu0 %3543
        %3545 = vrot.lane.b32.xlu0 %v2212, 14
        %v3546 = vpop.permute.xlu0 %3545
        %3547 = vrot.lane.b32.xlu0 %v2261, 14
        %v3548 = vpop.permute.xlu0 %3547
        %3549 = vrot.lane.b32.xlu0 %v2310, 14
        %v3550 = vpop.permute.xlu0 %3549
        %3551 = vrot.lane.b32.xlu0 %v2359, 14
        %v3552 = vpop.permute.xlu0 %3551
        %3553 = vrot.lane.b32.xlu0 %v2408, 14
        %v3554 = vpop.permute.xlu0 %3553
        %3555 = vrot.lane.b32.xlu0 %v2457, 14
        %v3556 = vpop.permute.xlu0 %3555
        %3557 = vrot.lane.b32.xlu0 %v2506, 14
        %v3558 = vpop.permute.xlu0 %3557
        %3559 = vrot.lane.b32.xlu0 %v2555, 14
        %v3560 = vpop.permute.xlu0 %3559
        %3561 = vrot.lane.b32.xlu0 %v2604, 14
        %v3562 = vpop.permute.xlu0 %3561
        %3563 = vrot.lane.b32.xlu0 %v2653, 14
        %v3564 = vpop.permute.xlu0 %3563
        %3565 = vrot.lane.b32.xlu0 %v2702, 14
        %v3566 = vpop.permute.xlu0 %3565
        %vm3599 = vcmask 15360
        %v3600 = vsel %vm3599, %v1157, %v2736
        %v3601 = vsel %vm3599, %v1206, %v2738
        %v3602 = vsel %vm3599, %v1255, %v2740
        %v3603 = vsel %vm3599, %v1304, %v2742
        %v3604 = vsel %vm3599, %v1353, %v2744
        %v3605 = vsel %vm3599, %v1402, %v2746
        %v3606 = vsel %vm3599, %v1451, %v2748
        %v3607 = vsel %vm3599, %v1500, %v2750
        %v3608 = vsel %vm3599, %v1549, %v2752
        %v3609 = vsel %vm3599, %v1598, %v2754
        %v3610 = vsel %vm3599, %v1647, %v2756
        %v3611 = vsel %vm3599, %v1696, %v2758
        %v3612 = vsel %vm3599, %v1745, %v2760
        %v3613 = vsel %vm3599, %v1794, %v2762
        %v3614 = vsel %vm3599, %v1843, %v2764
        %v3615 = vsel %vm3599, %v1892, %v2766
        %v3616 = vsel %vm3599, %v1941, %v2768
        %v3617 = vsel %vm3599, %v1990, %v2770
        %v3618 = vsel %vm3599, %v2039, %v2772
        %v3619 = vsel %vm3599, %v2088, %v2774
        %v3620 = vsel %vm3599, %v2137, %v2776
        %v3621 = vsel %vm3599, %v2186, %v2778
        %v3622 = vsel %vm3599, %v2235, %v2780
        %v3623 = vsel %vm3599, %v2284, %v2782
        %v3624 = vsel %vm3599, %v2333, %v2784
        %v3625 = vsel %vm3599, %v2382, %v2786
        %v3626 = vsel %vm3599, %v2431, %v2788
        %v3627 = vsel %vm3599, %v2480, %v2790
        %v3628 = vsel %vm3599, %v2529, %v2792
        %v3629 = vsel %vm3599, %v2578, %v2794
        %v3630 = vsel %vm3599, %v2627, %v2796
        %v3631 = vsel %vm3599, %v2676, %v2798
        %vm3632 = vcmask 31744
        %v3633 = vsel %vm3632, %v3600, %v2864
        %v3634 = vsel %vm3632, %v3601, %v2866
        %v3635 = vsel %vm3632, %v3602, %v2868
        %v3636 = vsel %vm3632, %v3603, %v2870
        %v3637 = vsel %vm3632, %v3604, %v2872
        %v3638 = vsel %vm3632, %v3605, %v2874
        %v3639 = vsel %vm3632, %v3606, %v2876
        %v3640 = vsel %vm3632, %v3607, %v2878
        %v3641 = vsel %vm3632, %v3608, %v2880
        %v3642 = vsel %vm3632, %v3609, %v2882
        %v3643 = vsel %vm3632, %v3610, %v2884
        %v3644 = vsel %vm3632, %v3611, %v2886
        %v3645 = vsel %vm3632, %v3612, %v2888
        %v3646 = vsel %vm3632, %v3613, %v2890
        %v3647 = vsel %vm3632, %v3614, %v2892
        %v3648 = vsel %vm3632, %v3615, %v2894
        %v3649 = vsel %vm3632, %v3616, %v2896
        %v3650 = vsel %vm3632, %v3617, %v2898
        %v3651 = vsel %vm3632, %v3618, %v2900
        %v3652 = vsel %vm3632, %v3619, %v2902
        %v3653 = vsel %vm3632, %v3620, %v2904
        %v3654 = vsel %vm3632, %v3621, %v2906
        %v3655 = vsel %vm3632, %v3622, %v2908
        %v3656 = vsel %vm3632, %v3623, %v2910
        %v3657 = vsel %vm3632, %v3624, %v2912
        %v3658 = vsel %vm3632, %v3625, %v2914
        %v3659 = vsel %vm3632, %v3626, %v2916
        %v3660 = vsel %vm3632, %v3627, %v2918
        %v3661 = vsel %vm3632, %v3628, %v2920
        %v3662 = vsel %vm3632, %v3629, %v2922
        %v3663 = vsel %vm3632, %v3630, %v2924
        %v3664 = vsel %vm3632, %v3631, %v2926
        %vm3665 = vcmask 48128
        %v3666 = vsel %vm3665, %v3633, %v2992
        %v3667 = vsel %vm3665, %v3634, %v2994
        %v3668 = vsel %vm3665, %v3635, %v2996
        %v3669 = vsel %vm3665, %v3636, %v2998
        %v3670 = vsel %vm3665, %v3637, %v3000
        %v3671 = vsel %vm3665, %v3638, %v3002
        %v3672 = vsel %vm3665, %v3639, %v3004
        %v3673 = vsel %vm3665, %v3640, %v3006
        %v3674 = vsel %vm3665, %v3641, %v3008
        %v3675 = vsel %vm3665, %v3642, %v3010
        %v3676 = vsel %vm3665, %v3643, %v3012
        %v3677 = vsel %vm3665, %v3644, %v3014
        %v3678 = vsel %vm3665, %v3645, %v3016
        %v3679 = vsel %vm3665, %v3646, %v3018
        %v3680 = vsel %vm3665, %v3647, %v3020
        %v3681 = vsel %vm3665, %v3648, %v3022
        %v3682 = vsel %vm3665, %v3649, %v3024
        %v3683 = vsel %vm3665, %v3650, %v3026
        %v3684 = vsel %vm3665, %v3651, %v3028
        %v3685 = vsel %vm3665, %v3652, %v3030
        %v3686 = vsel %vm3665, %v3653, %v3032
        %v3687 = vsel %vm3665, %v3654, %v3034
        %v3688 = vsel %vm3665, %v3655, %v3036
        %v3689 = vsel %vm3665, %v3656, %v3038
        %v3690 = vsel %vm3665, %v3657, %v3040
        %v3691 = vsel %vm3665, %v3658, %v3042
        %v3692 = vsel %vm3665, %v3659, %v3044
        %v3693 = vsel %vm3665, %v3660, %v3046
        %v3694 = vsel %vm3665, %v3661, %v3048
        %v3695 = vsel %vm3665, %v3662, %v3050
        %v3696 = vsel %vm3665, %v3663, %v3052
        %v3697 = vsel %vm3665, %v3664, %v3054
        %vm3698 = vcmask 64512
        %v3699 = vsel %vm3698, %v3666, %v3120
        %v3700 = vsel %vm3698, %v3667, %v3122
        %v3701 = vsel %vm3698, %v3668, %v3124
        %v3702 = vsel %vm3698, %v3669, %v3126
        %v3703 = vsel %vm3698, %v3670, %v3128
        %v3704 = vsel %vm3698, %v3671, %v3130
        %v3705 = vsel %vm3698, %v3672, %v3132
        %v3706 = vsel %vm3698, %v3673, %v3134
        %v3707 = vsel %vm3698, %v3674, %v3136
        %v3708 = vsel %vm3698, %v3675, %v3138
        %v3709 = vsel %vm3698, %v3676, %v3140
        %v3710 = vsel %vm3698, %v3677, %v3142
        %v3711 = vsel %vm3698, %v3678, %v3144
        %v3712 = vsel %vm3698, %v3679, %v3146
        %v3713 = vsel %vm3698, %v3680, %v3148
        %v3714 = vsel %vm3698, %v3681, %v3150
        %v3715 = vsel %vm3698, %v3682, %v3152
        %v3716 = vsel %vm3698, %v3683, %v3154
        %v3717 = vsel %vm3698, %v3684, %v3156
        %v3718 = vsel %vm3698, %v3685, %v3158
        %v3719 = vsel %vm3698, %v3686, %v3160
        %v3720 = vsel %vm3698, %v3687, %v3162
        %v3721 = vsel %vm3698, %v3688, %v3164
        %v3722 = vsel %vm3698, %v3689, %v3166
        %v3723 = vsel %vm3698, %v3690, %v3168
        %v3724 = vsel %vm3698, %v3691, %v3170
        %v3725 = vsel %vm3698, %v3692, %v3172
        %v3726 = vsel %vm3698, %v3693, %v3174
        %v3727 = vsel %vm3698, %v3694, %v3176
        %v3728 = vsel %vm3698, %v3695, %v3178
        %v3729 = vsel %vm3698, %v3696, %v3180
        %v3730 = vsel %vm3698, %v3697, %v3182
        %vm3731 = vcmask 80896
        %v3732 = vsel %vm3731, %v3699, %v3248
        %v3733 = vsel %vm3731, %v3700, %v3250
        %v3734 = vsel %vm3731, %v3701, %v3252
        %v3735 = vsel %vm3731, %v3702, %v3254
        %v3736 = vsel %vm3731, %v3703, %v3256
        %v3737 = vsel %vm3731, %v3704, %v3258
        %v3738 = vsel %vm3731, %v3705, %v3260
        %v3739 = vsel %vm3731, %v3706, %v3262
        %v3740 = vsel %vm3731, %v3707, %v3264
        %v3741 = vsel %vm3731, %v3708, %v3266
        %v3742 = vsel %vm3731, %v3709, %v3268
        %v3743 = vsel %vm3731, %v3710, %v3270
        %v3744 = vsel %vm3731, %v3711, %v3272
        %v3745 = vsel %vm3731, %v3712, %v3274
        %v3746 = vsel %vm3731, %v3713, %v3276
        %v3747 = vsel %vm3731, %v3714, %v3278
        %v3748 = vsel %vm3731, %v3715, %v3280
        %v3749 = vsel %vm3731, %v3716, %v3282
        %v3750 = vsel %vm3731, %v3717, %v3284
        %v3751 = vsel %vm3731, %v3718, %v3286
        %v3752 = vsel %vm3731, %v3719, %v3288
        %v3753 = vsel %vm3731, %v3720, %v3290
        %v3754 = vsel %vm3731, %v3721, %v3292
        %v3755 = vsel %vm3731, %v3722, %v3294
        %v3756 = vsel %vm3731, %v3723, %v3296
        %v3757 = vsel %vm3731, %v3724, %v3298
        %v3758 = vsel %vm3731, %v3725, %v3300
        %v3759 = vsel %vm3731, %v3726, %v3302
        %v3760 = vsel %vm3731, %v3727, %v3304
        %v3761 = vsel %vm3731, %v3728, %v3306
        %v3762 = vsel %vm3731, %v3729, %v3308
        %v3763 = vsel %vm3731, %v3730, %v3310
        %vm3764 = vcmask 97280
        %v3765 = vsel %vm3764, %v3732, %v3376
        %v3766 = vsel %vm3764, %v3733, %v3378
        %v3767 = vsel %vm3764, %v3734, %v3380
        %v3768 = vsel %vm3764, %v3735, %v3382
        %v3769 = vsel %vm3764, %v3736, %v3384
        %v3770 = vsel %vm3764, %v3737, %v3386
        %v3771 = vsel %vm3764, %v3738, %v3388
        %v3772 = vsel %vm3764, %v3739, %v3390
        %v3773 = vsel %vm3764, %v3740, %v3392
        %v3774 = vsel %vm3764, %v3741, %v3394
        %v3775 = vsel %vm3764, %v3742, %v3396
        %v3776 = vsel %vm3764, %v3743, %v3398
        %v3777 = vsel %vm3764, %v3744, %v3400
        %v3778 = vsel %vm3764, %v3745, %v3402
        %v3779 = vsel %vm3764, %v3746, %v3404
        %v3780 = vsel %vm3764, %v3747, %v3406
        %v3781 = vsel %vm3764, %v3748, %v3408
        %v3782 = vsel %vm3764, %v3749, %v3410
        %v3783 = vsel %vm3764, %v3750, %v3412
        %v3784 = vsel %vm3764, %v3751, %v3414
        %v3785 = vsel %vm3764, %v3752, %v3416
        %v3786 = vsel %vm3764, %v3753, %v3418
        %v3787 = vsel %vm3764, %v3754, %v3420
        %v3788 = vsel %vm3764, %v3755, %v3422
        %v3789 = vsel %vm3764, %v3756, %v3424
        %v3790 = vsel %vm3764, %v3757, %v3426
        %v3791 = vsel %vm3764, %v3758, %v3428
        %v3792 = vsel %vm3764, %v3759, %v3430
        %v3793 = vsel %vm3764, %v3760, %v3432
        %v3794 = vsel %vm3764, %v3761, %v3434
        %v3795 = vsel %vm3764, %v3762, %v3436
        %v3796 = vsel %vm3764, %v3763, %v3438
        %vm3797 = vcmask 113664
        %v3798 = vsel %vm3797, %v3765, %v3504
        %v3799 = vsel %vm3797, %v3766, %v3506
        %v3800 = vsel %vm3797, %v3767, %v3508
        %v3801 = vsel %vm3797, %v3768, %v3510
        %v3802 = vsel %vm3797, %v3769, %v3512
        %v3803 = vsel %vm3797, %v3770, %v3514
        %v3804 = vsel %vm3797, %v3771, %v3516
        %v3805 = vsel %vm3797, %v3772, %v3518
        %v3806 = vsel %vm3797, %v3773, %v3520
        %v3807 = vsel %vm3797, %v3774, %v3522
        %v3808 = vsel %vm3797, %v3775, %v3524
        %v3809 = vsel %vm3797, %v3776, %v3526
        %v3810 = vsel %vm3797, %v3777, %v3528
        %v3811 = vsel %vm3797, %v3778, %v3530
        %v3812 = vsel %vm3797, %v3779, %v3532
        %v3813 = vsel %vm3797, %v3780, %v3534
        %v3814 = vsel %vm3797, %v3781, %v3536
        %v3815 = vsel %vm3797, %v3782, %v3538
        %v3816 = vsel %vm3797, %v3783, %v3540
        %v3817 = vsel %vm3797, %v3784, %v3542
        %v3818 = vsel %vm3797, %v3785, %v3544
        %v3819 = vsel %vm3797, %v3786, %v3546
        %v3820 = vsel %vm3797, %v3787, %v3548
        %v3821 = vsel %vm3797, %v3788, %v3550
        %v3822 = vsel %vm3797, %v3789, %v3552
        %v3823 = vsel %vm3797, %v3790, %v3554
        %v3824 = vsel %vm3797, %v3791, %v3556
        %v3825 = vsel %vm3797, %v3792, %v3558
        %v3826 = vsel %vm3797, %v3793, %v3560
        %v3827 = vsel %vm3797, %v3794, %v3562
        %v3828 = vsel %vm3797, %v3795, %v3564
        %v3829 = vsel %vm3797, %v3796, %v3566
        %v3830 = vcombine.high %v1103, 0.0
        %v3832 = vunpack.c.l.s4 1983009808
        %v3833 = vunpack.c.0.s8 %v3832
        %v3834 = vlaneseq
        %v3835 = vshrl.u32 %v3834, 7
        %v3836 = vsub.s32 %v3833, %v3835
        %v3837 = vrot.slane %v1103, %v3836
        %v3839 = vunpack.c.l.s4 1983009808
        %v3840 = vunpack.c.0.s8 %v3839
        %v3841 = vlaneseq
        %v3842 = vshrl.u32 %v3841, 7
        %v3843 = vsub.s32 %v3840, %v3842
        %v3844 = vrot.slane %v3830, %v3843
        %v3845 = vcombine.high %v3837, 0.0
        %v3847 = vunpack.c.l.s4 1934713408
        %v3848 = vunpack.c.0.s8 %v3847
        %v3849 = vlaneseq
        %v3850 = vshrl.u32 %v3849, 7
        %v3851 = vsub.s32 %v3848, %v3850
        %v3852 = vrot.slane %v3837, %v3851
        %v3854 = vunpack.c.l.s4 1934713408
        %v3855 = vunpack.c.0.s8 %v3854
        %v3856 = vlaneseq
        %v3857 = vshrl.u32 %v3856, 7
        %v3858 = vsub.s32 %v3855, %v3857
        %v3859 = vrot.slane %v3845, %v3858
        %v3860 = vcombine.high %v3844, 0.0
        %v3862 = vunpack.c.l.s4 1934713408
        %v3863 = vunpack.c.0.s8 %v3862
        %v3864 = vlaneseq
        %v3865 = vshrl.u32 %v3864, 7
        %v3866 = vsub.s32 %v3863, %v3865
        %v3867 = vrot.slane %v3844, %v3866
        %v3869 = vunpack.c.l.s4 1934713408
        %v3870 = vunpack.c.0.s8 %v3869
        %v3871 = vlaneseq
        %v3872 = vshrl.u32 %v3871, 7
        %v3873 = vsub.s32 %v3870, %v3872
        %v3874 = vrot.slane %v3860, %v3873
        %v3875 = vcombine.high %v3852, 0.0
        %v3876 = vcombine.high %v3859, 0.0
        %v3877 = vcombine.high %v3867, 0.0
        %v3878 = vcombine.high %v3874, 0.0
        %v3879 = vcombine.high %v1104, 0.0
        %v3881 = vunpack.c.l.s4 1983009808
        %v3882 = vunpack.c.0.s8 %v3881
        %v3883 = vlaneseq
        %v3884 = vshrl.u32 %v3883, 7
        %v3885 = vsub.s32 %v3882, %v3884
        %v3886 = vrot.slane %v1104, %v3885
        %v3888 = vunpack.c.l.s4 1983009808
        %v3889 = vunpack.c.0.s8 %v3888
        %v3890 = vlaneseq
        %v3891 = vshrl.u32 %v3890, 7
        %v3892 = vsub.s32 %v3889, %v3891
        %v3893 = vrot.slane %v3879, %v3892
        %v3894 = vcombine.high %v3886, 0.0
        %v3896 = vunpack.c.l.s4 1934713408
        %v3897 = vunpack.c.0.s8 %v3896
        %v3898 = vlaneseq
        %v3899 = vshrl.u32 %v3898, 7
        %v3900 = vsub.s32 %v3897, %v3899
        %v3901 = vrot.slane %v3886, %v3900
        %v3903 = vunpack.c.l.s4 1934713408
        %v3904 = vunpack.c.0.s8 %v3903
        %v3905 = vlaneseq
        %v3906 = vshrl.u32 %v3905, 7
        %v3907 = vsub.s32 %v3904, %v3906
        %v3908 = vrot.slane %v3894, %v3907
        %v3909 = vcombine.high %v3893, 0.0
        %v3911 = vunpack.c.l.s4 1934713408
        %v3912 = vunpack.c.0.s8 %v3911
        %v3913 = vlaneseq
        %v3914 = vshrl.u32 %v3913, 7
        %v3915 = vsub.s32 %v3912, %v3914
        %v3916 = vrot.slane %v3893, %v3915
        %v3918 = vunpack.c.l.s4 1934713408
        %v3919 = vunpack.c.0.s8 %v3918
        %v3920 = vlaneseq
        %v3921 = vshrl.u32 %v3920, 7
        %v3922 = vsub.s32 %v3919, %v3921
        %v3923 = vrot.slane %v3909, %v3922
        %v3924 = vcombine.high %v3901, 0.0
        %v3925 = vcombine.high %v3908, 0.0
        %v3926 = vcombine.high %v3916, 0.0
        %v3927 = vcombine.high %v3923, 0.0
        %v3928 = vcombine.high %v1105, 0.0
        %v3930 = vunpack.c.l.s4 1983009808
        %v3931 = vunpack.c.0.s8 %v3930
        %v3932 = vlaneseq
        %v3933 = vshrl.u32 %v3932, 7
        %v3934 = vsub.s32 %v3931, %v3933
        %v3935 = vrot.slane %v1105, %v3934
        %v3937 = vunpack.c.l.s4 1983009808
        %v3938 = vunpack.c.0.s8 %v3937
        %v3939 = vlaneseq
        %v3940 = vshrl.u32 %v3939, 7
        %v3941 = vsub.s32 %v3938, %v3940
        %v3942 = vrot.slane %v3928, %v3941
        %v3943 = vcombine.high %v3935, 0.0
        %v3945 = vunpack.c.l.s4 1934713408
        %v3946 = vunpack.c.0.s8 %v3945
        %v3947 = vlaneseq
        %v3948 = vshrl.u32 %v3947, 7
        %v3949 = vsub.s32 %v3946, %v3948
        %v3950 = vrot.slane %v3935, %v3949
        %v3952 = vunpack.c.l.s4 1934713408
        %v3953 = vunpack.c.0.s8 %v3952
        %v3954 = vlaneseq
        %v3955 = vshrl.u32 %v3954, 7
        %v3956 = vsub.s32 %v3953, %v3955
        %v3957 = vrot.slane %v3943, %v3956
        %v3958 = vcombine.high %v3942, 0.0
        %v3960 = vunpack.c.l.s4 1934713408
        %v3961 = vunpack.c.0.s8 %v3960
        %v3962 = vlaneseq
        %v3963 = vshrl.u32 %v3962, 7
        %v3964 = vsub.s32 %v3961, %v3963
        %v3965 = vrot.slane %v3942, %v3964
        %v3967 = vunpack.c.l.s4 1934713408
        %v3968 = vunpack.c.0.s8 %v3967
        %v3969 = vlaneseq
        %v3970 = vshrl.u32 %v3969, 7
        %v3971 = vsub.s32 %v3968, %v3970
        %v3972 = vrot.slane %v3958, %v3971
        %v3973 = vcombine.high %v3950, 0.0
        %v3974 = vcombine.high %v3957, 0.0
        %v3975 = vcombine.high %v3965, 0.0
        %v3976 = vcombine.high %v3972, 0.0
        %v3977 = vcombine.high %v1106, 0.0
        %v3979 = vunpack.c.l.s4 1983009808
        %v3980 = vunpack.c.0.s8 %v3979
        %v3981 = vlaneseq
        %v3982 = vshrl.u32 %v3981, 7
        %v3983 = vsub.s32 %v3980, %v3982
        %v3984 = vrot.slane %v1106, %v3983
        %v3986 = vunpack.c.l.s4 1983009808
        %v3987 = vunpack.c.0.s8 %v3986
        %v3988 = vlaneseq
        %v3989 = vshrl.u32 %v3988, 7
        %v3990 = vsub.s32 %v3987, %v3989
        %v3991 = vrot.slane %v3977, %v3990
        %v3992 = vcombine.high %v3984, 0.0
        %v3994 = vunpack.c.l.s4 1934713408
        %v3995 = vunpack.c.0.s8 %v3994
        %v3996 = vlaneseq
        %v3997 = vshrl.u32 %v3996, 7
        %v3998 = vsub.s32 %v3995, %v3997
        %v3999 = vrot.slane %v3984, %v3998
        %v4001 = vunpack.c.l.s4 1934713408
        %v4002 = vunpack.c.0.s8 %v4001
        %v4003 = vlaneseq
        %v4004 = vshrl.u32 %v4003, 7
        %v4005 = vsub.s32 %v4002, %v4004
        %v4006 = vrot.slane %v3992, %v4005
        %v4007 = vcombine.high %v3991, 0.0
        %v4009 = vunpack.c.l.s4 1934713408
        %v4010 = vunpack.c.0.s8 %v4009
        %v4011 = vlaneseq
        %v4012 = vshrl.u32 %v4011, 7
        %v4013 = vsub.s32 %v4010, %v4012
        %v4014 = vrot.slane %v3991, %v4013
        %v4016 = vunpack.c.l.s4 1934713408
        %v4017 = vunpack.c.0.s8 %v4016
        %v4018 = vlaneseq
        %v4019 = vshrl.u32 %v4018, 7
        %v4020 = vsub.s32 %v4017, %v4019
        %v4021 = vrot.slane %v4007, %v4020
        %v4022 = vcombine.high %v3999, 0.0
        %v4023 = vcombine.high %v4006, 0.0
        %v4024 = vcombine.high %v4014, 0.0
        %v4025 = vcombine.high %v4021, 0.0
        %v4026 = vcombine.high %v1107, 0.0
        %v4028 = vunpack.c.l.s4 1983009808
        %v4029 = vunpack.c.0.s8 %v4028
        %v4030 = vlaneseq
        %v4031 = vshrl.u32 %v4030, 7
        %v4032 = vsub.s32 %v4029, %v4031
        %v4033 = vrot.slane %v1107, %v4032
        %v4035 = vunpack.c.l.s4 1983009808
        %v4036 = vunpack.c.0.s8 %v4035
        %v4037 = vlaneseq
        %v4038 = vshrl.u32 %v4037, 7
        %v4039 = vsub.s32 %v4036, %v4038
        %v4040 = vrot.slane %v4026, %v4039
        %v4041 = vcombine.high %v4033, 0.0
        %v4043 = vunpack.c.l.s4 1934713408
        %v4044 = vunpack.c.0.s8 %v4043
        %v4045 = vlaneseq
        %v4046 = vshrl.u32 %v4045, 7
        %v4047 = vsub.s32 %v4044, %v4046
        %v4048 = vrot.slane %v4033, %v4047
        %v4050 = vunpack.c.l.s4 1934713408
        %v4051 = vunpack.c.0.s8 %v4050
        %v4052 = vlaneseq
        %v4053 = vshrl.u32 %v4052, 7
        %v4054 = vsub.s32 %v4051, %v4053
        %v4055 = vrot.slane %v4041, %v4054
        %v4056 = vcombine.high %v4040, 0.0
        %v4058 = vunpack.c.l.s4 1934713408
        %v4059 = vunpack.c.0.s8 %v4058
        %v4060 = vlaneseq
        %v4061 = vshrl.u32 %v4060, 7
        %v4062 = vsub.s32 %v4059, %v4061
        %v4063 = vrot.slane %v4040, %v4062
        %v4065 = vunpack.c.l.s4 1934713408
        %v4066 = vunpack.c.0.s8 %v4065
        %v4067 = vlaneseq
        %v4068 = vshrl.u32 %v4067, 7
        %v4069 = vsub.s32 %v4066, %v4068
        %v4070 = vrot.slane %v4056, %v4069
        %v4071 = vcombine.high %v4048, 0.0
        %v4072 = vcombine.high %v4055, 0.0
        %v4073 = vcombine.high %v4063, 0.0
        %v4074 = vcombine.high %v4070, 0.0
        %v4075 = vcombine.high %v1108, 0.0
        %v4077 = vunpack.c.l.s4 1983009808
        %v4078 = vunpack.c.0.s8 %v4077
        %v4079 = vlaneseq
        %v4080 = vshrl.u32 %v4079, 7
        %v4081 = vsub.s32 %v4078, %v4080
        %v4082 = vrot.slane %v1108, %v4081
        %v4084 = vunpack.c.l.s4 1983009808
        %v4085 = vunpack.c.0.s8 %v4084
        %v4086 = vlaneseq
        %v4087 = vshrl.u32 %v4086, 7
        %v4088 = vsub.s32 %v4085, %v4087
        %v4089 = vrot.slane %v4075, %v4088
        %v4090 = vcombine.high %v4082, 0.0
        %v4092 = vunpack.c.l.s4 1934713408
        %v4093 = vunpack.c.0.s8 %v4092
        %v4094 = vlaneseq
        %v4095 = vshrl.u32 %v4094, 7
        %v4096 = vsub.s32 %v4093, %v4095
        %v4097 = vrot.slane %v4082, %v4096
        %v4099 = vunpack.c.l.s4 1934713408
        %v4100 = vunpack.c.0.s8 %v4099
        %v4101 = vlaneseq
        %v4102 = vshrl.u32 %v4101, 7
        %v4103 = vsub.s32 %v4100, %v4102
        %v4104 = vrot.slane %v4090, %v4103
        %v4105 = vcombine.high %v4089, 0.0
        %v4107 = vunpack.c.l.s4 1934713408
        %v4108 = vunpack.c.0.s8 %v4107
        %v4109 = vlaneseq
        %v4110 = vshrl.u32 %v4109, 7
        %v4111 = vsub.s32 %v4108, %v4110
        %v4112 = vrot.slane %v4089, %v4111
        %v4114 = vunpack.c.l.s4 1934713408
        %v4115 = vunpack.c.0.s8 %v4114
        %v4116 = vlaneseq
        %v4117 = vshrl.u32 %v4116, 7
        %v4118 = vsub.s32 %v4115, %v4117
        %v4119 = vrot.slane %v4105, %v4118
        %v4120 = vcombine.high %v4097, 0.0
        %v4121 = vcombine.high %v4104, 0.0
        %v4122 = vcombine.high %v4112, 0.0
        %v4123 = vcombine.high %v4119, 0.0
        %v4124 = vcombine.high %v1109, 0.0
        %v4126 = vunpack.c.l.s4 1983009808
        %v4127 = vunpack.c.0.s8 %v4126
        %v4128 = vlaneseq
        %v4129 = vshrl.u32 %v4128, 7
        %v4130 = vsub.s32 %v4127, %v4129
        %v4131 = vrot.slane %v1109, %v4130
        %v4133 = vunpack.c.l.s4 1983009808
        %v4134 = vunpack.c.0.s8 %v4133
        %v4135 = vlaneseq
        %v4136 = vshrl.u32 %v4135, 7
        %v4137 = vsub.s32 %v4134, %v4136
        %v4138 = vrot.slane %v4124, %v4137
        %v4139 = vcombine.high %v4131, 0.0
        %v4141 = vunpack.c.l.s4 1934713408
        %v4142 = vunpack.c.0.s8 %v4141
        %v4143 = vlaneseq
        %v4144 = vshrl.u32 %v4143, 7
        %v4145 = vsub.s32 %v4142, %v4144
        %v4146 = vrot.slane %v4131, %v4145
        %v4148 = vunpack.c.l.s4 1934713408
        %v4149 = vunpack.c.0.s8 %v4148
        %v4150 = vlaneseq
        %v4151 = vshrl.u32 %v4150, 7
        %v4152 = vsub.s32 %v4149, %v4151
        %v4153 = vrot.slane %v4139, %v4152
        %v4154 = vcombine.high %v4138, 0.0
        %v4156 = vunpack.c.l.s4 1934713408
        %v4157 = vunpack.c.0.s8 %v4156
        %v4158 = vlaneseq
        %v4159 = vshrl.u32 %v4158, 7
        %v4160 = vsub.s32 %v4157, %v4159
        %v4161 = vrot.slane %v4138, %v4160
        %v4163 = vunpack.c.l.s4 1934713408
        %v4164 = vunpack.c.0.s8 %v4163
        %v4165 = vlaneseq
        %v4166 = vshrl.u32 %v4165, 7
        %v4167 = vsub.s32 %v4164, %v4166
        %v4168 = vrot.slane %v4154, %v4167
        %v4169 = vcombine.high %v4146, 0.0
        %v4170 = vcombine.high %v4153, 0.0
        %v4171 = vcombine.high %v4161, 0.0
        %v4172 = vcombine.high %v4168, 0.0
        %v4173 = vcombine.high %v1110, 0.0
        %v4175 = vunpack.c.l.s4 1983009808
        %v4176 = vunpack.c.0.s8 %v4175
        %v4177 = vlaneseq
        %v4178 = vshrl.u32 %v4177, 7
        %v4179 = vsub.s32 %v4176, %v4178
        %v4180 = vrot.slane %v1110, %v4179
        %v4182 = vunpack.c.l.s4 1983009808
        %v4183 = vunpack.c.0.s8 %v4182
        %v4184 = vlaneseq
        %v4185 = vshrl.u32 %v4184, 7
        %v4186 = vsub.s32 %v4183, %v4185
        %v4187 = vrot.slane %v4173, %v4186
        %v4188 = vcombine.high %v4180, 0.0
        %v4190 = vunpack.c.l.s4 1934713408
        %v4191 = vunpack.c.0.s8 %v4190
        %v4192 = vlaneseq
        %v4193 = vshrl.u32 %v4192, 7
        %v4194 = vsub.s32 %v4191, %v4193
        %v4195 = vrot.slane %v4180, %v4194
        %v4197 = vunpack.c.l.s4 1934713408
        %v4198 = vunpack.c.0.s8 %v4197
        %v4199 = vlaneseq
        %v4200 = vshrl.u32 %v4199, 7
        %v4201 = vsub.s32 %v4198, %v4200
        %v4202 = vrot.slane %v4188, %v4201
        %v4203 = vcombine.high %v4187, 0.0
        %v4205 = vunpack.c.l.s4 1934713408
        %v4206 = vunpack.c.0.s8 %v4205
        %v4207 = vlaneseq
        %v4208 = vshrl.u32 %v4207, 7
        %v4209 = vsub.s32 %v4206, %v4208
        %v4210 = vrot.slane %v4187, %v4209
        %v4212 = vunpack.c.l.s4 1934713408
        %v4213 = vunpack.c.0.s8 %v4212
        %v4214 = vlaneseq
        %v4215 = vshrl.u32 %v4214, 7
        %v4216 = vsub.s32 %v4213, %v4215
        %v4217 = vrot.slane %v4203, %v4216
        %v4218 = vcombine.high %v4195, 0.0
        %v4219 = vcombine.high %v4202, 0.0
        %v4220 = vcombine.high %v4210, 0.0
        %v4221 = vcombine.high %v4217, 0.0
        %v4222 = vcombine.high %v1111, 0.0
        %v4224 = vunpack.c.l.s4 1983009808
        %v4225 = vunpack.c.0.s8 %v4224
        %v4226 = vlaneseq
        %v4227 = vshrl.u32 %v4226, 7
        %v4228 = vsub.s32 %v4225, %v4227
        %v4229 = vrot.slane %v1111, %v4228
        %v4231 = vunpack.c.l.s4 1983009808
        %v4232 = vunpack.c.0.s8 %v4231
        %v4233 = vlaneseq
        %v4234 = vshrl.u32 %v4233, 7
        %v4235 = vsub.s32 %v4232, %v4234
        %v4236 = vrot.slane %v4222, %v4235
        %v4237 = vcombine.high %v4229, 0.0
        %v4239 = vunpack.c.l.s4 1934713408
        %v4240 = vunpack.c.0.s8 %v4239
        %v4241 = vlaneseq
        %v4242 = vshrl.u32 %v4241, 7
        %v4243 = vsub.s32 %v4240, %v4242
        %v4244 = vrot.slane %v4229, %v4243
        %v4246 = vunpack.c.l.s4 1934713408
        %v4247 = vunpack.c.0.s8 %v4246
        %v4248 = vlaneseq
        %v4249 = vshrl.u32 %v4248, 7
        %v4250 = vsub.s32 %v4247, %v4249
        %v4251 = vrot.slane %v4237, %v4250
        %v4252 = vcombine.high %v4236, 0.0
        %v4254 = vunpack.c.l.s4 1934713408
        %v4255 = vunpack.c.0.s8 %v4254
        %v4256 = vlaneseq
        %v4257 = vshrl.u32 %v4256, 7
        %v4258 = vsub.s32 %v4255, %v4257
        %v4259 = vrot.slane %v4236, %v4258
        %v4261 = vunpack.c.l.s4 1934713408
        %v4262 = vunpack.c.0.s8 %v4261
        %v4263 = vlaneseq
        %v4264 = vshrl.u32 %v4263, 7
        %v4265 = vsub.s32 %v4262, %v4264
        %v4266 = vrot.slane %v4252, %v4265
        %v4267 = vcombine.high %v4244, 0.0
        %v4268 = vcombine.high %v4251, 0.0
        %v4269 = vcombine.high %v4259, 0.0
        %v4270 = vcombine.high %v4266, 0.0
        %v4271 = vcombine.high %v1112, 0.0
        %v4273 = vunpack.c.l.s4 1983009808
        %v4274 = vunpack.c.0.s8 %v4273
        %v4275 = vlaneseq
        %v4276 = vshrl.u32 %v4275, 7
        %v4277 = vsub.s32 %v4274, %v4276
        %v4278 = vrot.slane %v1112, %v4277
        %v4280 = vunpack.c.l.s4 1983009808
        %v4281 = vunpack.c.0.s8 %v4280
        %v4282 = vlaneseq
        %v4283 = vshrl.u32 %v4282, 7
        %v4284 = vsub.s32 %v4281, %v4283
        %v4285 = vrot.slane %v4271, %v4284
        %v4286 = vcombine.high %v4278, 0.0
        %v4288 = vunpack.c.l.s4 1934713408
        %v4289 = vunpack.c.0.s8 %v4288
        %v4290 = vlaneseq
        %v4291 = vshrl.u32 %v4290, 7
        %v4292 = vsub.s32 %v4289, %v4291
        %v4293 = vrot.slane %v4278, %v4292
        %v4295 = vunpack.c.l.s4 1934713408
        %v4296 = vunpack.c.0.s8 %v4295
        %v4297 = vlaneseq
        %v4298 = vshrl.u32 %v4297, 7
        %v4299 = vsub.s32 %v4296, %v4298
        %v4300 = vrot.slane %v4286, %v4299
        %v4301 = vcombine.high %v4285, 0.0
        %v4303 = vunpack.c.l.s4 1934713408
        %v4304 = vunpack.c.0.s8 %v4303
        %v4305 = vlaneseq
        %v4306 = vshrl.u32 %v4305, 7
        %v4307 = vsub.s32 %v4304, %v4306
        %v4308 = vrot.slane %v4285, %v4307
        %v4310 = vunpack.c.l.s4 1934713408
        %v4311 = vunpack.c.0.s8 %v4310
        %v4312 = vlaneseq
        %v4313 = vshrl.u32 %v4312, 7
        %v4314 = vsub.s32 %v4311, %v4313
        %v4315 = vrot.slane %v4301, %v4314
        %v4316 = vcombine.high %v4293, 0.0
        %v4317 = vcombine.high %v4300, 0.0
        %v4318 = vcombine.high %v4308, 0.0
        %v4319 = vcombine.high %v4315, 0.0
        %v4320 = vcombine.high %v1113, 0.0
        %v4322 = vunpack.c.l.s4 1983009808
        %v4323 = vunpack.c.0.s8 %v4322
        %v4324 = vlaneseq
        %v4325 = vshrl.u32 %v4324, 7
        %v4326 = vsub.s32 %v4323, %v4325
        %v4327 = vrot.slane %v1113, %v4326
        %v4329 = vunpack.c.l.s4 1983009808
        %v4330 = vunpack.c.0.s8 %v4329
        %v4331 = vlaneseq
        %v4332 = vshrl.u32 %v4331, 7
        %v4333 = vsub.s32 %v4330, %v4332
        %v4334 = vrot.slane %v4320, %v4333
        %v4335 = vcombine.high %v4327, 0.0
        %v4337 = vunpack.c.l.s4 1934713408
        %v4338 = vunpack.c.0.s8 %v4337
        %v4339 = vlaneseq
        %v4340 = vshrl.u32 %v4339, 7
        %v4341 = vsub.s32 %v4338, %v4340
        %v4342 = vrot.slane %v4327, %v4341
        %v4344 = vunpack.c.l.s4 1934713408
        %v4345 = vunpack.c.0.s8 %v4344
        %v4346 = vlaneseq
        %v4347 = vshrl.u32 %v4346, 7
        %v4348 = vsub.s32 %v4345, %v4347
        %v4349 = vrot.slane %v4335, %v4348
        %v4350 = vcombine.high %v4334, 0.0
        %v4352 = vunpack.c.l.s4 1934713408
        %v4353 = vunpack.c.0.s8 %v4352
        %v4354 = vlaneseq
        %v4355 = vshrl.u32 %v4354, 7
        %v4356 = vsub.s32 %v4353, %v4355
        %v4357 = vrot.slane %v4334, %v4356
        %v4359 = vunpack.c.l.s4 1934713408
        %v4360 = vunpack.c.0.s8 %v4359
        %v4361 = vlaneseq
        %v4362 = vshrl.u32 %v4361, 7
        %v4363 = vsub.s32 %v4360, %v4362
        %v4364 = vrot.slane %v4350, %v4363
        %v4365 = vcombine.high %v4342, 0.0
        %v4366 = vcombine.high %v4349, 0.0
        %v4367 = vcombine.high %v4357, 0.0
        %v4368 = vcombine.high %v4364, 0.0
        %v4369 = vcombine.high %v1114, 0.0
        %v4371 = vunpack.c.l.s4 1983009808
        %v4372 = vunpack.c.0.s8 %v4371
        %v4373 = vlaneseq
        %v4374 = vshrl.u32 %v4373, 7
        %v4375 = vsub.s32 %v4372, %v4374
        %v4376 = vrot.slane %v1114, %v4375
        %v4378 = vunpack.c.l.s4 1983009808
        %v4379 = vunpack.c.0.s8 %v4378
        %v4380 = vlaneseq
        %v4381 = vshrl.u32 %v4380, 7
        %v4382 = vsub.s32 %v4379, %v4381
        %v4383 = vrot.slane %v4369, %v4382
        %v4384 = vcombine.high %v4376, 0.0
        %v4386 = vunpack.c.l.s4 1934713408
        %v4387 = vunpack.c.0.s8 %v4386
        %v4388 = vlaneseq
        %v4389 = vshrl.u32 %v4388, 7
        %v4390 = vsub.s32 %v4387, %v4389
        %v4391 = vrot.slane %v4376, %v4390
        %v4393 = vunpack.c.l.s4 1934713408
        %v4394 = vunpack.c.0.s8 %v4393
        %v4395 = vlaneseq
        %v4396 = vshrl.u32 %v4395, 7
        %v4397 = vsub.s32 %v4394, %v4396
        %v4398 = vrot.slane %v4384, %v4397
        %v4399 = vcombine.high %v4383, 0.0
        %v4401 = vunpack.c.l.s4 1934713408
        %v4402 = vunpack.c.0.s8 %v4401
        %v4403 = vlaneseq
        %v4404 = vshrl.u32 %v4403, 7
        %v4405 = vsub.s32 %v4402, %v4404
        %v4406 = vrot.slane %v4383, %v4405
        %v4408 = vunpack.c.l.s4 1934713408
        %v4409 = vunpack.c.0.s8 %v4408
        %v4410 = vlaneseq
        %v4411 = vshrl.u32 %v4410, 7
        %v4412 = vsub.s32 %v4409, %v4411
        %v4413 = vrot.slane %v4399, %v4412
        %v4414 = vcombine.high %v4391, 0.0
        %v4415 = vcombine.high %v4398, 0.0
        %v4416 = vcombine.high %v4406, 0.0
        %v4417 = vcombine.high %v4413, 0.0
        %v4418 = vcombine.high %v1115, 0.0
        %v4420 = vunpack.c.l.s4 1983009808
        %v4421 = vunpack.c.0.s8 %v4420
        %v4422 = vlaneseq
        %v4423 = vshrl.u32 %v4422, 7
        %v4424 = vsub.s32 %v4421, %v4423
        %v4425 = vrot.slane %v1115, %v4424
        %v4427 = vunpack.c.l.s4 1983009808
        %v4428 = vunpack.c.0.s8 %v4427
        %v4429 = vlaneseq
        %v4430 = vshrl.u32 %v4429, 7
        %v4431 = vsub.s32 %v4428, %v4430
        %v4432 = vrot.slane %v4418, %v4431
        %v4433 = vcombine.high %v4425, 0.0
        %v4435 = vunpack.c.l.s4 1934713408
        %v4436 = vunpack.c.0.s8 %v4435
        %v4437 = vlaneseq
        %v4438 = vshrl.u32 %v4437, 7
        %v4439 = vsub.s32 %v4436, %v4438
        %v4440 = vrot.slane %v4425, %v4439
        %v4442 = vunpack.c.l.s4 1934713408
        %v4443 = vunpack.c.0.s8 %v4442
        %v4444 = vlaneseq
        %v4445 = vshrl.u32 %v4444, 7
        %v4446 = vsub.s32 %v4443, %v4445
        %v4447 = vrot.slane %v4433, %v4446
        %v4448 = vcombine.high %v4432, 0.0
        %v4450 = vunpack.c.l.s4 1934713408
        %v4451 = vunpack.c.0.s8 %v4450
        %v4452 = vlaneseq
        %v4453 = vshrl.u32 %v4452, 7
        %v4454 = vsub.s32 %v4451, %v4453
        %v4455 = vrot.slane %v4432, %v4454
        %v4457 = vunpack.c.l.s4 1934713408
        %v4458 = vunpack.c.0.s8 %v4457
        %v4459 = vlaneseq
        %v4460 = vshrl.u32 %v4459, 7
        %v4461 = vsub.s32 %v4458, %v4460
        %v4462 = vrot.slane %v4448, %v4461
        %v4463 = vcombine.high %v4440, 0.0
        %v4464 = vcombine.high %v4447, 0.0
        %v4465 = vcombine.high %v4455, 0.0
        %v4466 = vcombine.high %v4462, 0.0
        %v4467 = vcombine.high %v1116, 0.0
        %v4469 = vunpack.c.l.s4 1983009808
        %v4470 = vunpack.c.0.s8 %v4469
        %v4471 = vlaneseq
        %v4472 = vshrl.u32 %v4471, 7
        %v4473 = vsub.s32 %v4470, %v4472
        %v4474 = vrot.slane %v1116, %v4473
        %v4476 = vunpack.c.l.s4 1983009808
        %v4477 = vunpack.c.0.s8 %v4476
        %v4478 = vlaneseq
        %v4479 = vshrl.u32 %v4478, 7
        %v4480 = vsub.s32 %v4477, %v4479
        %v4481 = vrot.slane %v4467, %v4480
        %v4482 = vcombine.high %v4474, 0.0
        %v4484 = vunpack.c.l.s4 1934713408
        %v4485 = vunpack.c.0.s8 %v4484
        %v4486 = vlaneseq
        %v4487 = vshrl.u32 %v4486, 7
        %v4488 = vsub.s32 %v4485, %v4487
        %v4489 = vrot.slane %v4474, %v4488
        %v4491 = vunpack.c.l.s4 1934713408
        %v4492 = vunpack.c.0.s8 %v4491
        %v4493 = vlaneseq
        %v4494 = vshrl.u32 %v4493, 7
        %v4495 = vsub.s32 %v4492, %v4494
        %v4496 = vrot.slane %v4482, %v4495
        %v4497 = vcombine.high %v4481, 0.0
        %v4499 = vunpack.c.l.s4 1934713408
        %v4500 = vunpack.c.0.s8 %v4499
        %v4501 = vlaneseq
        %v4502 = vshrl.u32 %v4501, 7
        %v4503 = vsub.s32 %v4500, %v4502
        %v4504 = vrot.slane %v4481, %v4503
        %v4506 = vunpack.c.l.s4 1934713408
        %v4507 = vunpack.c.0.s8 %v4506
        %v4508 = vlaneseq
        %v4509 = vshrl.u32 %v4508, 7
        %v4510 = vsub.s32 %v4507, %v4509
        %v4511 = vrot.slane %v4497, %v4510
        %v4512 = vcombine.high %v4489, 0.0
        %v4513 = vcombine.high %v4496, 0.0
        %v4514 = vcombine.high %v4504, 0.0
        %v4515 = vcombine.high %v4511, 0.0
        %v4516 = vcombine.high %v1117, 0.0
        %v4518 = vunpack.c.l.s4 1983009808
        %v4519 = vunpack.c.0.s8 %v4518
        %v4520 = vlaneseq
        %v4521 = vshrl.u32 %v4520, 7
        %v4522 = vsub.s32 %v4519, %v4521
        %v4523 = vrot.slane %v1117, %v4522
        %v4525 = vunpack.c.l.s4 1983009808
        %v4526 = vunpack.c.0.s8 %v4525
        %v4527 = vlaneseq
        %v4528 = vshrl.u32 %v4527, 7
        %v4529 = vsub.s32 %v4526, %v4528
        %v4530 = vrot.slane %v4516, %v4529
        %v4531 = vcombine.high %v4523, 0.0
        %v4533 = vunpack.c.l.s4 1934713408
        %v4534 = vunpack.c.0.s8 %v4533
        %v4535 = vlaneseq
        %v4536 = vshrl.u32 %v4535, 7
        %v4537 = vsub.s32 %v4534, %v4536
        %v4538 = vrot.slane %v4523, %v4537
        %v4540 = vunpack.c.l.s4 1934713408
        %v4541 = vunpack.c.0.s8 %v4540
        %v4542 = vlaneseq
        %v4543 = vshrl.u32 %v4542, 7
        %v4544 = vsub.s32 %v4541, %v4543
        %v4545 = vrot.slane %v4531, %v4544
        %v4546 = vcombine.high %v4530, 0.0
        %v4548 = vunpack.c.l.s4 1934713408
        %v4549 = vunpack.c.0.s8 %v4548
        %v4550 = vlaneseq
        %v4551 = vshrl.u32 %v4550, 7
        %v4552 = vsub.s32 %v4549, %v4551
        %v4553 = vrot.slane %v4530, %v4552
        %v4555 = vunpack.c.l.s4 1934713408
        %v4556 = vunpack.c.0.s8 %v4555
        %v4557 = vlaneseq
        %v4558 = vshrl.u32 %v4557, 7
        %v4559 = vsub.s32 %v4556, %v4558
        %v4560 = vrot.slane %v4546, %v4559
        %v4561 = vcombine.high %v4538, 0.0
        %v4562 = vcombine.high %v4545, 0.0
        %v4563 = vcombine.high %v4553, 0.0
        %v4564 = vcombine.high %v4560, 0.0
        %v4565 = vcombine.high %v1118, 0.0
        %v4567 = vunpack.c.l.s4 1983009808
        %v4568 = vunpack.c.0.s8 %v4567
        %v4569 = vlaneseq
        %v4570 = vshrl.u32 %v4569, 7
        %v4571 = vsub.s32 %v4568, %v4570
        %v4572 = vrot.slane %v1118, %v4571
        %v4574 = vunpack.c.l.s4 1983009808
        %v4575 = vunpack.c.0.s8 %v4574
        %v4576 = vlaneseq
        %v4577 = vshrl.u32 %v4576, 7
        %v4578 = vsub.s32 %v4575, %v4577
        %v4579 = vrot.slane %v4565, %v4578
        %v4580 = vcombine.high %v4572, 0.0
        %v4582 = vunpack.c.l.s4 1934713408
        %v4583 = vunpack.c.0.s8 %v4582
        %v4584 = vlaneseq
        %v4585 = vshrl.u32 %v4584, 7
        %v4586 = vsub.s32 %v4583, %v4585
        %v4587 = vrot.slane %v4572, %v4586
        %v4589 = vunpack.c.l.s4 1934713408
        %v4590 = vunpack.c.0.s8 %v4589
        %v4591 = vlaneseq
        %v4592 = vshrl.u32 %v4591, 7
        %v4593 = vsub.s32 %v4590, %v4592
        %v4594 = vrot.slane %v4580, %v4593
        %v4595 = vcombine.high %v4579, 0.0
        %v4597 = vunpack.c.l.s4 1934713408
        %v4598 = vunpack.c.0.s8 %v4597
        %v4599 = vlaneseq
        %v4600 = vshrl.u32 %v4599, 7
        %v4601 = vsub.s32 %v4598, %v4600
        %v4602 = vrot.slane %v4579, %v4601
        %v4604 = vunpack.c.l.s4 1934713408
        %v4605 = vunpack.c.0.s8 %v4604
        %v4606 = vlaneseq
        %v4607 = vshrl.u32 %v4606, 7
        %v4608 = vsub.s32 %v4605, %v4607
        %v4609 = vrot.slane %v4595, %v4608
        %v4610 = vcombine.high %v4587, 0.0
        %v4611 = vcombine.high %v4594, 0.0
        %v4612 = vcombine.high %v4602, 0.0
        %v4613 = vcombine.high %v4609, 0.0
        %v4614 = vcombine.high %v1119, 0.0
        %v4616 = vunpack.c.l.s4 1983009808
        %v4617 = vunpack.c.0.s8 %v4616
        %v4618 = vlaneseq
        %v4619 = vshrl.u32 %v4618, 7
        %v4620 = vsub.s32 %v4617, %v4619
        %v4621 = vrot.slane %v1119, %v4620
        %v4623 = vunpack.c.l.s4 1983009808
        %v4624 = vunpack.c.0.s8 %v4623
        %v4625 = vlaneseq
        %v4626 = vshrl.u32 %v4625, 7
        %v4627 = vsub.s32 %v4624, %v4626
        %v4628 = vrot.slane %v4614, %v4627
        %v4629 = vcombine.high %v4621, 0.0
        %v4631 = vunpack.c.l.s4 1934713408
        %v4632 = vunpack.c.0.s8 %v4631
        %v4633 = vlaneseq
        %v4634 = vshrl.u32 %v4633, 7
        %v4635 = vsub.s32 %v4632, %v4634
        %v4636 = vrot.slane %v4621, %v4635
        %v4638 = vunpack.c.l.s4 1934713408
        %v4639 = vunpack.c.0.s8 %v4638
        %v4640 = vlaneseq
        %v4641 = vshrl.u32 %v4640, 7
        %v4642 = vsub.s32 %v4639, %v4641
        %v4643 = vrot.slane %v4629, %v4642
        %v4644 = vcombine.high %v4628, 0.0
        %v4646 = vunpack.c.l.s4 1934713408
        %v4647 = vunpack.c.0.s8 %v4646
        %v4648 = vlaneseq
        %v4649 = vshrl.u32 %v4648, 7
        %v4650 = vsub.s32 %v4647, %v4649
        %v4651 = vrot.slane %v4628, %v4650
        %v4653 = vunpack.c.l.s4 1934713408
        %v4654 = vunpack.c.0.s8 %v4653
        %v4655 = vlaneseq
        %v4656 = vshrl.u32 %v4655, 7
        %v4657 = vsub.s32 %v4654, %v4656
        %v4658 = vrot.slane %v4644, %v4657
        %v4659 = vcombine.high %v4636, 0.0
        %v4660 = vcombine.high %v4643, 0.0
        %v4661 = vcombine.high %v4651, 0.0
        %v4662 = vcombine.high %v4658, 0.0
        %v4663 = vcombine.high %v1120, 0.0
        %v4665 = vunpack.c.l.s4 1983009808
        %v4666 = vunpack.c.0.s8 %v4665
        %v4667 = vlaneseq
        %v4668 = vshrl.u32 %v4667, 7
        %v4669 = vsub.s32 %v4666, %v4668
        %v4670 = vrot.slane %v1120, %v4669
        %v4672 = vunpack.c.l.s4 1983009808
        %v4673 = vunpack.c.0.s8 %v4672
        %v4674 = vlaneseq
        %v4675 = vshrl.u32 %v4674, 7
        %v4676 = vsub.s32 %v4673, %v4675
        %v4677 = vrot.slane %v4663, %v4676
        %v4678 = vcombine.high %v4670, 0.0
        %v4680 = vunpack.c.l.s4 1934713408
        %v4681 = vunpack.c.0.s8 %v4680
        %v4682 = vlaneseq
        %v4683 = vshrl.u32 %v4682, 7
        %v4684 = vsub.s32 %v4681, %v4683
        %v4685 = vrot.slane %v4670, %v4684
        %v4687 = vunpack.c.l.s4 1934713408
        %v4688 = vunpack.c.0.s8 %v4687
        %v4689 = vlaneseq
        %v4690 = vshrl.u32 %v4689, 7
        %v4691 = vsub.s32 %v4688, %v4690
        %v4692 = vrot.slane %v4678, %v4691
        %v4693 = vcombine.high %v4677, 0.0
        %v4695 = vunpack.c.l.s4 1934713408
        %v4696 = vunpack.c.0.s8 %v4695
        %v4697 = vlaneseq
        %v4698 = vshrl.u32 %v4697, 7
        %v4699 = vsub.s32 %v4696, %v4698
        %v4700 = vrot.slane %v4677, %v4699
        %v4702 = vunpack.c.l.s4 1934713408
        %v4703 = vunpack.c.0.s8 %v4702
        %v4704 = vlaneseq
        %v4705 = vshrl.u32 %v4704, 7
        %v4706 = vsub.s32 %v4703, %v4705
        %v4707 = vrot.slane %v4693, %v4706
        %v4708 = vcombine.high %v4685, 0.0
        %v4709 = vcombine.high %v4692, 0.0
        %v4710 = vcombine.high %v4700, 0.0
        %v4711 = vcombine.high %v4707, 0.0
        %v4712 = vcombine.high %v1121, 0.0
        %v4714 = vunpack.c.l.s4 1983009808
        %v4715 = vunpack.c.0.s8 %v4714
        %v4716 = vlaneseq
        %v4717 = vshrl.u32 %v4716, 7
        %v4718 = vsub.s32 %v4715, %v4717
        %v4719 = vrot.slane %v1121, %v4718
        %v4721 = vunpack.c.l.s4 1983009808
        %v4722 = vunpack.c.0.s8 %v4721
        %v4723 = vlaneseq
        %v4724 = vshrl.u32 %v4723, 7
        %v4725 = vsub.s32 %v4722, %v4724
        %v4726 = vrot.slane %v4712, %v4725
        %v4727 = vcombine.high %v4719, 0.0
        %v4729 = vunpack.c.l.s4 1934713408
        %v4730 = vunpack.c.0.s8 %v4729
        %v4731 = vlaneseq
        %v4732 = vshrl.u32 %v4731, 7
        %v4733 = vsub.s32 %v4730, %v4732
        %v4734 = vrot.slane %v4719, %v4733
        %v4736 = vunpack.c.l.s4 1934713408
        %v4737 = vunpack.c.0.s8 %v4736
        %v4738 = vlaneseq
        %v4739 = vshrl.u32 %v4738, 7
        %v4740 = vsub.s32 %v4737, %v4739
        %v4741 = vrot.slane %v4727, %v4740
        %v4742 = vcombine.high %v4726, 0.0
        %v4744 = vunpack.c.l.s4 1934713408
        %v4745 = vunpack.c.0.s8 %v4744
        %v4746 = vlaneseq
        %v4747 = vshrl.u32 %v4746, 7
        %v4748 = vsub.s32 %v4745, %v4747
        %v4749 = vrot.slane %v4726, %v4748
        %v4751 = vunpack.c.l.s4 1934713408
        %v4752 = vunpack.c.0.s8 %v4751
        %v4753 = vlaneseq
        %v4754 = vshrl.u32 %v4753, 7
        %v4755 = vsub.s32 %v4752, %v4754
        %v4756 = vrot.slane %v4742, %v4755
        %v4757 = vcombine.high %v4734, 0.0
        %v4758 = vcombine.high %v4741, 0.0
        %v4759 = vcombine.high %v4749, 0.0
        %v4760 = vcombine.high %v4756, 0.0
        %v4761 = vcombine.high %v1122, 0.0
        %v4763 = vunpack.c.l.s4 1983009808
        %v4764 = vunpack.c.0.s8 %v4763
        %v4765 = vlaneseq
        %v4766 = vshrl.u32 %v4765, 7
        %v4767 = vsub.s32 %v4764, %v4766
        %v4768 = vrot.slane %v1122, %v4767
        %v4770 = vunpack.c.l.s4 1983009808
        %v4771 = vunpack.c.0.s8 %v4770
        %v4772 = vlaneseq
        %v4773 = vshrl.u32 %v4772, 7
        %v4774 = vsub.s32 %v4771, %v4773
        %v4775 = vrot.slane %v4761, %v4774
        %v4776 = vcombine.high %v4768, 0.0
        %v4778 = vunpack.c.l.s4 1934713408
        %v4779 = vunpack.c.0.s8 %v4778
        %v4780 = vlaneseq
        %v4781 = vshrl.u32 %v4780, 7
        %v4782 = vsub.s32 %v4779, %v4781
        %v4783 = vrot.slane %v4768, %v4782
        %v4785 = vunpack.c.l.s4 1934713408
        %v4786 = vunpack.c.0.s8 %v4785
        %v4787 = vlaneseq
        %v4788 = vshrl.u32 %v4787, 7
        %v4789 = vsub.s32 %v4786, %v4788
        %v4790 = vrot.slane %v4776, %v4789
        %v4791 = vcombine.high %v4775, 0.0
        %v4793 = vunpack.c.l.s4 1934713408
        %v4794 = vunpack.c.0.s8 %v4793
        %v4795 = vlaneseq
        %v4796 = vshrl.u32 %v4795, 7
        %v4797 = vsub.s32 %v4794, %v4796
        %v4798 = vrot.slane %v4775, %v4797
        %v4800 = vunpack.c.l.s4 1934713408
        %v4801 = vunpack.c.0.s8 %v4800
        %v4802 = vlaneseq
        %v4803 = vshrl.u32 %v4802, 7
        %v4804 = vsub.s32 %v4801, %v4803
        %v4805 = vrot.slane %v4791, %v4804
        %v4806 = vcombine.high %v4783, 0.0
        %v4807 = vcombine.high %v4790, 0.0
        %v4808 = vcombine.high %v4798, 0.0
        %v4809 = vcombine.high %v4805, 0.0
        %v4810 = vcombine.high %v1123, 0.0
        %v4812 = vunpack.c.l.s4 1983009808
        %v4813 = vunpack.c.0.s8 %v4812
        %v4814 = vlaneseq
        %v4815 = vshrl.u32 %v4814, 7
        %v4816 = vsub.s32 %v4813, %v4815
        %v4817 = vrot.slane %v1123, %v4816
        %v4819 = vunpack.c.l.s4 1983009808
        %v4820 = vunpack.c.0.s8 %v4819
        %v4821 = vlaneseq
        %v4822 = vshrl.u32 %v4821, 7
        %v4823 = vsub.s32 %v4820, %v4822
        %v4824 = vrot.slane %v4810, %v4823
        %v4825 = vcombine.high %v4817, 0.0
        %v4827 = vunpack.c.l.s4 1934713408
        %v4828 = vunpack.c.0.s8 %v4827
        %v4829 = vlaneseq
        %v4830 = vshrl.u32 %v4829, 7
        %v4831 = vsub.s32 %v4828, %v4830
        %v4832 = vrot.slane %v4817, %v4831
        %v4834 = vunpack.c.l.s4 1934713408
        %v4835 = vunpack.c.0.s8 %v4834
        %v4836 = vlaneseq
        %v4837 = vshrl.u32 %v4836, 7
        %v4838 = vsub.s32 %v4835, %v4837
        %v4839 = vrot.slane %v4825, %v4838
        %v4840 = vcombine.high %v4824, 0.0
        %v4842 = vunpack.c.l.s4 1934713408
        %v4843 = vunpack.c.0.s8 %v4842
        %v4844 = vlaneseq
        %v4845 = vshrl.u32 %v4844, 7
        %v4846 = vsub.s32 %v4843, %v4845
        %v4847 = vrot.slane %v4824, %v4846
        %v4849 = vunpack.c.l.s4 1934713408
        %v4850 = vunpack.c.0.s8 %v4849
        %v4851 = vlaneseq
        %v4852 = vshrl.u32 %v4851, 7
        %v4853 = vsub.s32 %v4850, %v4852
        %v4854 = vrot.slane %v4840, %v4853
        %v4855 = vcombine.high %v4832, 0.0
        %v4856 = vcombine.high %v4839, 0.0
        %v4857 = vcombine.high %v4847, 0.0
        %v4858 = vcombine.high %v4854, 0.0
        %v4859 = vcombine.high %v1124, 0.0
        %v4861 = vunpack.c.l.s4 1983009808
        %v4862 = vunpack.c.0.s8 %v4861
        %v4863 = vlaneseq
        %v4864 = vshrl.u32 %v4863, 7
        %v4865 = vsub.s32 %v4862, %v4864
        %v4866 = vrot.slane %v1124, %v4865
        %v4868 = vunpack.c.l.s4 1983009808
        %v4869 = vunpack.c.0.s8 %v4868
        %v4870 = vlaneseq
        %v4871 = vshrl.u32 %v4870, 7
        %v4872 = vsub.s32 %v4869, %v4871
        %v4873 = vrot.slane %v4859, %v4872
        %v4874 = vcombine.high %v4866, 0.0
        %v4876 = vunpack.c.l.s4 1934713408
        %v4877 = vunpack.c.0.s8 %v4876
        %v4878 = vlaneseq
        %v4879 = vshrl.u32 %v4878, 7
        %v4880 = vsub.s32 %v4877, %v4879
        %v4881 = vrot.slane %v4866, %v4880
        %v4883 = vunpack.c.l.s4 1934713408
        %v4884 = vunpack.c.0.s8 %v4883
        %v4885 = vlaneseq
        %v4886 = vshrl.u32 %v4885, 7
        %v4887 = vsub.s32 %v4884, %v4886
        %v4888 = vrot.slane %v4874, %v4887
        %v4889 = vcombine.high %v4873, 0.0
        %v4891 = vunpack.c.l.s4 1934713408
        %v4892 = vunpack.c.0.s8 %v4891
        %v4893 = vlaneseq
        %v4894 = vshrl.u32 %v4893, 7
        %v4895 = vsub.s32 %v4892, %v4894
        %v4896 = vrot.slane %v4873, %v4895
        %v4898 = vunpack.c.l.s4 1934713408
        %v4899 = vunpack.c.0.s8 %v4898
        %v4900 = vlaneseq
        %v4901 = vshrl.u32 %v4900, 7
        %v4902 = vsub.s32 %v4899, %v4901
        %v4903 = vrot.slane %v4889, %v4902
        %v4904 = vcombine.high %v4881, 0.0
        %v4905 = vcombine.high %v4888, 0.0
        %v4906 = vcombine.high %v4896, 0.0
        %v4907 = vcombine.high %v4903, 0.0
        %v4908 = vcombine.high %v1125, 0.0
        %v4910 = vunpack.c.l.s4 1983009808
        %v4911 = vunpack.c.0.s8 %v4910
        %v4912 = vlaneseq
        %v4913 = vshrl.u32 %v4912, 7
        %v4914 = vsub.s32 %v4911, %v4913
        %v4915 = vrot.slane %v1125, %v4914
        %v4917 = vunpack.c.l.s4 1983009808
        %v4918 = vunpack.c.0.s8 %v4917
        %v4919 = vlaneseq
        %v4920 = vshrl.u32 %v4919, 7
        %v4921 = vsub.s32 %v4918, %v4920
        %v4922 = vrot.slane %v4908, %v4921
        %v4923 = vcombine.high %v4915, 0.0
        %v4925 = vunpack.c.l.s4 1934713408
        %v4926 = vunpack.c.0.s8 %v4925
        %v4927 = vlaneseq
        %v4928 = vshrl.u32 %v4927, 7
        %v4929 = vsub.s32 %v4926, %v4928
        %v4930 = vrot.slane %v4915, %v4929
        %v4932 = vunpack.c.l.s4 1934713408
        %v4933 = vunpack.c.0.s8 %v4932
        %v4934 = vlaneseq
        %v4935 = vshrl.u32 %v4934, 7
        %v4936 = vsub.s32 %v4933, %v4935
        %v4937 = vrot.slane %v4923, %v4936
        %v4938 = vcombine.high %v4922, 0.0
        %v4940 = vunpack.c.l.s4 1934713408
        %v4941 = vunpack.c.0.s8 %v4940
        %v4942 = vlaneseq
        %v4943 = vshrl.u32 %v4942, 7
        %v4944 = vsub.s32 %v4941, %v4943
        %v4945 = vrot.slane %v4922, %v4944
        %v4947 = vunpack.c.l.s4 1934713408
        %v4948 = vunpack.c.0.s8 %v4947
        %v4949 = vlaneseq
        %v4950 = vshrl.u32 %v4949, 7
        %v4951 = vsub.s32 %v4948, %v4950
        %v4952 = vrot.slane %v4938, %v4951
        %v4953 = vcombine.high %v4930, 0.0
        %v4954 = vcombine.high %v4937, 0.0
        %v4955 = vcombine.high %v4945, 0.0
        %v4956 = vcombine.high %v4952, 0.0
        %v4957 = vcombine.high %v1126, 0.0
        %v4959 = vunpack.c.l.s4 1983009808
        %v4960 = vunpack.c.0.s8 %v4959
        %v4961 = vlaneseq
        %v4962 = vshrl.u32 %v4961, 7
        %v4963 = vsub.s32 %v4960, %v4962
        %v4964 = vrot.slane %v1126, %v4963
        %v4966 = vunpack.c.l.s4 1983009808
        %v4967 = vunpack.c.0.s8 %v4966
        %v4968 = vlaneseq
        %v4969 = vshrl.u32 %v4968, 7
        %v4970 = vsub.s32 %v4967, %v4969
        %v4971 = vrot.slane %v4957, %v4970
        %v4972 = vcombine.high %v4964, 0.0
        %v4974 = vunpack.c.l.s4 1934713408
        %v4975 = vunpack.c.0.s8 %v4974
        %v4976 = vlaneseq
        %v4977 = vshrl.u32 %v4976, 7
        %v4978 = vsub.s32 %v4975, %v4977
        %v4979 = vrot.slane %v4964, %v4978
        %v4981 = vunpack.c.l.s4 1934713408
        %v4982 = vunpack.c.0.s8 %v4981
        %v4983 = vlaneseq
        %v4984 = vshrl.u32 %v4983, 7
        %v4985 = vsub.s32 %v4982, %v4984
        %v4986 = vrot.slane %v4972, %v4985
        %v4987 = vcombine.high %v4971, 0.0
        %v4989 = vunpack.c.l.s4 1934713408
        %v4990 = vunpack.c.0.s8 %v4989
        %v4991 = vlaneseq
        %v4992 = vshrl.u32 %v4991, 7
        %v4993 = vsub.s32 %v4990, %v4992
        %v4994 = vrot.slane %v4971, %v4993
        %v4996 = vunpack.c.l.s4 1934713408
        %v4997 = vunpack.c.0.s8 %v4996
        %v4998 = vlaneseq
        %v4999 = vshrl.u32 %v4998, 7
        %v5000 = vsub.s32 %v4997, %v4999
        %v5001 = vrot.slane %v4987, %v5000
        %v5002 = vcombine.high %v4979, 0.0
        %v5003 = vcombine.high %v4986, 0.0
        %v5004 = vcombine.high %v4994, 0.0
        %v5005 = vcombine.high %v5001, 0.0
        %v5006 = vcombine.high %v1127, 0.0
        %v5008 = vunpack.c.l.s4 1983009808
        %v5009 = vunpack.c.0.s8 %v5008
        %v5010 = vlaneseq
        %v5011 = vshrl.u32 %v5010, 7
        %v5012 = vsub.s32 %v5009, %v5011
        %v5013 = vrot.slane %v1127, %v5012
        %v5015 = vunpack.c.l.s4 1983009808
        %v5016 = vunpack.c.0.s8 %v5015
        %v5017 = vlaneseq
        %v5018 = vshrl.u32 %v5017, 7
        %v5019 = vsub.s32 %v5016, %v5018
        %v5020 = vrot.slane %v5006, %v5019
        %v5021 = vcombine.high %v5013, 0.0
        %v5023 = vunpack.c.l.s4 1934713408
        %v5024 = vunpack.c.0.s8 %v5023
        %v5025 = vlaneseq
        %v5026 = vshrl.u32 %v5025, 7
        %v5027 = vsub.s32 %v5024, %v5026
        %v5028 = vrot.slane %v5013, %v5027
        %v5030 = vunpack.c.l.s4 1934713408
        %v5031 = vunpack.c.0.s8 %v5030
        %v5032 = vlaneseq
        %v5033 = vshrl.u32 %v5032, 7
        %v5034 = vsub.s32 %v5031, %v5033
        %v5035 = vrot.slane %v5021, %v5034
        %v5036 = vcombine.high %v5020, 0.0
        %v5038 = vunpack.c.l.s4 1934713408
        %v5039 = vunpack.c.0.s8 %v5038
        %v5040 = vlaneseq
        %v5041 = vshrl.u32 %v5040, 7
        %v5042 = vsub.s32 %v5039, %v5041
        %v5043 = vrot.slane %v5020, %v5042
        %v5045 = vunpack.c.l.s4 1934713408
        %v5046 = vunpack.c.0.s8 %v5045
        %v5047 = vlaneseq
        %v5048 = vshrl.u32 %v5047, 7
        %v5049 = vsub.s32 %v5046, %v5048
        %v5050 = vrot.slane %v5036, %v5049
        %v5051 = vcombine.high %v5028, 0.0
        %v5052 = vcombine.high %v5035, 0.0
        %v5053 = vcombine.high %v5043, 0.0
        %v5054 = vcombine.high %v5050, 0.0
        %v5055 = vcombine.high %v1128, 0.0
        %v5057 = vunpack.c.l.s4 1983009808
        %v5058 = vunpack.c.0.s8 %v5057
        %v5059 = vlaneseq
        %v5060 = vshrl.u32 %v5059, 7
        %v5061 = vsub.s32 %v5058, %v5060
        %v5062 = vrot.slane %v1128, %v5061
        %v5064 = vunpack.c.l.s4 1983009808
        %v5065 = vunpack.c.0.s8 %v5064
        %v5066 = vlaneseq
        %v5067 = vshrl.u32 %v5066, 7
        %v5068 = vsub.s32 %v5065, %v5067
        %v5069 = vrot.slane %v5055, %v5068
        %v5070 = vcombine.high %v5062, 0.0
        %v5072 = vunpack.c.l.s4 1934713408
        %v5073 = vunpack.c.0.s8 %v5072
        %v5074 = vlaneseq
        %v5075 = vshrl.u32 %v5074, 7
        %v5076 = vsub.s32 %v5073, %v5075
        %v5077 = vrot.slane %v5062, %v5076
        %v5079 = vunpack.c.l.s4 1934713408
        %v5080 = vunpack.c.0.s8 %v5079
        %v5081 = vlaneseq
        %v5082 = vshrl.u32 %v5081, 7
        %v5083 = vsub.s32 %v5080, %v5082
        %v5084 = vrot.slane %v5070, %v5083
        %v5085 = vcombine.high %v5069, 0.0
        %v5087 = vunpack.c.l.s4 1934713408
        %v5088 = vunpack.c.0.s8 %v5087
        %v5089 = vlaneseq
        %v5090 = vshrl.u32 %v5089, 7
        %v5091 = vsub.s32 %v5088, %v5090
        %v5092 = vrot.slane %v5069, %v5091
        %v5094 = vunpack.c.l.s4 1934713408
        %v5095 = vunpack.c.0.s8 %v5094
        %v5096 = vlaneseq
        %v5097 = vshrl.u32 %v5096, 7
        %v5098 = vsub.s32 %v5095, %v5097
        %v5099 = vrot.slane %v5085, %v5098
        %v5100 = vcombine.high %v5077, 0.0
        %v5101 = vcombine.high %v5084, 0.0
        %v5102 = vcombine.high %v5092, 0.0
        %v5103 = vcombine.high %v5099, 0.0
        %v5104 = vcombine.high %v1129, 0.0
        %v5106 = vunpack.c.l.s4 1983009808
        %v5107 = vunpack.c.0.s8 %v5106
        %v5108 = vlaneseq
        %v5109 = vshrl.u32 %v5108, 7
        %v5110 = vsub.s32 %v5107, %v5109
        %v5111 = vrot.slane %v1129, %v5110
        %v5113 = vunpack.c.l.s4 1983009808
        %v5114 = vunpack.c.0.s8 %v5113
        %v5115 = vlaneseq
        %v5116 = vshrl.u32 %v5115, 7
        %v5117 = vsub.s32 %v5114, %v5116
        %v5118 = vrot.slane %v5104, %v5117
        %v5119 = vcombine.high %v5111, 0.0
        %v5121 = vunpack.c.l.s4 1934713408
        %v5122 = vunpack.c.0.s8 %v5121
        %v5123 = vlaneseq
        %v5124 = vshrl.u32 %v5123, 7
        %v5125 = vsub.s32 %v5122, %v5124
        %v5126 = vrot.slane %v5111, %v5125
        %v5128 = vunpack.c.l.s4 1934713408
        %v5129 = vunpack.c.0.s8 %v5128
        %v5130 = vlaneseq
        %v5131 = vshrl.u32 %v5130, 7
        %v5132 = vsub.s32 %v5129, %v5131
        %v5133 = vrot.slane %v5119, %v5132
        %v5134 = vcombine.high %v5118, 0.0
        %v5136 = vunpack.c.l.s4 1934713408
        %v5137 = vunpack.c.0.s8 %v5136
        %v5138 = vlaneseq
        %v5139 = vshrl.u32 %v5138, 7
        %v5140 = vsub.s32 %v5137, %v5139
        %v5141 = vrot.slane %v5118, %v5140
        %v5143 = vunpack.c.l.s4 1934713408
        %v5144 = vunpack.c.0.s8 %v5143
        %v5145 = vlaneseq
        %v5146 = vshrl.u32 %v5145, 7
        %v5147 = vsub.s32 %v5144, %v5146
        %v5148 = vrot.slane %v5134, %v5147
        %v5149 = vcombine.high %v5126, 0.0
        %v5150 = vcombine.high %v5133, 0.0
        %v5151 = vcombine.high %v5141, 0.0
        %v5152 = vcombine.high %v5148, 0.0
        %v5153 = vcombine.high %v1130, 0.0
        %v5155 = vunpack.c.l.s4 1983009808
        %v5156 = vunpack.c.0.s8 %v5155
        %v5157 = vlaneseq
        %v5158 = vshrl.u32 %v5157, 7
        %v5159 = vsub.s32 %v5156, %v5158
        %v5160 = vrot.slane %v1130, %v5159
        %v5162 = vunpack.c.l.s4 1983009808
        %v5163 = vunpack.c.0.s8 %v5162
        %v5164 = vlaneseq
        %v5165 = vshrl.u32 %v5164, 7
        %v5166 = vsub.s32 %v5163, %v5165
        %v5167 = vrot.slane %v5153, %v5166
        %v5168 = vcombine.high %v5160, 0.0
        %v5170 = vunpack.c.l.s4 1934713408
        %v5171 = vunpack.c.0.s8 %v5170
        %v5172 = vlaneseq
        %v5173 = vshrl.u32 %v5172, 7
        %v5174 = vsub.s32 %v5171, %v5173
        %v5175 = vrot.slane %v5160, %v5174
        %v5177 = vunpack.c.l.s4 1934713408
        %v5178 = vunpack.c.0.s8 %v5177
        %v5179 = vlaneseq
        %v5180 = vshrl.u32 %v5179, 7
        %v5181 = vsub.s32 %v5178, %v5180
        %v5182 = vrot.slane %v5168, %v5181
        %v5183 = vcombine.high %v5167, 0.0
        %v5185 = vunpack.c.l.s4 1934713408
        %v5186 = vunpack.c.0.s8 %v5185
        %v5187 = vlaneseq
        %v5188 = vshrl.u32 %v5187, 7
        %v5189 = vsub.s32 %v5186, %v5188
        %v5190 = vrot.slane %v5167, %v5189
        %v5192 = vunpack.c.l.s4 1934713408
        %v5193 = vunpack.c.0.s8 %v5192
        %v5194 = vlaneseq
        %v5195 = vshrl.u32 %v5194, 7
        %v5196 = vsub.s32 %v5193, %v5195
        %v5197 = vrot.slane %v5183, %v5196
        %v5198 = vcombine.high %v5175, 0.0
        %v5199 = vcombine.high %v5182, 0.0
        %v5200 = vcombine.high %v5190, 0.0
        %v5201 = vcombine.high %v5197, 0.0
        %v5202 = vcombine.high %v1131, 0.0
        %v5204 = vunpack.c.l.s4 1983009808
        %v5205 = vunpack.c.0.s8 %v5204
        %v5206 = vlaneseq
        %v5207 = vshrl.u32 %v5206, 7
        %v5208 = vsub.s32 %v5205, %v5207
        %v5209 = vrot.slane %v1131, %v5208
        %v5211 = vunpack.c.l.s4 1983009808
        %v5212 = vunpack.c.0.s8 %v5211
        %v5213 = vlaneseq
        %v5214 = vshrl.u32 %v5213, 7
        %v5215 = vsub.s32 %v5212, %v5214
        %v5216 = vrot.slane %v5202, %v5215
        %v5217 = vcombine.high %v5209, 0.0
        %v5219 = vunpack.c.l.s4 1934713408
        %v5220 = vunpack.c.0.s8 %v5219
        %v5221 = vlaneseq
        %v5222 = vshrl.u32 %v5221, 7
        %v5223 = vsub.s32 %v5220, %v5222
        %v5224 = vrot.slane %v5209, %v5223
        %v5226 = vunpack.c.l.s4 1934713408
        %v5227 = vunpack.c.0.s8 %v5226
        %v5228 = vlaneseq
        %v5229 = vshrl.u32 %v5228, 7
        %v5230 = vsub.s32 %v5227, %v5229
        %v5231 = vrot.slane %v5217, %v5230
        %v5232 = vcombine.high %v5216, 0.0
        %v5234 = vunpack.c.l.s4 1934713408
        %v5235 = vunpack.c.0.s8 %v5234
        %v5236 = vlaneseq
        %v5237 = vshrl.u32 %v5236, 7
        %v5238 = vsub.s32 %v5235, %v5237
        %v5239 = vrot.slane %v5216, %v5238
        %v5241 = vunpack.c.l.s4 1934713408
        %v5242 = vunpack.c.0.s8 %v5241
        %v5243 = vlaneseq
        %v5244 = vshrl.u32 %v5243, 7
        %v5245 = vsub.s32 %v5242, %v5244
        %v5246 = vrot.slane %v5232, %v5245
        %v5247 = vcombine.high %v5224, 0.0
        %v5248 = vcombine.high %v5231, 0.0
        %v5249 = vcombine.high %v5239, 0.0
        %v5250 = vcombine.high %v5246, 0.0
        %v5251 = vcombine.high %v1132, 0.0
        %v5253 = vunpack.c.l.s4 1983009808
        %v5254 = vunpack.c.0.s8 %v5253
        %v5255 = vlaneseq
        %v5256 = vshrl.u32 %v5255, 7
        %v5257 = vsub.s32 %v5254, %v5256
        %v5258 = vrot.slane %v1132, %v5257
        %v5260 = vunpack.c.l.s4 1983009808
        %v5261 = vunpack.c.0.s8 %v5260
        %v5262 = vlaneseq
        %v5263 = vshrl.u32 %v5262, 7
        %v5264 = vsub.s32 %v5261, %v5263
        %v5265 = vrot.slane %v5251, %v5264
        %v5266 = vcombine.high %v5258, 0.0
        %v5268 = vunpack.c.l.s4 1934713408
        %v5269 = vunpack.c.0.s8 %v5268
        %v5270 = vlaneseq
        %v5271 = vshrl.u32 %v5270, 7
        %v5272 = vsub.s32 %v5269, %v5271
        %v5273 = vrot.slane %v5258, %v5272
        %v5275 = vunpack.c.l.s4 1934713408
        %v5276 = vunpack.c.0.s8 %v5275
        %v5277 = vlaneseq
        %v5278 = vshrl.u32 %v5277, 7
        %v5279 = vsub.s32 %v5276, %v5278
        %v5280 = vrot.slane %v5266, %v5279
        %v5281 = vcombine.high %v5265, 0.0
        %v5283 = vunpack.c.l.s4 1934713408
        %v5284 = vunpack.c.0.s8 %v5283
        %v5285 = vlaneseq
        %v5286 = vshrl.u32 %v5285, 7
        %v5287 = vsub.s32 %v5284, %v5286
        %v5288 = vrot.slane %v5265, %v5287
        %v5290 = vunpack.c.l.s4 1934713408
        %v5291 = vunpack.c.0.s8 %v5290
        %v5292 = vlaneseq
        %v5293 = vshrl.u32 %v5292, 7
        %v5294 = vsub.s32 %v5291, %v5293
        %v5295 = vrot.slane %v5281, %v5294
        %v5296 = vcombine.high %v5273, 0.0
        %v5297 = vcombine.high %v5280, 0.0
        %v5298 = vcombine.high %v5288, 0.0
        %v5299 = vcombine.high %v5295, 0.0
        %v5300 = vcombine.high %v1133, 0.0
        %v5302 = vunpack.c.l.s4 1983009808
        %v5303 = vunpack.c.0.s8 %v5302
        %v5304 = vlaneseq
        %v5305 = vshrl.u32 %v5304, 7
        %v5306 = vsub.s32 %v5303, %v5305
        %v5307 = vrot.slane %v1133, %v5306
        %v5309 = vunpack.c.l.s4 1983009808
        %v5310 = vunpack.c.0.s8 %v5309
        %v5311 = vlaneseq
        %v5312 = vshrl.u32 %v5311, 7
        %v5313 = vsub.s32 %v5310, %v5312
        %v5314 = vrot.slane %v5300, %v5313
        %v5315 = vcombine.high %v5307, 0.0
        %v5317 = vunpack.c.l.s4 1934713408
        %v5318 = vunpack.c.0.s8 %v5317
        %v5319 = vlaneseq
        %v5320 = vshrl.u32 %v5319, 7
        %v5321 = vsub.s32 %v5318, %v5320
        %v5322 = vrot.slane %v5307, %v5321
        %v5324 = vunpack.c.l.s4 1934713408
        %v5325 = vunpack.c.0.s8 %v5324
        %v5326 = vlaneseq
        %v5327 = vshrl.u32 %v5326, 7
        %v5328 = vsub.s32 %v5325, %v5327
        %v5329 = vrot.slane %v5315, %v5328
        %v5330 = vcombine.high %v5314, 0.0
        %v5332 = vunpack.c.l.s4 1934713408
        %v5333 = vunpack.c.0.s8 %v5332
        %v5334 = vlaneseq
        %v5335 = vshrl.u32 %v5334, 7
        %v5336 = vsub.s32 %v5333, %v5335
        %v5337 = vrot.slane %v5314, %v5336
        %v5339 = vunpack.c.l.s4 1934713408
        %v5340 = vunpack.c.0.s8 %v5339
        %v5341 = vlaneseq
        %v5342 = vshrl.u32 %v5341, 7
        %v5343 = vsub.s32 %v5340, %v5342
        %v5344 = vrot.slane %v5330, %v5343
        %v5345 = vcombine.high %v5322, 0.0
        %v5346 = vcombine.high %v5329, 0.0
        %v5347 = vcombine.high %v5337, 0.0
        %v5348 = vcombine.high %v5344, 0.0
        %v5349 = vcombine.high %v1134, 0.0
        %v5351 = vunpack.c.l.s4 1983009808
        %v5352 = vunpack.c.0.s8 %v5351
        %v5353 = vlaneseq
        %v5354 = vshrl.u32 %v5353, 7
        %v5355 = vsub.s32 %v5352, %v5354
        %v5356 = vrot.slane %v1134, %v5355
        %v5358 = vunpack.c.l.s4 1983009808
        %v5359 = vunpack.c.0.s8 %v5358
        %v5360 = vlaneseq
        %v5361 = vshrl.u32 %v5360, 7
        %v5362 = vsub.s32 %v5359, %v5361
        %v5363 = vrot.slane %v5349, %v5362
        %v5364 = vcombine.high %v5356, 0.0
        %v5366 = vunpack.c.l.s4 1934713408
        %v5367 = vunpack.c.0.s8 %v5366
        %v5368 = vlaneseq
        %v5369 = vshrl.u32 %v5368, 7
        %v5370 = vsub.s32 %v5367, %v5369
        %v5371 = vrot.slane %v5356, %v5370
        %v5373 = vunpack.c.l.s4 1934713408
        %v5374 = vunpack.c.0.s8 %v5373
        %v5375 = vlaneseq
        %v5376 = vshrl.u32 %v5375, 7
        %v5377 = vsub.s32 %v5374, %v5376
        %v5378 = vrot.slane %v5364, %v5377
        %v5379 = vcombine.high %v5363, 0.0
        %v5381 = vunpack.c.l.s4 1934713408
        %v5382 = vunpack.c.0.s8 %v5381
        %v5383 = vlaneseq
        %v5384 = vshrl.u32 %v5383, 7
        %v5385 = vsub.s32 %v5382, %v5384
        %v5386 = vrot.slane %v5363, %v5385
        %v5388 = vunpack.c.l.s4 1934713408
        %v5389 = vunpack.c.0.s8 %v5388
        %v5390 = vlaneseq
        %v5391 = vshrl.u32 %v5390, 7
        %v5392 = vsub.s32 %v5389, %v5391
        %v5393 = vrot.slane %v5379, %v5392
        %v5394 = vcombine.high %v5371, 0.0
        %v5395 = vcombine.high %v5378, 0.0
        %v5396 = vcombine.high %v5386, 0.0
        %v5397 = vcombine.high %v5393, 0.0
        %5430 = vrot.lane.b32.xlu0 %v3875, 2
        %v5431 = vpop.permute.xlu0 %5430
        %5432 = vrot.lane.b32.xlu0 %v3924, 2
        %v5433 = vpop.permute.xlu0 %5432
        %5434 = vrot.lane.b32.xlu0 %v3973, 2
        %v5435 = vpop.permute.xlu0 %5434
        %5436 = vrot.lane.b32.xlu0 %v4022, 2
        %v5437 = vpop.permute.xlu0 %5436
        %5438 = vrot.lane.b32.xlu0 %v4071, 2
        %v5439 = vpop.permute.xlu0 %5438
        %5440 = vrot.lane.b32.xlu0 %v4120, 2
        %v5441 = vpop.permute.xlu0 %5440
        %5442 = vrot.lane.b32.xlu0 %v4169, 2
        %v5443 = vpop.permute.xlu0 %5442
        %5444 = vrot.lane.b32.xlu0 %v4218, 2
        %v5445 = vpop.permute.xlu0 %5444
        %5446 = vrot.lane.b32.xlu0 %v4267, 2
        %v5447 = vpop.permute.xlu0 %5446
        %5448 = vrot.lane.b32.xlu0 %v4316, 2
        %v5449 = vpop.permute.xlu0 %5448
        %5450 = vrot.lane.b32.xlu0 %v4365, 2
        %v5451 = vpop.permute.xlu0 %5450
        %5452 = vrot.lane.b32.xlu0 %v4414, 2
        %v5453 = vpop.permute.xlu0 %5452
        %5454 = vrot.lane.b32.xlu0 %v4463, 2
        %v5455 = vpop.permute.xlu0 %5454
        %5456 = vrot.lane.b32.xlu0 %v4512, 2
        %v5457 = vpop.permute.xlu0 %5456
        %5458 = vrot.lane.b32.xlu0 %v4561, 2
        %v5459 = vpop.permute.xlu0 %5458
        %5460 = vrot.lane.b32.xlu0 %v4610, 2
        %v5461 = vpop.permute.xlu0 %5460
        %5462 = vrot.lane.b32.xlu0 %v4659, 2
        %v5463 = vpop.permute.xlu0 %5462
        %5464 = vrot.lane.b32.xlu0 %v4708, 2
        %v5465 = vpop.permute.xlu0 %5464
        %5466 = vrot.lane.b32.xlu0 %v4757, 2
        %v5467 = vpop.permute.xlu0 %5466
        %5468 = vrot.lane.b32.xlu0 %v4806, 2
        %v5469 = vpop.permute.xlu0 %5468
        %5470 = vrot.lane.b32.xlu0 %v4855, 2
        %v5471 = vpop.permute.xlu0 %5470
        %5472 = vrot.lane.b32.xlu0 %v4904, 2
        %v5473 = vpop.permute.xlu0 %5472
        %5474 = vrot.lane.b32.xlu0 %v4953, 2
        %v5475 = vpop.permute.xlu0 %5474
        %5476 = vrot.lane.b32.xlu0 %v5002, 2
        %v5477 = vpop.permute.xlu0 %5476
        %5478 = vrot.lane.b32.xlu0 %v5051, 2
        %v5479 = vpop.permute.xlu0 %5478
        %5480 = vrot.lane.b32.xlu0 %v5100, 2
        %v5481 = vpop.permute.xlu0 %5480
        %5482 = vrot.lane.b32.xlu0 %v5149, 2
        %v5483 = vpop.permute.xlu0 %5482
        %5484 = vrot.lane.b32.xlu0 %v5198, 2
        %v5485 = vpop.permute.xlu0 %5484
        %5486 = vrot.lane.b32.xlu0 %v5247, 2
        %v5487 = vpop.permute.xlu0 %5486
        %5488 = vrot.lane.b32.xlu0 %v5296, 2
        %v5489 = vpop.permute.xlu0 %5488
        %5490 = vrot.lane.b32.xlu0 %v5345, 2
        %v5491 = vpop.permute.xlu0 %5490
        %5492 = vrot.lane.b32.xlu0 %v5394, 2
        %v5493 = vpop.permute.xlu0 %5492
        %5558 = vrot.lane.b32.xlu0 %v3859, 4
        %v5559 = vpop.permute.xlu0 %5558
        %5560 = vrot.lane.b32.xlu0 %v3908, 4
        %v5561 = vpop.permute.xlu0 %5560
        %5562 = vrot.lane.b32.xlu0 %v3957, 4
        %v5563 = vpop.permute.xlu0 %5562
        %5564 = vrot.lane.b32.xlu0 %v4006, 4
        %v5565 = vpop.permute.xlu0 %5564
        %5566 = vrot.lane.b32.xlu0 %v4055, 4
        %v5567 = vpop.permute.xlu0 %5566
        %5568 = vrot.lane.b32.xlu0 %v4104, 4
        %v5569 = vpop.permute.xlu0 %5568
        %5570 = vrot.lane.b32.xlu0 %v4153, 4
        %v5571 = vpop.permute.xlu0 %5570
        %5572 = vrot.lane.b32.xlu0 %v4202, 4
        %v5573 = vpop.permute.xlu0 %5572
        %5574 = vrot.lane.b32.xlu0 %v4251, 4
        %v5575 = vpop.permute.xlu0 %5574
        %5576 = vrot.lane.b32.xlu0 %v4300, 4
        %v5577 = vpop.permute.xlu0 %5576
        %5578 = vrot.lane.b32.xlu0 %v4349, 4
        %v5579 = vpop.permute.xlu0 %5578
        %5580 = vrot.lane.b32.xlu0 %v4398, 4
        %v5581 = vpop.permute.xlu0 %5580
        %5582 = vrot.lane.b32.xlu0 %v4447, 4
        %v5583 = vpop.permute.xlu0 %5582
        %5584 = vrot.lane.b32.xlu0 %v4496, 4
        %v5585 = vpop.permute.xlu0 %5584
        %5586 = vrot.lane.b32.xlu0 %v4545, 4
        %v5587 = vpop.permute.xlu0 %5586
        %5588 = vrot.lane.b32.xlu0 %v4594, 4
        %v5589 = vpop.permute.xlu0 %5588
        %5590 = vrot.lane.b32.xlu0 %v4643, 4
        %v5591 = vpop.permute.xlu0 %5590
        %5592 = vrot.lane.b32.xlu0 %v4692, 4
        %v5593 = vpop.permute.xlu0 %5592
        %5594 = vrot.lane.b32.xlu0 %v4741, 4
        %v5595 = vpop.permute.xlu0 %5594
        %5596 = vrot.lane.b32.xlu0 %v4790, 4
        %v5597 = vpop.permute.xlu0 %5596
        %5598 = vrot.lane.b32.xlu0 %v4839, 4
        %v5599 = vpop.permute.xlu0 %5598
        %5600 = vrot.lane.b32.xlu0 %v4888, 4
        %v5601 = vpop.permute.xlu0 %5600
        %5602 = vrot.lane.b32.xlu0 %v4937, 4
        %v5603 = vpop.permute.xlu0 %5602
        %5604 = vrot.lane.b32.xlu0 %v4986, 4
        %v5605 = vpop.permute.xlu0 %5604
        %5606 = vrot.lane.b32.xlu0 %v5035, 4
        %v5607 = vpop.permute.xlu0 %5606
        %5608 = vrot.lane.b32.xlu0 %v5084, 4
        %v5609 = vpop.permute.xlu0 %5608
        %5610 = vrot.lane.b32.xlu0 %v5133, 4
        %v5611 = vpop.permute.xlu0 %5610
        %5612 = vrot.lane.b32.xlu0 %v5182, 4
        %v5613 = vpop.permute.xlu0 %5612
        %5614 = vrot.lane.b32.xlu0 %v5231, 4
        %v5615 = vpop.permute.xlu0 %5614
        %5616 = vrot.lane.b32.xlu0 %v5280, 4
        %v5617 = vpop.permute.xlu0 %5616
        %5618 = vrot.lane.b32.xlu0 %v5329, 4
        %v5619 = vpop.permute.xlu0 %5618
        %5620 = vrot.lane.b32.xlu0 %v5378, 4
        %v5621 = vpop.permute.xlu0 %5620
        %5686 = vrot.lane.b32.xlu0 %v3876, 6
        %v5687 = vpop.permute.xlu0 %5686
        %5688 = vrot.lane.b32.xlu0 %v3925, 6
        %v5689 = vpop.permute.xlu0 %5688
        %5690 = vrot.lane.b32.xlu0 %v3974, 6
        %v5691 = vpop.permute.xlu0 %5690
        %5692 = vrot.lane.b32.xlu0 %v4023, 6
        %v5693 = vpop.permute.xlu0 %5692
        %5694 = vrot.lane.b32.xlu0 %v4072, 6
        %v5695 = vpop.permute.xlu0 %5694
        %5696 = vrot.lane.b32.xlu0 %v4121, 6
        %v5697 = vpop.permute.xlu0 %5696
        %5698 = vrot.lane.b32.xlu0 %v4170, 6
        %v5699 = vpop.permute.xlu0 %5698
        %5700 = vrot.lane.b32.xlu0 %v4219, 6
        %v5701 = vpop.permute.xlu0 %5700
        %5702 = vrot.lane.b32.xlu0 %v4268, 6
        %v5703 = vpop.permute.xlu0 %5702
        %5704 = vrot.lane.b32.xlu0 %v4317, 6
        %v5705 = vpop.permute.xlu0 %5704
        %5706 = vrot.lane.b32.xlu0 %v4366, 6
        %v5707 = vpop.permute.xlu0 %5706
        %5708 = vrot.lane.b32.xlu0 %v4415, 6
        %v5709 = vpop.permute.xlu0 %5708
        %5710 = vrot.lane.b32.xlu0 %v4464, 6
        %v5711 = vpop.permute.xlu0 %5710
        %5712 = vrot.lane.b32.xlu0 %v4513, 6
        %v5713 = vpop.permute.xlu0 %5712
        %5714 = vrot.lane.b32.xlu0 %v4562, 6
        %v5715 = vpop.permute.xlu0 %5714
        %5716 = vrot.lane.b32.xlu0 %v4611, 6
        %v5717 = vpop.permute.xlu0 %5716
        %5718 = vrot.lane.b32.xlu0 %v4660, 6
        %v5719 = vpop.permute.xlu0 %5718
        %5720 = vrot.lane.b32.xlu0 %v4709, 6
        %v5721 = vpop.permute.xlu0 %5720
        %5722 = vrot.lane.b32.xlu0 %v4758, 6
        %v5723 = vpop.permute.xlu0 %5722
        %5724 = vrot.lane.b32.xlu0 %v4807, 6
        %v5725 = vpop.permute.xlu0 %5724
        %5726 = vrot.lane.b32.xlu0 %v4856, 6
        %v5727 = vpop.permute.xlu0 %5726
        %5728 = vrot.lane.b32.xlu0 %v4905, 6
        %v5729 = vpop.permute.xlu0 %5728
        %5730 = vrot.lane.b32.xlu0 %v4954, 6
        %v5731 = vpop.permute.xlu0 %5730
        %5732 = vrot.lane.b32.xlu0 %v5003, 6
        %v5733 = vpop.permute.xlu0 %5732
        %5734 = vrot.lane.b32.xlu0 %v5052, 6
        %v5735 = vpop.permute.xlu0 %5734
        %5736 = vrot.lane.b32.xlu0 %v5101, 6
        %v5737 = vpop.permute.xlu0 %5736
        %5738 = vrot.lane.b32.xlu0 %v5150, 6
        %v5739 = vpop.permute.xlu0 %5738
        %5740 = vrot.lane.b32.xlu0 %v5199, 6
        %v5741 = vpop.permute.xlu0 %5740
        %5742 = vrot.lane.b32.xlu0 %v5248, 6
        %v5743 = vpop.permute.xlu0 %5742
        %5744 = vrot.lane.b32.xlu0 %v5297, 6
        %v5745 = vpop.permute.xlu0 %5744
        %5746 = vrot.lane.b32.xlu0 %v5346, 6
        %v5747 = vpop.permute.xlu0 %5746
        %5748 = vrot.lane.b32.xlu0 %v5395, 6
        %v5749 = vpop.permute.xlu0 %5748
        %5814 = vrot.lane.b32.xlu0 %v3867, 8
        %v5815 = vpop.permute.xlu0 %5814
        %5816 = vrot.lane.b32.xlu0 %v3916, 8
        %v5817 = vpop.permute.xlu0 %5816
        %5818 = vrot.lane.b32.xlu0 %v3965, 8
        %v5819 = vpop.permute.xlu0 %5818
        %5820 = vrot.lane.b32.xlu0 %v4014, 8
        %v5821 = vpop.permute.xlu0 %5820
        %5822 = vrot.lane.b32.xlu0 %v4063, 8
        %v5823 = vpop.permute.xlu0 %5822
        %5824 = vrot.lane.b32.xlu0 %v4112, 8
        %v5825 = vpop.permute.xlu0 %5824
        %5826 = vrot.lane.b32.xlu0 %v4161, 8
        %v5827 = vpop.permute.xlu0 %5826
        %5828 = vrot.lane.b32.xlu0 %v4210, 8
        %v5829 = vpop.permute.xlu0 %5828
        %5830 = vrot.lane.b32.xlu0 %v4259, 8
        %v5831 = vpop.permute.xlu0 %5830
        %5832 = vrot.lane.b32.xlu0 %v4308, 8
        %v5833 = vpop.permute.xlu0 %5832
        %5834 = vrot.lane.b32.xlu0 %v4357, 8
        %v5835 = vpop.permute.xlu0 %5834
        %5836 = vrot.lane.b32.xlu0 %v4406, 8
        %v5837 = vpop.permute.xlu0 %5836
        %5838 = vrot.lane.b32.xlu0 %v4455, 8
        %v5839 = vpop.permute.xlu0 %5838
        %5840 = vrot.lane.b32.xlu0 %v4504, 8
        %v5841 = vpop.permute.xlu0 %5840
        %5842 = vrot.lane.b32.xlu0 %v4553, 8
        %v5843 = vpop.permute.xlu0 %5842
        %5844 = vrot.lane.b32.xlu0 %v4602, 8
        %v5845 = vpop.permute.xlu0 %5844
        %5846 = vrot.lane.b32.xlu0 %v4651, 8
        %v5847 = vpop.permute.xlu0 %5846
        %5848 = vrot.lane.b32.xlu0 %v4700, 8
        %v5849 = vpop.permute.xlu0 %5848
        %5850 = vrot.lane.b32.xlu0 %v4749, 8
        %v5851 = vpop.permute.xlu0 %5850
        %5852 = vrot.lane.b32.xlu0 %v4798, 8
        %v5853 = vpop.permute.xlu0 %5852
        %5854 = vrot.lane.b32.xlu0 %v4847, 8
        %v5855 = vpop.permute.xlu0 %5854
        %5856 = vrot.lane.b32.xlu0 %v4896, 8
        %v5857 = vpop.permute.xlu0 %5856
        %5858 = vrot.lane.b32.xlu0 %v4945, 8
        %v5859 = vpop.permute.xlu0 %5858
        %5860 = vrot.lane.b32.xlu0 %v4994, 8
        %v5861 = vpop.permute.xlu0 %5860
        %5862 = vrot.lane.b32.xlu0 %v5043, 8
        %v5863 = vpop.permute.xlu0 %5862
        %5864 = vrot.lane.b32.xlu0 %v5092, 8
        %v5865 = vpop.permute.xlu0 %5864
        %5866 = vrot.lane.b32.xlu0 %v5141, 8
        %v5867 = vpop.permute.xlu0 %5866
        %5868 = vrot.lane.b32.xlu0 %v5190, 8
        %v5869 = vpop.permute.xlu0 %5868
        %5870 = vrot.lane.b32.xlu0 %v5239, 8
        %v5871 = vpop.permute.xlu0 %5870
        %5872 = vrot.lane.b32.xlu0 %v5288, 8
        %v5873 = vpop.permute.xlu0 %5872
        %5874 = vrot.lane.b32.xlu0 %v5337, 8
        %v5875 = vpop.permute.xlu0 %5874
        %5876 = vrot.lane.b32.xlu0 %v5386, 8
        %v5877 = vpop.permute.xlu0 %5876
        %5942 = vrot.lane.b32.xlu0 %v3877, 10
        %v5943 = vpop.permute.xlu0 %5942
        %5944 = vrot.lane.b32.xlu0 %v3926, 10
        %v5945 = vpop.permute.xlu0 %5944
        %5946 = vrot.lane.b32.xlu0 %v3975, 10
        %v5947 = vpop.permute.xlu0 %5946
        %5948 = vrot.lane.b32.xlu0 %v4024, 10
        %v5949 = vpop.permute.xlu0 %5948
        %5950 = vrot.lane.b32.xlu0 %v4073, 10
        %v5951 = vpop.permute.xlu0 %5950
        %5952 = vrot.lane.b32.xlu0 %v4122, 10
        %v5953 = vpop.permute.xlu0 %5952
        %5954 = vrot.lane.b32.xlu0 %v4171, 10
        %v5955 = vpop.permute.xlu0 %5954
        %5956 = vrot.lane.b32.xlu0 %v4220, 10
        %v5957 = vpop.permute.xlu0 %5956
        %5958 = vrot.lane.b32.xlu0 %v4269, 10
        %v5959 = vpop.permute.xlu0 %5958
        %5960 = vrot.lane.b32.xlu0 %v4318, 10
        %v5961 = vpop.permute.xlu0 %5960
        %5962 = vrot.lane.b32.xlu0 %v4367, 10
        %v5963 = vpop.permute.xlu0 %5962
        %5964 = vrot.lane.b32.xlu0 %v4416, 10
        %v5965 = vpop.permute.xlu0 %5964
        %5966 = vrot.lane.b32.xlu0 %v4465, 10
        %v5967 = vpop.permute.xlu0 %5966
        %5968 = vrot.lane.b32.xlu0 %v4514, 10
        %v5969 = vpop.permute.xlu0 %5968
        %5970 = vrot.lane.b32.xlu0 %v4563, 10
        %v5971 = vpop.permute.xlu0 %5970
        %5972 = vrot.lane.b32.xlu0 %v4612, 10
        %v5973 = vpop.permute.xlu0 %5972
        %5974 = vrot.lane.b32.xlu0 %v4661, 10
        %v5975 = vpop.permute.xlu0 %5974
        %5976 = vrot.lane.b32.xlu0 %v4710, 10
        %v5977 = vpop.permute.xlu0 %5976
        %5978 = vrot.lane.b32.xlu0 %v4759, 10
        %v5979 = vpop.permute.xlu0 %5978
        %5980 = vrot.lane.b32.xlu0 %v4808, 10
        %v5981 = vpop.permute.xlu0 %5980
        %5982 = vrot.lane.b32.xlu0 %v4857, 10
        %v5983 = vpop.permute.xlu0 %5982
        %5984 = vrot.lane.b32.xlu0 %v4906, 10
        %v5985 = vpop.permute.xlu0 %5984
        %5986 = vrot.lane.b32.xlu0 %v4955, 10
        %v5987 = vpop.permute.xlu0 %5986
        %5988 = vrot.lane.b32.xlu0 %v5004, 10
        %v5989 = vpop.permute.xlu0 %5988
        %5990 = vrot.lane.b32.xlu0 %v5053, 10
        %v5991 = vpop.permute.xlu0 %5990
        %5992 = vrot.lane.b32.xlu0 %v5102, 10
        %v5993 = vpop.permute.xlu0 %5992
        %5994 = vrot.lane.b32.xlu0 %v5151, 10
        %v5995 = vpop.permute.xlu0 %5994
        %5996 = vrot.lane.b32.xlu0 %v5200, 10
        %v5997 = vpop.permute.xlu0 %5996
        %5998 = vrot.lane.b32.xlu0 %v5249, 10
        %v5999 = vpop.permute.xlu0 %5998
        %6000 = vrot.lane.b32.xlu0 %v5298, 10
        %v6001 = vpop.permute.xlu0 %6000
        %6002 = vrot.lane.b32.xlu0 %v5347, 10
        %v6003 = vpop.permute.xlu0 %6002
        %6004 = vrot.lane.b32.xlu0 %v5396, 10
        %v6005 = vpop.permute.xlu0 %6004
        %6070 = vrot.lane.b32.xlu0 %v3874, 12
        %v6071 = vpop.permute.xlu0 %6070
        %6072 = vrot.lane.b32.xlu0 %v3923, 12
        %v6073 = vpop.permute.xlu0 %6072
        %6074 = vrot.lane.b32.xlu0 %v3972, 12
        %v6075 = vpop.permute.xlu0 %6074
        %6076 = vrot.lane.b32.xlu0 %v4021, 12
        %v6077 = vpop.permute.xlu0 %6076
        %6078 = vrot.lane.b32.xlu0 %v4070, 12
        %v6079 = vpop.permute.xlu0 %6078
        %6080 = vrot.lane.b32.xlu0 %v4119, 12
        %v6081 = vpop.permute.xlu0 %6080
        %6082 = vrot.lane.b32.xlu0 %v4168, 12
        %v6083 = vpop.permute.xlu0 %6082
        %6084 = vrot.lane.b32.xlu0 %v4217, 12
        %v6085 = vpop.permute.xlu0 %6084
        %6086 = vrot.lane.b32.xlu0 %v4266, 12
        %v6087 = vpop.permute.xlu0 %6086
        %6088 = vrot.lane.b32.xlu0 %v4315, 12
        %v6089 = vpop.permute.xlu0 %6088
        %6090 = vrot.lane.b32.xlu0 %v4364, 12
        %v6091 = vpop.permute.xlu0 %6090
        %6092 = vrot.lane.b32.xlu0 %v4413, 12
        %v6093 = vpop.permute.xlu0 %6092
        %6094 = vrot.lane.b32.xlu0 %v4462, 12
        %v6095 = vpop.permute.xlu0 %6094
        %6096 = vrot.lane.b32.xlu0 %v4511, 12
        %v6097 = vpop.permute.xlu0 %6096
        %6098 = vrot.lane.b32.xlu0 %v4560, 12
        %v6099 = vpop.permute.xlu0 %6098
        %6100 = vrot.lane.b32.xlu0 %v4609, 12
        %v6101 = vpop.permute.xlu0 %6100
        %6102 = vrot.lane.b32.xlu0 %v4658, 12
        %v6103 = vpop.permute.xlu0 %6102
        %6104 = vrot.lane.b32.xlu0 %v4707, 12
        %v6105 = vpop.permute.xlu0 %6104
        %6106 = vrot.lane.b32.xlu0 %v4756, 12
        %v6107 = vpop.permute.xlu0 %6106
        %6108 = vrot.lane.b32.xlu0 %v4805, 12
        %v6109 = vpop.permute.xlu0 %6108
        %6110 = vrot.lane.b32.xlu0 %v4854, 12
        %v6111 = vpop.permute.xlu0 %6110
        %6112 = vrot.lane.b32.xlu0 %v4903, 12
        %v6113 = vpop.permute.xlu0 %6112
        %6114 = vrot.lane.b32.xlu0 %v4952, 12
        %v6115 = vpop.permute.xlu0 %6114
        %6116 = vrot.lane.b32.xlu0 %v5001, 12
        %v6117 = vpop.permute.xlu0 %6116
        %6118 = vrot.lane.b32.xlu0 %v5050, 12
        %v6119 = vpop.permute.xlu0 %6118
        %6120 = vrot.lane.b32.xlu0 %v5099, 12
        %v6121 = vpop.permute.xlu0 %6120
        %6122 = vrot.lane.b32.xlu0 %v5148, 12
        %v6123 = vpop.permute.xlu0 %6122
        %6124 = vrot.lane.b32.xlu0 %v5197, 12
        %v6125 = vpop.permute.xlu0 %6124
        %6126 = vrot.lane.b32.xlu0 %v5246, 12
        %v6127 = vpop.permute.xlu0 %6126
        %6128 = vrot.lane.b32.xlu0 %v5295, 12
        %v6129 = vpop.permute.xlu0 %6128
        %6130 = vrot.lane.b32.xlu0 %v5344, 12
        %v6131 = vpop.permute.xlu0 %6130
        %6132 = vrot.lane.b32.xlu0 %v5393, 12
        %v6133 = vpop.permute.xlu0 %6132
        %6198 = vrot.lane.b32.xlu0 %v3878, 14
        %v6199 = vpop.permute.xlu0 %6198
        %6200 = vrot.lane.b32.xlu0 %v3927, 14
        %v6201 = vpop.permute.xlu0 %6200
        %6202 = vrot.lane.b32.xlu0 %v3976, 14
        %v6203 = vpop.permute.xlu0 %6202
        %6204 = vrot.lane.b32.xlu0 %v4025, 14
        %v6205 = vpop.permute.xlu0 %6204
        %6206 = vrot.lane.b32.xlu0 %v4074, 14
        %v6207 = vpop.permute.xlu0 %6206
        %6208 = vrot.lane.b32.xlu0 %v4123, 14
        %v6209 = vpop.permute.xlu0 %6208
        %6210 = vrot.lane.b32.xlu0 %v4172, 14
        %v6211 = vpop.permute.xlu0 %6210
        %6212 = vrot.lane.b32.xlu0 %v4221, 14
        %v6213 = vpop.permute.xlu0 %6212
        %6214 = vrot.lane.b32.xlu0 %v4270, 14
        %v6215 = vpop.permute.xlu0 %6214
        %6216 = vrot.lane.b32.xlu0 %v4319, 14
        %v6217 = vpop.permute.xlu0 %6216
        %6218 = vrot.lane.b32.xlu0 %v4368, 14
        %v6219 = vpop.permute.xlu0 %6218
        %6220 = vrot.lane.b32.xlu0 %v4417, 14
        %v6221 = vpop.permute.xlu0 %6220
        %6222 = vrot.lane.b32.xlu0 %v4466, 14
        %v6223 = vpop.permute.xlu0 %6222
        %6224 = vrot.lane.b32.xlu0 %v4515, 14
        %v6225 = vpop.permute.xlu0 %6224
        %6226 = vrot.lane.b32.xlu0 %v4564, 14
        %v6227 = vpop.permute.xlu0 %6226
        %6228 = vrot.lane.b32.xlu0 %v4613, 14
        %v6229 = vpop.permute.xlu0 %6228
        %6230 = vrot.lane.b32.xlu0 %v4662, 14
        %v6231 = vpop.permute.xlu0 %6230
        %6232 = vrot.lane.b32.xlu0 %v4711, 14
        %v6233 = vpop.permute.xlu0 %6232
        %6234 = vrot.lane.b32.xlu0 %v4760, 14
        %v6235 = vpop.permute.xlu0 %6234
        %6236 = vrot.lane.b32.xlu0 %v4809, 14
        %v6237 = vpop.permute.xlu0 %6236
        %6238 = vrot.lane.b32.xlu0 %v4858, 14
        %v6239 = vpop.permute.xlu0 %6238
        %6240 = vrot.lane.b32.xlu0 %v4907, 14
        %v6241 = vpop.permute.xlu0 %6240
        %6242 = vrot.lane.b32.xlu0 %v4956, 14
        %v6243 = vpop.permute.xlu0 %6242
        %6244 = vrot.lane.b32.xlu0 %v5005, 14
        %v6245 = vpop.permute.xlu0 %6244
        %6246 = vrot.lane.b32.xlu0 %v5054, 14
        %v6247 = vpop.permute.xlu0 %6246
        %6248 = vrot.lane.b32.xlu0 %v5103, 14
        %v6249 = vpop.permute.xlu0 %6248
        %6250 = vrot.lane.b32.xlu0 %v5152, 14
        %v6251 = vpop.permute.xlu0 %6250
        %6252 = vrot.lane.b32.xlu0 %v5201, 14
        %v6253 = vpop.permute.xlu0 %6252
        %6254 = vrot.lane.b32.xlu0 %v5250, 14
        %v6255 = vpop.permute.xlu0 %6254
        %6256 = vrot.lane.b32.xlu0 %v5299, 14
        %v6257 = vpop.permute.xlu0 %6256
        %6258 = vrot.lane.b32.xlu0 %v5348, 14
        %v6259 = vpop.permute.xlu0 %6258
        %6260 = vrot.lane.b32.xlu0 %v5397, 14
        %v6261 = vpop.permute.xlu0 %6260
        %v6294 = vsel %vm3599, %v3852, %v5431
        %v6295 = vsel %vm3599, %v3901, %v5433
        %v6296 = vsel %vm3599, %v3950, %v5435
        %v6297 = vsel %vm3599, %v3999, %v5437
        %v6298 = vsel %vm3599, %v4048, %v5439
        %v6299 = vsel %vm3599, %v4097, %v5441
        %v6300 = vsel %vm3599, %v4146, %v5443
        %v6301 = vsel %vm3599, %v4195, %v5445
        %v6302 = vsel %vm3599, %v4244, %v5447
        %v6303 = vsel %vm3599, %v4293, %v5449
        %v6304 = vsel %vm3599, %v4342, %v5451
        %v6305 = vsel %vm3599, %v4391, %v5453
        %v6306 = vsel %vm3599, %v4440, %v5455
        %v6307 = vsel %vm3599, %v4489, %v5457
        %v6308 = vsel %vm3599, %v4538, %v5459
        %v6309 = vsel %vm3599, %v4587, %v5461
        %v6310 = vsel %vm3599, %v4636, %v5463
        %v6311 = vsel %vm3599, %v4685, %v5465
        %v6312 = vsel %vm3599, %v4734, %v5467
        %v6313 = vsel %vm3599, %v4783, %v5469
        %v6314 = vsel %vm3599, %v4832, %v5471
        %v6315 = vsel %vm3599, %v4881, %v5473
        %v6316 = vsel %vm3599, %v4930, %v5475
        %v6317 = vsel %vm3599, %v4979, %v5477
        %v6318 = vsel %vm3599, %v5028, %v5479
        %v6319 = vsel %vm3599, %v5077, %v5481
        %v6320 = vsel %vm3599, %v5126, %v5483
        %v6321 = vsel %vm3599, %v5175, %v5485
        %v6322 = vsel %vm3599, %v5224, %v5487
        %v6323 = vsel %vm3599, %v5273, %v5489
        %v6324 = vsel %vm3599, %v5322, %v5491
        %v6325 = vsel %vm3599, %v5371, %v5493
        %v6326 = vsel %vm3632, %v6294, %v5559
        %v6327 = vsel %vm3632, %v6295, %v5561
        %v6328 = vsel %vm3632, %v6296, %v5563
        %v6329 = vsel %vm3632, %v6297, %v5565
        %v6330 = vsel %vm3632, %v6298, %v5567
        %v6331 = vsel %vm3632, %v6299, %v5569
        %v6332 = vsel %vm3632, %v6300, %v5571
        %v6333 = vsel %vm3632, %v6301, %v5573
        %v6334 = vsel %vm3632, %v6302, %v5575
        %v6335 = vsel %vm3632, %v6303, %v5577
        %v6336 = vsel %vm3632, %v6304, %v5579
        %v6337 = vsel %vm3632, %v6305, %v5581
        %v6338 = vsel %vm3632, %v6306, %v5583
        %v6339 = vsel %vm3632, %v6307, %v5585
        %v6340 = vsel %vm3632, %v6308, %v5587
        %v6341 = vsel %vm3632, %v6309, %v5589
        %v6342 = vsel %vm3632, %v6310, %v5591
        %v6343 = vsel %vm3632, %v6311, %v5593
        %v6344 = vsel %vm3632, %v6312, %v5595
        %v6345 = vsel %vm3632, %v6313, %v5597
        %v6346 = vsel %vm3632, %v6314, %v5599
        %v6347 = vsel %vm3632, %v6315, %v5601
        %v6348 = vsel %vm3632, %v6316, %v5603
        %v6349 = vsel %vm3632, %v6317, %v5605
        %v6350 = vsel %vm3632, %v6318, %v5607
        %v6351 = vsel %vm3632, %v6319, %v5609
        %v6352 = vsel %vm3632, %v6320, %v5611
        %v6353 = vsel %vm3632, %v6321, %v5613
        %v6354 = vsel %vm3632, %v6322, %v5615
        %v6355 = vsel %vm3632, %v6323, %v5617
        %v6356 = vsel %vm3632, %v6324, %v5619
        %v6357 = vsel %vm3632, %v6325, %v5621
        %v6358 = vsel %vm3665, %v6326, %v5687
        %v6359 = vsel %vm3665, %v6327, %v5689
        %v6360 = vsel %vm3665, %v6328, %v5691
        %v6361 = vsel %vm3665, %v6329, %v5693
        %v6362 = vsel %vm3665, %v6330, %v5695
        %v6363 = vsel %vm3665, %v6331, %v5697
        %v6364 = vsel %vm3665, %v6332, %v5699
        %v6365 = vsel %vm3665, %v6333, %v5701
        %v6366 = vsel %vm3665, %v6334, %v5703
        %v6367 = vsel %vm3665, %v6335, %v5705
        %v6368 = vsel %vm3665, %v6336, %v5707
        %v6369 = vsel %vm3665, %v6337, %v5709
        %v6370 = vsel %vm3665, %v6338, %v5711
        %v6371 = vsel %vm3665, %v6339, %v5713
        %v6372 = vsel %vm3665, %v6340, %v5715
        %v6373 = vsel %vm3665, %v6341, %v5717
        %v6374 = vsel %vm3665, %v6342, %v5719
        %v6375 = vsel %vm3665, %v6343, %v5721
        %v6376 = vsel %vm3665, %v6344, %v5723
        %v6377 = vsel %vm3665, %v6345, %v5725
        %v6378 = vsel %vm3665, %v6346, %v5727
        %v6379 = vsel %vm3665, %v6347, %v5729
        %v6380 = vsel %vm3665, %v6348, %v5731
        %v6381 = vsel %vm3665, %v6349, %v5733
        %v6382 = vsel %vm3665, %v6350, %v5735
        %v6383 = vsel %vm3665, %v6351, %v5737
        %v6384 = vsel %vm3665, %v6352, %v5739
        %v6385 = vsel %vm3665, %v6353, %v5741
        %v6386 = vsel %vm3665, %v6354, %v5743
        %v6387 = vsel %vm3665, %v6355, %v5745
        %v6388 = vsel %vm3665, %v6356, %v5747
        %v6389 = vsel %vm3665, %v6357, %v5749
        %v6390 = vsel %vm3698, %v6358, %v5815
        %v6391 = vsel %vm3698, %v6359, %v5817
        %v6392 = vsel %vm3698, %v6360, %v5819
        %v6393 = vsel %vm3698, %v6361, %v5821
        %v6394 = vsel %vm3698, %v6362, %v5823
        %v6395 = vsel %vm3698, %v6363, %v5825
        %v6396 = vsel %vm3698, %v6364, %v5827
        %v6397 = vsel %vm3698, %v6365, %v5829
        %v6398 = vsel %vm3698, %v6366, %v5831
        %v6399 = vsel %vm3698, %v6367, %v5833
        %v6400 = vsel %vm3698, %v6368, %v5835
        %v6401 = vsel %vm3698, %v6369, %v5837
        %v6402 = vsel %vm3698, %v6370, %v5839
        %v6403 = vsel %vm3698, %v6371, %v5841
        %v6404 = vsel %vm3698, %v6372, %v5843
        %v6405 = vsel %vm3698, %v6373, %v5845
        %v6406 = vsel %vm3698, %v6374, %v5847
        %v6407 = vsel %vm3698, %v6375, %v5849
        %v6408 = vsel %vm3698, %v6376, %v5851
        %v6409 = vsel %vm3698, %v6377, %v5853
        %v6410 = vsel %vm3698, %v6378, %v5855
        %v6411 = vsel %vm3698, %v6379, %v5857
        %v6412 = vsel %vm3698, %v6380, %v5859
        %v6413 = vsel %vm3698, %v6381, %v5861
        %v6414 = vsel %vm3698, %v6382, %v5863
        %v6415 = vsel %vm3698, %v6383, %v5865
        %v6416 = vsel %vm3698, %v6384, %v5867
        %v6417 = vsel %vm3698, %v6385, %v5869
        %v6418 = vsel %vm3698, %v6386, %v5871
        %v6419 = vsel %vm3698, %v6387, %v5873
        %v6420 = vsel %vm3698, %v6388, %v5875
        %v6421 = vsel %vm3698, %v6389, %v5877
        %v6422 = vsel %vm3731, %v6390, %v5943
        %v6423 = vsel %vm3731, %v6391, %v5945
        %v6424 = vsel %vm3731, %v6392, %v5947
        %v6425 = vsel %vm3731, %v6393, %v5949
        %v6426 = vsel %vm3731, %v6394, %v5951
        %v6427 = vsel %vm3731, %v6395, %v5953
        %v6428 = vsel %vm3731, %v6396, %v5955
        %v6429 = vsel %vm3731, %v6397, %v5957
        %v6430 = vsel %vm3731, %v6398, %v5959
        %v6431 = vsel %vm3731, %v6399, %v5961
        %v6432 = vsel %vm3731, %v6400, %v5963
        %v6433 = vsel %vm3731, %v6401, %v5965
        %v6434 = vsel %vm3731, %v6402, %v5967
        %v6435 = vsel %vm3731, %v6403, %v5969
        %v6436 = vsel %vm3731, %v6404, %v5971
        %v6437 = vsel %vm3731, %v6405, %v5973
        %v6438 = vsel %vm3731, %v6406, %v5975
        %v6439 = vsel %vm3731, %v6407, %v5977
        %v6440 = vsel %vm3731, %v6408, %v5979
        %v6441 = vsel %vm3731, %v6409, %v5981
        %v6442 = vsel %vm3731, %v6410, %v5983
        %v6443 = vsel %vm3731, %v6411, %v5985
        %v6444 = vsel %vm3731, %v6412, %v5987
        %v6445 = vsel %vm3731, %v6413, %v5989
        %v6446 = vsel %vm3731, %v6414, %v5991
        %v6447 = vsel %vm3731, %v6415, %v5993
        %v6448 = vsel %vm3731, %v6416, %v5995
        %v6449 = vsel %vm3731, %v6417, %v5997
        %v6450 = vsel %vm3731, %v6418, %v5999
        %v6451 = vsel %vm3731, %v6419, %v6001
        %v6452 = vsel %vm3731, %v6420, %v6003
        %v6453 = vsel %vm3731, %v6421, %v6005
        %v6454 = vsel %vm3764, %v6422, %v6071
        %v6455 = vsel %vm3764, %v6423, %v6073
        %v6456 = vsel %vm3764, %v6424, %v6075
        %v6457 = vsel %vm3764, %v6425, %v6077
        %v6458 = vsel %vm3764, %v6426, %v6079
        %v6459 = vsel %vm3764, %v6427, %v6081
        %v6460 = vsel %vm3764, %v6428, %v6083
        %v6461 = vsel %vm3764, %v6429, %v6085
        %v6462 = vsel %vm3764, %v6430, %v6087
        %v6463 = vsel %vm3764, %v6431, %v6089
        %v6464 = vsel %vm3764, %v6432, %v6091
        %v6465 = vsel %vm3764, %v6433, %v6093
        %v6466 = vsel %vm3764, %v6434, %v6095
        %v6467 = vsel %vm3764, %v6435, %v6097
        %v6468 = vsel %vm3764, %v6436, %v6099
        %v6469 = vsel %vm3764, %v6437, %v6101
        %v6470 = vsel %vm3764, %v6438, %v6103
        %v6471 = vsel %vm3764, %v6439, %v6105
        %v6472 = vsel %vm3764, %v6440, %v6107
        %v6473 = vsel %vm3764, %v6441, %v6109
        %v6474 = vsel %vm3764, %v6442, %v6111
        %v6475 = vsel %vm3764, %v6443, %v6113
        %v6476 = vsel %vm3764, %v6444, %v6115
        %v6477 = vsel %vm3764, %v6445, %v6117
        %v6478 = vsel %vm3764, %v6446, %v6119
        %v6479 = vsel %vm3764, %v6447, %v6121
        %v6480 = vsel %vm3764, %v6448, %v6123
        %v6481 = vsel %vm3764, %v6449, %v6125
        %v6482 = vsel %vm3764, %v6450, %v6127
        %v6483 = vsel %vm3764, %v6451, %v6129
        %v6484 = vsel %vm3764, %v6452, %v6131
        %v6485 = vsel %vm3764, %v6453, %v6133
        %v6486 = vsel %vm3797, %v6454, %v6199
        %v6487 = vsel %vm3797, %v6455, %v6201
        %v6488 = vsel %vm3797, %v6456, %v6203
        %v6489 = vsel %vm3797, %v6457, %v6205
        %v6490 = vsel %vm3797, %v6458, %v6207
        %v6491 = vsel %vm3797, %v6459, %v6209
        %v6492 = vsel %vm3797, %v6460, %v6211
        %v6493 = vsel %vm3797, %v6461, %v6213
        %v6494 = vsel %vm3797, %v6462, %v6215
        %v6495 = vsel %vm3797, %v6463, %v6217
        %v6496 = vsel %vm3797, %v6464, %v6219
        %v6497 = vsel %vm3797, %v6465, %v6221
        %v6498 = vsel %vm3797, %v6466, %v6223
        %v6499 = vsel %vm3797, %v6467, %v6225
        %v6500 = vsel %vm3797, %v6468, %v6227
        %v6501 = vsel %vm3797, %v6469, %v6229
        %v6502 = vsel %vm3797, %v6470, %v6231
        %v6503 = vsel %vm3797, %v6471, %v6233
        %v6504 = vsel %vm3797, %v6472, %v6235
        %v6505 = vsel %vm3797, %v6473, %v6237
        %v6506 = vsel %vm3797, %v6474, %v6239
        %v6507 = vsel %vm3797, %v6475, %v6241
        %v6508 = vsel %vm3797, %v6476, %v6243
        %v6509 = vsel %vm3797, %v6477, %v6245
        %v6510 = vsel %vm3797, %v6478, %v6247
        %v6511 = vsel %vm3797, %v6479, %v6249
        %v6512 = vsel %vm3797, %v6480, %v6251
        %v6513 = vsel %vm3797, %v6481, %v6253
        %v6514 = vsel %vm3797, %v6482, %v6255
        %v6515 = vsel %vm3797, %v6483, %v6257
        %v6516 = vsel %vm3797, %v6484, %v6259
        %v6517 = vsel %vm3797, %v6485, %v6261
        %v6550 = vrot.slane %v6486, 7
        %v6551 = vrot.slane %v6487, 7
        %v6552 = vrot.slane %v6488, 7
        %v6553 = vrot.slane %v6489, 7
        %v6554 = vrot.slane %v6490, 7
        %v6555 = vrot.slane %v6491, 7
        %v6556 = vrot.slane %v6492, 7
        %v6557 = vrot.slane %v6493, 7
        %v6558 = vrot.slane %v6494, 7
        %v6559 = vrot.slane %v6495, 7
        %v6560 = vrot.slane %v6496, 7
        %v6561 = vrot.slane %v6497, 7
        %v6562 = vrot.slane %v6498, 7
        %v6563 = vrot.slane %v6499, 7
        %v6564 = vrot.slane %v6500, 7
        %v6565 = vrot.slane %v6501, 7
        %v6566 = vrot.slane %v6502, 7
        %v6567 = vrot.slane %v6503, 7
        %v6568 = vrot.slane %v6504, 7
        %v6569 = vrot.slane %v6505, 7
        %v6570 = vrot.slane %v6506, 7
        %v6571 = vrot.slane %v6507, 7
        %v6572 = vrot.slane %v6508, 7
        %v6573 = vrot.slane %v6509, 7
        %v6574 = vrot.slane %v6510, 7
        %v6575 = vrot.slane %v6511, 7
        %v6576 = vrot.slane %v6512, 7
        %v6577 = vrot.slane %v6513, 7
        %v6578 = vrot.slane %v6514, 7
        %v6579 = vrot.slane %v6515, 7
        %v6580 = vrot.slane %v6516, 7
        %v6581 = vrot.slane %v6517, 7
        %vm6614 = vcmask 1040384
        %v6615 = vsel %vm6614, %v3798, %v6550
        %v6616 = vsel %vm6614, %v3799, %v6551
        %v6617 = vsel %vm6614, %v3800, %v6552
        %v6618 = vsel %vm6614, %v3801, %v6553
        %v6619 = vsel %vm6614, %v3802, %v6554
        %v6620 = vsel %vm6614, %v3803, %v6555
        %v6621 = vsel %vm6614, %v3804, %v6556
        %v6622 = vsel %vm6614, %v3805, %v6557
        %v6623 = vsel %vm6614, %v3806, %v6558
        %v6624 = vsel %vm6614, %v3807, %v6559
        %v6625 = vsel %vm6614, %v3808, %v6560
        %v6626 = vsel %vm6614, %v3809, %v6561
        %v6627 = vsel %vm6614, %v3810, %v6562
        %v6628 = vsel %vm6614, %v3811, %v6563
        %v6629 = vsel %vm6614, %v3812, %v6564
        %v6630 = vsel %vm6614, %v3813, %v6565
        %v6631 = vsel %vm6614, %v3814, %v6566
        %v6632 = vsel %vm6614, %v3815, %v6567
        %v6633 = vsel %vm6614, %v3816, %v6568
        %v6634 = vsel %vm6614, %v3817, %v6569
        %v6635 = vsel %vm6614, %v3818, %v6570
        %v6636 = vsel %vm6614, %v3819, %v6571
        %v6637 = vsel %vm6614, %v3820, %v6572
        %v6638 = vsel %vm6614, %v3821, %v6573
        %v6639 = vsel %vm6614, %v3822, %v6574
        %v6640 = vsel %vm6614, %v3823, %v6575
        %v6641 = vsel %vm6614, %v3824, %v6576
        %v6642 = vsel %vm6614, %v3825, %v6577
        %v6643 = vsel %vm6614, %v3826, %v6578
        %v6644 = vsel %vm6614, %v3827, %v6579
        %v6645 = vsel %vm6614, %v3828, %v6580
        %v6646 = vsel %vm6614, %v3829, %v6581
        %v6679 = vcombine.low %v6615, %v6616
        %v6680 = vcombine.low %v6617, %v6618
        %v6682 = vunpack.c.l.s4 1983009808
        %v6683 = vunpack.c.0.s8 %v6682
        %v6684 = vlaneseq
        %v6685 = vshrl.u32 %v6684, 7
        %v6686 = vsub.s32 %v6683, %v6685
        %v6687 = vrot.slane %v6679, %v6686
        %v6689 = vunpack.c.l.s4 1983009808
        %v6690 = vunpack.c.0.s8 %v6689
        %v6691 = vlaneseq
        %v6692 = vshrl.u32 %v6691, 7
        %v6693 = vsub.s32 %v6690, %v6692
        %v6694 = vrot.slane %v6680, %v6693
        %v6695 = vcombine.low %v6687, %v6694
        %v6696 = vcombine.low %v6619, %v6620
        %v6697 = vcombine.low %v6621, %v6622
        %v6699 = vunpack.c.l.s4 1983009808
        %v6700 = vunpack.c.0.s8 %v6699
        %v6701 = vlaneseq
        %v6702 = vshrl.u32 %v6701, 7
        %v6703 = vsub.s32 %v6700, %v6702
        %v6704 = vrot.slane %v6696, %v6703
        %v6706 = vunpack.c.l.s4 1983009808
        %v6707 = vunpack.c.0.s8 %v6706
        %v6708 = vlaneseq
        %v6709 = vshrl.u32 %v6708, 7
        %v6710 = vsub.s32 %v6707, %v6709
        %v6711 = vrot.slane %v6697, %v6710
        %v6712 = vcombine.low %v6704, %v6711
        %v6713 = vcombine.low %v6623, %v6624
        %v6714 = vcombine.low %v6625, %v6626
        %v6716 = vunpack.c.l.s4 1983009808
        %v6717 = vunpack.c.0.s8 %v6716
        %v6718 = vlaneseq
        %v6719 = vshrl.u32 %v6718, 7
        %v6720 = vsub.s32 %v6717, %v6719
        %v6721 = vrot.slane %v6713, %v6720
        %v6723 = vunpack.c.l.s4 1983009808
        %v6724 = vunpack.c.0.s8 %v6723
        %v6725 = vlaneseq
        %v6726 = vshrl.u32 %v6725, 7
        %v6727 = vsub.s32 %v6724, %v6726
        %v6728 = vrot.slane %v6714, %v6727
        %v6729 = vcombine.low %v6721, %v6728
        %v6730 = vcombine.low %v6627, %v6628
        %v6731 = vcombine.low %v6629, %v6630
        %v6733 = vunpack.c.l.s4 1983009808
        %v6734 = vunpack.c.0.s8 %v6733
        %v6735 = vlaneseq
        %v6736 = vshrl.u32 %v6735, 7
        %v6737 = vsub.s32 %v6734, %v6736
        %v6738 = vrot.slane %v6730, %v6737
        %v6740 = vunpack.c.l.s4 1983009808
        %v6741 = vunpack.c.0.s8 %v6740
        %v6742 = vlaneseq
        %v6743 = vshrl.u32 %v6742, 7
        %v6744 = vsub.s32 %v6741, %v6743
        %v6745 = vrot.slane %v6731, %v6744
        %v6746 = vcombine.low %v6738, %v6745
        %v6747 = vcombine.low %v6631, %v6632
        %v6748 = vcombine.low %v6633, %v6634
        %v6750 = vunpack.c.l.s4 1983009808
        %v6751 = vunpack.c.0.s8 %v6750
        %v6752 = vlaneseq
        %v6753 = vshrl.u32 %v6752, 7
        %v6754 = vsub.s32 %v6751, %v6753
        %v6755 = vrot.slane %v6747, %v6754
        %v6757 = vunpack.c.l.s4 1983009808
        %v6758 = vunpack.c.0.s8 %v6757
        %v6759 = vlaneseq
        %v6760 = vshrl.u32 %v6759, 7
        %v6761 = vsub.s32 %v6758, %v6760
        %v6762 = vrot.slane %v6748, %v6761
        %v6763 = vcombine.low %v6755, %v6762
        %v6764 = vcombine.low %v6635, %v6636
        %v6765 = vcombine.low %v6637, %v6638
        %v6767 = vunpack.c.l.s4 1983009808
        %v6768 = vunpack.c.0.s8 %v6767
        %v6769 = vlaneseq
        %v6770 = vshrl.u32 %v6769, 7
        %v6771 = vsub.s32 %v6768, %v6770
        %v6772 = vrot.slane %v6764, %v6771
        %v6774 = vunpack.c.l.s4 1983009808
        %v6775 = vunpack.c.0.s8 %v6774
        %v6776 = vlaneseq
        %v6777 = vshrl.u32 %v6776, 7
        %v6778 = vsub.s32 %v6775, %v6777
        %v6779 = vrot.slane %v6765, %v6778
        %v6780 = vcombine.low %v6772, %v6779
        %v6781 = vcombine.low %v6639, %v6640
        %v6782 = vcombine.low %v6641, %v6642
        %v6784 = vunpack.c.l.s4 1983009808
        %v6785 = vunpack.c.0.s8 %v6784
        %v6786 = vlaneseq
        %v6787 = vshrl.u32 %v6786, 7
        %v6788 = vsub.s32 %v6785, %v6787
        %v6789 = vrot.slane %v6781, %v6788
        %v6791 = vunpack.c.l.s4 1983009808
        %v6792 = vunpack.c.0.s8 %v6791
        %v6793 = vlaneseq
        %v6794 = vshrl.u32 %v6793, 7
        %v6795 = vsub.s32 %v6792, %v6794
        %v6796 = vrot.slane %v6782, %v6795
        %v6797 = vcombine.low %v6789, %v6796
        %v6798 = vcombine.low %v6643, %v6644
        %v6799 = vcombine.low %v6645, %v6646
        %v6801 = vunpack.c.l.s4 1983009808
        %v6802 = vunpack.c.0.s8 %v6801
        %v6803 = vlaneseq
        %v6804 = vshrl.u32 %v6803, 7
        %v6805 = vsub.s32 %v6802, %v6804
        %v6806 = vrot.slane %v6798, %v6805
        %v6808 = vunpack.c.l.s4 1983009808
        %v6809 = vunpack.c.0.s8 %v6808
        %v6810 = vlaneseq
        %v6811 = vshrl.u32 %v6810, 7
        %v6812 = vsub.s32 %v6809, %v6811
        %v6813 = vrot.slane %v6799, %v6812
        %v6814 = vcombine.low %v6806, %v6813
        %vm6823 = vcmask 130048
        %6824 = vst.msk [vmem:[%s152] sm:$0xff] %vm6823, %v6695
        %6825 = vst.msk [vmem:[%s152 + $0x8] sm:$0xff] %vm6823, %v6712
        %6826 = vst.msk [vmem:[%s152 + $0x20] sm:$0xff] %vm6823, %v6729
        %6827 = vst.msk [vmem:[%s152 + $0x28] sm:$0xff] %vm6823, %v6746
        %6828 = vst.msk [vmem:[%s152 + $0x40] sm:$0xff] %vm6823, %v6763
        %6829 = vst.msk [vmem:[%s152 + $0x48] sm:$0xff] %vm6823, %v6780
        %6830 = vst.msk [vmem:[%s152 + $0x60] sm:$0xff] %vm6823, %v6797
        %6831 = vst.msk [vmem:[%s152 + $0x68] sm:$0xff] %vm6823, %v6814
        %s6832 = scalar_lea.vmem %s134, 128 [#allocation2]
        %v6833 = vld [vmem:[%s6832] sm:$0xff]
        %v6834 = vld [vmem:[%s6832 + $0x8] sm:$0xff]
        %v6835 = vld [vmem:[%s6832 + $0x10] sm:$0xff]
        %v6836 = vld [vmem:[%s6832 + $0x18] sm:$0xff]
        %s6837 = scalar_lea.vmem %s134, 160 [#allocation2]
        %v6838 = vld [vmem:[%s6837] sm:$0xff]
        %v6839 = vld [vmem:[%s6837 + $0x8] sm:$0xff]
        %v6840 = vld [vmem:[%s6837 + $0x10] sm:$0xff]
        %v6841 = vld [vmem:[%s6837 + $0x18] sm:$0xff]
        %v6842 = vlaneseq
        %v6843 = vshrl.u32 %v6842, 7
        %v6844 = vsub.s32 0, %v6843
        %v6845 = vrot.slane %v6833, %v6844
        %6847 = vbcast.lane.b32.xlu0 %v6845, 256
        %v6848 = vpop.permute.xlu0 %6847
        %v6849 = vlaneseq
        %v6850 = vshrl.u32 %v6849, 7
        %v6851 = vsub.s32 1, %v6850
        %v6852 = vrot.slane %v6833, %v6851
        %6854 = vbcast.lane.b32.xlu0 %v6852, 256
        %v6855 = vpop.permute.xlu0 %6854
        %v6856 = vlaneseq
        %v6857 = vshrl.u32 %v6856, 7
        %v6858 = vsub.s32 2, %v6857
        %v6859 = vrot.slane %v6833, %v6858
        %6861 = vbcast.lane.b32.xlu0 %v6859, 256
        %v6862 = vpop.permute.xlu0 %6861
        %v6863 = vlaneseq
        %v6864 = vshrl.u32 %v6863, 7
        %v6865 = vsub.s32 3, %v6864
        %v6866 = vrot.slane %v6833, %v6865
        %6868 = vbcast.lane.b32.xlu0 %v6866, 256
        %v6869 = vpop.permute.xlu0 %6868
        %v6870 = vlaneseq
        %v6871 = vshrl.u32 %v6870, 7
        %v6872 = vsub.s32 4, %v6871
        %v6873 = vrot.slane %v6833, %v6872
        %6875 = vbcast.lane.b32.xlu0 %v6873, 256
        %v6876 = vpop.permute.xlu0 %6875
        %v6877 = vlaneseq
        %v6878 = vshrl.u32 %v6877, 7
        %v6879 = vsub.s32 5, %v6878
        %v6880 = vrot.slane %v6833, %v6879
        %6882 = vbcast.lane.b32.xlu0 %v6880, 256
        %v6883 = vpop.permute.xlu0 %6882
        %v6884 = vlaneseq
        %v6885 = vshrl.u32 %v6884, 7
        %v6886 = vsub.s32 6, %v6885
        %v6887 = vrot.slane %v6833, %v6886
        %6889 = vbcast.lane.b32.xlu0 %v6887, 256
        %v6890 = vpop.permute.xlu0 %6889
        %v6891 = vlaneseq
        %v6892 = vshrl.u32 %v6891, 7
        %v6893 = vsub.s32 7, %v6892
        %v6894 = vrot.slane %v6833, %v6893
        %6896 = vbcast.lane.b32.xlu0 %v6894, 256
        %v6897 = vpop.permute.xlu0 %6896
        %v6898 = vlaneseq
        %v6899 = vshrl.u32 %v6898, 7
        %v6900 = vsub.s32 0, %v6899
        %v6901 = vrot.slane %v6834, %v6900
        %6903 = vbcast.lane.b32.xlu0 %v6901, 256
        %v6904 = vpop.permute.xlu0 %6903
        %v6905 = vlaneseq
        %v6906 = vshrl.u32 %v6905, 7
        %v6907 = vsub.s32 1, %v6906
        %v6908 = vrot.slane %v6834, %v6907
        %6910 = vbcast.lane.b32.xlu0 %v6908, 256
        %v6911 = vpop.permute.xlu0 %6910
        %v6912 = vlaneseq
        %v6913 = vshrl.u32 %v6912, 7
        %v6914 = vsub.s32 2, %v6913
        %v6915 = vrot.slane %v6834, %v6914
        %6917 = vbcast.lane.b32.xlu0 %v6915, 256
        %v6918 = vpop.permute.xlu0 %6917
        %v6919 = vlaneseq
        %v6920 = vshrl.u32 %v6919, 7
        %v6921 = vsub.s32 3, %v6920
        %v6922 = vrot.slane %v6834, %v6921
        %6924 = vbcast.lane.b32.xlu0 %v6922, 256
        %v6925 = vpop.permute.xlu0 %6924
        %v6926 = vlaneseq
        %v6927 = vshrl.u32 %v6926, 7
        %v6928 = vsub.s32 4, %v6927
        %v6929 = vrot.slane %v6834, %v6928
        %6931 = vbcast.lane.b32.xlu0 %v6929, 256
        %v6932 = vpop.permute.xlu0 %6931
        %v6933 = vlaneseq
        %v6934 = vshrl.u32 %v6933, 7
        %v6935 = vsub.s32 5, %v6934
        %v6936 = vrot.slane %v6834, %v6935
        %6938 = vbcast.lane.b32.xlu0 %v6936, 256
        %v6939 = vpop.permute.xlu0 %6938
        %v6940 = vlaneseq
        %v6941 = vshrl.u32 %v6940, 7
        %v6942 = vsub.s32 6, %v6941
        %v6943 = vrot.slane %v6834, %v6942
        %6945 = vbcast.lane.b32.xlu0 %v6943, 256
        %v6946 = vpop.permute.xlu0 %6945
        %v6947 = vlaneseq
        %v6948 = vshrl.u32 %v6947, 7
        %v6949 = vsub.s32 7, %v6948
        %v6950 = vrot.slane %v6834, %v6949
        %6952 = vbcast.lane.b32.xlu0 %v6950, 256
        %v6953 = vpop.permute.xlu0 %6952
        %v6954 = vlaneseq
        %v6955 = vshrl.u32 %v6954, 7
        %v6956 = vsub.s32 0, %v6955
        %v6957 = vrot.slane %v6835, %v6956
        %6959 = vbcast.lane.b32.xlu0 %v6957, 256
        %v6960 = vpop.permute.xlu0 %6959
        %v6961 = vlaneseq
        %v6962 = vshrl.u32 %v6961, 7
        %v6963 = vsub.s32 1, %v6962
        %v6964 = vrot.slane %v6835, %v6963
        %6966 = vbcast.lane.b32.xlu0 %v6964, 256
        %v6967 = vpop.permute.xlu0 %6966
        %v6968 = vlaneseq
        %v6969 = vshrl.u32 %v6968, 7
        %v6970 = vsub.s32 2, %v6969
        %v6971 = vrot.slane %v6835, %v6970
        %6973 = vbcast.lane.b32.xlu0 %v6971, 256
        %v6974 = vpop.permute.xlu0 %6973
        %v6975 = vlaneseq
        %v6976 = vshrl.u32 %v6975, 7
        %v6977 = vsub.s32 3, %v6976
        %v6978 = vrot.slane %v6835, %v6977
        %6980 = vbcast.lane.b32.xlu0 %v6978, 256
        %v6981 = vpop.permute.xlu0 %6980
        %v6982 = vlaneseq
        %v6983 = vshrl.u32 %v6982, 7
        %v6984 = vsub.s32 4, %v6983
        %v6985 = vrot.slane %v6835, %v6984
        %6987 = vbcast.lane.b32.xlu0 %v6985, 256
        %v6988 = vpop.permute.xlu0 %6987
        %v6989 = vlaneseq
        %v6990 = vshrl.u32 %v6989, 7
        %v6991 = vsub.s32 5, %v6990
        %v6992 = vrot.slane %v6835, %v6991
        %6994 = vbcast.lane.b32.xlu0 %v6992, 256
        %v6995 = vpop.permute.xlu0 %6994
        %v6996 = vlaneseq
        %v6997 = vshrl.u32 %v6996, 7
        %v6998 = vsub.s32 6, %v6997
        %v6999 = vrot.slane %v6835, %v6998
        %7001 = vbcast.lane.b32.xlu0 %v6999, 256
        %v7002 = vpop.permute.xlu0 %7001
        %v7003 = vlaneseq
        %v7004 = vshrl.u32 %v7003, 7
        %v7005 = vsub.s32 7, %v7004
        %v7006 = vrot.slane %v6835, %v7005
        %7008 = vbcast.lane.b32.xlu0 %v7006, 256
        %v7009 = vpop.permute.xlu0 %7008
        %v7010 = vlaneseq
        %v7011 = vshrl.u32 %v7010, 7
        %v7012 = vsub.s32 0, %v7011
        %v7013 = vrot.slane %v6836, %v7012
        %7015 = vbcast.lane.b32.xlu0 %v7013, 256
        %v7016 = vpop.permute.xlu0 %7015
        %v7017 = vlaneseq
        %v7018 = vshrl.u32 %v7017, 7
        %v7019 = vsub.s32 1, %v7018
        %v7020 = vrot.slane %v6836, %v7019
        %7022 = vbcast.lane.b32.xlu0 %v7020, 256
        %v7023 = vpop.permute.xlu0 %7022
        %v7024 = vlaneseq
        %v7025 = vshrl.u32 %v7024, 7
        %v7026 = vsub.s32 2, %v7025
        %v7027 = vrot.slane %v6836, %v7026
        %7029 = vbcast.lane.b32.xlu0 %v7027, 256
        %v7030 = vpop.permute.xlu0 %7029
        %v7031 = vlaneseq
        %v7032 = vshrl.u32 %v7031, 7
        %v7033 = vsub.s32 3, %v7032
        %v7034 = vrot.slane %v6836, %v7033
        %7036 = vbcast.lane.b32.xlu0 %v7034, 256
        %v7037 = vpop.permute.xlu0 %7036
        %v7038 = vlaneseq
        %v7039 = vshrl.u32 %v7038, 7
        %v7040 = vsub.s32 4, %v7039
        %v7041 = vrot.slane %v6836, %v7040
        %7043 = vbcast.lane.b32.xlu0 %v7041, 256
        %v7044 = vpop.permute.xlu0 %7043
        %v7045 = vlaneseq
        %v7046 = vshrl.u32 %v7045, 7
        %v7047 = vsub.s32 5, %v7046
        %v7048 = vrot.slane %v6836, %v7047
        %7050 = vbcast.lane.b32.xlu0 %v7048, 256
        %v7051 = vpop.permute.xlu0 %7050
        %v7052 = vlaneseq
        %v7053 = vshrl.u32 %v7052, 7
        %v7054 = vsub.s32 6, %v7053
        %v7055 = vrot.slane %v6836, %v7054
        %7057 = vbcast.lane.b32.xlu0 %v7055, 256
        %v7058 = vpop.permute.xlu0 %7057
        %v7059 = vlaneseq
        %v7060 = vshrl.u32 %v7059, 7
        %v7061 = vsub.s32 7, %v7060
        %v7062 = vrot.slane %v6836, %v7061
        %7064 = vbcast.lane.b32.xlu0 %v7062, 256
        %v7065 = vpop.permute.xlu0 %7064
        %v7066 = vlaneseq
        %v7067 = vshrl.u32 %v7066, 7
        %v7068 = vsub.s32 0, %v7067
        %v7069 = vrot.slane %v6838, %v7068
        %7071 = vbcast.lane.b32.xlu0 %v7069, 256
        %v7072 = vpop.permute.xlu0 %7071
        %v7073 = vlaneseq
        %v7074 = vshrl.u32 %v7073, 7
        %v7075 = vsub.s32 1, %v7074
        %v7076 = vrot.slane %v6838, %v7075
        %7078 = vbcast.lane.b32.xlu0 %v7076, 256
        %v7079 = vpop.permute.xlu0 %7078
        %v7080 = vlaneseq
        %v7081 = vshrl.u32 %v7080, 7
        %v7082 = vsub.s32 2, %v7081
        %v7083 = vrot.slane %v6838, %v7082
        %7085 = vbcast.lane.b32.xlu0 %v7083, 256
        %v7086 = vpop.permute.xlu0 %7085
        %v7087 = vlaneseq
        %v7088 = vshrl.u32 %v7087, 7
        %v7089 = vsub.s32 3, %v7088
        %v7090 = vrot.slane %v6838, %v7089
        %7092 = vbcast.lane.b32.xlu0 %v7090, 256
        %v7093 = vpop.permute.xlu0 %7092
        %v7094 = vlaneseq
        %v7095 = vshrl.u32 %v7094, 7
        %v7096 = vsub.s32 4, %v7095
        %v7097 = vrot.slane %v6838, %v7096
        %7099 = vbcast.lane.b32.xlu0 %v7097, 256
        %v7100 = vpop.permute.xlu0 %7099
        %v7101 = vlaneseq
        %v7102 = vshrl.u32 %v7101, 7
        %v7103 = vsub.s32 5, %v7102
        %v7104 = vrot.slane %v6838, %v7103
        %7106 = vbcast.lane.b32.xlu0 %v7104, 256
        %v7107 = vpop.permute.xlu0 %7106
        %v7108 = vlaneseq
        %v7109 = vshrl.u32 %v7108, 7
        %v7110 = vsub.s32 6, %v7109
        %v7111 = vrot.slane %v6838, %v7110
        %7113 = vbcast.lane.b32.xlu0 %v7111, 256
        %v7114 = vpop.permute.xlu0 %7113
        %v7115 = vlaneseq
        %v7116 = vshrl.u32 %v7115, 7
        %v7117 = vsub.s32 7, %v7116
        %v7118 = vrot.slane %v6838, %v7117
        %7120 = vbcast.lane.b32.xlu0 %v7118, 256
        %v7121 = vpop.permute.xlu0 %7120
        %v7122 = vlaneseq
        %v7123 = vshrl.u32 %v7122, 7
        %v7124 = vsub.s32 0, %v7123
        %v7125 = vrot.slane %v6839, %v7124
        %7127 = vbcast.lane.b32.xlu0 %v7125, 256
        %v7128 = vpop.permute.xlu0 %7127
        %v7129 = vlaneseq
        %v7130 = vshrl.u32 %v7129, 7
        %v7131 = vsub.s32 1, %v7130
        %v7132 = vrot.slane %v6839, %v7131
        %7134 = vbcast.lane.b32.xlu0 %v7132, 256
        %v7135 = vpop.permute.xlu0 %7134
        %v7136 = vlaneseq
        %v7137 = vshrl.u32 %v7136, 7
        %v7138 = vsub.s32 2, %v7137
        %v7139 = vrot.slane %v6839, %v7138
        %7141 = vbcast.lane.b32.xlu0 %v7139, 256
        %v7142 = vpop.permute.xlu0 %7141
        %v7143 = vlaneseq
        %v7144 = vshrl.u32 %v7143, 7
        %v7145 = vsub.s32 3, %v7144
        %v7146 = vrot.slane %v6839, %v7145
        %7148 = vbcast.lane.b32.xlu0 %v7146, 256
        %v7149 = vpop.permute.xlu0 %7148
        %v7150 = vlaneseq
        %v7151 = vshrl.u32 %v7150, 7
        %v7152 = vsub.s32 4, %v7151
        %v7153 = vrot.slane %v6839, %v7152
        %7155 = vbcast.lane.b32.xlu0 %v7153, 256
        %v7156 = vpop.permute.xlu0 %7155
        %v7157 = vlaneseq
        %v7158 = vshrl.u32 %v7157, 7
        %v7159 = vsub.s32 5, %v7158
        %v7160 = vrot.slane %v6839, %v7159
        %7162 = vbcast.lane.b32.xlu0 %v7160, 256
        %v7163 = vpop.permute.xlu0 %7162
        %v7164 = vlaneseq
        %v7165 = vshrl.u32 %v7164, 7
        %v7166 = vsub.s32 6, %v7165
        %v7167 = vrot.slane %v6839, %v7166
        %7169 = vbcast.lane.b32.xlu0 %v7167, 256
        %v7170 = vpop.permute.xlu0 %7169
        %v7171 = vlaneseq
        %v7172 = vshrl.u32 %v7171, 7
        %v7173 = vsub.s32 7, %v7172
        %v7174 = vrot.slane %v6839, %v7173
        %7176 = vbcast.lane.b32.xlu0 %v7174, 256
        %v7177 = vpop.permute.xlu0 %7176
        %v7178 = vlaneseq
        %v7179 = vshrl.u32 %v7178, 7
        %v7180 = vsub.s32 0, %v7179
        %v7181 = vrot.slane %v6840, %v7180
        %7183 = vbcast.lane.b32.xlu0 %v7181, 256
        %v7184 = vpop.permute.xlu0 %7183
        %v7185 = vlaneseq
        %v7186 = vshrl.u32 %v7185, 7
        %v7187 = vsub.s32 1, %v7186
        %v7188 = vrot.slane %v6840, %v7187
        %7190 = vbcast.lane.b32.xlu0 %v7188, 256
        %v7191 = vpop.permute.xlu0 %7190
        %v7192 = vlaneseq
        %v7193 = vshrl.u32 %v7192, 7
        %v7194 = vsub.s32 2, %v7193
        %v7195 = vrot.slane %v6840, %v7194
        %7197 = vbcast.lane.b32.xlu0 %v7195, 256
        %v7198 = vpop.permute.xlu0 %7197
        %v7199 = vlaneseq
        %v7200 = vshrl.u32 %v7199, 7
        %v7201 = vsub.s32 3, %v7200
        %v7202 = vrot.slane %v6840, %v7201
        %7204 = vbcast.lane.b32.xlu0 %v7202, 256
        %v7205 = vpop.permute.xlu0 %7204
        %v7206 = vlaneseq
        %v7207 = vshrl.u32 %v7206, 7
        %v7208 = vsub.s32 4, %v7207
        %v7209 = vrot.slane %v6840, %v7208
        %7211 = vbcast.lane.b32.xlu0 %v7209, 256
        %v7212 = vpop.permute.xlu0 %7211
        %v7213 = vlaneseq
        %v7214 = vshrl.u32 %v7213, 7
        %v7215 = vsub.s32 5, %v7214
        %v7216 = vrot.slane %v6840, %v7215
        %7218 = vbcast.lane.b32.xlu0 %v7216, 256
        %v7219 = vpop.permute.xlu0 %7218
        %v7220 = vlaneseq
        %v7221 = vshrl.u32 %v7220, 7
        %v7222 = vsub.s32 6, %v7221
        %v7223 = vrot.slane %v6840, %v7222
        %7225 = vbcast.lane.b32.xlu0 %v7223, 256
        %v7226 = vpop.permute.xlu0 %7225
        %v7227 = vlaneseq
        %v7228 = vshrl.u32 %v7227, 7
        %v7229 = vsub.s32 7, %v7228
        %v7230 = vrot.slane %v6840, %v7229
        %7232 = vbcast.lane.b32.xlu0 %v7230, 256
        %v7233 = vpop.permute.xlu0 %7232
        %v7234 = vlaneseq
        %v7235 = vshrl.u32 %v7234, 7
        %v7236 = vsub.s32 0, %v7235
        %v7237 = vrot.slane %v6841, %v7236
        %7239 = vbcast.lane.b32.xlu0 %v7237, 256
        %v7240 = vpop.permute.xlu0 %7239
        %v7241 = vlaneseq
        %v7242 = vshrl.u32 %v7241, 7
        %v7243 = vsub.s32 1, %v7242
        %v7244 = vrot.slane %v6841, %v7243
        %7246 = vbcast.lane.b32.xlu0 %v7244, 256
        %v7247 = vpop.permute.xlu0 %7246
        %v7248 = vlaneseq
        %v7249 = vshrl.u32 %v7248, 7
        %v7250 = vsub.s32 2, %v7249
        %v7251 = vrot.slane %v6841, %v7250
        %7253 = vbcast.lane.b32.xlu0 %v7251, 256
        %v7254 = vpop.permute.xlu0 %7253
        %v7255 = vlaneseq
        %v7256 = vshrl.u32 %v7255, 7
        %v7257 = vsub.s32 3, %v7256
        %v7258 = vrot.slane %v6841, %v7257
        %7260 = vbcast.lane.b32.xlu0 %v7258, 256
        %v7261 = vpop.permute.xlu0 %7260
        %v7262 = vlaneseq
        %v7263 = vshrl.u32 %v7262, 7
        %v7264 = vsub.s32 4, %v7263
        %v7265 = vrot.slane %v6841, %v7264
        %7267 = vbcast.lane.b32.xlu0 %v7265, 256
        %v7268 = vpop.permute.xlu0 %7267
        %v7269 = vlaneseq
        %v7270 = vshrl.u32 %v7269, 7
        %v7271 = vsub.s32 5, %v7270
        %v7272 = vrot.slane %v6841, %v7271
        %7274 = vbcast.lane.b32.xlu0 %v7272, 256
        %v7275 = vpop.permute.xlu0 %7274
        %v7276 = vlaneseq
        %v7277 = vshrl.u32 %v7276, 7
        %v7278 = vsub.s32 6, %v7277
        %v7279 = vrot.slane %v6841, %v7278
        %7281 = vbcast.lane.b32.xlu0 %v7279, 256
        %v7282 = vpop.permute.xlu0 %7281
        %v7283 = vlaneseq
        %v7284 = vshrl.u32 %v7283, 7
        %v7285 = vsub.s32 7, %v7284
        %v7286 = vrot.slane %v6841, %v7285
        %7288 = vbcast.lane.b32.xlu0 %v7286, 256
        %v7289 = vpop.permute.xlu0 %7288
        %v7290 = vsel %vm612, %v6848, %v7072
        %v7291 = vsel %vm612, %v6855, %v7079
        %v7292 = vsel %vm612, %v6862, %v7086
        %v7293 = vsel %vm612, %v6869, %v7093
        %v7294 = vsel %vm612, %v6876, %v7100
        %v7295 = vsel %vm612, %v6883, %v7107
        %v7296 = vsel %vm612, %v6890, %v7114
        %v7297 = vsel %vm612, %v6897, %v7121
        %v7298 = vsel %vm612, %v6904, %v7128
        %v7299 = vsel %vm612, %v6911, %v7135
        %v7300 = vsel %vm612, %v6918, %v7142
        %v7301 = vsel %vm612, %v6925, %v7149
        %v7302 = vsel %vm612, %v6932, %v7156
        %v7303 = vsel %vm612, %v6939, %v7163
        %v7304 = vsel %vm612, %v6946, %v7170
        %v7305 = vsel %vm612, %v6953, %v7177
        %v7306 = vsel %vm612, %v6960, %v7184
        %v7307 = vsel %vm612, %v6967, %v7191
        %v7308 = vsel %vm612, %v6974, %v7198
        %v7309 = vsel %vm612, %v6981, %v7205
        %v7310 = vsel %vm612, %v6988, %v7212
        %v7311 = vsel %vm612, %v6995, %v7219
        %v7312 = vsel %vm612, %v7002, %v7226
        %v7313 = vsel %vm612, %v7009, %v7233
        %v7314 = vsel %vm612, %v7016, %v7240
        %v7315 = vsel %vm612, %v7023, %v7247
        %v7316 = vsel %vm612, %v7030, %v7254
        %v7317 = vsel %vm612, %v7037, %v7261
        %v7318 = vsel %vm612, %v7044, %v7268
        %v7319 = vsel %vm612, %v7051, %v7275
        %v7320 = vsel %vm612, %v7058, %v7282
        %v7321 = vsel %vm612, %v7065, %v7289
        %s7322 = scalar_lea.vmem %s134, 192 [#allocation2]
        %v7323 = vld [vmem:[%s7322] sm:$0xff]
        %v7324 = vld [vmem:[%s7322 + $0x8] sm:$0xff]
        %v7325 = vld [vmem:[%s7322 + $0x10] sm:$0xff]
        %v7326 = vld [vmem:[%s7322 + $0x18] sm:$0xff]
        %s7327 = scalar_lea.vmem %s134, 224 [#allocation2]
        %v7328 = vld [vmem:[%s7327] sm:$0xff]
        %v7329 = vld [vmem:[%s7327 + $0x8] sm:$0xff]
        %v7330 = vld [vmem:[%s7327 + $0x10] sm:$0xff]
        %v7331 = vld [vmem:[%s7327 + $0x18] sm:$0xff]
        %v7332 = vlaneseq
        %v7333 = vshrl.u32 %v7332, 7
        %v7334 = vsub.s32 0, %v7333
        %v7335 = vrot.slane %v7323, %v7334
        %7337 = vbcast.lane.b32.xlu0 %v7335, 256
        %v7338 = vpop.permute.xlu0 %7337
        %v7339 = vlaneseq
        %v7340 = vshrl.u32 %v7339, 7
        %v7341 = vsub.s32 1, %v7340
        %v7342 = vrot.slane %v7323, %v7341
        %7344 = vbcast.lane.b32.xlu0 %v7342, 256
        %v7345 = vpop.permute.xlu0 %7344
        %v7346 = vlaneseq
        %v7347 = vshrl.u32 %v7346, 7
        %v7348 = vsub.s32 2, %v7347
        %v7349 = vrot.slane %v7323, %v7348
        %7351 = vbcast.lane.b32.xlu0 %v7349, 256
        %v7352 = vpop.permute.xlu0 %7351
        %v7353 = vlaneseq
        %v7354 = vshrl.u32 %v7353, 7
        %v7355 = vsub.s32 3, %v7354
        %v7356 = vrot.slane %v7323, %v7355
        %7358 = vbcast.lane.b32.xlu0 %v7356, 256
        %v7359 = vpop.permute.xlu0 %7358
        %v7360 = vlaneseq
        %v7361 = vshrl.u32 %v7360, 7
        %v7362 = vsub.s32 4, %v7361
        %v7363 = vrot.slane %v7323, %v7362
        %7365 = vbcast.lane.b32.xlu0 %v7363, 256
        %v7366 = vpop.permute.xlu0 %7365
        %v7367 = vlaneseq
        %v7368 = vshrl.u32 %v7367, 7
        %v7369 = vsub.s32 5, %v7368
        %v7370 = vrot.slane %v7323, %v7369
        %7372 = vbcast.lane.b32.xlu0 %v7370, 256
        %v7373 = vpop.permute.xlu0 %7372
        %v7374 = vlaneseq
        %v7375 = vshrl.u32 %v7374, 7
        %v7376 = vsub.s32 6, %v7375
        %v7377 = vrot.slane %v7323, %v7376
        %7379 = vbcast.lane.b32.xlu0 %v7377, 256
        %v7380 = vpop.permute.xlu0 %7379
        %v7381 = vlaneseq
        %v7382 = vshrl.u32 %v7381, 7
        %v7383 = vsub.s32 7, %v7382
        %v7384 = vrot.slane %v7323, %v7383
        %7386 = vbcast.lane.b32.xlu0 %v7384, 256
        %v7387 = vpop.permute.xlu0 %7386
        %v7388 = vlaneseq
        %v7389 = vshrl.u32 %v7388, 7
        %v7390 = vsub.s32 0, %v7389
        %v7391 = vrot.slane %v7324, %v7390
        %7393 = vbcast.lane.b32.xlu0 %v7391, 256
        %v7394 = vpop.permute.xlu0 %7393
        %v7395 = vlaneseq
        %v7396 = vshrl.u32 %v7395, 7
        %v7397 = vsub.s32 1, %v7396
        %v7398 = vrot.slane %v7324, %v7397
        %7400 = vbcast.lane.b32.xlu0 %v7398, 256
        %v7401 = vpop.permute.xlu0 %7400
        %v7402 = vlaneseq
        %v7403 = vshrl.u32 %v7402, 7
        %v7404 = vsub.s32 2, %v7403
        %v7405 = vrot.slane %v7324, %v7404
        %7407 = vbcast.lane.b32.xlu0 %v7405, 256
        %v7408 = vpop.permute.xlu0 %7407
        %v7409 = vlaneseq
        %v7410 = vshrl.u32 %v7409, 7
        %v7411 = vsub.s32 3, %v7410
        %v7412 = vrot.slane %v7324, %v7411
        %7414 = vbcast.lane.b32.xlu0 %v7412, 256
        %v7415 = vpop.permute.xlu0 %7414
        %v7416 = vlaneseq
        %v7417 = vshrl.u32 %v7416, 7
        %v7418 = vsub.s32 4, %v7417
        %v7419 = vrot.slane %v7324, %v7418
        %7421 = vbcast.lane.b32.xlu0 %v7419, 256
        %v7422 = vpop.permute.xlu0 %7421
        %v7423 = vlaneseq
        %v7424 = vshrl.u32 %v7423, 7
        %v7425 = vsub.s32 5, %v7424
        %v7426 = vrot.slane %v7324, %v7425
        %7428 = vbcast.lane.b32.xlu0 %v7426, 256
        %v7429 = vpop.permute.xlu0 %7428
        %v7430 = vlaneseq
        %v7431 = vshrl.u32 %v7430, 7
        %v7432 = vsub.s32 6, %v7431
        %v7433 = vrot.slane %v7324, %v7432
        %7435 = vbcast.lane.b32.xlu0 %v7433, 256
        %v7436 = vpop.permute.xlu0 %7435
        %v7437 = vlaneseq
        %v7438 = vshrl.u32 %v7437, 7
        %v7439 = vsub.s32 7, %v7438
        %v7440 = vrot.slane %v7324, %v7439
        %7442 = vbcast.lane.b32.xlu0 %v7440, 256
        %v7443 = vpop.permute.xlu0 %7442
        %v7444 = vlaneseq
        %v7445 = vshrl.u32 %v7444, 7
        %v7446 = vsub.s32 0, %v7445
        %v7447 = vrot.slane %v7325, %v7446
        %7449 = vbcast.lane.b32.xlu0 %v7447, 256
        %v7450 = vpop.permute.xlu0 %7449
        %v7451 = vlaneseq
        %v7452 = vshrl.u32 %v7451, 7
        %v7453 = vsub.s32 1, %v7452
        %v7454 = vrot.slane %v7325, %v7453
        %7456 = vbcast.lane.b32.xlu0 %v7454, 256
        %v7457 = vpop.permute.xlu0 %7456
        %v7458 = vlaneseq
        %v7459 = vshrl.u32 %v7458, 7
        %v7460 = vsub.s32 2, %v7459
        %v7461 = vrot.slane %v7325, %v7460
        %7463 = vbcast.lane.b32.xlu0 %v7461, 256
        %v7464 = vpop.permute.xlu0 %7463
        %v7465 = vlaneseq
        %v7466 = vshrl.u32 %v7465, 7
        %v7467 = vsub.s32 3, %v7466
        %v7468 = vrot.slane %v7325, %v7467
        %7470 = vbcast.lane.b32.xlu0 %v7468, 256
        %v7471 = vpop.permute.xlu0 %7470
        %v7472 = vlaneseq
        %v7473 = vshrl.u32 %v7472, 7
        %v7474 = vsub.s32 4, %v7473
        %v7475 = vrot.slane %v7325, %v7474
        %7477 = vbcast.lane.b32.xlu0 %v7475, 256
        %v7478 = vpop.permute.xlu0 %7477
        %v7479 = vlaneseq
        %v7480 = vshrl.u32 %v7479, 7
        %v7481 = vsub.s32 5, %v7480
        %v7482 = vrot.slane %v7325, %v7481
        %7484 = vbcast.lane.b32.xlu0 %v7482, 256
        %v7485 = vpop.permute.xlu0 %7484
        %v7486 = vlaneseq
        %v7487 = vshrl.u32 %v7486, 7
        %v7488 = vsub.s32 6, %v7487
        %v7489 = vrot.slane %v7325, %v7488
        %7491 = vbcast.lane.b32.xlu0 %v7489, 256
        %v7492 = vpop.permute.xlu0 %7491
        %v7493 = vlaneseq
        %v7494 = vshrl.u32 %v7493, 7
        %v7495 = vsub.s32 7, %v7494
        %v7496 = vrot.slane %v7325, %v7495
        %7498 = vbcast.lane.b32.xlu0 %v7496, 256
        %v7499 = vpop.permute.xlu0 %7498
        %v7500 = vlaneseq
        %v7501 = vshrl.u32 %v7500, 7
        %v7502 = vsub.s32 0, %v7501
        %v7503 = vrot.slane %v7326, %v7502
        %7505 = vbcast.lane.b32.xlu0 %v7503, 256
        %v7506 = vpop.permute.xlu0 %7505
        %v7507 = vlaneseq
        %v7508 = vshrl.u32 %v7507, 7
        %v7509 = vsub.s32 1, %v7508
        %v7510 = vrot.slane %v7326, %v7509
        %7512 = vbcast.lane.b32.xlu0 %v7510, 256
        %v7513 = vpop.permute.xlu0 %7512
        %v7514 = vlaneseq
        %v7515 = vshrl.u32 %v7514, 7
        %v7516 = vsub.s32 2, %v7515
        %v7517 = vrot.slane %v7326, %v7516
        %7519 = vbcast.lane.b32.xlu0 %v7517, 256
        %v7520 = vpop.permute.xlu0 %7519
        %v7521 = vlaneseq
        %v7522 = vshrl.u32 %v7521, 7
        %v7523 = vsub.s32 3, %v7522
        %v7524 = vrot.slane %v7326, %v7523
        %7526 = vbcast.lane.b32.xlu0 %v7524, 256
        %v7527 = vpop.permute.xlu0 %7526
        %v7528 = vlaneseq
        %v7529 = vshrl.u32 %v7528, 7
        %v7530 = vsub.s32 4, %v7529
        %v7531 = vrot.slane %v7326, %v7530
        %7533 = vbcast.lane.b32.xlu0 %v7531, 256
        %v7534 = vpop.permute.xlu0 %7533
        %v7535 = vlaneseq
        %v7536 = vshrl.u32 %v7535, 7
        %v7537 = vsub.s32 5, %v7536
        %v7538 = vrot.slane %v7326, %v7537
        %7540 = vbcast.lane.b32.xlu0 %v7538, 256
        %v7541 = vpop.permute.xlu0 %7540
        %v7542 = vlaneseq
        %v7543 = vshrl.u32 %v7542, 7
        %v7544 = vsub.s32 6, %v7543
        %v7545 = vrot.slane %v7326, %v7544
        %7547 = vbcast.lane.b32.xlu0 %v7545, 256
        %v7548 = vpop.permute.xlu0 %7547
        %v7549 = vlaneseq
        %v7550 = vshrl.u32 %v7549, 7
        %v7551 = vsub.s32 7, %v7550
        %v7552 = vrot.slane %v7326, %v7551
        %7554 = vbcast.lane.b32.xlu0 %v7552, 256
        %v7555 = vpop.permute.xlu0 %7554
        %v7556 = vlaneseq
        %v7557 = vshrl.u32 %v7556, 7
        %v7558 = vsub.s32 0, %v7557
        %v7559 = vrot.slane %v7328, %v7558
        %7561 = vbcast.lane.b32.xlu0 %v7559, 256
        %v7562 = vpop.permute.xlu0 %7561
        %v7563 = vlaneseq
        %v7564 = vshrl.u32 %v7563, 7
        %v7565 = vsub.s32 1, %v7564
        %v7566 = vrot.slane %v7328, %v7565
        %7568 = vbcast.lane.b32.xlu0 %v7566, 256
        %v7569 = vpop.permute.xlu0 %7568
        %v7570 = vlaneseq
        %v7571 = vshrl.u32 %v7570, 7
        %v7572 = vsub.s32 2, %v7571
        %v7573 = vrot.slane %v7328, %v7572
        %7575 = vbcast.lane.b32.xlu0 %v7573, 256
        %v7576 = vpop.permute.xlu0 %7575
        %v7577 = vlaneseq
        %v7578 = vshrl.u32 %v7577, 7
        %v7579 = vsub.s32 3, %v7578
        %v7580 = vrot.slane %v7328, %v7579
        %7582 = vbcast.lane.b32.xlu0 %v7580, 256
        %v7583 = vpop.permute.xlu0 %7582
        %v7584 = vlaneseq
        %v7585 = vshrl.u32 %v7584, 7
        %v7586 = vsub.s32 4, %v7585
        %v7587 = vrot.slane %v7328, %v7586
        %7589 = vbcast.lane.b32.xlu0 %v7587, 256
        %v7590 = vpop.permute.xlu0 %7589
        %v7591 = vlaneseq
        %v7592 = vshrl.u32 %v7591, 7
        %v7593 = vsub.s32 5, %v7592
        %v7594 = vrot.slane %v7328, %v7593
        %7596 = vbcast.lane.b32.xlu0 %v7594, 256
        %v7597 = vpop.permute.xlu0 %7596
        %v7598 = vlaneseq
        %v7599 = vshrl.u32 %v7598, 7
        %v7600 = vsub.s32 6, %v7599
        %v7601 = vrot.slane %v7328, %v7600
        %7603 = vbcast.lane.b32.xlu0 %v7601, 256
        %v7604 = vpop.permute.xlu0 %7603
        %v7605 = vlaneseq
        %v7606 = vshrl.u32 %v7605, 7
        %v7607 = vsub.s32 7, %v7606
        %v7608 = vrot.slane %v7328, %v7607
        %7610 = vbcast.lane.b32.xlu0 %v7608, 256
        %v7611 = vpop.permute.xlu0 %7610
        %v7612 = vlaneseq
        %v7613 = vshrl.u32 %v7612, 7
        %v7614 = vsub.s32 0, %v7613
        %v7615 = vrot.slane %v7329, %v7614
        %7617 = vbcast.lane.b32.xlu0 %v7615, 256
        %v7618 = vpop.permute.xlu0 %7617
        %v7619 = vlaneseq
        %v7620 = vshrl.u32 %v7619, 7
        %v7621 = vsub.s32 1, %v7620
        %v7622 = vrot.slane %v7329, %v7621
        %7624 = vbcast.lane.b32.xlu0 %v7622, 256
        %v7625 = vpop.permute.xlu0 %7624
        %v7626 = vlaneseq
        %v7627 = vshrl.u32 %v7626, 7
        %v7628 = vsub.s32 2, %v7627
        %v7629 = vrot.slane %v7329, %v7628
        %7631 = vbcast.lane.b32.xlu0 %v7629, 256
        %v7632 = vpop.permute.xlu0 %7631
        %v7633 = vlaneseq
        %v7634 = vshrl.u32 %v7633, 7
        %v7635 = vsub.s32 3, %v7634
        %v7636 = vrot.slane %v7329, %v7635
        %7638 = vbcast.lane.b32.xlu0 %v7636, 256
        %v7639 = vpop.permute.xlu0 %7638
        %v7640 = vlaneseq
        %v7641 = vshrl.u32 %v7640, 7
        %v7642 = vsub.s32 4, %v7641
        %v7643 = vrot.slane %v7329, %v7642
        %7645 = vbcast.lane.b32.xlu0 %v7643, 256
        %v7646 = vpop.permute.xlu0 %7645
        %v7647 = vlaneseq
        %v7648 = vshrl.u32 %v7647, 7
        %v7649 = vsub.s32 5, %v7648
        %v7650 = vrot.slane %v7329, %v7649
        %7652 = vbcast.lane.b32.xlu0 %v7650, 256
        %v7653 = vpop.permute.xlu0 %7652
        %v7654 = vlaneseq
        %v7655 = vshrl.u32 %v7654, 7
        %v7656 = vsub.s32 6, %v7655
        %v7657 = vrot.slane %v7329, %v7656
        %7659 = vbcast.lane.b32.xlu0 %v7657, 256
        %v7660 = vpop.permute.xlu0 %7659
        %v7661 = vlaneseq
        %v7662 = vshrl.u32 %v7661, 7
        %v7663 = vsub.s32 7, %v7662
        %v7664 = vrot.slane %v7329, %v7663
        %7666 = vbcast.lane.b32.xlu0 %v7664, 256
        %v7667 = vpop.permute.xlu0 %7666
        %v7668 = vlaneseq
        %v7669 = vshrl.u32 %v7668, 7
        %v7670 = vsub.s32 0, %v7669
        %v7671 = vrot.slane %v7330, %v7670
        %7673 = vbcast.lane.b32.xlu0 %v7671, 256
        %v7674 = vpop.permute.xlu0 %7673
        %v7675 = vlaneseq
        %v7676 = vshrl.u32 %v7675, 7
        %v7677 = vsub.s32 1, %v7676
        %v7678 = vrot.slane %v7330, %v7677
        %7680 = vbcast.lane.b32.xlu0 %v7678, 256
        %v7681 = vpop.permute.xlu0 %7680
        %v7682 = vlaneseq
        %v7683 = vshrl.u32 %v7682, 7
        %v7684 = vsub.s32 2, %v7683
        %v7685 = vrot.slane %v7330, %v7684
        %7687 = vbcast.lane.b32.xlu0 %v7685, 256
        %v7688 = vpop.permute.xlu0 %7687
        %v7689 = vlaneseq
        %v7690 = vshrl.u32 %v7689, 7
        %v7691 = vsub.s32 3, %v7690
        %v7692 = vrot.slane %v7330, %v7691
        %7694 = vbcast.lane.b32.xlu0 %v7692, 256
        %v7695 = vpop.permute.xlu0 %7694
        %v7696 = vlaneseq
        %v7697 = vshrl.u32 %v7696, 7
        %v7698 = vsub.s32 4, %v7697
        %v7699 = vrot.slane %v7330, %v7698
        %7701 = vbcast.lane.b32.xlu0 %v7699, 256
        %v7702 = vpop.permute.xlu0 %7701
        %v7703 = vlaneseq
        %v7704 = vshrl.u32 %v7703, 7
        %v7705 = vsub.s32 5, %v7704
        %v7706 = vrot.slane %v7330, %v7705
        %7708 = vbcast.lane.b32.xlu0 %v7706, 256
        %v7709 = vpop.permute.xlu0 %7708
        %v7710 = vlaneseq
        %v7711 = vshrl.u32 %v7710, 7
        %v7712 = vsub.s32 6, %v7711
        %v7713 = vrot.slane %v7330, %v7712
        %7715 = vbcast.lane.b32.xlu0 %v7713, 256
        %v7716 = vpop.permute.xlu0 %7715
        %v7717 = vlaneseq
        %v7718 = vshrl.u32 %v7717, 7
        %v7719 = vsub.s32 7, %v7718
        %v7720 = vrot.slane %v7330, %v7719
        %7722 = vbcast.lane.b32.xlu0 %v7720, 256
        %v7723 = vpop.permute.xlu0 %7722
        %v7724 = vlaneseq
        %v7725 = vshrl.u32 %v7724, 7
        %v7726 = vsub.s32 0, %v7725
        %v7727 = vrot.slane %v7331, %v7726
        %7729 = vbcast.lane.b32.xlu0 %v7727, 256
        %v7730 = vpop.permute.xlu0 %7729
        %v7731 = vlaneseq
        %v7732 = vshrl.u32 %v7731, 7
        %v7733 = vsub.s32 1, %v7732
        %v7734 = vrot.slane %v7331, %v7733
        %7736 = vbcast.lane.b32.xlu0 %v7734, 256
        %v7737 = vpop.permute.xlu0 %7736
        %v7738 = vlaneseq
        %v7739 = vshrl.u32 %v7738, 7
        %v7740 = vsub.s32 2, %v7739
        %v7741 = vrot.slane %v7331, %v7740
        %7743 = vbcast.lane.b32.xlu0 %v7741, 256
        %v7744 = vpop.permute.xlu0 %7743
        %v7745 = vlaneseq
        %v7746 = vshrl.u32 %v7745, 7
        %v7747 = vsub.s32 3, %v7746
        %v7748 = vrot.slane %v7331, %v7747
        %7750 = vbcast.lane.b32.xlu0 %v7748, 256
        %v7751 = vpop.permute.xlu0 %7750
        %v7752 = vlaneseq
        %v7753 = vshrl.u32 %v7752, 7
        %v7754 = vsub.s32 4, %v7753
        %v7755 = vrot.slane %v7331, %v7754
        %7757 = vbcast.lane.b32.xlu0 %v7755, 256
        %v7758 = vpop.permute.xlu0 %7757
        %v7759 = vlaneseq
        %v7760 = vshrl.u32 %v7759, 7
        %v7761 = vsub.s32 5, %v7760
        %v7762 = vrot.slane %v7331, %v7761
        %7764 = vbcast.lane.b32.xlu0 %v7762, 256
        %v7765 = vpop.permute.xlu0 %7764
        %v7766 = vlaneseq
        %v7767 = vshrl.u32 %v7766, 7
        %v7768 = vsub.s32 6, %v7767
        %v7769 = vrot.slane %v7331, %v7768
        %7771 = vbcast.lane.b32.xlu0 %v7769, 256
        %v7772 = vpop.permute.xlu0 %7771
        %v7773 = vlaneseq
        %v7774 = vshrl.u32 %v7773, 7
        %v7775 = vsub.s32 7, %v7774
        %v7776 = vrot.slane %v7331, %v7775
        %7778 = vbcast.lane.b32.xlu0 %v7776, 256
        %v7779 = vpop.permute.xlu0 %7778
        %v7780 = vsel %vm612, %v7338, %v7562
        %v7781 = vsel %vm612, %v7345, %v7569
        %v7782 = vsel %vm612, %v7352, %v7576
        %v7783 = vsel %vm612, %v7359, %v7583
        %v7784 = vsel %vm612, %v7366, %v7590
        %v7785 = vsel %vm612, %v7373, %v7597
        %v7786 = vsel %vm612, %v7380, %v7604
        %v7787 = vsel %vm612, %v7387, %v7611
        %v7788 = vsel %vm612, %v7394, %v7618
        %v7789 = vsel %vm612, %v7401, %v7625
        %v7790 = vsel %vm612, %v7408, %v7632
        %v7791 = vsel %vm612, %v7415, %v7639
        %v7792 = vsel %vm612, %v7422, %v7646
        %v7793 = vsel %vm612, %v7429, %v7653
        %v7794 = vsel %vm612, %v7436, %v7660
        %v7795 = vsel %vm612, %v7443, %v7667
        %v7796 = vsel %vm612, %v7450, %v7674
        %v7797 = vsel %vm612, %v7457, %v7681
        %v7798 = vsel %vm612, %v7464, %v7688
        %v7799 = vsel %vm612, %v7471, %v7695
        %v7800 = vsel %vm612, %v7478, %v7702
        %v7801 = vsel %vm612, %v7485, %v7709
        %v7802 = vsel %vm612, %v7492, %v7716
        %v7803 = vsel %vm612, %v7499, %v7723
        %v7804 = vsel %vm612, %v7506, %v7730
        %v7805 = vsel %vm612, %v7513, %v7737
        %v7806 = vsel %vm612, %v7520, %v7744
        %v7807 = vsel %vm612, %v7527, %v7751
        %v7808 = vsel %vm612, %v7534, %v7758
        %v7809 = vsel %vm612, %v7541, %v7765
        %v7810 = vsel %vm612, %v7548, %v7772
        %v7811 = vsel %vm612, %v7555, %v7779
        %v7812 = vcombine.high %v7290, 0.0
        %v7814 = vunpack.c.l.s4 1983009808
        %v7815 = vunpack.c.0.s8 %v7814
        %v7816 = vlaneseq
        %v7817 = vshrl.u32 %v7816, 7
        %v7818 = vsub.s32 %v7815, %v7817
        %v7819 = vrot.slane %v7290, %v7818
        %v7821 = vunpack.c.l.s4 1983009808
        %v7822 = vunpack.c.0.s8 %v7821
        %v7823 = vlaneseq
        %v7824 = vshrl.u32 %v7823, 7
        %v7825 = vsub.s32 %v7822, %v7824
        %v7826 = vrot.slane %v7812, %v7825
        %v7827 = vcombine.high %v7819, 0.0
        %v7829 = vunpack.c.l.s4 1934713408
        %v7830 = vunpack.c.0.s8 %v7829
        %v7831 = vlaneseq
        %v7832 = vshrl.u32 %v7831, 7
        %v7833 = vsub.s32 %v7830, %v7832
        %v7834 = vrot.slane %v7819, %v7833
        %v7836 = vunpack.c.l.s4 1934713408
        %v7837 = vunpack.c.0.s8 %v7836
        %v7838 = vlaneseq
        %v7839 = vshrl.u32 %v7838, 7
        %v7840 = vsub.s32 %v7837, %v7839
        %v7841 = vrot.slane %v7827, %v7840
        %v7842 = vcombine.high %v7826, 0.0
        %v7844 = vunpack.c.l.s4 1934713408
        %v7845 = vunpack.c.0.s8 %v7844
        %v7846 = vlaneseq
        %v7847 = vshrl.u32 %v7846, 7
        %v7848 = vsub.s32 %v7845, %v7847
        %v7849 = vrot.slane %v7826, %v7848
        %v7851 = vunpack.c.l.s4 1934713408
        %v7852 = vunpack.c.0.s8 %v7851
        %v7853 = vlaneseq
        %v7854 = vshrl.u32 %v7853, 7
        %v7855 = vsub.s32 %v7852, %v7854
        %v7856 = vrot.slane %v7842, %v7855
        %v7857 = vcombine.high %v7834, 0.0
        %v7858 = vcombine.high %v7841, 0.0
        %v7859 = vcombine.high %v7849, 0.0
        %v7860 = vcombine.high %v7856, 0.0
        %v7861 = vcombine.high %v7291, 0.0
        %v7863 = vunpack.c.l.s4 1983009808
        %v7864 = vunpack.c.0.s8 %v7863
        %v7865 = vlaneseq
        %v7866 = vshrl.u32 %v7865, 7
        %v7867 = vsub.s32 %v7864, %v7866
        %v7868 = vrot.slane %v7291, %v7867
        %v7870 = vunpack.c.l.s4 1983009808
        %v7871 = vunpack.c.0.s8 %v7870
        %v7872 = vlaneseq
        %v7873 = vshrl.u32 %v7872, 7
        %v7874 = vsub.s32 %v7871, %v7873
        %v7875 = vrot.slane %v7861, %v7874
        %v7876 = vcombine.high %v7868, 0.0
        %v7878 = vunpack.c.l.s4 1934713408
        %v7879 = vunpack.c.0.s8 %v7878
        %v7880 = vlaneseq
        %v7881 = vshrl.u32 %v7880, 7
        %v7882 = vsub.s32 %v7879, %v7881
        %v7883 = vrot.slane %v7868, %v7882
        %v7885 = vunpack.c.l.s4 1934713408
        %v7886 = vunpack.c.0.s8 %v7885
        %v7887 = vlaneseq
        %v7888 = vshrl.u32 %v7887, 7
        %v7889 = vsub.s32 %v7886, %v7888
        %v7890 = vrot.slane %v7876, %v7889
        %v7891 = vcombine.high %v7875, 0.0
        %v7893 = vunpack.c.l.s4 1934713408
        %v7894 = vunpack.c.0.s8 %v7893
        %v7895 = vlaneseq
        %v7896 = vshrl.u32 %v7895, 7
        %v7897 = vsub.s32 %v7894, %v7896
        %v7898 = vrot.slane %v7875, %v7897
        %v7900 = vunpack.c.l.s4 1934713408
        %v7901 = vunpack.c.0.s8 %v7900
        %v7902 = vlaneseq
        %v7903 = vshrl.u32 %v7902, 7
        %v7904 = vsub.s32 %v7901, %v7903
        %v7905 = vrot.slane %v7891, %v7904
        %v7906 = vcombine.high %v7883, 0.0
        %v7907 = vcombine.high %v7890, 0.0
        %v7908 = vcombine.high %v7898, 0.0
        %v7909 = vcombine.high %v7905, 0.0
        %v7910 = vcombine.high %v7292, 0.0
        %v7912 = vunpack.c.l.s4 1983009808
        %v7913 = vunpack.c.0.s8 %v7912
        %v7914 = vlaneseq
        %v7915 = vshrl.u32 %v7914, 7
        %v7916 = vsub.s32 %v7913, %v7915
        %v7917 = vrot.slane %v7292, %v7916
        %v7919 = vunpack.c.l.s4 1983009808
        %v7920 = vunpack.c.0.s8 %v7919
        %v7921 = vlaneseq
        %v7922 = vshrl.u32 %v7921, 7
        %v7923 = vsub.s32 %v7920, %v7922
        %v7924 = vrot.slane %v7910, %v7923
        %v7925 = vcombine.high %v7917, 0.0
        %v7927 = vunpack.c.l.s4 1934713408
        %v7928 = vunpack.c.0.s8 %v7927
        %v7929 = vlaneseq
        %v7930 = vshrl.u32 %v7929, 7
        %v7931 = vsub.s32 %v7928, %v7930
        %v7932 = vrot.slane %v7917, %v7931
        %v7934 = vunpack.c.l.s4 1934713408
        %v7935 = vunpack.c.0.s8 %v7934
        %v7936 = vlaneseq
        %v7937 = vshrl.u32 %v7936, 7
        %v7938 = vsub.s32 %v7935, %v7937
        %v7939 = vrot.slane %v7925, %v7938
        %v7940 = vcombine.high %v7924, 0.0
        %v7942 = vunpack.c.l.s4 1934713408
        %v7943 = vunpack.c.0.s8 %v7942
        %v7944 = vlaneseq
        %v7945 = vshrl.u32 %v7944, 7
        %v7946 = vsub.s32 %v7943, %v7945
        %v7947 = vrot.slane %v7924, %v7946
        %v7949 = vunpack.c.l.s4 1934713408
        %v7950 = vunpack.c.0.s8 %v7949
        %v7951 = vlaneseq
        %v7952 = vshrl.u32 %v7951, 7
        %v7953 = vsub.s32 %v7950, %v7952
        %v7954 = vrot.slane %v7940, %v7953
        %v7955 = vcombine.high %v7932, 0.0
        %v7956 = vcombine.high %v7939, 0.0
        %v7957 = vcombine.high %v7947, 0.0
        %v7958 = vcombine.high %v7954, 0.0
        %v7959 = vcombine.high %v7293, 0.0
        %v7961 = vunpack.c.l.s4 1983009808
        %v7962 = vunpack.c.0.s8 %v7961
        %v7963 = vlaneseq
        %v7964 = vshrl.u32 %v7963, 7
        %v7965 = vsub.s32 %v7962, %v7964
        %v7966 = vrot.slane %v7293, %v7965
        %v7968 = vunpack.c.l.s4 1983009808
        %v7969 = vunpack.c.0.s8 %v7968
        %v7970 = vlaneseq
        %v7971 = vshrl.u32 %v7970, 7
        %v7972 = vsub.s32 %v7969, %v7971
        %v7973 = vrot.slane %v7959, %v7972
        %v7974 = vcombine.high %v7966, 0.0
        %v7976 = vunpack.c.l.s4 1934713408
        %v7977 = vunpack.c.0.s8 %v7976
        %v7978 = vlaneseq
        %v7979 = vshrl.u32 %v7978, 7
        %v7980 = vsub.s32 %v7977, %v7979
        %v7981 = vrot.slane %v7966, %v7980
        %v7983 = vunpack.c.l.s4 1934713408
        %v7984 = vunpack.c.0.s8 %v7983
        %v7985 = vlaneseq
        %v7986 = vshrl.u32 %v7985, 7
        %v7987 = vsub.s32 %v7984, %v7986
        %v7988 = vrot.slane %v7974, %v7987
        %v7989 = vcombine.high %v7973, 0.0
        %v7991 = vunpack.c.l.s4 1934713408
        %v7992 = vunpack.c.0.s8 %v7991
        %v7993 = vlaneseq
        %v7994 = vshrl.u32 %v7993, 7
        %v7995 = vsub.s32 %v7992, %v7994
        %v7996 = vrot.slane %v7973, %v7995
        %v7998 = vunpack.c.l.s4 1934713408
        %v7999 = vunpack.c.0.s8 %v7998
        %v8000 = vlaneseq
        %v8001 = vshrl.u32 %v8000, 7
        %v8002 = vsub.s32 %v7999, %v8001
        %v8003 = vrot.slane %v7989, %v8002
        %v8004 = vcombine.high %v7981, 0.0
        %v8005 = vcombine.high %v7988, 0.0
        %v8006 = vcombine.high %v7996, 0.0
        %v8007 = vcombine.high %v8003, 0.0
        %v8008 = vcombine.high %v7294, 0.0
        %v8010 = vunpack.c.l.s4 1983009808
        %v8011 = vunpack.c.0.s8 %v8010
        %v8012 = vlaneseq
        %v8013 = vshrl.u32 %v8012, 7
        %v8014 = vsub.s32 %v8011, %v8013
        %v8015 = vrot.slane %v7294, %v8014
        %v8017 = vunpack.c.l.s4 1983009808
        %v8018 = vunpack.c.0.s8 %v8017
        %v8019 = vlaneseq
        %v8020 = vshrl.u32 %v8019, 7
        %v8021 = vsub.s32 %v8018, %v8020
        %v8022 = vrot.slane %v8008, %v8021
        %v8023 = vcombine.high %v8015, 0.0
        %v8025 = vunpack.c.l.s4 1934713408
        %v8026 = vunpack.c.0.s8 %v8025
        %v8027 = vlaneseq
        %v8028 = vshrl.u32 %v8027, 7
        %v8029 = vsub.s32 %v8026, %v8028
        %v8030 = vrot.slane %v8015, %v8029
        %v8032 = vunpack.c.l.s4 1934713408
        %v8033 = vunpack.c.0.s8 %v8032
        %v8034 = vlaneseq
        %v8035 = vshrl.u32 %v8034, 7
        %v8036 = vsub.s32 %v8033, %v8035
        %v8037 = vrot.slane %v8023, %v8036
        %v8038 = vcombine.high %v8022, 0.0
        %v8040 = vunpack.c.l.s4 1934713408
        %v8041 = vunpack.c.0.s8 %v8040
        %v8042 = vlaneseq
        %v8043 = vshrl.u32 %v8042, 7
        %v8044 = vsub.s32 %v8041, %v8043
        %v8045 = vrot.slane %v8022, %v8044
        %v8047 = vunpack.c.l.s4 1934713408
        %v8048 = vunpack.c.0.s8 %v8047
        %v8049 = vlaneseq
        %v8050 = vshrl.u32 %v8049, 7
        %v8051 = vsub.s32 %v8048, %v8050
        %v8052 = vrot.slane %v8038, %v8051
        %v8053 = vcombine.high %v8030, 0.0
        %v8054 = vcombine.high %v8037, 0.0
        %v8055 = vcombine.high %v8045, 0.0
        %v8056 = vcombine.high %v8052, 0.0
        %v8057 = vcombine.high %v7295, 0.0
        %v8059 = vunpack.c.l.s4 1983009808
        %v8060 = vunpack.c.0.s8 %v8059
        %v8061 = vlaneseq
        %v8062 = vshrl.u32 %v8061, 7
        %v8063 = vsub.s32 %v8060, %v8062
        %v8064 = vrot.slane %v7295, %v8063
        %v8066 = vunpack.c.l.s4 1983009808
        %v8067 = vunpack.c.0.s8 %v8066
        %v8068 = vlaneseq
        %v8069 = vshrl.u32 %v8068, 7
        %v8070 = vsub.s32 %v8067, %v8069
        %v8071 = vrot.slane %v8057, %v8070
        %v8072 = vcombine.high %v8064, 0.0
        %v8074 = vunpack.c.l.s4 1934713408
        %v8075 = vunpack.c.0.s8 %v8074
        %v8076 = vlaneseq
        %v8077 = vshrl.u32 %v8076, 7
        %v8078 = vsub.s32 %v8075, %v8077
        %v8079 = vrot.slane %v8064, %v8078
        %v8081 = vunpack.c.l.s4 1934713408
        %v8082 = vunpack.c.0.s8 %v8081
        %v8083 = vlaneseq
        %v8084 = vshrl.u32 %v8083, 7
        %v8085 = vsub.s32 %v8082, %v8084
        %v8086 = vrot.slane %v8072, %v8085
        %v8087 = vcombine.high %v8071, 0.0
        %v8089 = vunpack.c.l.s4 1934713408
        %v8090 = vunpack.c.0.s8 %v8089
        %v8091 = vlaneseq
        %v8092 = vshrl.u32 %v8091, 7
        %v8093 = vsub.s32 %v8090, %v8092
        %v8094 = vrot.slane %v8071, %v8093
        %v8096 = vunpack.c.l.s4 1934713408
        %v8097 = vunpack.c.0.s8 %v8096
        %v8098 = vlaneseq
        %v8099 = vshrl.u32 %v8098, 7
        %v8100 = vsub.s32 %v8097, %v8099
        %v8101 = vrot.slane %v8087, %v8100
        %v8102 = vcombine.high %v8079, 0.0
        %v8103 = vcombine.high %v8086, 0.0
        %v8104 = vcombine.high %v8094, 0.0
        %v8105 = vcombine.high %v8101, 0.0
        %v8106 = vcombine.high %v7296, 0.0
        %v8108 = vunpack.c.l.s4 1983009808
        %v8109 = vunpack.c.0.s8 %v8108
        %v8110 = vlaneseq
        %v8111 = vshrl.u32 %v8110, 7
        %v8112 = vsub.s32 %v8109, %v8111
        %v8113 = vrot.slane %v7296, %v8112
        %v8115 = vunpack.c.l.s4 1983009808
        %v8116 = vunpack.c.0.s8 %v8115
        %v8117 = vlaneseq
        %v8118 = vshrl.u32 %v8117, 7
        %v8119 = vsub.s32 %v8116, %v8118
        %v8120 = vrot.slane %v8106, %v8119
        %v8121 = vcombine.high %v8113, 0.0
        %v8123 = vunpack.c.l.s4 1934713408
        %v8124 = vunpack.c.0.s8 %v8123
        %v8125 = vlaneseq
        %v8126 = vshrl.u32 %v8125, 7
        %v8127 = vsub.s32 %v8124, %v8126
        %v8128 = vrot.slane %v8113, %v8127
        %v8130 = vunpack.c.l.s4 1934713408
        %v8131 = vunpack.c.0.s8 %v8130
        %v8132 = vlaneseq
        %v8133 = vshrl.u32 %v8132, 7
        %v8134 = vsub.s32 %v8131, %v8133
        %v8135 = vrot.slane %v8121, %v8134
        %v8136 = vcombine.high %v8120, 0.0
        %v8138 = vunpack.c.l.s4 1934713408
        %v8139 = vunpack.c.0.s8 %v8138
        %v8140 = vlaneseq
        %v8141 = vshrl.u32 %v8140, 7
        %v8142 = vsub.s32 %v8139, %v8141
        %v8143 = vrot.slane %v8120, %v8142
        %v8145 = vunpack.c.l.s4 1934713408
        %v8146 = vunpack.c.0.s8 %v8145
        %v8147 = vlaneseq
        %v8148 = vshrl.u32 %v8147, 7
        %v8149 = vsub.s32 %v8146, %v8148
        %v8150 = vrot.slane %v8136, %v8149
        %v8151 = vcombine.high %v8128, 0.0
        %v8152 = vcombine.high %v8135, 0.0
        %v8153 = vcombine.high %v8143, 0.0
        %v8154 = vcombine.high %v8150, 0.0
        %v8155 = vcombine.high %v7297, 0.0
        %v8157 = vunpack.c.l.s4 1983009808
        %v8158 = vunpack.c.0.s8 %v8157
        %v8159 = vlaneseq
        %v8160 = vshrl.u32 %v8159, 7
        %v8161 = vsub.s32 %v8158, %v8160
        %v8162 = vrot.slane %v7297, %v8161
        %v8164 = vunpack.c.l.s4 1983009808
        %v8165 = vunpack.c.0.s8 %v8164
        %v8166 = vlaneseq
        %v8167 = vshrl.u32 %v8166, 7
        %v8168 = vsub.s32 %v8165, %v8167
        %v8169 = vrot.slane %v8155, %v8168
        %v8170 = vcombine.high %v8162, 0.0
        %v8172 = vunpack.c.l.s4 1934713408
        %v8173 = vunpack.c.0.s8 %v8172
        %v8174 = vlaneseq
        %v8175 = vshrl.u32 %v8174, 7
        %v8176 = vsub.s32 %v8173, %v8175
        %v8177 = vrot.slane %v8162, %v8176
        %v8179 = vunpack.c.l.s4 1934713408
        %v8180 = vunpack.c.0.s8 %v8179
        %v8181 = vlaneseq
        %v8182 = vshrl.u32 %v8181, 7
        %v8183 = vsub.s32 %v8180, %v8182
        %v8184 = vrot.slane %v8170, %v8183
        %v8185 = vcombine.high %v8169, 0.0
        %v8187 = vunpack.c.l.s4 1934713408
        %v8188 = vunpack.c.0.s8 %v8187
        %v8189 = vlaneseq
        %v8190 = vshrl.u32 %v8189, 7
        %v8191 = vsub.s32 %v8188, %v8190
        %v8192 = vrot.slane %v8169, %v8191
        %v8194 = vunpack.c.l.s4 1934713408
        %v8195 = vunpack.c.0.s8 %v8194
        %v8196 = vlaneseq
        %v8197 = vshrl.u32 %v8196, 7
        %v8198 = vsub.s32 %v8195, %v8197
        %v8199 = vrot.slane %v8185, %v8198
        %v8200 = vcombine.high %v8177, 0.0
        %v8201 = vcombine.high %v8184, 0.0
        %v8202 = vcombine.high %v8192, 0.0
        %v8203 = vcombine.high %v8199, 0.0
        %v8204 = vcombine.high %v7298, 0.0
        %v8206 = vunpack.c.l.s4 1983009808
        %v8207 = vunpack.c.0.s8 %v8206
        %v8208 = vlaneseq
        %v8209 = vshrl.u32 %v8208, 7
        %v8210 = vsub.s32 %v8207, %v8209
        %v8211 = vrot.slane %v7298, %v8210
        %v8213 = vunpack.c.l.s4 1983009808
        %v8214 = vunpack.c.0.s8 %v8213
        %v8215 = vlaneseq
        %v8216 = vshrl.u32 %v8215, 7
        %v8217 = vsub.s32 %v8214, %v8216
        %v8218 = vrot.slane %v8204, %v8217
        %v8219 = vcombine.high %v8211, 0.0
        %v8221 = vunpack.c.l.s4 1934713408
        %v8222 = vunpack.c.0.s8 %v8221
        %v8223 = vlaneseq
        %v8224 = vshrl.u32 %v8223, 7
        %v8225 = vsub.s32 %v8222, %v8224
        %v8226 = vrot.slane %v8211, %v8225
        %v8228 = vunpack.c.l.s4 1934713408
        %v8229 = vunpack.c.0.s8 %v8228
        %v8230 = vlaneseq
        %v8231 = vshrl.u32 %v8230, 7
        %v8232 = vsub.s32 %v8229, %v8231
        %v8233 = vrot.slane %v8219, %v8232
        %v8234 = vcombine.high %v8218, 0.0
        %v8236 = vunpack.c.l.s4 1934713408
        %v8237 = vunpack.c.0.s8 %v8236
        %v8238 = vlaneseq
        %v8239 = vshrl.u32 %v8238, 7
        %v8240 = vsub.s32 %v8237, %v8239
        %v8241 = vrot.slane %v8218, %v8240
        %v8243 = vunpack.c.l.s4 1934713408
        %v8244 = vunpack.c.0.s8 %v8243
        %v8245 = vlaneseq
        %v8246 = vshrl.u32 %v8245, 7
        %v8247 = vsub.s32 %v8244, %v8246
        %v8248 = vrot.slane %v8234, %v8247
        %v8249 = vcombine.high %v8226, 0.0
        %v8250 = vcombine.high %v8233, 0.0
        %v8251 = vcombine.high %v8241, 0.0
        %v8252 = vcombine.high %v8248, 0.0
        %v8253 = vcombine.high %v7299, 0.0
        %v8255 = vunpack.c.l.s4 1983009808
        %v8256 = vunpack.c.0.s8 %v8255
        %v8257 = vlaneseq
        %v8258 = vshrl.u32 %v8257, 7
        %v8259 = vsub.s32 %v8256, %v8258
        %v8260 = vrot.slane %v7299, %v8259
        %v8262 = vunpack.c.l.s4 1983009808
        %v8263 = vunpack.c.0.s8 %v8262
        %v8264 = vlaneseq
        %v8265 = vshrl.u32 %v8264, 7
        %v8266 = vsub.s32 %v8263, %v8265
        %v8267 = vrot.slane %v8253, %v8266
        %v8268 = vcombine.high %v8260, 0.0
        %v8270 = vunpack.c.l.s4 1934713408
        %v8271 = vunpack.c.0.s8 %v8270
        %v8272 = vlaneseq
        %v8273 = vshrl.u32 %v8272, 7
        %v8274 = vsub.s32 %v8271, %v8273
        %v8275 = vrot.slane %v8260, %v8274
        %v8277 = vunpack.c.l.s4 1934713408
        %v8278 = vunpack.c.0.s8 %v8277
        %v8279 = vlaneseq
        %v8280 = vshrl.u32 %v8279, 7
        %v8281 = vsub.s32 %v8278, %v8280
        %v8282 = vrot.slane %v8268, %v8281
        %v8283 = vcombine.high %v8267, 0.0
        %v8285 = vunpack.c.l.s4 1934713408
        %v8286 = vunpack.c.0.s8 %v8285
        %v8287 = vlaneseq
        %v8288 = vshrl.u32 %v8287, 7
        %v8289 = vsub.s32 %v8286, %v8288
        %v8290 = vrot.slane %v8267, %v8289
        %v8292 = vunpack.c.l.s4 1934713408
        %v8293 = vunpack.c.0.s8 %v8292
        %v8294 = vlaneseq
        %v8295 = vshrl.u32 %v8294, 7
        %v8296 = vsub.s32 %v8293, %v8295
        %v8297 = vrot.slane %v8283, %v8296
        %v8298 = vcombine.high %v8275, 0.0
        %v8299 = vcombine.high %v8282, 0.0
        %v8300 = vcombine.high %v8290, 0.0
        %v8301 = vcombine.high %v8297, 0.0
        %v8302 = vcombine.high %v7300, 0.0
        %v8304 = vunpack.c.l.s4 1983009808
        %v8305 = vunpack.c.0.s8 %v8304
        %v8306 = vlaneseq
        %v8307 = vshrl.u32 %v8306, 7
        %v8308 = vsub.s32 %v8305, %v8307
        %v8309 = vrot.slane %v7300, %v8308
        %v8311 = vunpack.c.l.s4 1983009808
        %v8312 = vunpack.c.0.s8 %v8311
        %v8313 = vlaneseq
        %v8314 = vshrl.u32 %v8313, 7
        %v8315 = vsub.s32 %v8312, %v8314
        %v8316 = vrot.slane %v8302, %v8315
        %v8317 = vcombine.high %v8309, 0.0
        %v8319 = vunpack.c.l.s4 1934713408
        %v8320 = vunpack.c.0.s8 %v8319
        %v8321 = vlaneseq
        %v8322 = vshrl.u32 %v8321, 7
        %v8323 = vsub.s32 %v8320, %v8322
        %v8324 = vrot.slane %v8309, %v8323
        %v8326 = vunpack.c.l.s4 1934713408
        %v8327 = vunpack.c.0.s8 %v8326
        %v8328 = vlaneseq
        %v8329 = vshrl.u32 %v8328, 7
        %v8330 = vsub.s32 %v8327, %v8329
        %v8331 = vrot.slane %v8317, %v8330
        %v8332 = vcombine.high %v8316, 0.0
        %v8334 = vunpack.c.l.s4 1934713408
        %v8335 = vunpack.c.0.s8 %v8334
        %v8336 = vlaneseq
        %v8337 = vshrl.u32 %v8336, 7
        %v8338 = vsub.s32 %v8335, %v8337
        %v8339 = vrot.slane %v8316, %v8338
        %v8341 = vunpack.c.l.s4 1934713408
        %v8342 = vunpack.c.0.s8 %v8341
        %v8343 = vlaneseq
        %v8344 = vshrl.u32 %v8343, 7
        %v8345 = vsub.s32 %v8342, %v8344
        %v8346 = vrot.slane %v8332, %v8345
        %v8347 = vcombine.high %v8324, 0.0
        %v8348 = vcombine.high %v8331, 0.0
        %v8349 = vcombine.high %v8339, 0.0
        %v8350 = vcombine.high %v8346, 0.0
        %v8351 = vcombine.high %v7301, 0.0
        %v8353 = vunpack.c.l.s4 1983009808
        %v8354 = vunpack.c.0.s8 %v8353
        %v8355 = vlaneseq
        %v8356 = vshrl.u32 %v8355, 7
        %v8357 = vsub.s32 %v8354, %v8356
        %v8358 = vrot.slane %v7301, %v8357
        %v8360 = vunpack.c.l.s4 1983009808
        %v8361 = vunpack.c.0.s8 %v8360
        %v8362 = vlaneseq
        %v8363 = vshrl.u32 %v8362, 7
        %v8364 = vsub.s32 %v8361, %v8363
        %v8365 = vrot.slane %v8351, %v8364
        %v8366 = vcombine.high %v8358, 0.0
        %v8368 = vunpack.c.l.s4 1934713408
        %v8369 = vunpack.c.0.s8 %v8368
        %v8370 = vlaneseq
        %v8371 = vshrl.u32 %v8370, 7
        %v8372 = vsub.s32 %v8369, %v8371
        %v8373 = vrot.slane %v8358, %v8372
        %v8375 = vunpack.c.l.s4 1934713408
        %v8376 = vunpack.c.0.s8 %v8375
        %v8377 = vlaneseq
        %v8378 = vshrl.u32 %v8377, 7
        %v8379 = vsub.s32 %v8376, %v8378
        %v8380 = vrot.slane %v8366, %v8379
        %v8381 = vcombine.high %v8365, 0.0
        %v8383 = vunpack.c.l.s4 1934713408
        %v8384 = vunpack.c.0.s8 %v8383
        %v8385 = vlaneseq
        %v8386 = vshrl.u32 %v8385, 7
        %v8387 = vsub.s32 %v8384, %v8386
        %v8388 = vrot.slane %v8365, %v8387
        %v8390 = vunpack.c.l.s4 1934713408
        %v8391 = vunpack.c.0.s8 %v8390
        %v8392 = vlaneseq
        %v8393 = vshrl.u32 %v8392, 7
        %v8394 = vsub.s32 %v8391, %v8393
        %v8395 = vrot.slane %v8381, %v8394
        %v8396 = vcombine.high %v8373, 0.0
        %v8397 = vcombine.high %v8380, 0.0
        %v8398 = vcombine.high %v8388, 0.0
        %v8399 = vcombine.high %v8395, 0.0
        %v8400 = vcombine.high %v7302, 0.0
        %v8402 = vunpack.c.l.s4 1983009808
        %v8403 = vunpack.c.0.s8 %v8402
        %v8404 = vlaneseq
        %v8405 = vshrl.u32 %v8404, 7
        %v8406 = vsub.s32 %v8403, %v8405
        %v8407 = vrot.slane %v7302, %v8406
        %v8409 = vunpack.c.l.s4 1983009808
        %v8410 = vunpack.c.0.s8 %v8409
        %v8411 = vlaneseq
        %v8412 = vshrl.u32 %v8411, 7
        %v8413 = vsub.s32 %v8410, %v8412
        %v8414 = vrot.slane %v8400, %v8413
        %v8415 = vcombine.high %v8407, 0.0
        %v8417 = vunpack.c.l.s4 1934713408
        %v8418 = vunpack.c.0.s8 %v8417
        %v8419 = vlaneseq
        %v8420 = vshrl.u32 %v8419, 7
        %v8421 = vsub.s32 %v8418, %v8420
        %v8422 = vrot.slane %v8407, %v8421
        %v8424 = vunpack.c.l.s4 1934713408
        %v8425 = vunpack.c.0.s8 %v8424
        %v8426 = vlaneseq
        %v8427 = vshrl.u32 %v8426, 7
        %v8428 = vsub.s32 %v8425, %v8427
        %v8429 = vrot.slane %v8415, %v8428
        %v8430 = vcombine.high %v8414, 0.0
        %v8432 = vunpack.c.l.s4 1934713408
        %v8433 = vunpack.c.0.s8 %v8432
        %v8434 = vlaneseq
        %v8435 = vshrl.u32 %v8434, 7
        %v8436 = vsub.s32 %v8433, %v8435
        %v8437 = vrot.slane %v8414, %v8436
        %v8439 = vunpack.c.l.s4 1934713408
        %v8440 = vunpack.c.0.s8 %v8439
        %v8441 = vlaneseq
        %v8442 = vshrl.u32 %v8441, 7
        %v8443 = vsub.s32 %v8440, %v8442
        %v8444 = vrot.slane %v8430, %v8443
        %v8445 = vcombine.high %v8422, 0.0
        %v8446 = vcombine.high %v8429, 0.0
        %v8447 = vcombine.high %v8437, 0.0
        %v8448 = vcombine.high %v8444, 0.0
        %v8449 = vcombine.high %v7303, 0.0
        %v8451 = vunpack.c.l.s4 1983009808
        %v8452 = vunpack.c.0.s8 %v8451
        %v8453 = vlaneseq
        %v8454 = vshrl.u32 %v8453, 7
        %v8455 = vsub.s32 %v8452, %v8454
        %v8456 = vrot.slane %v7303, %v8455
        %v8458 = vunpack.c.l.s4 1983009808
        %v8459 = vunpack.c.0.s8 %v8458
        %v8460 = vlaneseq
        %v8461 = vshrl.u32 %v8460, 7
        %v8462 = vsub.s32 %v8459, %v8461
        %v8463 = vrot.slane %v8449, %v8462
        %v8464 = vcombine.high %v8456, 0.0
        %v8466 = vunpack.c.l.s4 1934713408
        %v8467 = vunpack.c.0.s8 %v8466
        %v8468 = vlaneseq
        %v8469 = vshrl.u32 %v8468, 7
        %v8470 = vsub.s32 %v8467, %v8469
        %v8471 = vrot.slane %v8456, %v8470
        %v8473 = vunpack.c.l.s4 1934713408
        %v8474 = vunpack.c.0.s8 %v8473
        %v8475 = vlaneseq
        %v8476 = vshrl.u32 %v8475, 7
        %v8477 = vsub.s32 %v8474, %v8476
        %v8478 = vrot.slane %v8464, %v8477
        %v8479 = vcombine.high %v8463, 0.0
        %v8481 = vunpack.c.l.s4 1934713408
        %v8482 = vunpack.c.0.s8 %v8481
        %v8483 = vlaneseq
        %v8484 = vshrl.u32 %v8483, 7
        %v8485 = vsub.s32 %v8482, %v8484
        %v8486 = vrot.slane %v8463, %v8485
        %v8488 = vunpack.c.l.s4 1934713408
        %v8489 = vunpack.c.0.s8 %v8488
        %v8490 = vlaneseq
        %v8491 = vshrl.u32 %v8490, 7
        %v8492 = vsub.s32 %v8489, %v8491
        %v8493 = vrot.slane %v8479, %v8492
        %v8494 = vcombine.high %v8471, 0.0
        %v8495 = vcombine.high %v8478, 0.0
        %v8496 = vcombine.high %v8486, 0.0
        %v8497 = vcombine.high %v8493, 0.0
        %v8498 = vcombine.high %v7304, 0.0
        %v8500 = vunpack.c.l.s4 1983009808
        %v8501 = vunpack.c.0.s8 %v8500
        %v8502 = vlaneseq
        %v8503 = vshrl.u32 %v8502, 7
        %v8504 = vsub.s32 %v8501, %v8503
        %v8505 = vrot.slane %v7304, %v8504
        %v8507 = vunpack.c.l.s4 1983009808
        %v8508 = vunpack.c.0.s8 %v8507
        %v8509 = vlaneseq
        %v8510 = vshrl.u32 %v8509, 7
        %v8511 = vsub.s32 %v8508, %v8510
        %v8512 = vrot.slane %v8498, %v8511
        %v8513 = vcombine.high %v8505, 0.0
        %v8515 = vunpack.c.l.s4 1934713408
        %v8516 = vunpack.c.0.s8 %v8515
        %v8517 = vlaneseq
        %v8518 = vshrl.u32 %v8517, 7
        %v8519 = vsub.s32 %v8516, %v8518
        %v8520 = vrot.slane %v8505, %v8519
        %v8522 = vunpack.c.l.s4 1934713408
        %v8523 = vunpack.c.0.s8 %v8522
        %v8524 = vlaneseq
        %v8525 = vshrl.u32 %v8524, 7
        %v8526 = vsub.s32 %v8523, %v8525
        %v8527 = vrot.slane %v8513, %v8526
        %v8528 = vcombine.high %v8512, 0.0
        %v8530 = vunpack.c.l.s4 1934713408
        %v8531 = vunpack.c.0.s8 %v8530
        %v8532 = vlaneseq
        %v8533 = vshrl.u32 %v8532, 7
        %v8534 = vsub.s32 %v8531, %v8533
        %v8535 = vrot.slane %v8512, %v8534
        %v8537 = vunpack.c.l.s4 1934713408
        %v8538 = vunpack.c.0.s8 %v8537
        %v8539 = vlaneseq
        %v8540 = vshrl.u32 %v8539, 7
        %v8541 = vsub.s32 %v8538, %v8540
        %v8542 = vrot.slane %v8528, %v8541
        %v8543 = vcombine.high %v8520, 0.0
        %v8544 = vcombine.high %v8527, 0.0
        %v8545 = vcombine.high %v8535, 0.0
        %v8546 = vcombine.high %v8542, 0.0
        %v8547 = vcombine.high %v7305, 0.0
        %v8549 = vunpack.c.l.s4 1983009808
        %v8550 = vunpack.c.0.s8 %v8549
        %v8551 = vlaneseq
        %v8552 = vshrl.u32 %v8551, 7
        %v8553 = vsub.s32 %v8550, %v8552
        %v8554 = vrot.slane %v7305, %v8553
        %v8556 = vunpack.c.l.s4 1983009808
        %v8557 = vunpack.c.0.s8 %v8556
        %v8558 = vlaneseq
        %v8559 = vshrl.u32 %v8558, 7
        %v8560 = vsub.s32 %v8557, %v8559
        %v8561 = vrot.slane %v8547, %v8560
        %v8562 = vcombine.high %v8554, 0.0
        %v8564 = vunpack.c.l.s4 1934713408
        %v8565 = vunpack.c.0.s8 %v8564
        %v8566 = vlaneseq
        %v8567 = vshrl.u32 %v8566, 7
        %v8568 = vsub.s32 %v8565, %v8567
        %v8569 = vrot.slane %v8554, %v8568
        %v8571 = vunpack.c.l.s4 1934713408
        %v8572 = vunpack.c.0.s8 %v8571
        %v8573 = vlaneseq
        %v8574 = vshrl.u32 %v8573, 7
        %v8575 = vsub.s32 %v8572, %v8574
        %v8576 = vrot.slane %v8562, %v8575
        %v8577 = vcombine.high %v8561, 0.0
        %v8579 = vunpack.c.l.s4 1934713408
        %v8580 = vunpack.c.0.s8 %v8579
        %v8581 = vlaneseq
        %v8582 = vshrl.u32 %v8581, 7
        %v8583 = vsub.s32 %v8580, %v8582
        %v8584 = vrot.slane %v8561, %v8583
        %v8586 = vunpack.c.l.s4 1934713408
        %v8587 = vunpack.c.0.s8 %v8586
        %v8588 = vlaneseq
        %v8589 = vshrl.u32 %v8588, 7
        %v8590 = vsub.s32 %v8587, %v8589
        %v8591 = vrot.slane %v8577, %v8590
        %v8592 = vcombine.high %v8569, 0.0
        %v8593 = vcombine.high %v8576, 0.0
        %v8594 = vcombine.high %v8584, 0.0
        %v8595 = vcombine.high %v8591, 0.0
        %v8596 = vcombine.high %v7306, 0.0
        %v8598 = vunpack.c.l.s4 1983009808
        %v8599 = vunpack.c.0.s8 %v8598
        %v8600 = vlaneseq
        %v8601 = vshrl.u32 %v8600, 7
        %v8602 = vsub.s32 %v8599, %v8601
        %v8603 = vrot.slane %v7306, %v8602
        %v8605 = vunpack.c.l.s4 1983009808
        %v8606 = vunpack.c.0.s8 %v8605
        %v8607 = vlaneseq
        %v8608 = vshrl.u32 %v8607, 7
        %v8609 = vsub.s32 %v8606, %v8608
        %v8610 = vrot.slane %v8596, %v8609
        %v8611 = vcombine.high %v8603, 0.0
        %v8613 = vunpack.c.l.s4 1934713408
        %v8614 = vunpack.c.0.s8 %v8613
        %v8615 = vlaneseq
        %v8616 = vshrl.u32 %v8615, 7
        %v8617 = vsub.s32 %v8614, %v8616
        %v8618 = vrot.slane %v8603, %v8617
        %v8620 = vunpack.c.l.s4 1934713408
        %v8621 = vunpack.c.0.s8 %v8620
        %v8622 = vlaneseq
        %v8623 = vshrl.u32 %v8622, 7
        %v8624 = vsub.s32 %v8621, %v8623
        %v8625 = vrot.slane %v8611, %v8624
        %v8626 = vcombine.high %v8610, 0.0
        %v8628 = vunpack.c.l.s4 1934713408
        %v8629 = vunpack.c.0.s8 %v8628
        %v8630 = vlaneseq
        %v8631 = vshrl.u32 %v8630, 7
        %v8632 = vsub.s32 %v8629, %v8631
        %v8633 = vrot.slane %v8610, %v8632
        %v8635 = vunpack.c.l.s4 1934713408
        %v8636 = vunpack.c.0.s8 %v8635
        %v8637 = vlaneseq
        %v8638 = vshrl.u32 %v8637, 7
        %v8639 = vsub.s32 %v8636, %v8638
        %v8640 = vrot.slane %v8626, %v8639
        %v8641 = vcombine.high %v8618, 0.0
        %v8642 = vcombine.high %v8625, 0.0
        %v8643 = vcombine.high %v8633, 0.0
        %v8644 = vcombine.high %v8640, 0.0
        %v8645 = vcombine.high %v7307, 0.0
        %v8647 = vunpack.c.l.s4 1983009808
        %v8648 = vunpack.c.0.s8 %v8647
        %v8649 = vlaneseq
        %v8650 = vshrl.u32 %v8649, 7
        %v8651 = vsub.s32 %v8648, %v8650
        %v8652 = vrot.slane %v7307, %v8651
        %v8654 = vunpack.c.l.s4 1983009808
        %v8655 = vunpack.c.0.s8 %v8654
        %v8656 = vlaneseq
        %v8657 = vshrl.u32 %v8656, 7
        %v8658 = vsub.s32 %v8655, %v8657
        %v8659 = vrot.slane %v8645, %v8658
        %v8660 = vcombine.high %v8652, 0.0
        %v8662 = vunpack.c.l.s4 1934713408
        %v8663 = vunpack.c.0.s8 %v8662
        %v8664 = vlaneseq
        %v8665 = vshrl.u32 %v8664, 7
        %v8666 = vsub.s32 %v8663, %v8665
        %v8667 = vrot.slane %v8652, %v8666
        %v8669 = vunpack.c.l.s4 1934713408
        %v8670 = vunpack.c.0.s8 %v8669
        %v8671 = vlaneseq
        %v8672 = vshrl.u32 %v8671, 7
        %v8673 = vsub.s32 %v8670, %v8672
        %v8674 = vrot.slane %v8660, %v8673
        %v8675 = vcombine.high %v8659, 0.0
        %v8677 = vunpack.c.l.s4 1934713408
        %v8678 = vunpack.c.0.s8 %v8677
        %v8679 = vlaneseq
        %v8680 = vshrl.u32 %v8679, 7
        %v8681 = vsub.s32 %v8678, %v8680
        %v8682 = vrot.slane %v8659, %v8681
        %v8684 = vunpack.c.l.s4 1934713408
        %v8685 = vunpack.c.0.s8 %v8684
        %v8686 = vlaneseq
        %v8687 = vshrl.u32 %v8686, 7
        %v8688 = vsub.s32 %v8685, %v8687
        %v8689 = vrot.slane %v8675, %v8688
        %v8690 = vcombine.high %v8667, 0.0
        %v8691 = vcombine.high %v8674, 0.0
        %v8692 = vcombine.high %v8682, 0.0
        %v8693 = vcombine.high %v8689, 0.0
        %v8694 = vcombine.high %v7308, 0.0
        %v8696 = vunpack.c.l.s4 1983009808
        %v8697 = vunpack.c.0.s8 %v8696
        %v8698 = vlaneseq
        %v8699 = vshrl.u32 %v8698, 7
        %v8700 = vsub.s32 %v8697, %v8699
        %v8701 = vrot.slane %v7308, %v8700
        %v8703 = vunpack.c.l.s4 1983009808
        %v8704 = vunpack.c.0.s8 %v8703
        %v8705 = vlaneseq
        %v8706 = vshrl.u32 %v8705, 7
        %v8707 = vsub.s32 %v8704, %v8706
        %v8708 = vrot.slane %v8694, %v8707
        %v8709 = vcombine.high %v8701, 0.0
        %v8711 = vunpack.c.l.s4 1934713408
        %v8712 = vunpack.c.0.s8 %v8711
        %v8713 = vlaneseq
        %v8714 = vshrl.u32 %v8713, 7
        %v8715 = vsub.s32 %v8712, %v8714
        %v8716 = vrot.slane %v8701, %v8715
        %v8718 = vunpack.c.l.s4 1934713408
        %v8719 = vunpack.c.0.s8 %v8718
        %v8720 = vlaneseq
        %v8721 = vshrl.u32 %v8720, 7
        %v8722 = vsub.s32 %v8719, %v8721
        %v8723 = vrot.slane %v8709, %v8722
        %v8724 = vcombine.high %v8708, 0.0
        %v8726 = vunpack.c.l.s4 1934713408
        %v8727 = vunpack.c.0.s8 %v8726
        %v8728 = vlaneseq
        %v8729 = vshrl.u32 %v8728, 7
        %v8730 = vsub.s32 %v8727, %v8729
        %v8731 = vrot.slane %v8708, %v8730
        %v8733 = vunpack.c.l.s4 1934713408
        %v8734 = vunpack.c.0.s8 %v8733
        %v8735 = vlaneseq
        %v8736 = vshrl.u32 %v8735, 7
        %v8737 = vsub.s32 %v8734, %v8736
        %v8738 = vrot.slane %v8724, %v8737
        %v8739 = vcombine.high %v8716, 0.0
        %v8740 = vcombine.high %v8723, 0.0
        %v8741 = vcombine.high %v8731, 0.0
        %v8742 = vcombine.high %v8738, 0.0
        %v8743 = vcombine.high %v7309, 0.0
        %v8745 = vunpack.c.l.s4 1983009808
        %v8746 = vunpack.c.0.s8 %v8745
        %v8747 = vlaneseq
        %v8748 = vshrl.u32 %v8747, 7
        %v8749 = vsub.s32 %v8746, %v8748
        %v8750 = vrot.slane %v7309, %v8749
        %v8752 = vunpack.c.l.s4 1983009808
        %v8753 = vunpack.c.0.s8 %v8752
        %v8754 = vlaneseq
        %v8755 = vshrl.u32 %v8754, 7
        %v8756 = vsub.s32 %v8753, %v8755
        %v8757 = vrot.slane %v8743, %v8756
        %v8758 = vcombine.high %v8750, 0.0
        %v8760 = vunpack.c.l.s4 1934713408
        %v8761 = vunpack.c.0.s8 %v8760
        %v8762 = vlaneseq
        %v8763 = vshrl.u32 %v8762, 7
        %v8764 = vsub.s32 %v8761, %v8763
        %v8765 = vrot.slane %v8750, %v8764
        %v8767 = vunpack.c.l.s4 1934713408
        %v8768 = vunpack.c.0.s8 %v8767
        %v8769 = vlaneseq
        %v8770 = vshrl.u32 %v8769, 7
        %v8771 = vsub.s32 %v8768, %v8770
        %v8772 = vrot.slane %v8758, %v8771
        %v8773 = vcombine.high %v8757, 0.0
        %v8775 = vunpack.c.l.s4 1934713408
        %v8776 = vunpack.c.0.s8 %v8775
        %v8777 = vlaneseq
        %v8778 = vshrl.u32 %v8777, 7
        %v8779 = vsub.s32 %v8776, %v8778
        %v8780 = vrot.slane %v8757, %v8779
        %v8782 = vunpack.c.l.s4 1934713408
        %v8783 = vunpack.c.0.s8 %v8782
        %v8784 = vlaneseq
        %v8785 = vshrl.u32 %v8784, 7
        %v8786 = vsub.s32 %v8783, %v8785
        %v8787 = vrot.slane %v8773, %v8786
        %v8788 = vcombine.high %v8765, 0.0
        %v8789 = vcombine.high %v8772, 0.0
        %v8790 = vcombine.high %v8780, 0.0
        %v8791 = vcombine.high %v8787, 0.0
        %v8792 = vcombine.high %v7310, 0.0
        %v8794 = vunpack.c.l.s4 1983009808
        %v8795 = vunpack.c.0.s8 %v8794
        %v8796 = vlaneseq
        %v8797 = vshrl.u32 %v8796, 7
        %v8798 = vsub.s32 %v8795, %v8797
        %v8799 = vrot.slane %v7310, %v8798
        %v8801 = vunpack.c.l.s4 1983009808
        %v8802 = vunpack.c.0.s8 %v8801
        %v8803 = vlaneseq
        %v8804 = vshrl.u32 %v8803, 7
        %v8805 = vsub.s32 %v8802, %v8804
        %v8806 = vrot.slane %v8792, %v8805
        %v8807 = vcombine.high %v8799, 0.0
        %v8809 = vunpack.c.l.s4 1934713408
        %v8810 = vunpack.c.0.s8 %v8809
        %v8811 = vlaneseq
        %v8812 = vshrl.u32 %v8811, 7
        %v8813 = vsub.s32 %v8810, %v8812
        %v8814 = vrot.slane %v8799, %v8813
        %v8816 = vunpack.c.l.s4 1934713408
        %v8817 = vunpack.c.0.s8 %v8816
        %v8818 = vlaneseq
        %v8819 = vshrl.u32 %v8818, 7
        %v8820 = vsub.s32 %v8817, %v8819
        %v8821 = vrot.slane %v8807, %v8820
        %v8822 = vcombine.high %v8806, 0.0
        %v8824 = vunpack.c.l.s4 1934713408
        %v8825 = vunpack.c.0.s8 %v8824
        %v8826 = vlaneseq
        %v8827 = vshrl.u32 %v8826, 7
        %v8828 = vsub.s32 %v8825, %v8827
        %v8829 = vrot.slane %v8806, %v8828
        %v8831 = vunpack.c.l.s4 1934713408
        %v8832 = vunpack.c.0.s8 %v8831
        %v8833 = vlaneseq
        %v8834 = vshrl.u32 %v8833, 7
        %v8835 = vsub.s32 %v8832, %v8834
        %v8836 = vrot.slane %v8822, %v8835
        %v8837 = vcombine.high %v8814, 0.0
        %v8838 = vcombine.high %v8821, 0.0
        %v8839 = vcombine.high %v8829, 0.0
        %v8840 = vcombine.high %v8836, 0.0
        %v8841 = vcombine.high %v7311, 0.0
        %v8843 = vunpack.c.l.s4 1983009808
        %v8844 = vunpack.c.0.s8 %v8843
        %v8845 = vlaneseq
        %v8846 = vshrl.u32 %v8845, 7
        %v8847 = vsub.s32 %v8844, %v8846
        %v8848 = vrot.slane %v7311, %v8847
        %v8850 = vunpack.c.l.s4 1983009808
        %v8851 = vunpack.c.0.s8 %v8850
        %v8852 = vlaneseq
        %v8853 = vshrl.u32 %v8852, 7
        %v8854 = vsub.s32 %v8851, %v8853
        %v8855 = vrot.slane %v8841, %v8854
        %v8856 = vcombine.high %v8848, 0.0
        %v8858 = vunpack.c.l.s4 1934713408
        %v8859 = vunpack.c.0.s8 %v8858
        %v8860 = vlaneseq
        %v8861 = vshrl.u32 %v8860, 7
        %v8862 = vsub.s32 %v8859, %v8861
        %v8863 = vrot.slane %v8848, %v8862
        %v8865 = vunpack.c.l.s4 1934713408
        %v8866 = vunpack.c.0.s8 %v8865
        %v8867 = vlaneseq
        %v8868 = vshrl.u32 %v8867, 7
        %v8869 = vsub.s32 %v8866, %v8868
        %v8870 = vrot.slane %v8856, %v8869
        %v8871 = vcombine.high %v8855, 0.0
        %v8873 = vunpack.c.l.s4 1934713408
        %v8874 = vunpack.c.0.s8 %v8873
        %v8875 = vlaneseq
        %v8876 = vshrl.u32 %v8875, 7
        %v8877 = vsub.s32 %v8874, %v8876
        %v8878 = vrot.slane %v8855, %v8877
        %v8880 = vunpack.c.l.s4 1934713408
        %v8881 = vunpack.c.0.s8 %v8880
        %v8882 = vlaneseq
        %v8883 = vshrl.u32 %v8882, 7
        %v8884 = vsub.s32 %v8881, %v8883
        %v8885 = vrot.slane %v8871, %v8884
        %v8886 = vcombine.high %v8863, 0.0
        %v8887 = vcombine.high %v8870, 0.0
        %v8888 = vcombine.high %v8878, 0.0
        %v8889 = vcombine.high %v8885, 0.0
        %v8890 = vcombine.high %v7312, 0.0
        %v8892 = vunpack.c.l.s4 1983009808
        %v8893 = vunpack.c.0.s8 %v8892
        %v8894 = vlaneseq
        %v8895 = vshrl.u32 %v8894, 7
        %v8896 = vsub.s32 %v8893, %v8895
        %v8897 = vrot.slane %v7312, %v8896
        %v8899 = vunpack.c.l.s4 1983009808
        %v8900 = vunpack.c.0.s8 %v8899
        %v8901 = vlaneseq
        %v8902 = vshrl.u32 %v8901, 7
        %v8903 = vsub.s32 %v8900, %v8902
        %v8904 = vrot.slane %v8890, %v8903
        %v8905 = vcombine.high %v8897, 0.0
        %v8907 = vunpack.c.l.s4 1934713408
        %v8908 = vunpack.c.0.s8 %v8907
        %v8909 = vlaneseq
        %v8910 = vshrl.u32 %v8909, 7
        %v8911 = vsub.s32 %v8908, %v8910
        %v8912 = vrot.slane %v8897, %v8911
        %v8914 = vunpack.c.l.s4 1934713408
        %v8915 = vunpack.c.0.s8 %v8914
        %v8916 = vlaneseq
        %v8917 = vshrl.u32 %v8916, 7
        %v8918 = vsub.s32 %v8915, %v8917
        %v8919 = vrot.slane %v8905, %v8918
        %v8920 = vcombine.high %v8904, 0.0
        %v8922 = vunpack.c.l.s4 1934713408
        %v8923 = vunpack.c.0.s8 %v8922
        %v8924 = vlaneseq
        %v8925 = vshrl.u32 %v8924, 7
        %v8926 = vsub.s32 %v8923, %v8925
        %v8927 = vrot.slane %v8904, %v8926
        %v8929 = vunpack.c.l.s4 1934713408
        %v8930 = vunpack.c.0.s8 %v8929
        %v8931 = vlaneseq
        %v8932 = vshrl.u32 %v8931, 7
        %v8933 = vsub.s32 %v8930, %v8932
        %v8934 = vrot.slane %v8920, %v8933
        %v8935 = vcombine.high %v8912, 0.0
        %v8936 = vcombine.high %v8919, 0.0
        %v8937 = vcombine.high %v8927, 0.0
        %v8938 = vcombine.high %v8934, 0.0
        %v8939 = vcombine.high %v7313, 0.0
        %v8941 = vunpack.c.l.s4 1983009808
        %v8942 = vunpack.c.0.s8 %v8941
        %v8943 = vlaneseq
        %v8944 = vshrl.u32 %v8943, 7
        %v8945 = vsub.s32 %v8942, %v8944
        %v8946 = vrot.slane %v7313, %v8945
        %v8948 = vunpack.c.l.s4 1983009808
        %v8949 = vunpack.c.0.s8 %v8948
        %v8950 = vlaneseq
        %v8951 = vshrl.u32 %v8950, 7
        %v8952 = vsub.s32 %v8949, %v8951
        %v8953 = vrot.slane %v8939, %v8952
        %v8954 = vcombine.high %v8946, 0.0
        %v8956 = vunpack.c.l.s4 1934713408
        %v8957 = vunpack.c.0.s8 %v8956
        %v8958 = vlaneseq
        %v8959 = vshrl.u32 %v8958, 7
        %v8960 = vsub.s32 %v8957, %v8959
        %v8961 = vrot.slane %v8946, %v8960
        %v8963 = vunpack.c.l.s4 1934713408
        %v8964 = vunpack.c.0.s8 %v8963
        %v8965 = vlaneseq
        %v8966 = vshrl.u32 %v8965, 7
        %v8967 = vsub.s32 %v8964, %v8966
        %v8968 = vrot.slane %v8954, %v8967
        %v8969 = vcombine.high %v8953, 0.0
        %v8971 = vunpack.c.l.s4 1934713408
        %v8972 = vunpack.c.0.s8 %v8971
        %v8973 = vlaneseq
        %v8974 = vshrl.u32 %v8973, 7
        %v8975 = vsub.s32 %v8972, %v8974
        %v8976 = vrot.slane %v8953, %v8975
        %v8978 = vunpack.c.l.s4 1934713408
        %v8979 = vunpack.c.0.s8 %v8978
        %v8980 = vlaneseq
        %v8981 = vshrl.u32 %v8980, 7
        %v8982 = vsub.s32 %v8979, %v8981
        %v8983 = vrot.slane %v8969, %v8982
        %v8984 = vcombine.high %v8961, 0.0
        %v8985 = vcombine.high %v8968, 0.0
        %v8986 = vcombine.high %v8976, 0.0
        %v8987 = vcombine.high %v8983, 0.0
        %v8988 = vcombine.high %v7314, 0.0
        %v8990 = vunpack.c.l.s4 1983009808
        %v8991 = vunpack.c.0.s8 %v8990
        %v8992 = vlaneseq
        %v8993 = vshrl.u32 %v8992, 7
        %v8994 = vsub.s32 %v8991, %v8993
        %v8995 = vrot.slane %v7314, %v8994
        %v8997 = vunpack.c.l.s4 1983009808
        %v8998 = vunpack.c.0.s8 %v8997
        %v8999 = vlaneseq
        %v9000 = vshrl.u32 %v8999, 7
        %v9001 = vsub.s32 %v8998, %v9000
        %v9002 = vrot.slane %v8988, %v9001
        %v9003 = vcombine.high %v8995, 0.0
        %v9005 = vunpack.c.l.s4 1934713408
        %v9006 = vunpack.c.0.s8 %v9005
        %v9007 = vlaneseq
        %v9008 = vshrl.u32 %v9007, 7
        %v9009 = vsub.s32 %v9006, %v9008
        %v9010 = vrot.slane %v8995, %v9009
        %v9012 = vunpack.c.l.s4 1934713408
        %v9013 = vunpack.c.0.s8 %v9012
        %v9014 = vlaneseq
        %v9015 = vshrl.u32 %v9014, 7
        %v9016 = vsub.s32 %v9013, %v9015
        %v9017 = vrot.slane %v9003, %v9016
        %v9018 = vcombine.high %v9002, 0.0
        %v9020 = vunpack.c.l.s4 1934713408
        %v9021 = vunpack.c.0.s8 %v9020
        %v9022 = vlaneseq
        %v9023 = vshrl.u32 %v9022, 7
        %v9024 = vsub.s32 %v9021, %v9023
        %v9025 = vrot.slane %v9002, %v9024
        %v9027 = vunpack.c.l.s4 1934713408
        %v9028 = vunpack.c.0.s8 %v9027
        %v9029 = vlaneseq
        %v9030 = vshrl.u32 %v9029, 7
        %v9031 = vsub.s32 %v9028, %v9030
        %v9032 = vrot.slane %v9018, %v9031
        %v9033 = vcombine.high %v9010, 0.0
        %v9034 = vcombine.high %v9017, 0.0
        %v9035 = vcombine.high %v9025, 0.0
        %v9036 = vcombine.high %v9032, 0.0
        %v9037 = vcombine.high %v7315, 0.0
        %v9039 = vunpack.c.l.s4 1983009808
        %v9040 = vunpack.c.0.s8 %v9039
        %v9041 = vlaneseq
        %v9042 = vshrl.u32 %v9041, 7
        %v9043 = vsub.s32 %v9040, %v9042
        %v9044 = vrot.slane %v7315, %v9043
        %v9046 = vunpack.c.l.s4 1983009808
        %v9047 = vunpack.c.0.s8 %v9046
        %v9048 = vlaneseq
        %v9049 = vshrl.u32 %v9048, 7
        %v9050 = vsub.s32 %v9047, %v9049
        %v9051 = vrot.slane %v9037, %v9050
        %v9052 = vcombine.high %v9044, 0.0
        %v9054 = vunpack.c.l.s4 1934713408
        %v9055 = vunpack.c.0.s8 %v9054
        %v9056 = vlaneseq
        %v9057 = vshrl.u32 %v9056, 7
        %v9058 = vsub.s32 %v9055, %v9057
        %v9059 = vrot.slane %v9044, %v9058
        %v9061 = vunpack.c.l.s4 1934713408
        %v9062 = vunpack.c.0.s8 %v9061
        %v9063 = vlaneseq
        %v9064 = vshrl.u32 %v9063, 7
        %v9065 = vsub.s32 %v9062, %v9064
        %v9066 = vrot.slane %v9052, %v9065
        %v9067 = vcombine.high %v9051, 0.0
        %v9069 = vunpack.c.l.s4 1934713408
        %v9070 = vunpack.c.0.s8 %v9069
        %v9071 = vlaneseq
        %v9072 = vshrl.u32 %v9071, 7
        %v9073 = vsub.s32 %v9070, %v9072
        %v9074 = vrot.slane %v9051, %v9073
        %v9076 = vunpack.c.l.s4 1934713408
        %v9077 = vunpack.c.0.s8 %v9076
        %v9078 = vlaneseq
        %v9079 = vshrl.u32 %v9078, 7
        %v9080 = vsub.s32 %v9077, %v9079
        %v9081 = vrot.slane %v9067, %v9080
        %v9082 = vcombine.high %v9059, 0.0
        %v9083 = vcombine.high %v9066, 0.0
        %v9084 = vcombine.high %v9074, 0.0
        %v9085 = vcombine.high %v9081, 0.0
        %v9086 = vcombine.high %v7316, 0.0
        %v9088 = vunpack.c.l.s4 1983009808
        %v9089 = vunpack.c.0.s8 %v9088
        %v9090 = vlaneseq
        %v9091 = vshrl.u32 %v9090, 7
        %v9092 = vsub.s32 %v9089, %v9091
        %v9093 = vrot.slane %v7316, %v9092
        %v9095 = vunpack.c.l.s4 1983009808
        %v9096 = vunpack.c.0.s8 %v9095
        %v9097 = vlaneseq
        %v9098 = vshrl.u32 %v9097, 7
        %v9099 = vsub.s32 %v9096, %v9098
        %v9100 = vrot.slane %v9086, %v9099
        %v9101 = vcombine.high %v9093, 0.0
        %v9103 = vunpack.c.l.s4 1934713408
        %v9104 = vunpack.c.0.s8 %v9103
        %v9105 = vlaneseq
        %v9106 = vshrl.u32 %v9105, 7
        %v9107 = vsub.s32 %v9104, %v9106
        %v9108 = vrot.slane %v9093, %v9107
        %v9110 = vunpack.c.l.s4 1934713408
        %v9111 = vunpack.c.0.s8 %v9110
        %v9112 = vlaneseq
        %v9113 = vshrl.u32 %v9112, 7
        %v9114 = vsub.s32 %v9111, %v9113
        %v9115 = vrot.slane %v9101, %v9114
        %v9116 = vcombine.high %v9100, 0.0
        %v9118 = vunpack.c.l.s4 1934713408
        %v9119 = vunpack.c.0.s8 %v9118
        %v9120 = vlaneseq
        %v9121 = vshrl.u32 %v9120, 7
        %v9122 = vsub.s32 %v9119, %v9121
        %v9123 = vrot.slane %v9100, %v9122
        %v9125 = vunpack.c.l.s4 1934713408
        %v9126 = vunpack.c.0.s8 %v9125
        %v9127 = vlaneseq
        %v9128 = vshrl.u32 %v9127, 7
        %v9129 = vsub.s32 %v9126, %v9128
        %v9130 = vrot.slane %v9116, %v9129
        %v9131 = vcombine.high %v9108, 0.0
        %v9132 = vcombine.high %v9115, 0.0
        %v9133 = vcombine.high %v9123, 0.0
        %v9134 = vcombine.high %v9130, 0.0
        %v9135 = vcombine.high %v7317, 0.0
        %v9137 = vunpack.c.l.s4 1983009808
        %v9138 = vunpack.c.0.s8 %v9137
        %v9139 = vlaneseq
        %v9140 = vshrl.u32 %v9139, 7
        %v9141 = vsub.s32 %v9138, %v9140
        %v9142 = vrot.slane %v7317, %v9141
        %v9144 = vunpack.c.l.s4 1983009808
        %v9145 = vunpack.c.0.s8 %v9144
        %v9146 = vlaneseq
        %v9147 = vshrl.u32 %v9146, 7
        %v9148 = vsub.s32 %v9145, %v9147
        %v9149 = vrot.slane %v9135, %v9148
        %v9150 = vcombine.high %v9142, 0.0
        %v9152 = vunpack.c.l.s4 1934713408
        %v9153 = vunpack.c.0.s8 %v9152
        %v9154 = vlaneseq
        %v9155 = vshrl.u32 %v9154, 7
        %v9156 = vsub.s32 %v9153, %v9155
        %v9157 = vrot.slane %v9142, %v9156
        %v9159 = vunpack.c.l.s4 1934713408
        %v9160 = vunpack.c.0.s8 %v9159
        %v9161 = vlaneseq
        %v9162 = vshrl.u32 %v9161, 7
        %v9163 = vsub.s32 %v9160, %v9162
        %v9164 = vrot.slane %v9150, %v9163
        %v9165 = vcombine.high %v9149, 0.0
        %v9167 = vunpack.c.l.s4 1934713408
        %v9168 = vunpack.c.0.s8 %v9167
        %v9169 = vlaneseq
        %v9170 = vshrl.u32 %v9169, 7
        %v9171 = vsub.s32 %v9168, %v9170
        %v9172 = vrot.slane %v9149, %v9171
        %v9174 = vunpack.c.l.s4 1934713408
        %v9175 = vunpack.c.0.s8 %v9174
        %v9176 = vlaneseq
        %v9177 = vshrl.u32 %v9176, 7
        %v9178 = vsub.s32 %v9175, %v9177
        %v9179 = vrot.slane %v9165, %v9178
        %v9180 = vcombine.high %v9157, 0.0
        %v9181 = vcombine.high %v9164, 0.0
        %v9182 = vcombine.high %v9172, 0.0
        %v9183 = vcombine.high %v9179, 0.0
        %v9184 = vcombine.high %v7318, 0.0
        %v9186 = vunpack.c.l.s4 1983009808
        %v9187 = vunpack.c.0.s8 %v9186
        %v9188 = vlaneseq
        %v9189 = vshrl.u32 %v9188, 7
        %v9190 = vsub.s32 %v9187, %v9189
        %v9191 = vrot.slane %v7318, %v9190
        %v9193 = vunpack.c.l.s4 1983009808
        %v9194 = vunpack.c.0.s8 %v9193
        %v9195 = vlaneseq
        %v9196 = vshrl.u32 %v9195, 7
        %v9197 = vsub.s32 %v9194, %v9196
        %v9198 = vrot.slane %v9184, %v9197
        %v9199 = vcombine.high %v9191, 0.0
        %v9201 = vunpack.c.l.s4 1934713408
        %v9202 = vunpack.c.0.s8 %v9201
        %v9203 = vlaneseq
        %v9204 = vshrl.u32 %v9203, 7
        %v9205 = vsub.s32 %v9202, %v9204
        %v9206 = vrot.slane %v9191, %v9205
        %v9208 = vunpack.c.l.s4 1934713408
        %v9209 = vunpack.c.0.s8 %v9208
        %v9210 = vlaneseq
        %v9211 = vshrl.u32 %v9210, 7
        %v9212 = vsub.s32 %v9209, %v9211
        %v9213 = vrot.slane %v9199, %v9212
        %v9214 = vcombine.high %v9198, 0.0
        %v9216 = vunpack.c.l.s4 1934713408
        %v9217 = vunpack.c.0.s8 %v9216
        %v9218 = vlaneseq
        %v9219 = vshrl.u32 %v9218, 7
        %v9220 = vsub.s32 %v9217, %v9219
        %v9221 = vrot.slane %v9198, %v9220
        %v9223 = vunpack.c.l.s4 1934713408
        %v9224 = vunpack.c.0.s8 %v9223
        %v9225 = vlaneseq
        %v9226 = vshrl.u32 %v9225, 7
        %v9227 = vsub.s32 %v9224, %v9226
        %v9228 = vrot.slane %v9214, %v9227
        %v9229 = vcombine.high %v9206, 0.0
        %v9230 = vcombine.high %v9213, 0.0
        %v9231 = vcombine.high %v9221, 0.0
        %v9232 = vcombine.high %v9228, 0.0
        %v9233 = vcombine.high %v7319, 0.0
        %v9235 = vunpack.c.l.s4 1983009808
        %v9236 = vunpack.c.0.s8 %v9235
        %v9237 = vlaneseq
        %v9238 = vshrl.u32 %v9237, 7
        %v9239 = vsub.s32 %v9236, %v9238
        %v9240 = vrot.slane %v7319, %v9239
        %v9242 = vunpack.c.l.s4 1983009808
        %v9243 = vunpack.c.0.s8 %v9242
        %v9244 = vlaneseq
        %v9245 = vshrl.u32 %v9244, 7
        %v9246 = vsub.s32 %v9243, %v9245
        %v9247 = vrot.slane %v9233, %v9246
        %v9248 = vcombine.high %v9240, 0.0
        %v9250 = vunpack.c.l.s4 1934713408
        %v9251 = vunpack.c.0.s8 %v9250
        %v9252 = vlaneseq
        %v9253 = vshrl.u32 %v9252, 7
        %v9254 = vsub.s32 %v9251, %v9253
        %v9255 = vrot.slane %v9240, %v9254
        %v9257 = vunpack.c.l.s4 1934713408
        %v9258 = vunpack.c.0.s8 %v9257
        %v9259 = vlaneseq
        %v9260 = vshrl.u32 %v9259, 7
        %v9261 = vsub.s32 %v9258, %v9260
        %v9262 = vrot.slane %v9248, %v9261
        %v9263 = vcombine.high %v9247, 0.0
        %v9265 = vunpack.c.l.s4 1934713408
        %v9266 = vunpack.c.0.s8 %v9265
        %v9267 = vlaneseq
        %v9268 = vshrl.u32 %v9267, 7
        %v9269 = vsub.s32 %v9266, %v9268
        %v9270 = vrot.slane %v9247, %v9269
        %v9272 = vunpack.c.l.s4 1934713408
        %v9273 = vunpack.c.0.s8 %v9272
        %v9274 = vlaneseq
        %v9275 = vshrl.u32 %v9274, 7
        %v9276 = vsub.s32 %v9273, %v9275
        %v9277 = vrot.slane %v9263, %v9276
        %v9278 = vcombine.high %v9255, 0.0
        %v9279 = vcombine.high %v9262, 0.0
        %v9280 = vcombine.high %v9270, 0.0
        %v9281 = vcombine.high %v9277, 0.0
        %v9282 = vcombine.high %v7320, 0.0
        %v9284 = vunpack.c.l.s4 1983009808
        %v9285 = vunpack.c.0.s8 %v9284
        %v9286 = vlaneseq
        %v9287 = vshrl.u32 %v9286, 7
        %v9288 = vsub.s32 %v9285, %v9287
        %v9289 = vrot.slane %v7320, %v9288
        %v9291 = vunpack.c.l.s4 1983009808
        %v9292 = vunpack.c.0.s8 %v9291
        %v9293 = vlaneseq
        %v9294 = vshrl.u32 %v9293, 7
        %v9295 = vsub.s32 %v9292, %v9294
        %v9296 = vrot.slane %v9282, %v9295
        %v9297 = vcombine.high %v9289, 0.0
        %v9299 = vunpack.c.l.s4 1934713408
        %v9300 = vunpack.c.0.s8 %v9299
        %v9301 = vlaneseq
        %v9302 = vshrl.u32 %v9301, 7
        %v9303 = vsub.s32 %v9300, %v9302
        %v9304 = vrot.slane %v9289, %v9303
        %v9306 = vunpack.c.l.s4 1934713408
        %v9307 = vunpack.c.0.s8 %v9306
        %v9308 = vlaneseq
        %v9309 = vshrl.u32 %v9308, 7
        %v9310 = vsub.s32 %v9307, %v9309
        %v9311 = vrot.slane %v9297, %v9310
        %v9312 = vcombine.high %v9296, 0.0
        %v9314 = vunpack.c.l.s4 1934713408
        %v9315 = vunpack.c.0.s8 %v9314
        %v9316 = vlaneseq
        %v9317 = vshrl.u32 %v9316, 7
        %v9318 = vsub.s32 %v9315, %v9317
        %v9319 = vrot.slane %v9296, %v9318
        %v9321 = vunpack.c.l.s4 1934713408
        %v9322 = vunpack.c.0.s8 %v9321
        %v9323 = vlaneseq
        %v9324 = vshrl.u32 %v9323, 7
        %v9325 = vsub.s32 %v9322, %v9324
        %v9326 = vrot.slane %v9312, %v9325
        %v9327 = vcombine.high %v9304, 0.0
        %v9328 = vcombine.high %v9311, 0.0
        %v9329 = vcombine.high %v9319, 0.0
        %v9330 = vcombine.high %v9326, 0.0
        %v9331 = vcombine.high %v7321, 0.0
        %v9333 = vunpack.c.l.s4 1983009808
        %v9334 = vunpack.c.0.s8 %v9333
        %v9335 = vlaneseq
        %v9336 = vshrl.u32 %v9335, 7
        %v9337 = vsub.s32 %v9334, %v9336
        %v9338 = vrot.slane %v7321, %v9337
        %v9340 = vunpack.c.l.s4 1983009808
        %v9341 = vunpack.c.0.s8 %v9340
        %v9342 = vlaneseq
        %v9343 = vshrl.u32 %v9342, 7
        %v9344 = vsub.s32 %v9341, %v9343
        %v9345 = vrot.slane %v9331, %v9344
        %v9346 = vcombine.high %v9338, 0.0
        %v9348 = vunpack.c.l.s4 1934713408
        %v9349 = vunpack.c.0.s8 %v9348
        %v9350 = vlaneseq
        %v9351 = vshrl.u32 %v9350, 7
        %v9352 = vsub.s32 %v9349, %v9351
        %v9353 = vrot.slane %v9338, %v9352
        %v9355 = vunpack.c.l.s4 1934713408
        %v9356 = vunpack.c.0.s8 %v9355
        %v9357 = vlaneseq
        %v9358 = vshrl.u32 %v9357, 7
        %v9359 = vsub.s32 %v9356, %v9358
        %v9360 = vrot.slane %v9346, %v9359
        %v9361 = vcombine.high %v9345, 0.0
        %v9363 = vunpack.c.l.s4 1934713408
        %v9364 = vunpack.c.0.s8 %v9363
        %v9365 = vlaneseq
        %v9366 = vshrl.u32 %v9365, 7
        %v9367 = vsub.s32 %v9364, %v9366
        %v9368 = vrot.slane %v9345, %v9367
        %v9370 = vunpack.c.l.s4 1934713408
        %v9371 = vunpack.c.0.s8 %v9370
        %v9372 = vlaneseq
        %v9373 = vshrl.u32 %v9372, 7
        %v9374 = vsub.s32 %v9371, %v9373
        %v9375 = vrot.slane %v9361, %v9374
        %v9376 = vcombine.high %v9353, 0.0
        %v9377 = vcombine.high %v9360, 0.0
        %v9378 = vcombine.high %v9368, 0.0
        %v9379 = vcombine.high %v9375, 0.0
        %9412 = vrot.lane.b32.xlu0 %v7857, 2
        %v9413 = vpop.permute.xlu0 %9412
        %9414 = vrot.lane.b32.xlu0 %v7906, 2
        %v9415 = vpop.permute.xlu0 %9414
        %9416 = vrot.lane.b32.xlu0 %v7955, 2
        %v9417 = vpop.permute.xlu0 %9416
        %9418 = vrot.lane.b32.xlu0 %v8004, 2
        %v9419 = vpop.permute.xlu0 %9418
        %9420 = vrot.lane.b32.xlu0 %v8053, 2
        %v9421 = vpop.permute.xlu0 %9420
        %9422 = vrot.lane.b32.xlu0 %v8102, 2
        %v9423 = vpop.permute.xlu0 %9422
        %9424 = vrot.lane.b32.xlu0 %v8151, 2
        %v9425 = vpop.permute.xlu0 %9424
        %9426 = vrot.lane.b32.xlu0 %v8200, 2
        %v9427 = vpop.permute.xlu0 %9426
        %9428 = vrot.lane.b32.xlu0 %v8249, 2
        %v9429 = vpop.permute.xlu0 %9428
        %9430 = vrot.lane.b32.xlu0 %v8298, 2
        %v9431 = vpop.permute.xlu0 %9430
        %9432 = vrot.lane.b32.xlu0 %v8347, 2
        %v9433 = vpop.permute.xlu0 %9432
        %9434 = vrot.lane.b32.xlu0 %v8396, 2
        %v9435 = vpop.permute.xlu0 %9434
        %9436 = vrot.lane.b32.xlu0 %v8445, 2
        %v9437 = vpop.permute.xlu0 %9436
        %9438 = vrot.lane.b32.xlu0 %v8494, 2
        %v9439 = vpop.permute.xlu0 %9438
        %9440 = vrot.lane.b32.xlu0 %v8543, 2
        %v9441 = vpop.permute.xlu0 %9440
        %9442 = vrot.lane.b32.xlu0 %v8592, 2
        %v9443 = vpop.permute.xlu0 %9442
        %9444 = vrot.lane.b32.xlu0 %v8641, 2
        %v9445 = vpop.permute.xlu0 %9444
        %9446 = vrot.lane.b32.xlu0 %v8690, 2
        %v9447 = vpop.permute.xlu0 %9446
        %9448 = vrot.lane.b32.xlu0 %v8739, 2
        %v9449 = vpop.permute.xlu0 %9448
        %9450 = vrot.lane.b32.xlu0 %v8788, 2
        %v9451 = vpop.permute.xlu0 %9450
        %9452 = vrot.lane.b32.xlu0 %v8837, 2
        %v9453 = vpop.permute.xlu0 %9452
        %9454 = vrot.lane.b32.xlu0 %v8886, 2
        %v9455 = vpop.permute.xlu0 %9454
        %9456 = vrot.lane.b32.xlu0 %v8935, 2
        %v9457 = vpop.permute.xlu0 %9456
        %9458 = vrot.lane.b32.xlu0 %v8984, 2
        %v9459 = vpop.permute.xlu0 %9458
        %9460 = vrot.lane.b32.xlu0 %v9033, 2
        %v9461 = vpop.permute.xlu0 %9460
        %9462 = vrot.lane.b32.xlu0 %v9082, 2
        %v9463 = vpop.permute.xlu0 %9462
        %9464 = vrot.lane.b32.xlu0 %v9131, 2
        %v9465 = vpop.permute.xlu0 %9464
        %9466 = vrot.lane.b32.xlu0 %v9180, 2
        %v9467 = vpop.permute.xlu0 %9466
        %9468 = vrot.lane.b32.xlu0 %v9229, 2
        %v9469 = vpop.permute.xlu0 %9468
        %9470 = vrot.lane.b32.xlu0 %v9278, 2
        %v9471 = vpop.permute.xlu0 %9470
        %9472 = vrot.lane.b32.xlu0 %v9327, 2
        %v9473 = vpop.permute.xlu0 %9472
        %9474 = vrot.lane.b32.xlu0 %v9376, 2
        %v9475 = vpop.permute.xlu0 %9474
        %9540 = vrot.lane.b32.xlu0 %v7841, 4
        %v9541 = vpop.permute.xlu0 %9540
        %9542 = vrot.lane.b32.xlu0 %v7890, 4
        %v9543 = vpop.permute.xlu0 %9542
        %9544 = vrot.lane.b32.xlu0 %v7939, 4
        %v9545 = vpop.permute.xlu0 %9544
        %9546 = vrot.lane.b32.xlu0 %v7988, 4
        %v9547 = vpop.permute.xlu0 %9546
        %9548 = vrot.lane.b32.xlu0 %v8037, 4
        %v9549 = vpop.permute.xlu0 %9548
        %9550 = vrot.lane.b32.xlu0 %v8086, 4
        %v9551 = vpop.permute.xlu0 %9550
        %9552 = vrot.lane.b32.xlu0 %v8135, 4
        %v9553 = vpop.permute.xlu0 %9552
        %9554 = vrot.lane.b32.xlu0 %v8184, 4
        %v9555 = vpop.permute.xlu0 %9554
        %9556 = vrot.lane.b32.xlu0 %v8233, 4
        %v9557 = vpop.permute.xlu0 %9556
        %9558 = vrot.lane.b32.xlu0 %v8282, 4
        %v9559 = vpop.permute.xlu0 %9558
        %9560 = vrot.lane.b32.xlu0 %v8331, 4
        %v9561 = vpop.permute.xlu0 %9560
        %9562 = vrot.lane.b32.xlu0 %v8380, 4
        %v9563 = vpop.permute.xlu0 %9562
        %9564 = vrot.lane.b32.xlu0 %v8429, 4
        %v9565 = vpop.permute.xlu0 %9564
        %9566 = vrot.lane.b32.xlu0 %v8478, 4
        %v9567 = vpop.permute.xlu0 %9566
        %9568 = vrot.lane.b32.xlu0 %v8527, 4
        %v9569 = vpop.permute.xlu0 %9568
        %9570 = vrot.lane.b32.xlu0 %v8576, 4
        %v9571 = vpop.permute.xlu0 %9570
        %9572 = vrot.lane.b32.xlu0 %v8625, 4
        %v9573 = vpop.permute.xlu0 %9572
        %9574 = vrot.lane.b32.xlu0 %v8674, 4
        %v9575 = vpop.permute.xlu0 %9574
        %9576 = vrot.lane.b32.xlu0 %v8723, 4
        %v9577 = vpop.permute.xlu0 %9576
        %9578 = vrot.lane.b32.xlu0 %v8772, 4
        %v9579 = vpop.permute.xlu0 %9578
        %9580 = vrot.lane.b32.xlu0 %v8821, 4
        %v9581 = vpop.permute.xlu0 %9580
        %9582 = vrot.lane.b32.xlu0 %v8870, 4
        %v9583 = vpop.permute.xlu0 %9582
        %9584 = vrot.lane.b32.xlu0 %v8919, 4
        %v9585 = vpop.permute.xlu0 %9584
        %9586 = vrot.lane.b32.xlu0 %v8968, 4
        %v9587 = vpop.permute.xlu0 %9586
        %9588 = vrot.lane.b32.xlu0 %v9017, 4
        %v9589 = vpop.permute.xlu0 %9588
        %9590 = vrot.lane.b32.xlu0 %v9066, 4
        %v9591 = vpop.permute.xlu0 %9590
        %9592 = vrot.lane.b32.xlu0 %v9115, 4
        %v9593 = vpop.permute.xlu0 %9592
        %9594 = vrot.lane.b32.xlu0 %v9164, 4
        %v9595 = vpop.permute.xlu0 %9594
        %9596 = vrot.lane.b32.xlu0 %v9213, 4
        %v9597 = vpop.permute.xlu0 %9596
        %9598 = vrot.lane.b32.xlu0 %v9262, 4
        %v9599 = vpop.permute.xlu0 %9598
        %9600 = vrot.lane.b32.xlu0 %v9311, 4
        %v9601 = vpop.permute.xlu0 %9600
        %9602 = vrot.lane.b32.xlu0 %v9360, 4
        %v9603 = vpop.permute.xlu0 %9602
        %9668 = vrot.lane.b32.xlu0 %v7858, 6
        %v9669 = vpop.permute.xlu0 %9668
        %9670 = vrot.lane.b32.xlu0 %v7907, 6
        %v9671 = vpop.permute.xlu0 %9670
        %9672 = vrot.lane.b32.xlu0 %v7956, 6
        %v9673 = vpop.permute.xlu0 %9672
        %9674 = vrot.lane.b32.xlu0 %v8005, 6
        %v9675 = vpop.permute.xlu0 %9674
        %9676 = vrot.lane.b32.xlu0 %v8054, 6
        %v9677 = vpop.permute.xlu0 %9676
        %9678 = vrot.lane.b32.xlu0 %v8103, 6
        %v9679 = vpop.permute.xlu0 %9678
        %9680 = vrot.lane.b32.xlu0 %v8152, 6
        %v9681 = vpop.permute.xlu0 %9680
        %9682 = vrot.lane.b32.xlu0 %v8201, 6
        %v9683 = vpop.permute.xlu0 %9682
        %9684 = vrot.lane.b32.xlu0 %v8250, 6
        %v9685 = vpop.permute.xlu0 %9684
        %9686 = vrot.lane.b32.xlu0 %v8299, 6
        %v9687 = vpop.permute.xlu0 %9686
        %9688 = vrot.lane.b32.xlu0 %v8348, 6
        %v9689 = vpop.permute.xlu0 %9688
        %9690 = vrot.lane.b32.xlu0 %v8397, 6
        %v9691 = vpop.permute.xlu0 %9690
        %9692 = vrot.lane.b32.xlu0 %v8446, 6
        %v9693 = vpop.permute.xlu0 %9692
        %9694 = vrot.lane.b32.xlu0 %v8495, 6
        %v9695 = vpop.permute.xlu0 %9694
        %9696 = vrot.lane.b32.xlu0 %v8544, 6
        %v9697 = vpop.permute.xlu0 %9696
        %9698 = vrot.lane.b32.xlu0 %v8593, 6
        %v9699 = vpop.permute.xlu0 %9698
        %9700 = vrot.lane.b32.xlu0 %v8642, 6
        %v9701 = vpop.permute.xlu0 %9700
        %9702 = vrot.lane.b32.xlu0 %v8691, 6
        %v9703 = vpop.permute.xlu0 %9702
        %9704 = vrot.lane.b32.xlu0 %v8740, 6
        %v9705 = vpop.permute.xlu0 %9704
        %9706 = vrot.lane.b32.xlu0 %v8789, 6
        %v9707 = vpop.permute.xlu0 %9706
        %9708 = vrot.lane.b32.xlu0 %v8838, 6
        %v9709 = vpop.permute.xlu0 %9708
        %9710 = vrot.lane.b32.xlu0 %v8887, 6
        %v9711 = vpop.permute.xlu0 %9710
        %9712 = vrot.lane.b32.xlu0 %v8936, 6
        %v9713 = vpop.permute.xlu0 %9712
        %9714 = vrot.lane.b32.xlu0 %v8985, 6
        %v9715 = vpop.permute.xlu0 %9714
        %9716 = vrot.lane.b32.xlu0 %v9034, 6
        %v9717 = vpop.permute.xlu0 %9716
        %9718 = vrot.lane.b32.xlu0 %v9083, 6
        %v9719 = vpop.permute.xlu0 %9718
        %9720 = vrot.lane.b32.xlu0 %v9132, 6
        %v9721 = vpop.permute.xlu0 %9720
        %9722 = vrot.lane.b32.xlu0 %v9181, 6
        %v9723 = vpop.permute.xlu0 %9722
        %9724 = vrot.lane.b32.xlu0 %v9230, 6
        %v9725 = vpop.permute.xlu0 %9724
        %9726 = vrot.lane.b32.xlu0 %v9279, 6
        %v9727 = vpop.permute.xlu0 %9726
        %9728 = vrot.lane.b32.xlu0 %v9328, 6
        %v9729 = vpop.permute.xlu0 %9728
        %9730 = vrot.lane.b32.xlu0 %v9377, 6
        %v9731 = vpop.permute.xlu0 %9730
        %9796 = vrot.lane.b32.xlu0 %v7849, 8
        %v9797 = vpop.permute.xlu0 %9796
        %9798 = vrot.lane.b32.xlu0 %v7898, 8
        %v9799 = vpop.permute.xlu0 %9798
        %9800 = vrot.lane.b32.xlu0 %v7947, 8
        %v9801 = vpop.permute.xlu0 %9800
        %9802 = vrot.lane.b32.xlu0 %v7996, 8
        %v9803 = vpop.permute.xlu0 %9802
        %9804 = vrot.lane.b32.xlu0 %v8045, 8
        %v9805 = vpop.permute.xlu0 %9804
        %9806 = vrot.lane.b32.xlu0 %v8094, 8
        %v9807 = vpop.permute.xlu0 %9806
        %9808 = vrot.lane.b32.xlu0 %v8143, 8
        %v9809 = vpop.permute.xlu0 %9808
        %9810 = vrot.lane.b32.xlu0 %v8192, 8
        %v9811 = vpop.permute.xlu0 %9810
        %9812 = vrot.lane.b32.xlu0 %v8241, 8
        %v9813 = vpop.permute.xlu0 %9812
        %9814 = vrot.lane.b32.xlu0 %v8290, 8
        %v9815 = vpop.permute.xlu0 %9814
        %9816 = vrot.lane.b32.xlu0 %v8339, 8
        %v9817 = vpop.permute.xlu0 %9816
        %9818 = vrot.lane.b32.xlu0 %v8388, 8
        %v9819 = vpop.permute.xlu0 %9818
        %9820 = vrot.lane.b32.xlu0 %v8437, 8
        %v9821 = vpop.permute.xlu0 %9820
        %9822 = vrot.lane.b32.xlu0 %v8486, 8
        %v9823 = vpop.permute.xlu0 %9822
        %9824 = vrot.lane.b32.xlu0 %v8535, 8
        %v9825 = vpop.permute.xlu0 %9824
        %9826 = vrot.lane.b32.xlu0 %v8584, 8
        %v9827 = vpop.permute.xlu0 %9826
        %9828 = vrot.lane.b32.xlu0 %v8633, 8
        %v9829 = vpop.permute.xlu0 %9828
        %9830 = vrot.lane.b32.xlu0 %v8682, 8
        %v9831 = vpop.permute.xlu0 %9830
        %9832 = vrot.lane.b32.xlu0 %v8731, 8
        %v9833 = vpop.permute.xlu0 %9832
        %9834 = vrot.lane.b32.xlu0 %v8780, 8
        %v9835 = vpop.permute.xlu0 %9834
        %9836 = vrot.lane.b32.xlu0 %v8829, 8
        %v9837 = vpop.permute.xlu0 %9836
        %9838 = vrot.lane.b32.xlu0 %v8878, 8
        %v9839 = vpop.permute.xlu0 %9838
        %9840 = vrot.lane.b32.xlu0 %v8927, 8
        %v9841 = vpop.permute.xlu0 %9840
        %9842 = vrot.lane.b32.xlu0 %v8976, 8
        %v9843 = vpop.permute.xlu0 %9842
        %9844 = vrot.lane.b32.xlu0 %v9025, 8
        %v9845 = vpop.permute.xlu0 %9844
        %9846 = vrot.lane.b32.xlu0 %v9074, 8
        %v9847 = vpop.permute.xlu0 %9846
        %9848 = vrot.lane.b32.xlu0 %v9123, 8
        %v9849 = vpop.permute.xlu0 %9848
        %9850 = vrot.lane.b32.xlu0 %v9172, 8
        %v9851 = vpop.permute.xlu0 %9850
        %9852 = vrot.lane.b32.xlu0 %v9221, 8
        %v9853 = vpop.permute.xlu0 %9852
        %9854 = vrot.lane.b32.xlu0 %v9270, 8
        %v9855 = vpop.permute.xlu0 %9854
        %9856 = vrot.lane.b32.xlu0 %v9319, 8
        %v9857 = vpop.permute.xlu0 %9856
        %9858 = vrot.lane.b32.xlu0 %v9368, 8
        %v9859 = vpop.permute.xlu0 %9858
        %9924 = vrot.lane.b32.xlu0 %v7859, 10
        %v9925 = vpop.permute.xlu0 %9924
        %9926 = vrot.lane.b32.xlu0 %v7908, 10
        %v9927 = vpop.permute.xlu0 %9926
        %9928 = vrot.lane.b32.xlu0 %v7957, 10
        %v9929 = vpop.permute.xlu0 %9928
        %9930 = vrot.lane.b32.xlu0 %v8006, 10
        %v9931 = vpop.permute.xlu0 %9930
        %9932 = vrot.lane.b32.xlu0 %v8055, 10
        %v9933 = vpop.permute.xlu0 %9932
        %9934 = vrot.lane.b32.xlu0 %v8104, 10
        %v9935 = vpop.permute.xlu0 %9934
        %9936 = vrot.lane.b32.xlu0 %v8153, 10
        %v9937 = vpop.permute.xlu0 %9936
        %9938 = vrot.lane.b32.xlu0 %v8202, 10
        %v9939 = vpop.permute.xlu0 %9938
        %9940 = vrot.lane.b32.xlu0 %v8251, 10
        %v9941 = vpop.permute.xlu0 %9940
        %9942 = vrot.lane.b32.xlu0 %v8300, 10
        %v9943 = vpop.permute.xlu0 %9942
        %9944 = vrot.lane.b32.xlu0 %v8349, 10
        %v9945 = vpop.permute.xlu0 %9944
        %9946 = vrot.lane.b32.xlu0 %v8398, 10
        %v9947 = vpop.permute.xlu0 %9946
        %9948 = vrot.lane.b32.xlu0 %v8447, 10
        %v9949 = vpop.permute.xlu0 %9948
        %9950 = vrot.lane.b32.xlu0 %v8496, 10
        %v9951 = vpop.permute.xlu0 %9950
        %9952 = vrot.lane.b32.xlu0 %v8545, 10
        %v9953 = vpop.permute.xlu0 %9952
        %9954 = vrot.lane.b32.xlu0 %v8594, 10
        %v9955 = vpop.permute.xlu0 %9954
        %9956 = vrot.lane.b32.xlu0 %v8643, 10
        %v9957 = vpop.permute.xlu0 %9956
        %9958 = vrot.lane.b32.xlu0 %v8692, 10
        %v9959 = vpop.permute.xlu0 %9958
        %9960 = vrot.lane.b32.xlu0 %v8741, 10
        %v9961 = vpop.permute.xlu0 %9960
        %9962 = vrot.lane.b32.xlu0 %v8790, 10
        %v9963 = vpop.permute.xlu0 %9962
        %9964 = vrot.lane.b32.xlu0 %v8839, 10
        %v9965 = vpop.permute.xlu0 %9964
        %9966 = vrot.lane.b32.xlu0 %v8888, 10
        %v9967 = vpop.permute.xlu0 %9966
        %9968 = vrot.lane.b32.xlu0 %v8937, 10
        %v9969 = vpop.permute.xlu0 %9968
        %9970 = vrot.lane.b32.xlu0 %v8986, 10
        %v9971 = vpop.permute.xlu0 %9970
        %9972 = vrot.lane.b32.xlu0 %v9035, 10
        %v9973 = vpop.permute.xlu0 %9972
        %9974 = vrot.lane.b32.xlu0 %v9084, 10
        %v9975 = vpop.permute.xlu0 %9974
        %9976 = vrot.lane.b32.xlu0 %v9133, 10
        %v9977 = vpop.permute.xlu0 %9976
        %9978 = vrot.lane.b32.xlu0 %v9182, 10
        %v9979 = vpop.permute.xlu0 %9978
        %9980 = vrot.lane.b32.xlu0 %v9231, 10
        %v9981 = vpop.permute.xlu0 %9980
        %9982 = vrot.lane.b32.xlu0 %v9280, 10
        %v9983 = vpop.permute.xlu0 %9982
        %9984 = vrot.lane.b32.xlu0 %v9329, 10
        %v9985 = vpop.permute.xlu0 %9984
        %9986 = vrot.lane.b32.xlu0 %v9378, 10
        %v9987 = vpop.permute.xlu0 %9986
        %10052 = vrot.lane.b32.xlu0 %v7856, 12
        %v10053 = vpop.permute.xlu0 %10052
        %10054 = vrot.lane.b32.xlu0 %v7905, 12
        %v10055 = vpop.permute.xlu0 %10054
        %10056 = vrot.lane.b32.xlu0 %v7954, 12
        %v10057 = vpop.permute.xlu0 %10056
        %10058 = vrot.lane.b32.xlu0 %v8003, 12
        %v10059 = vpop.permute.xlu0 %10058
        %10060 = vrot.lane.b32.xlu0 %v8052, 12
        %v10061 = vpop.permute.xlu0 %10060
        %10062 = vrot.lane.b32.xlu0 %v8101, 12
        %v10063 = vpop.permute.xlu0 %10062
        %10064 = vrot.lane.b32.xlu0 %v8150, 12
        %v10065 = vpop.permute.xlu0 %10064
        %10066 = vrot.lane.b32.xlu0 %v8199, 12
        %v10067 = vpop.permute.xlu0 %10066
        %10068 = vrot.lane.b32.xlu0 %v8248, 12
        %v10069 = vpop.permute.xlu0 %10068
        %10070 = vrot.lane.b32.xlu0 %v8297, 12
        %v10071 = vpop.permute.xlu0 %10070
        %10072 = vrot.lane.b32.xlu0 %v8346, 12
        %v10073 = vpop.permute.xlu0 %10072
        %10074 = vrot.lane.b32.xlu0 %v8395, 12
        %v10075 = vpop.permute.xlu0 %10074
        %10076 = vrot.lane.b32.xlu0 %v8444, 12
        %v10077 = vpop.permute.xlu0 %10076
        %10078 = vrot.lane.b32.xlu0 %v8493, 12
        %v10079 = vpop.permute.xlu0 %10078
        %10080 = vrot.lane.b32.xlu0 %v8542, 12
        %v10081 = vpop.permute.xlu0 %10080
        %10082 = vrot.lane.b32.xlu0 %v8591, 12
        %v10083 = vpop.permute.xlu0 %10082
        %10084 = vrot.lane.b32.xlu0 %v8640, 12
        %v10085 = vpop.permute.xlu0 %10084
        %10086 = vrot.lane.b32.xlu0 %v8689, 12
        %v10087 = vpop.permute.xlu0 %10086
        %10088 = vrot.lane.b32.xlu0 %v8738, 12
        %v10089 = vpop.permute.xlu0 %10088
        %10090 = vrot.lane.b32.xlu0 %v8787, 12
        %v10091 = vpop.permute.xlu0 %10090
        %10092 = vrot.lane.b32.xlu0 %v8836, 12
        %v10093 = vpop.permute.xlu0 %10092
        %10094 = vrot.lane.b32.xlu0 %v8885, 12
        %v10095 = vpop.permute.xlu0 %10094
        %10096 = vrot.lane.b32.xlu0 %v8934, 12
        %v10097 = vpop.permute.xlu0 %10096
        %10098 = vrot.lane.b32.xlu0 %v8983, 12
        %v10099 = vpop.permute.xlu0 %10098
        %10100 = vrot.lane.b32.xlu0 %v9032, 12
        %v10101 = vpop.permute.xlu0 %10100
        %10102 = vrot.lane.b32.xlu0 %v9081, 12
        %v10103 = vpop.permute.xlu0 %10102
        %10104 = vrot.lane.b32.xlu0 %v9130, 12
        %v10105 = vpop.permute.xlu0 %10104
        %10106 = vrot.lane.b32.xlu0 %v9179, 12
        %v10107 = vpop.permute.xlu0 %10106
        %10108 = vrot.lane.b32.xlu0 %v9228, 12
        %v10109 = vpop.permute.xlu0 %10108
        %10110 = vrot.lane.b32.xlu0 %v9277, 12
        %v10111 = vpop.permute.xlu0 %10110
        %10112 = vrot.lane.b32.xlu0 %v9326, 12
        %v10113 = vpop.permute.xlu0 %10112
        %10114 = vrot.lane.b32.xlu0 %v9375, 12
        %v10115 = vpop.permute.xlu0 %10114
        %10180 = vrot.lane.b32.xlu0 %v7860, 14
        %v10181 = vpop.permute.xlu0 %10180
        %10182 = vrot.lane.b32.xlu0 %v7909, 14
        %v10183 = vpop.permute.xlu0 %10182
        %10184 = vrot.lane.b32.xlu0 %v7958, 14
        %v10185 = vpop.permute.xlu0 %10184
        %10186 = vrot.lane.b32.xlu0 %v8007, 14
        %v10187 = vpop.permute.xlu0 %10186
        %10188 = vrot.lane.b32.xlu0 %v8056, 14
        %v10189 = vpop.permute.xlu0 %10188
        %10190 = vrot.lane.b32.xlu0 %v8105, 14
        %v10191 = vpop.permute.xlu0 %10190
        %10192 = vrot.lane.b32.xlu0 %v8154, 14
        %v10193 = vpop.permute.xlu0 %10192
        %10194 = vrot.lane.b32.xlu0 %v8203, 14
        %v10195 = vpop.permute.xlu0 %10194
        %10196 = vrot.lane.b32.xlu0 %v8252, 14
        %v10197 = vpop.permute.xlu0 %10196
        %10198 = vrot.lane.b32.xlu0 %v8301, 14
        %v10199 = vpop.permute.xlu0 %10198
        %10200 = vrot.lane.b32.xlu0 %v8350, 14
        %v10201 = vpop.permute.xlu0 %10200
        %10202 = vrot.lane.b32.xlu0 %v8399, 14
        %v10203 = vpop.permute.xlu0 %10202
        %10204 = vrot.lane.b32.xlu0 %v8448, 14
        %v10205 = vpop.permute.xlu0 %10204
        %10206 = vrot.lane.b32.xlu0 %v8497, 14
        %v10207 = vpop.permute.xlu0 %10206
        %10208 = vrot.lane.b32.xlu0 %v8546, 14
        %v10209 = vpop.permute.xlu0 %10208
        %10210 = vrot.lane.b32.xlu0 %v8595, 14
        %v10211 = vpop.permute.xlu0 %10210
        %10212 = vrot.lane.b32.xlu0 %v8644, 14
        %v10213 = vpop.permute.xlu0 %10212
        %10214 = vrot.lane.b32.xlu0 %v8693, 14
        %v10215 = vpop.permute.xlu0 %10214
        %10216 = vrot.lane.b32.xlu0 %v8742, 14
        %v10217 = vpop.permute.xlu0 %10216
        %10218 = vrot.lane.b32.xlu0 %v8791, 14
        %v10219 = vpop.permute.xlu0 %10218
        %10220 = vrot.lane.b32.xlu0 %v8840, 14
        %v10221 = vpop.permute.xlu0 %10220
        %10222 = vrot.lane.b32.xlu0 %v8889, 14
        %v10223 = vpop.permute.xlu0 %10222
        %10224 = vrot.lane.b32.xlu0 %v8938, 14
        %v10225 = vpop.permute.xlu0 %10224
        %10226 = vrot.lane.b32.xlu0 %v8987, 14
        %v10227 = vpop.permute.xlu0 %10226
        %10228 = vrot.lane.b32.xlu0 %v9036, 14
        %v10229 = vpop.permute.xlu0 %10228
        %10230 = vrot.lane.b32.xlu0 %v9085, 14
        %v10231 = vpop.permute.xlu0 %10230
        %10232 = vrot.lane.b32.xlu0 %v9134, 14
        %v10233 = vpop.permute.xlu0 %10232
        %10234 = vrot.lane.b32.xlu0 %v9183, 14
        %v10235 = vpop.permute.xlu0 %10234
        %10236 = vrot.lane.b32.xlu0 %v9232, 14
        %v10237 = vpop.permute.xlu0 %10236
        %10238 = vrot.lane.b32.xlu0 %v9281, 14
        %v10239 = vpop.permute.xlu0 %10238
        %10240 = vrot.lane.b32.xlu0 %v9330, 14
        %v10241 = vpop.permute.xlu0 %10240
        %10242 = vrot.lane.b32.xlu0 %v9379, 14
        %v10243 = vpop.permute.xlu0 %10242
        %v10276 = vsel %vm3599, %v7834, %v9413
        %v10277 = vsel %vm3599, %v7883, %v9415
        %v10278 = vsel %vm3599, %v7932, %v9417
        %v10279 = vsel %vm3599, %v7981, %v9419
        %v10280 = vsel %vm3599, %v8030, %v9421
        %v10281 = vsel %vm3599, %v8079, %v9423
        %v10282 = vsel %vm3599, %v8128, %v9425
        %v10283 = vsel %vm3599, %v8177, %v9427
        %v10284 = vsel %vm3599, %v8226, %v9429
        %v10285 = vsel %vm3599, %v8275, %v9431
        %v10286 = vsel %vm3599, %v8324, %v9433
        %v10287 = vsel %vm3599, %v8373, %v9435
        %v10288 = vsel %vm3599, %v8422, %v9437
        %v10289 = vsel %vm3599, %v8471, %v9439
        %v10290 = vsel %vm3599, %v8520, %v9441
        %v10291 = vsel %vm3599, %v8569, %v9443
        %v10292 = vsel %vm3599, %v8618, %v9445
        %v10293 = vsel %vm3599, %v8667, %v9447
        %v10294 = vsel %vm3599, %v8716, %v9449
        %v10295 = vsel %vm3599, %v8765, %v9451
        %v10296 = vsel %vm3599, %v8814, %v9453
        %v10297 = vsel %vm3599, %v8863, %v9455
        %v10298 = vsel %vm3599, %v8912, %v9457
        %v10299 = vsel %vm3599, %v8961, %v9459
        %v10300 = vsel %vm3599, %v9010, %v9461
        %v10301 = vsel %vm3599, %v9059, %v9463
        %v10302 = vsel %vm3599, %v9108, %v9465
        %v10303 = vsel %vm3599, %v9157, %v9467
        %v10304 = vsel %vm3599, %v9206, %v9469
        %v10305 = vsel %vm3599, %v9255, %v9471
        %v10306 = vsel %vm3599, %v9304, %v9473
        %v10307 = vsel %vm3599, %v9353, %v9475
        %v10308 = vsel %vm3632, %v10276, %v9541
        %v10309 = vsel %vm3632, %v10277, %v9543
        %v10310 = vsel %vm3632, %v10278, %v9545
        %v10311 = vsel %vm3632, %v10279, %v9547
        %v10312 = vsel %vm3632, %v10280, %v9549
        %v10313 = vsel %vm3632, %v10281, %v9551
        %v10314 = vsel %vm3632, %v10282, %v9553
        %v10315 = vsel %vm3632, %v10283, %v9555
        %v10316 = vsel %vm3632, %v10284, %v9557
        %v10317 = vsel %vm3632, %v10285, %v9559
        %v10318 = vsel %vm3632, %v10286, %v9561
        %v10319 = vsel %vm3632, %v10287, %v9563
        %v10320 = vsel %vm3632, %v10288, %v9565
        %v10321 = vsel %vm3632, %v10289, %v9567
        %v10322 = vsel %vm3632, %v10290, %v9569
        %v10323 = vsel %vm3632, %v10291, %v9571
        %v10324 = vsel %vm3632, %v10292, %v9573
        %v10325 = vsel %vm3632, %v10293, %v9575
        %v10326 = vsel %vm3632, %v10294, %v9577
        %v10327 = vsel %vm3632, %v10295, %v9579
        %v10328 = vsel %vm3632, %v10296, %v9581
        %v10329 = vsel %vm3632, %v10297, %v9583
        %v10330 = vsel %vm3632, %v10298, %v9585
        %v10331 = vsel %vm3632, %v10299, %v9587
        %v10332 = vsel %vm3632, %v10300, %v9589
        %v10333 = vsel %vm3632, %v10301, %v9591
        %v10334 = vsel %vm3632, %v10302, %v9593
        %v10335 = vsel %vm3632, %v10303, %v9595
        %v10336 = vsel %vm3632, %v10304, %v9597
        %v10337 = vsel %vm3632, %v10305, %v9599
        %v10338 = vsel %vm3632, %v10306, %v9601
        %v10339 = vsel %vm3632, %v10307, %v9603
        %v10340 = vsel %vm3665, %v10308, %v9669
        %v10341 = vsel %vm3665, %v10309, %v9671
        %v10342 = vsel %vm3665, %v10310, %v9673
        %v10343 = vsel %vm3665, %v10311, %v9675
        %v10344 = vsel %vm3665, %v10312, %v9677
        %v10345 = vsel %vm3665, %v10313, %v9679
        %v10346 = vsel %vm3665, %v10314, %v9681
        %v10347 = vsel %vm3665, %v10315, %v9683
        %v10348 = vsel %vm3665, %v10316, %v9685
        %v10349 = vsel %vm3665, %v10317, %v9687
        %v10350 = vsel %vm3665, %v10318, %v9689
        %v10351 = vsel %vm3665, %v10319, %v9691
        %v10352 = vsel %vm3665, %v10320, %v9693
        %v10353 = vsel %vm3665, %v10321, %v9695
        %v10354 = vsel %vm3665, %v10322, %v9697
        %v10355 = vsel %vm3665, %v10323, %v9699
        %v10356 = vsel %vm3665, %v10324, %v9701
        %v10357 = vsel %vm3665, %v10325, %v9703
        %v10358 = vsel %vm3665, %v10326, %v9705
        %v10359 = vsel %vm3665, %v10327, %v9707
        %v10360 = vsel %vm3665, %v10328, %v9709
        %v10361 = vsel %vm3665, %v10329, %v9711
        %v10362 = vsel %vm3665, %v10330, %v9713
        %v10363 = vsel %vm3665, %v10331, %v9715
        %v10364 = vsel %vm3665, %v10332, %v9717
        %v10365 = vsel %vm3665, %v10333, %v9719
        %v10366 = vsel %vm3665, %v10334, %v9721
        %v10367 = vsel %vm3665, %v10335, %v9723
        %v10368 = vsel %vm3665, %v10336, %v9725
        %v10369 = vsel %vm3665, %v10337, %v9727
        %v10370 = vsel %vm3665, %v10338, %v9729
        %v10371 = vsel %vm3665, %v10339, %v9731
        %v10372 = vsel %vm3698, %v10340, %v9797
        %v10373 = vsel %vm3698, %v10341, %v9799
        %v10374 = vsel %vm3698, %v10342, %v9801
        %v10375 = vsel %vm3698, %v10343, %v9803
        %v10376 = vsel %vm3698, %v10344, %v9805
        %v10377 = vsel %vm3698, %v10345, %v9807
        %v10378 = vsel %vm3698, %v10346, %v9809
        %v10379 = vsel %vm3698, %v10347, %v9811
        %v10380 = vsel %vm3698, %v10348, %v9813
        %v10381 = vsel %vm3698, %v10349, %v9815
        %v10382 = vsel %vm3698, %v10350, %v9817
        %v10383 = vsel %vm3698, %v10351, %v9819
        %v10384 = vsel %vm3698, %v10352, %v9821
        %v10385 = vsel %vm3698, %v10353, %v9823
        %v10386 = vsel %vm3698, %v10354, %v9825
        %v10387 = vsel %vm3698, %v10355, %v9827
        %v10388 = vsel %vm3698, %v10356, %v9829
        %v10389 = vsel %vm3698, %v10357, %v9831
        %v10390 = vsel %vm3698, %v10358, %v9833
        %v10391 = vsel %vm3698, %v10359, %v9835
        %v10392 = vsel %vm3698, %v10360, %v9837
        %v10393 = vsel %vm3698, %v10361, %v9839
        %v10394 = vsel %vm3698, %v10362, %v9841
        %v10395 = vsel %vm3698, %v10363, %v9843
        %v10396 = vsel %vm3698, %v10364, %v9845
        %v10397 = vsel %vm3698, %v10365, %v9847
        %v10398 = vsel %vm3698, %v10366, %v9849
        %v10399 = vsel %vm3698, %v10367, %v9851
        %v10400 = vsel %vm3698, %v10368, %v9853
        %v10401 = vsel %vm3698, %v10369, %v9855
        %v10402 = vsel %vm3698, %v10370, %v9857
        %v10403 = vsel %vm3698, %v10371, %v9859
        %v10404 = vsel %vm3731, %v10372, %v9925
        %v10405 = vsel %vm3731, %v10373, %v9927
        %v10406 = vsel %vm3731, %v10374, %v9929
        %v10407 = vsel %vm3731, %v10375, %v9931
        %v10408 = vsel %vm3731, %v10376, %v9933
        %v10409 = vsel %vm3731, %v10377, %v9935
        %v10410 = vsel %vm3731, %v10378, %v9937
        %v10411 = vsel %vm3731, %v10379, %v9939
        %v10412 = vsel %vm3731, %v10380, %v9941
        %v10413 = vsel %vm3731, %v10381, %v9943
        %v10414 = vsel %vm3731, %v10382, %v9945
        %v10415 = vsel %vm3731, %v10383, %v9947
        %v10416 = vsel %vm3731, %v10384, %v9949
        %v10417 = vsel %vm3731, %v10385, %v9951
        %v10418 = vsel %vm3731, %v10386, %v9953
        %v10419 = vsel %vm3731, %v10387, %v9955
        %v10420 = vsel %vm3731, %v10388, %v9957
        %v10421 = vsel %vm3731, %v10389, %v9959
        %v10422 = vsel %vm3731, %v10390, %v9961
        %v10423 = vsel %vm3731, %v10391, %v9963
        %v10424 = vsel %vm3731, %v10392, %v9965
        %v10425 = vsel %vm3731, %v10393, %v9967
        %v10426 = vsel %vm3731, %v10394, %v9969
        %v10427 = vsel %vm3731, %v10395, %v9971
        %v10428 = vsel %vm3731, %v10396, %v9973
        %v10429 = vsel %vm3731, %v10397, %v9975
        %v10430 = vsel %vm3731, %v10398, %v9977
        %v10431 = vsel %vm3731, %v10399, %v9979
        %v10432 = vsel %vm3731, %v10400, %v9981
        %v10433 = vsel %vm3731, %v10401, %v9983
        %v10434 = vsel %vm3731, %v10402, %v9985
        %v10435 = vsel %vm3731, %v10403, %v9987
        %v10436 = vsel %vm3764, %v10404, %v10053
        %v10437 = vsel %vm3764, %v10405, %v10055
        %v10438 = vsel %vm3764, %v10406, %v10057
        %v10439 = vsel %vm3764, %v10407, %v10059
        %v10440 = vsel %vm3764, %v10408, %v10061
        %v10441 = vsel %vm3764, %v10409, %v10063
        %v10442 = vsel %vm3764, %v10410, %v10065
        %v10443 = vsel %vm3764, %v10411, %v10067
        %v10444 = vsel %vm3764, %v10412, %v10069
        %v10445 = vsel %vm3764, %v10413, %v10071
        %v10446 = vsel %vm3764, %v10414, %v10073
        %v10447 = vsel %vm3764, %v10415, %v10075
        %v10448 = vsel %vm3764, %v10416, %v10077
        %v10449 = vsel %vm3764, %v10417, %v10079
        %v10450 = vsel %vm3764, %v10418, %v10081
        %v10451 = vsel %vm3764, %v10419, %v10083
        %v10452 = vsel %vm3764, %v10420, %v10085
        %v10453 = vsel %vm3764, %v10421, %v10087
        %v10454 = vsel %vm3764, %v10422, %v10089
        %v10455 = vsel %vm3764, %v10423, %v10091
        %v10456 = vsel %vm3764, %v10424, %v10093
        %v10457 = vsel %vm3764, %v10425, %v10095
        %v10458 = vsel %vm3764, %v10426, %v10097
        %v10459 = vsel %vm3764, %v10427, %v10099
        %v10460 = vsel %vm3764, %v10428, %v10101
        %v10461 = vsel %vm3764, %v10429, %v10103
        %v10462 = vsel %vm3764, %v10430, %v10105
        %v10463 = vsel %vm3764, %v10431, %v10107
        %v10464 = vsel %vm3764, %v10432, %v10109
        %v10465 = vsel %vm3764, %v10433, %v10111
        %v10466 = vsel %vm3764, %v10434, %v10113
        %v10467 = vsel %vm3764, %v10435, %v10115
        %v10468 = vsel %vm3797, %v10436, %v10181
        %v10469 = vsel %vm3797, %v10437, %v10183
        %v10470 = vsel %vm3797, %v10438, %v10185
        %v10471 = vsel %vm3797, %v10439, %v10187
        %v10472 = vsel %vm3797, %v10440, %v10189
        %v10473 = vsel %vm3797, %v10441, %v10191
        %v10474 = vsel %vm3797, %v10442, %v10193
        %v10475 = vsel %vm3797, %v10443, %v10195
        %v10476 = vsel %vm3797, %v10444, %v10197
        %v10477 = vsel %vm3797, %v10445, %v10199
        %v10478 = vsel %vm3797, %v10446, %v10201
        %v10479 = vsel %vm3797, %v10447, %v10203
        %v10480 = vsel %vm3797, %v10448, %v10205
        %v10481 = vsel %vm3797, %v10449, %v10207
        %v10482 = vsel %vm3797, %v10450, %v10209
        %v10483 = vsel %vm3797, %v10451, %v10211
        %v10484 = vsel %vm3797, %v10452, %v10213
        %v10485 = vsel %vm3797, %v10453, %v10215
        %v10486 = vsel %vm3797, %v10454, %v10217
        %v10487 = vsel %vm3797, %v10455, %v10219
        %v10488 = vsel %vm3797, %v10456, %v10221
        %v10489 = vsel %vm3797, %v10457, %v10223
        %v10490 = vsel %vm3797, %v10458, %v10225
        %v10491 = vsel %vm3797, %v10459, %v10227
        %v10492 = vsel %vm3797, %v10460, %v10229
        %v10493 = vsel %vm3797, %v10461, %v10231
        %v10494 = vsel %vm3797, %v10462, %v10233
        %v10495 = vsel %vm3797, %v10463, %v10235
        %v10496 = vsel %vm3797, %v10464, %v10237
        %v10497 = vsel %vm3797, %v10465, %v10239
        %v10498 = vsel %vm3797, %v10466, %v10241
        %v10499 = vsel %vm3797, %v10467, %v10243
        %v10500 = vcombine.high %v7780, 0.0
        %v10502 = vunpack.c.l.s4 1983009808
        %v10503 = vunpack.c.0.s8 %v10502
        %v10504 = vlaneseq
        %v10505 = vshrl.u32 %v10504, 7
        %v10506 = vsub.s32 %v10503, %v10505
        %v10507 = vrot.slane %v7780, %v10506
        %v10509 = vunpack.c.l.s4 1983009808
        %v10510 = vunpack.c.0.s8 %v10509
        %v10511 = vlaneseq
        %v10512 = vshrl.u32 %v10511, 7
        %v10513 = vsub.s32 %v10510, %v10512
        %v10514 = vrot.slane %v10500, %v10513
        %v10515 = vcombine.high %v10507, 0.0
        %v10517 = vunpack.c.l.s4 1934713408
        %v10518 = vunpack.c.0.s8 %v10517
        %v10519 = vlaneseq
        %v10520 = vshrl.u32 %v10519, 7
        %v10521 = vsub.s32 %v10518, %v10520
        %v10522 = vrot.slane %v10507, %v10521
        %v10524 = vunpack.c.l.s4 1934713408
        %v10525 = vunpack.c.0.s8 %v10524
        %v10526 = vlaneseq
        %v10527 = vshrl.u32 %v10526, 7
        %v10528 = vsub.s32 %v10525, %v10527
        %v10529 = vrot.slane %v10515, %v10528
        %v10530 = vcombine.high %v10514, 0.0
        %v10532 = vunpack.c.l.s4 1934713408
        %v10533 = vunpack.c.0.s8 %v10532
        %v10534 = vlaneseq
        %v10535 = vshrl.u32 %v10534, 7
        %v10536 = vsub.s32 %v10533, %v10535
        %v10537 = vrot.slane %v10514, %v10536
        %v10539 = vunpack.c.l.s4 1934713408
        %v10540 = vunpack.c.0.s8 %v10539
        %v10541 = vlaneseq
        %v10542 = vshrl.u32 %v10541, 7
        %v10543 = vsub.s32 %v10540, %v10542
        %v10544 = vrot.slane %v10530, %v10543
        %v10545 = vcombine.high %v10522, 0.0
        %v10546 = vcombine.high %v10529, 0.0
        %v10547 = vcombine.high %v10537, 0.0
        %v10548 = vcombine.high %v10544, 0.0
        %v10549 = vcombine.high %v7781, 0.0
        %v10551 = vunpack.c.l.s4 1983009808
        %v10552 = vunpack.c.0.s8 %v10551
        %v10553 = vlaneseq
        %v10554 = vshrl.u32 %v10553, 7
        %v10555 = vsub.s32 %v10552, %v10554
        %v10556 = vrot.slane %v7781, %v10555
        %v10558 = vunpack.c.l.s4 1983009808
        %v10559 = vunpack.c.0.s8 %v10558
        %v10560 = vlaneseq
        %v10561 = vshrl.u32 %v10560, 7
        %v10562 = vsub.s32 %v10559, %v10561
        %v10563 = vrot.slane %v10549, %v10562
        %v10564 = vcombine.high %v10556, 0.0
        %v10566 = vunpack.c.l.s4 1934713408
        %v10567 = vunpack.c.0.s8 %v10566
        %v10568 = vlaneseq
        %v10569 = vshrl.u32 %v10568, 7
        %v10570 = vsub.s32 %v10567, %v10569
        %v10571 = vrot.slane %v10556, %v10570
        %v10573 = vunpack.c.l.s4 1934713408
        %v10574 = vunpack.c.0.s8 %v10573
        %v10575 = vlaneseq
        %v10576 = vshrl.u32 %v10575, 7
        %v10577 = vsub.s32 %v10574, %v10576
        %v10578 = vrot.slane %v10564, %v10577
        %v10579 = vcombine.high %v10563, 0.0
        %v10581 = vunpack.c.l.s4 1934713408
        %v10582 = vunpack.c.0.s8 %v10581
        %v10583 = vlaneseq
        %v10584 = vshrl.u32 %v10583, 7
        %v10585 = vsub.s32 %v10582, %v10584
        %v10586 = vrot.slane %v10563, %v10585
        %v10588 = vunpack.c.l.s4 1934713408
        %v10589 = vunpack.c.0.s8 %v10588
        %v10590 = vlaneseq
        %v10591 = vshrl.u32 %v10590, 7
        %v10592 = vsub.s32 %v10589, %v10591
        %v10593 = vrot.slane %v10579, %v10592
        %v10594 = vcombine.high %v10571, 0.0
        %v10595 = vcombine.high %v10578, 0.0
        %v10596 = vcombine.high %v10586, 0.0
        %v10597 = vcombine.high %v10593, 0.0
        %v10598 = vcombine.high %v7782, 0.0
        %v10600 = vunpack.c.l.s4 1983009808
        %v10601 = vunpack.c.0.s8 %v10600
        %v10602 = vlaneseq
        %v10603 = vshrl.u32 %v10602, 7
        %v10604 = vsub.s32 %v10601, %v10603
        %v10605 = vrot.slane %v7782, %v10604
        %v10607 = vunpack.c.l.s4 1983009808
        %v10608 = vunpack.c.0.s8 %v10607
        %v10609 = vlaneseq
        %v10610 = vshrl.u32 %v10609, 7
        %v10611 = vsub.s32 %v10608, %v10610
        %v10612 = vrot.slane %v10598, %v10611
        %v10613 = vcombine.high %v10605, 0.0
        %v10615 = vunpack.c.l.s4 1934713408
        %v10616 = vunpack.c.0.s8 %v10615
        %v10617 = vlaneseq
        %v10618 = vshrl.u32 %v10617, 7
        %v10619 = vsub.s32 %v10616, %v10618
        %v10620 = vrot.slane %v10605, %v10619
        %v10622 = vunpack.c.l.s4 1934713408
        %v10623 = vunpack.c.0.s8 %v10622
        %v10624 = vlaneseq
        %v10625 = vshrl.u32 %v10624, 7
        %v10626 = vsub.s32 %v10623, %v10625
        %v10627 = vrot.slane %v10613, %v10626
        %v10628 = vcombine.high %v10612, 0.0
        %v10630 = vunpack.c.l.s4 1934713408
        %v10631 = vunpack.c.0.s8 %v10630
        %v10632 = vlaneseq
        %v10633 = vshrl.u32 %v10632, 7
        %v10634 = vsub.s32 %v10631, %v10633
        %v10635 = vrot.slane %v10612, %v10634
        %v10637 = vunpack.c.l.s4 1934713408
        %v10638 = vunpack.c.0.s8 %v10637
        %v10639 = vlaneseq
        %v10640 = vshrl.u32 %v10639, 7
        %v10641 = vsub.s32 %v10638, %v10640
        %v10642 = vrot.slane %v10628, %v10641
        %v10643 = vcombine.high %v10620, 0.0
        %v10644 = vcombine.high %v10627, 0.0
        %v10645 = vcombine.high %v10635, 0.0
        %v10646 = vcombine.high %v10642, 0.0
        %v10647 = vcombine.high %v7783, 0.0
        %v10649 = vunpack.c.l.s4 1983009808
        %v10650 = vunpack.c.0.s8 %v10649
        %v10651 = vlaneseq
        %v10652 = vshrl.u32 %v10651, 7
        %v10653 = vsub.s32 %v10650, %v10652
        %v10654 = vrot.slane %v7783, %v10653
        %v10656 = vunpack.c.l.s4 1983009808
        %v10657 = vunpack.c.0.s8 %v10656
        %v10658 = vlaneseq
        %v10659 = vshrl.u32 %v10658, 7
        %v10660 = vsub.s32 %v10657, %v10659
        %v10661 = vrot.slane %v10647, %v10660
        %v10662 = vcombine.high %v10654, 0.0
        %v10664 = vunpack.c.l.s4 1934713408
        %v10665 = vunpack.c.0.s8 %v10664
        %v10666 = vlaneseq
        %v10667 = vshrl.u32 %v10666, 7
        %v10668 = vsub.s32 %v10665, %v10667
        %v10669 = vrot.slane %v10654, %v10668
        %v10671 = vunpack.c.l.s4 1934713408
        %v10672 = vunpack.c.0.s8 %v10671
        %v10673 = vlaneseq
        %v10674 = vshrl.u32 %v10673, 7
        %v10675 = vsub.s32 %v10672, %v10674
        %v10676 = vrot.slane %v10662, %v10675
        %v10677 = vcombine.high %v10661, 0.0
        %v10679 = vunpack.c.l.s4 1934713408
        %v10680 = vunpack.c.0.s8 %v10679
        %v10681 = vlaneseq
        %v10682 = vshrl.u32 %v10681, 7
        %v10683 = vsub.s32 %v10680, %v10682
        %v10684 = vrot.slane %v10661, %v10683
        %v10686 = vunpack.c.l.s4 1934713408
        %v10687 = vunpack.c.0.s8 %v10686
        %v10688 = vlaneseq
        %v10689 = vshrl.u32 %v10688, 7
        %v10690 = vsub.s32 %v10687, %v10689
        %v10691 = vrot.slane %v10677, %v10690
        %v10692 = vcombine.high %v10669, 0.0
        %v10693 = vcombine.high %v10676, 0.0
        %v10694 = vcombine.high %v10684, 0.0
        %v10695 = vcombine.high %v10691, 0.0
        %v10696 = vcombine.high %v7784, 0.0
        %v10698 = vunpack.c.l.s4 1983009808
        %v10699 = vunpack.c.0.s8 %v10698
        %v10700 = vlaneseq
        %v10701 = vshrl.u32 %v10700, 7
        %v10702 = vsub.s32 %v10699, %v10701
        %v10703 = vrot.slane %v7784, %v10702
        %v10705 = vunpack.c.l.s4 1983009808
        %v10706 = vunpack.c.0.s8 %v10705
        %v10707 = vlaneseq
        %v10708 = vshrl.u32 %v10707, 7
        %v10709 = vsub.s32 %v10706, %v10708
        %v10710 = vrot.slane %v10696, %v10709
        %v10711 = vcombine.high %v10703, 0.0
        %v10713 = vunpack.c.l.s4 1934713408
        %v10714 = vunpack.c.0.s8 %v10713
        %v10715 = vlaneseq
        %v10716 = vshrl.u32 %v10715, 7
        %v10717 = vsub.s32 %v10714, %v10716
        %v10718 = vrot.slane %v10703, %v10717
        %v10720 = vunpack.c.l.s4 1934713408
        %v10721 = vunpack.c.0.s8 %v10720
        %v10722 = vlaneseq
        %v10723 = vshrl.u32 %v10722, 7
        %v10724 = vsub.s32 %v10721, %v10723
        %v10725 = vrot.slane %v10711, %v10724
        %v10726 = vcombine.high %v10710, 0.0
        %v10728 = vunpack.c.l.s4 1934713408
        %v10729 = vunpack.c.0.s8 %v10728
        %v10730 = vlaneseq
        %v10731 = vshrl.u32 %v10730, 7
        %v10732 = vsub.s32 %v10729, %v10731
        %v10733 = vrot.slane %v10710, %v10732
        %v10735 = vunpack.c.l.s4 1934713408
        %v10736 = vunpack.c.0.s8 %v10735
        %v10737 = vlaneseq
        %v10738 = vshrl.u32 %v10737, 7
        %v10739 = vsub.s32 %v10736, %v10738
        %v10740 = vrot.slane %v10726, %v10739
        %v10741 = vcombine.high %v10718, 0.0
        %v10742 = vcombine.high %v10725, 0.0
        %v10743 = vcombine.high %v10733, 0.0
        %v10744 = vcombine.high %v10740, 0.0
        %v10745 = vcombine.high %v7785, 0.0
        %v10747 = vunpack.c.l.s4 1983009808
        %v10748 = vunpack.c.0.s8 %v10747
        %v10749 = vlaneseq
        %v10750 = vshrl.u32 %v10749, 7
        %v10751 = vsub.s32 %v10748, %v10750
        %v10752 = vrot.slane %v7785, %v10751
        %v10754 = vunpack.c.l.s4 1983009808
        %v10755 = vunpack.c.0.s8 %v10754
        %v10756 = vlaneseq
        %v10757 = vshrl.u32 %v10756, 7
        %v10758 = vsub.s32 %v10755, %v10757
        %v10759 = vrot.slane %v10745, %v10758
        %v10760 = vcombine.high %v10752, 0.0
        %v10762 = vunpack.c.l.s4 1934713408
        %v10763 = vunpack.c.0.s8 %v10762
        %v10764 = vlaneseq
        %v10765 = vshrl.u32 %v10764, 7
        %v10766 = vsub.s32 %v10763, %v10765
        %v10767 = vrot.slane %v10752, %v10766
        %v10769 = vunpack.c.l.s4 1934713408
        %v10770 = vunpack.c.0.s8 %v10769
        %v10771 = vlaneseq
        %v10772 = vshrl.u32 %v10771, 7
        %v10773 = vsub.s32 %v10770, %v10772
        %v10774 = vrot.slane %v10760, %v10773
        %v10775 = vcombine.high %v10759, 0.0
        %v10777 = vunpack.c.l.s4 1934713408
        %v10778 = vunpack.c.0.s8 %v10777
        %v10779 = vlaneseq
        %v10780 = vshrl.u32 %v10779, 7
        %v10781 = vsub.s32 %v10778, %v10780
        %v10782 = vrot.slane %v10759, %v10781
        %v10784 = vunpack.c.l.s4 1934713408
        %v10785 = vunpack.c.0.s8 %v10784
        %v10786 = vlaneseq
        %v10787 = vshrl.u32 %v10786, 7
        %v10788 = vsub.s32 %v10785, %v10787
        %v10789 = vrot.slane %v10775, %v10788
        %v10790 = vcombine.high %v10767, 0.0
        %v10791 = vcombine.high %v10774, 0.0
        %v10792 = vcombine.high %v10782, 0.0
        %v10793 = vcombine.high %v10789, 0.0
        %v10794 = vcombine.high %v7786, 0.0
        %v10796 = vunpack.c.l.s4 1983009808
        %v10797 = vunpack.c.0.s8 %v10796
        %v10798 = vlaneseq
        %v10799 = vshrl.u32 %v10798, 7
        %v10800 = vsub.s32 %v10797, %v10799
        %v10801 = vrot.slane %v7786, %v10800
        %v10803 = vunpack.c.l.s4 1983009808
        %v10804 = vunpack.c.0.s8 %v10803
        %v10805 = vlaneseq
        %v10806 = vshrl.u32 %v10805, 7
        %v10807 = vsub.s32 %v10804, %v10806
        %v10808 = vrot.slane %v10794, %v10807
        %v10809 = vcombine.high %v10801, 0.0
        %v10811 = vunpack.c.l.s4 1934713408
        %v10812 = vunpack.c.0.s8 %v10811
        %v10813 = vlaneseq
        %v10814 = vshrl.u32 %v10813, 7
        %v10815 = vsub.s32 %v10812, %v10814
        %v10816 = vrot.slane %v10801, %v10815
        %v10818 = vunpack.c.l.s4 1934713408
        %v10819 = vunpack.c.0.s8 %v10818
        %v10820 = vlaneseq
        %v10821 = vshrl.u32 %v10820, 7
        %v10822 = vsub.s32 %v10819, %v10821
        %v10823 = vrot.slane %v10809, %v10822
        %v10824 = vcombine.high %v10808, 0.0
        %v10826 = vunpack.c.l.s4 1934713408
        %v10827 = vunpack.c.0.s8 %v10826
        %v10828 = vlaneseq
        %v10829 = vshrl.u32 %v10828, 7
        %v10830 = vsub.s32 %v10827, %v10829
        %v10831 = vrot.slane %v10808, %v10830
        %v10833 = vunpack.c.l.s4 1934713408
        %v10834 = vunpack.c.0.s8 %v10833
        %v10835 = vlaneseq
        %v10836 = vshrl.u32 %v10835, 7
        %v10837 = vsub.s32 %v10834, %v10836
        %v10838 = vrot.slane %v10824, %v10837
        %v10839 = vcombine.high %v10816, 0.0
        %v10840 = vcombine.high %v10823, 0.0
        %v10841 = vcombine.high %v10831, 0.0
        %v10842 = vcombine.high %v10838, 0.0
        %v10843 = vcombine.high %v7787, 0.0
        %v10845 = vunpack.c.l.s4 1983009808
        %v10846 = vunpack.c.0.s8 %v10845
        %v10847 = vlaneseq
        %v10848 = vshrl.u32 %v10847, 7
        %v10849 = vsub.s32 %v10846, %v10848
        %v10850 = vrot.slane %v7787, %v10849
        %v10852 = vunpack.c.l.s4 1983009808
        %v10853 = vunpack.c.0.s8 %v10852
        %v10854 = vlaneseq
        %v10855 = vshrl.u32 %v10854, 7
        %v10856 = vsub.s32 %v10853, %v10855
        %v10857 = vrot.slane %v10843, %v10856
        %v10858 = vcombine.high %v10850, 0.0
        %v10860 = vunpack.c.l.s4 1934713408
        %v10861 = vunpack.c.0.s8 %v10860
        %v10862 = vlaneseq
        %v10863 = vshrl.u32 %v10862, 7
        %v10864 = vsub.s32 %v10861, %v10863
        %v10865 = vrot.slane %v10850, %v10864
        %v10867 = vunpack.c.l.s4 1934713408
        %v10868 = vunpack.c.0.s8 %v10867
        %v10869 = vlaneseq
        %v10870 = vshrl.u32 %v10869, 7
        %v10871 = vsub.s32 %v10868, %v10870
        %v10872 = vrot.slane %v10858, %v10871
        %v10873 = vcombine.high %v10857, 0.0
        %v10875 = vunpack.c.l.s4 1934713408
        %v10876 = vunpack.c.0.s8 %v10875
        %v10877 = vlaneseq
        %v10878 = vshrl.u32 %v10877, 7
        %v10879 = vsub.s32 %v10876, %v10878
        %v10880 = vrot.slane %v10857, %v10879
        %v10882 = vunpack.c.l.s4 1934713408
        %v10883 = vunpack.c.0.s8 %v10882
        %v10884 = vlaneseq
        %v10885 = vshrl.u32 %v10884, 7
        %v10886 = vsub.s32 %v10883, %v10885
        %v10887 = vrot.slane %v10873, %v10886
        %v10888 = vcombine.high %v10865, 0.0
        %v10889 = vcombine.high %v10872, 0.0
        %v10890 = vcombine.high %v10880, 0.0
        %v10891 = vcombine.high %v10887, 0.0
        %v10892 = vcombine.high %v7788, 0.0
        %v10894 = vunpack.c.l.s4 1983009808
        %v10895 = vunpack.c.0.s8 %v10894
        %v10896 = vlaneseq
        %v10897 = vshrl.u32 %v10896, 7
        %v10898 = vsub.s32 %v10895, %v10897
        %v10899 = vrot.slane %v7788, %v10898
        %v10901 = vunpack.c.l.s4 1983009808
        %v10902 = vunpack.c.0.s8 %v10901
        %v10903 = vlaneseq
        %v10904 = vshrl.u32 %v10903, 7
        %v10905 = vsub.s32 %v10902, %v10904
        %v10906 = vrot.slane %v10892, %v10905
        %v10907 = vcombine.high %v10899, 0.0
        %v10909 = vunpack.c.l.s4 1934713408
        %v10910 = vunpack.c.0.s8 %v10909
        %v10911 = vlaneseq
        %v10912 = vshrl.u32 %v10911, 7
        %v10913 = vsub.s32 %v10910, %v10912
        %v10914 = vrot.slane %v10899, %v10913
        %v10916 = vunpack.c.l.s4 1934713408
        %v10917 = vunpack.c.0.s8 %v10916
        %v10918 = vlaneseq
        %v10919 = vshrl.u32 %v10918, 7
        %v10920 = vsub.s32 %v10917, %v10919
        %v10921 = vrot.slane %v10907, %v10920
        %v10922 = vcombine.high %v10906, 0.0
        %v10924 = vunpack.c.l.s4 1934713408
        %v10925 = vunpack.c.0.s8 %v10924
        %v10926 = vlaneseq
        %v10927 = vshrl.u32 %v10926, 7
        %v10928 = vsub.s32 %v10925, %v10927
        %v10929 = vrot.slane %v10906, %v10928
        %v10931 = vunpack.c.l.s4 1934713408
        %v10932 = vunpack.c.0.s8 %v10931
        %v10933 = vlaneseq
        %v10934 = vshrl.u32 %v10933, 7
        %v10935 = vsub.s32 %v10932, %v10934
        %v10936 = vrot.slane %v10922, %v10935
        %v10937 = vcombine.high %v10914, 0.0
        %v10938 = vcombine.high %v10921, 0.0
        %v10939 = vcombine.high %v10929, 0.0
        %v10940 = vcombine.high %v10936, 0.0
        %v10941 = vcombine.high %v7789, 0.0
        %v10943 = vunpack.c.l.s4 1983009808
        %v10944 = vunpack.c.0.s8 %v10943
        %v10945 = vlaneseq
        %v10946 = vshrl.u32 %v10945, 7
        %v10947 = vsub.s32 %v10944, %v10946
        %v10948 = vrot.slane %v7789, %v10947
        %v10950 = vunpack.c.l.s4 1983009808
        %v10951 = vunpack.c.0.s8 %v10950
        %v10952 = vlaneseq
        %v10953 = vshrl.u32 %v10952, 7
        %v10954 = vsub.s32 %v10951, %v10953
        %v10955 = vrot.slane %v10941, %v10954
        %v10956 = vcombine.high %v10948, 0.0
        %v10958 = vunpack.c.l.s4 1934713408
        %v10959 = vunpack.c.0.s8 %v10958
        %v10960 = vlaneseq
        %v10961 = vshrl.u32 %v10960, 7
        %v10962 = vsub.s32 %v10959, %v10961
        %v10963 = vrot.slane %v10948, %v10962
        %v10965 = vunpack.c.l.s4 1934713408
        %v10966 = vunpack.c.0.s8 %v10965
        %v10967 = vlaneseq
        %v10968 = vshrl.u32 %v10967, 7
        %v10969 = vsub.s32 %v10966, %v10968
        %v10970 = vrot.slane %v10956, %v10969
        %v10971 = vcombine.high %v10955, 0.0
        %v10973 = vunpack.c.l.s4 1934713408
        %v10974 = vunpack.c.0.s8 %v10973
        %v10975 = vlaneseq
        %v10976 = vshrl.u32 %v10975, 7
        %v10977 = vsub.s32 %v10974, %v10976
        %v10978 = vrot.slane %v10955, %v10977
        %v10980 = vunpack.c.l.s4 1934713408
        %v10981 = vunpack.c.0.s8 %v10980
        %v10982 = vlaneseq
        %v10983 = vshrl.u32 %v10982, 7
        %v10984 = vsub.s32 %v10981, %v10983
        %v10985 = vrot.slane %v10971, %v10984
        %v10986 = vcombine.high %v10963, 0.0
        %v10987 = vcombine.high %v10970, 0.0
        %v10988 = vcombine.high %v10978, 0.0
        %v10989 = vcombine.high %v10985, 0.0
        %v10990 = vcombine.high %v7790, 0.0
        %v10992 = vunpack.c.l.s4 1983009808
        %v10993 = vunpack.c.0.s8 %v10992
        %v10994 = vlaneseq
        %v10995 = vshrl.u32 %v10994, 7
        %v10996 = vsub.s32 %v10993, %v10995
        %v10997 = vrot.slane %v7790, %v10996
        %v10999 = vunpack.c.l.s4 1983009808
        %v11000 = vunpack.c.0.s8 %v10999
        %v11001 = vlaneseq
        %v11002 = vshrl.u32 %v11001, 7
        %v11003 = vsub.s32 %v11000, %v11002
        %v11004 = vrot.slane %v10990, %v11003
        %v11005 = vcombine.high %v10997, 0.0
        %v11007 = vunpack.c.l.s4 1934713408
        %v11008 = vunpack.c.0.s8 %v11007
        %v11009 = vlaneseq
        %v11010 = vshrl.u32 %v11009, 7
        %v11011 = vsub.s32 %v11008, %v11010
        %v11012 = vrot.slane %v10997, %v11011
        %v11014 = vunpack.c.l.s4 1934713408
        %v11015 = vunpack.c.0.s8 %v11014
        %v11016 = vlaneseq
        %v11017 = vshrl.u32 %v11016, 7
        %v11018 = vsub.s32 %v11015, %v11017
        %v11019 = vrot.slane %v11005, %v11018
        %v11020 = vcombine.high %v11004, 0.0
        %v11022 = vunpack.c.l.s4 1934713408
        %v11023 = vunpack.c.0.s8 %v11022
        %v11024 = vlaneseq
        %v11025 = vshrl.u32 %v11024, 7
        %v11026 = vsub.s32 %v11023, %v11025
        %v11027 = vrot.slane %v11004, %v11026
        %v11029 = vunpack.c.l.s4 1934713408
        %v11030 = vunpack.c.0.s8 %v11029
        %v11031 = vlaneseq
        %v11032 = vshrl.u32 %v11031, 7
        %v11033 = vsub.s32 %v11030, %v11032
        %v11034 = vrot.slane %v11020, %v11033
        %v11035 = vcombine.high %v11012, 0.0
        %v11036 = vcombine.high %v11019, 0.0
        %v11037 = vcombine.high %v11027, 0.0
        %v11038 = vcombine.high %v11034, 0.0
        %v11039 = vcombine.high %v7791, 0.0
        %v11041 = vunpack.c.l.s4 1983009808
        %v11042 = vunpack.c.0.s8 %v11041
        %v11043 = vlaneseq
        %v11044 = vshrl.u32 %v11043, 7
        %v11045 = vsub.s32 %v11042, %v11044
        %v11046 = vrot.slane %v7791, %v11045
        %v11048 = vunpack.c.l.s4 1983009808
        %v11049 = vunpack.c.0.s8 %v11048
        %v11050 = vlaneseq
        %v11051 = vshrl.u32 %v11050, 7
        %v11052 = vsub.s32 %v11049, %v11051
        %v11053 = vrot.slane %v11039, %v11052
        %v11054 = vcombine.high %v11046, 0.0
        %v11056 = vunpack.c.l.s4 1934713408
        %v11057 = vunpack.c.0.s8 %v11056
        %v11058 = vlaneseq
        %v11059 = vshrl.u32 %v11058, 7
        %v11060 = vsub.s32 %v11057, %v11059
        %v11061 = vrot.slane %v11046, %v11060
        %v11063 = vunpack.c.l.s4 1934713408
        %v11064 = vunpack.c.0.s8 %v11063
        %v11065 = vlaneseq
        %v11066 = vshrl.u32 %v11065, 7
        %v11067 = vsub.s32 %v11064, %v11066
        %v11068 = vrot.slane %v11054, %v11067
        %v11069 = vcombine.high %v11053, 0.0
        %v11071 = vunpack.c.l.s4 1934713408
        %v11072 = vunpack.c.0.s8 %v11071
        %v11073 = vlaneseq
        %v11074 = vshrl.u32 %v11073, 7
        %v11075 = vsub.s32 %v11072, %v11074
        %v11076 = vrot.slane %v11053, %v11075
        %v11078 = vunpack.c.l.s4 1934713408
        %v11079 = vunpack.c.0.s8 %v11078
        %v11080 = vlaneseq
        %v11081 = vshrl.u32 %v11080, 7
        %v11082 = vsub.s32 %v11079, %v11081
        %v11083 = vrot.slane %v11069, %v11082
        %v11084 = vcombine.high %v11061, 0.0
        %v11085 = vcombine.high %v11068, 0.0
        %v11086 = vcombine.high %v11076, 0.0
        %v11087 = vcombine.high %v11083, 0.0
        %v11088 = vcombine.high %v7792, 0.0
        %v11090 = vunpack.c.l.s4 1983009808
        %v11091 = vunpack.c.0.s8 %v11090
        %v11092 = vlaneseq
        %v11093 = vshrl.u32 %v11092, 7
        %v11094 = vsub.s32 %v11091, %v11093
        %v11095 = vrot.slane %v7792, %v11094
        %v11097 = vunpack.c.l.s4 1983009808
        %v11098 = vunpack.c.0.s8 %v11097
        %v11099 = vlaneseq
        %v11100 = vshrl.u32 %v11099, 7
        %v11101 = vsub.s32 %v11098, %v11100
        %v11102 = vrot.slane %v11088, %v11101
        %v11103 = vcombine.high %v11095, 0.0
        %v11105 = vunpack.c.l.s4 1934713408
        %v11106 = vunpack.c.0.s8 %v11105
        %v11107 = vlaneseq
        %v11108 = vshrl.u32 %v11107, 7
        %v11109 = vsub.s32 %v11106, %v11108
        %v11110 = vrot.slane %v11095, %v11109
        %v11112 = vunpack.c.l.s4 1934713408
        %v11113 = vunpack.c.0.s8 %v11112
        %v11114 = vlaneseq
        %v11115 = vshrl.u32 %v11114, 7
        %v11116 = vsub.s32 %v11113, %v11115
        %v11117 = vrot.slane %v11103, %v11116
        %v11118 = vcombine.high %v11102, 0.0
        %v11120 = vunpack.c.l.s4 1934713408
        %v11121 = vunpack.c.0.s8 %v11120
        %v11122 = vlaneseq
        %v11123 = vshrl.u32 %v11122, 7
        %v11124 = vsub.s32 %v11121, %v11123
        %v11125 = vrot.slane %v11102, %v11124
        %v11127 = vunpack.c.l.s4 1934713408
        %v11128 = vunpack.c.0.s8 %v11127
        %v11129 = vlaneseq
        %v11130 = vshrl.u32 %v11129, 7
        %v11131 = vsub.s32 %v11128, %v11130
        %v11132 = vrot.slane %v11118, %v11131
        %v11133 = vcombine.high %v11110, 0.0
        %v11134 = vcombine.high %v11117, 0.0
        %v11135 = vcombine.high %v11125, 0.0
        %v11136 = vcombine.high %v11132, 0.0
        %v11137 = vcombine.high %v7793, 0.0
        %v11139 = vunpack.c.l.s4 1983009808
        %v11140 = vunpack.c.0.s8 %v11139
        %v11141 = vlaneseq
        %v11142 = vshrl.u32 %v11141, 7
        %v11143 = vsub.s32 %v11140, %v11142
        %v11144 = vrot.slane %v7793, %v11143
        %v11146 = vunpack.c.l.s4 1983009808
        %v11147 = vunpack.c.0.s8 %v11146
        %v11148 = vlaneseq
        %v11149 = vshrl.u32 %v11148, 7
        %v11150 = vsub.s32 %v11147, %v11149
        %v11151 = vrot.slane %v11137, %v11150
        %v11152 = vcombine.high %v11144, 0.0
        %v11154 = vunpack.c.l.s4 1934713408
        %v11155 = vunpack.c.0.s8 %v11154
        %v11156 = vlaneseq
        %v11157 = vshrl.u32 %v11156, 7
        %v11158 = vsub.s32 %v11155, %v11157
        %v11159 = vrot.slane %v11144, %v11158
        %v11161 = vunpack.c.l.s4 1934713408
        %v11162 = vunpack.c.0.s8 %v11161
        %v11163 = vlaneseq
        %v11164 = vshrl.u32 %v11163, 7
        %v11165 = vsub.s32 %v11162, %v11164
        %v11166 = vrot.slane %v11152, %v11165
        %v11167 = vcombine.high %v11151, 0.0
        %v11169 = vunpack.c.l.s4 1934713408
        %v11170 = vunpack.c.0.s8 %v11169
        %v11171 = vlaneseq
        %v11172 = vshrl.u32 %v11171, 7
        %v11173 = vsub.s32 %v11170, %v11172
        %v11174 = vrot.slane %v11151, %v11173
        %v11176 = vunpack.c.l.s4 1934713408
        %v11177 = vunpack.c.0.s8 %v11176
        %v11178 = vlaneseq
        %v11179 = vshrl.u32 %v11178, 7
        %v11180 = vsub.s32 %v11177, %v11179
        %v11181 = vrot.slane %v11167, %v11180
        %v11182 = vcombine.high %v11159, 0.0
        %v11183 = vcombine.high %v11166, 0.0
        %v11184 = vcombine.high %v11174, 0.0
        %v11185 = vcombine.high %v11181, 0.0
        %v11186 = vcombine.high %v7794, 0.0
        %v11188 = vunpack.c.l.s4 1983009808
        %v11189 = vunpack.c.0.s8 %v11188
        %v11190 = vlaneseq
        %v11191 = vshrl.u32 %v11190, 7
        %v11192 = vsub.s32 %v11189, %v11191
        %v11193 = vrot.slane %v7794, %v11192
        %v11195 = vunpack.c.l.s4 1983009808
        %v11196 = vunpack.c.0.s8 %v11195
        %v11197 = vlaneseq
        %v11198 = vshrl.u32 %v11197, 7
        %v11199 = vsub.s32 %v11196, %v11198
        %v11200 = vrot.slane %v11186, %v11199
        %v11201 = vcombine.high %v11193, 0.0
        %v11203 = vunpack.c.l.s4 1934713408
        %v11204 = vunpack.c.0.s8 %v11203
        %v11205 = vlaneseq
        %v11206 = vshrl.u32 %v11205, 7
        %v11207 = vsub.s32 %v11204, %v11206
        %v11208 = vrot.slane %v11193, %v11207
        %v11210 = vunpack.c.l.s4 1934713408
        %v11211 = vunpack.c.0.s8 %v11210
        %v11212 = vlaneseq
        %v11213 = vshrl.u32 %v11212, 7
        %v11214 = vsub.s32 %v11211, %v11213
        %v11215 = vrot.slane %v11201, %v11214
        %v11216 = vcombine.high %v11200, 0.0
        %v11218 = vunpack.c.l.s4 1934713408
        %v11219 = vunpack.c.0.s8 %v11218
        %v11220 = vlaneseq
        %v11221 = vshrl.u32 %v11220, 7
        %v11222 = vsub.s32 %v11219, %v11221
        %v11223 = vrot.slane %v11200, %v11222
        %v11225 = vunpack.c.l.s4 1934713408
        %v11226 = vunpack.c.0.s8 %v11225
        %v11227 = vlaneseq
        %v11228 = vshrl.u32 %v11227, 7
        %v11229 = vsub.s32 %v11226, %v11228
        %v11230 = vrot.slane %v11216, %v11229
        %v11231 = vcombine.high %v11208, 0.0
        %v11232 = vcombine.high %v11215, 0.0
        %v11233 = vcombine.high %v11223, 0.0
        %v11234 = vcombine.high %v11230, 0.0
        %v11235 = vcombine.high %v7795, 0.0
        %v11237 = vunpack.c.l.s4 1983009808
        %v11238 = vunpack.c.0.s8 %v11237
        %v11239 = vlaneseq
        %v11240 = vshrl.u32 %v11239, 7
        %v11241 = vsub.s32 %v11238, %v11240
        %v11242 = vrot.slane %v7795, %v11241
        %v11244 = vunpack.c.l.s4 1983009808
        %v11245 = vunpack.c.0.s8 %v11244
        %v11246 = vlaneseq
        %v11247 = vshrl.u32 %v11246, 7
        %v11248 = vsub.s32 %v11245, %v11247
        %v11249 = vrot.slane %v11235, %v11248
        %v11250 = vcombine.high %v11242, 0.0
        %v11252 = vunpack.c.l.s4 1934713408
        %v11253 = vunpack.c.0.s8 %v11252
        %v11254 = vlaneseq
        %v11255 = vshrl.u32 %v11254, 7
        %v11256 = vsub.s32 %v11253, %v11255
        %v11257 = vrot.slane %v11242, %v11256
        %v11259 = vunpack.c.l.s4 1934713408
        %v11260 = vunpack.c.0.s8 %v11259
        %v11261 = vlaneseq
        %v11262 = vshrl.u32 %v11261, 7
        %v11263 = vsub.s32 %v11260, %v11262
        %v11264 = vrot.slane %v11250, %v11263
        %v11265 = vcombine.high %v11249, 0.0
        %v11267 = vunpack.c.l.s4 1934713408
        %v11268 = vunpack.c.0.s8 %v11267
        %v11269 = vlaneseq
        %v11270 = vshrl.u32 %v11269, 7
        %v11271 = vsub.s32 %v11268, %v11270
        %v11272 = vrot.slane %v11249, %v11271
        %v11274 = vunpack.c.l.s4 1934713408
        %v11275 = vunpack.c.0.s8 %v11274
        %v11276 = vlaneseq
        %v11277 = vshrl.u32 %v11276, 7
        %v11278 = vsub.s32 %v11275, %v11277
        %v11279 = vrot.slane %v11265, %v11278
        %v11280 = vcombine.high %v11257, 0.0
        %v11281 = vcombine.high %v11264, 0.0
        %v11282 = vcombine.high %v11272, 0.0
        %v11283 = vcombine.high %v11279, 0.0
        %v11284 = vcombine.high %v7796, 0.0
        %v11286 = vunpack.c.l.s4 1983009808
        %v11287 = vunpack.c.0.s8 %v11286
        %v11288 = vlaneseq
        %v11289 = vshrl.u32 %v11288, 7
        %v11290 = vsub.s32 %v11287, %v11289
        %v11291 = vrot.slane %v7796, %v11290
        %v11293 = vunpack.c.l.s4 1983009808
        %v11294 = vunpack.c.0.s8 %v11293
        %v11295 = vlaneseq
        %v11296 = vshrl.u32 %v11295, 7
        %v11297 = vsub.s32 %v11294, %v11296
        %v11298 = vrot.slane %v11284, %v11297
        %v11299 = vcombine.high %v11291, 0.0
        %v11301 = vunpack.c.l.s4 1934713408
        %v11302 = vunpack.c.0.s8 %v11301
        %v11303 = vlaneseq
        %v11304 = vshrl.u32 %v11303, 7
        %v11305 = vsub.s32 %v11302, %v11304
        %v11306 = vrot.slane %v11291, %v11305
        %v11308 = vunpack.c.l.s4 1934713408
        %v11309 = vunpack.c.0.s8 %v11308
        %v11310 = vlaneseq
        %v11311 = vshrl.u32 %v11310, 7
        %v11312 = vsub.s32 %v11309, %v11311
        %v11313 = vrot.slane %v11299, %v11312
        %v11314 = vcombine.high %v11298, 0.0
        %v11316 = vunpack.c.l.s4 1934713408
        %v11317 = vunpack.c.0.s8 %v11316
        %v11318 = vlaneseq
        %v11319 = vshrl.u32 %v11318, 7
        %v11320 = vsub.s32 %v11317, %v11319
        %v11321 = vrot.slane %v11298, %v11320
        %v11323 = vunpack.c.l.s4 1934713408
        %v11324 = vunpack.c.0.s8 %v11323
        %v11325 = vlaneseq
        %v11326 = vshrl.u32 %v11325, 7
        %v11327 = vsub.s32 %v11324, %v11326
        %v11328 = vrot.slane %v11314, %v11327
        %v11329 = vcombine.high %v11306, 0.0
        %v11330 = vcombine.high %v11313, 0.0
        %v11331 = vcombine.high %v11321, 0.0
        %v11332 = vcombine.high %v11328, 0.0
        %v11333 = vcombine.high %v7797, 0.0
        %v11335 = vunpack.c.l.s4 1983009808
        %v11336 = vunpack.c.0.s8 %v11335
        %v11337 = vlaneseq
        %v11338 = vshrl.u32 %v11337, 7
        %v11339 = vsub.s32 %v11336, %v11338
        %v11340 = vrot.slane %v7797, %v11339
        %v11342 = vunpack.c.l.s4 1983009808
        %v11343 = vunpack.c.0.s8 %v11342
        %v11344 = vlaneseq
        %v11345 = vshrl.u32 %v11344, 7
        %v11346 = vsub.s32 %v11343, %v11345
        %v11347 = vrot.slane %v11333, %v11346
        %v11348 = vcombine.high %v11340, 0.0
        %v11350 = vunpack.c.l.s4 1934713408
        %v11351 = vunpack.c.0.s8 %v11350
        %v11352 = vlaneseq
        %v11353 = vshrl.u32 %v11352, 7
        %v11354 = vsub.s32 %v11351, %v11353
        %v11355 = vrot.slane %v11340, %v11354
        %v11357 = vunpack.c.l.s4 1934713408
        %v11358 = vunpack.c.0.s8 %v11357
        %v11359 = vlaneseq
        %v11360 = vshrl.u32 %v11359, 7
        %v11361 = vsub.s32 %v11358, %v11360
        %v11362 = vrot.slane %v11348, %v11361
        %v11363 = vcombine.high %v11347, 0.0
        %v11365 = vunpack.c.l.s4 1934713408
        %v11366 = vunpack.c.0.s8 %v11365
        %v11367 = vlaneseq
        %v11368 = vshrl.u32 %v11367, 7
        %v11369 = vsub.s32 %v11366, %v11368
        %v11370 = vrot.slane %v11347, %v11369
        %v11372 = vunpack.c.l.s4 1934713408
        %v11373 = vunpack.c.0.s8 %v11372
        %v11374 = vlaneseq
        %v11375 = vshrl.u32 %v11374, 7
        %v11376 = vsub.s32 %v11373, %v11375
        %v11377 = vrot.slane %v11363, %v11376
        %v11378 = vcombine.high %v11355, 0.0
        %v11379 = vcombine.high %v11362, 0.0
        %v11380 = vcombine.high %v11370, 0.0
        %v11381 = vcombine.high %v11377, 0.0
        %v11382 = vcombine.high %v7798, 0.0
        %v11384 = vunpack.c.l.s4 1983009808
        %v11385 = vunpack.c.0.s8 %v11384
        %v11386 = vlaneseq
        %v11387 = vshrl.u32 %v11386, 7
        %v11388 = vsub.s32 %v11385, %v11387
        %v11389 = vrot.slane %v7798, %v11388
        %v11391 = vunpack.c.l.s4 1983009808
        %v11392 = vunpack.c.0.s8 %v11391
        %v11393 = vlaneseq
        %v11394 = vshrl.u32 %v11393, 7
        %v11395 = vsub.s32 %v11392, %v11394
        %v11396 = vrot.slane %v11382, %v11395
        %v11397 = vcombine.high %v11389, 0.0
        %v11399 = vunpack.c.l.s4 1934713408
        %v11400 = vunpack.c.0.s8 %v11399
        %v11401 = vlaneseq
        %v11402 = vshrl.u32 %v11401, 7
        %v11403 = vsub.s32 %v11400, %v11402
        %v11404 = vrot.slane %v11389, %v11403
        %v11406 = vunpack.c.l.s4 1934713408
        %v11407 = vunpack.c.0.s8 %v11406
        %v11408 = vlaneseq
        %v11409 = vshrl.u32 %v11408, 7
        %v11410 = vsub.s32 %v11407, %v11409
        %v11411 = vrot.slane %v11397, %v11410
        %v11412 = vcombine.high %v11396, 0.0
        %v11414 = vunpack.c.l.s4 1934713408
        %v11415 = vunpack.c.0.s8 %v11414
        %v11416 = vlaneseq
        %v11417 = vshrl.u32 %v11416, 7
        %v11418 = vsub.s32 %v11415, %v11417
        %v11419 = vrot.slane %v11396, %v11418
        %v11421 = vunpack.c.l.s4 1934713408
        %v11422 = vunpack.c.0.s8 %v11421
        %v11423 = vlaneseq
        %v11424 = vshrl.u32 %v11423, 7
        %v11425 = vsub.s32 %v11422, %v11424
        %v11426 = vrot.slane %v11412, %v11425
        %v11427 = vcombine.high %v11404, 0.0
        %v11428 = vcombine.high %v11411, 0.0
        %v11429 = vcombine.high %v11419, 0.0
        %v11430 = vcombine.high %v11426, 0.0
        %v11431 = vcombine.high %v7799, 0.0
        %v11433 = vunpack.c.l.s4 1983009808
        %v11434 = vunpack.c.0.s8 %v11433
        %v11435 = vlaneseq
        %v11436 = vshrl.u32 %v11435, 7
        %v11437 = vsub.s32 %v11434, %v11436
        %v11438 = vrot.slane %v7799, %v11437
        %v11440 = vunpack.c.l.s4 1983009808
        %v11441 = vunpack.c.0.s8 %v11440
        %v11442 = vlaneseq
        %v11443 = vshrl.u32 %v11442, 7
        %v11444 = vsub.s32 %v11441, %v11443
        %v11445 = vrot.slane %v11431, %v11444
        %v11446 = vcombine.high %v11438, 0.0
        %v11448 = vunpack.c.l.s4 1934713408
        %v11449 = vunpack.c.0.s8 %v11448
        %v11450 = vlaneseq
        %v11451 = vshrl.u32 %v11450, 7
        %v11452 = vsub.s32 %v11449, %v11451
        %v11453 = vrot.slane %v11438, %v11452
        %v11455 = vunpack.c.l.s4 1934713408
        %v11456 = vunpack.c.0.s8 %v11455
        %v11457 = vlaneseq
        %v11458 = vshrl.u32 %v11457, 7
        %v11459 = vsub.s32 %v11456, %v11458
        %v11460 = vrot.slane %v11446, %v11459
        %v11461 = vcombine.high %v11445, 0.0
        %v11463 = vunpack.c.l.s4 1934713408
        %v11464 = vunpack.c.0.s8 %v11463
        %v11465 = vlaneseq
        %v11466 = vshrl.u32 %v11465, 7
        %v11467 = vsub.s32 %v11464, %v11466
        %v11468 = vrot.slane %v11445, %v11467
        %v11470 = vunpack.c.l.s4 1934713408
        %v11471 = vunpack.c.0.s8 %v11470
        %v11472 = vlaneseq
        %v11473 = vshrl.u32 %v11472, 7
        %v11474 = vsub.s32 %v11471, %v11473
        %v11475 = vrot.slane %v11461, %v11474
        %v11476 = vcombine.high %v11453, 0.0
        %v11477 = vcombine.high %v11460, 0.0
        %v11478 = vcombine.high %v11468, 0.0
        %v11479 = vcombine.high %v11475, 0.0
        %v11480 = vcombine.high %v7800, 0.0
        %v11482 = vunpack.c.l.s4 1983009808
        %v11483 = vunpack.c.0.s8 %v11482
        %v11484 = vlaneseq
        %v11485 = vshrl.u32 %v11484, 7
        %v11486 = vsub.s32 %v11483, %v11485
        %v11487 = vrot.slane %v7800, %v11486
        %v11489 = vunpack.c.l.s4 1983009808
        %v11490 = vunpack.c.0.s8 %v11489
        %v11491 = vlaneseq
        %v11492 = vshrl.u32 %v11491, 7
        %v11493 = vsub.s32 %v11490, %v11492
        %v11494 = vrot.slane %v11480, %v11493
        %v11495 = vcombine.high %v11487, 0.0
        %v11497 = vunpack.c.l.s4 1934713408
        %v11498 = vunpack.c.0.s8 %v11497
        %v11499 = vlaneseq
        %v11500 = vshrl.u32 %v11499, 7
        %v11501 = vsub.s32 %v11498, %v11500
        %v11502 = vrot.slane %v11487, %v11501
        %v11504 = vunpack.c.l.s4 1934713408
        %v11505 = vunpack.c.0.s8 %v11504
        %v11506 = vlaneseq
        %v11507 = vshrl.u32 %v11506, 7
        %v11508 = vsub.s32 %v11505, %v11507
        %v11509 = vrot.slane %v11495, %v11508
        %v11510 = vcombine.high %v11494, 0.0
        %v11512 = vunpack.c.l.s4 1934713408
        %v11513 = vunpack.c.0.s8 %v11512
        %v11514 = vlaneseq
        %v11515 = vshrl.u32 %v11514, 7
        %v11516 = vsub.s32 %v11513, %v11515
        %v11517 = vrot.slane %v11494, %v11516
        %v11519 = vunpack.c.l.s4 1934713408
        %v11520 = vunpack.c.0.s8 %v11519
        %v11521 = vlaneseq
        %v11522 = vshrl.u32 %v11521, 7
        %v11523 = vsub.s32 %v11520, %v11522
        %v11524 = vrot.slane %v11510, %v11523
        %v11525 = vcombine.high %v11502, 0.0
        %v11526 = vcombine.high %v11509, 0.0
        %v11527 = vcombine.high %v11517, 0.0
        %v11528 = vcombine.high %v11524, 0.0
        %v11529 = vcombine.high %v7801, 0.0
        %v11531 = vunpack.c.l.s4 1983009808
        %v11532 = vunpack.c.0.s8 %v11531
        %v11533 = vlaneseq
        %v11534 = vshrl.u32 %v11533, 7
        %v11535 = vsub.s32 %v11532, %v11534
        %v11536 = vrot.slane %v7801, %v11535
        %v11538 = vunpack.c.l.s4 1983009808
        %v11539 = vunpack.c.0.s8 %v11538
        %v11540 = vlaneseq
        %v11541 = vshrl.u32 %v11540, 7
        %v11542 = vsub.s32 %v11539, %v11541
        %v11543 = vrot.slane %v11529, %v11542
        %v11544 = vcombine.high %v11536, 0.0
        %v11546 = vunpack.c.l.s4 1934713408
        %v11547 = vunpack.c.0.s8 %v11546
        %v11548 = vlaneseq
        %v11549 = vshrl.u32 %v11548, 7
        %v11550 = vsub.s32 %v11547, %v11549
        %v11551 = vrot.slane %v11536, %v11550
        %v11553 = vunpack.c.l.s4 1934713408
        %v11554 = vunpack.c.0.s8 %v11553
        %v11555 = vlaneseq
        %v11556 = vshrl.u32 %v11555, 7
        %v11557 = vsub.s32 %v11554, %v11556
        %v11558 = vrot.slane %v11544, %v11557
        %v11559 = vcombine.high %v11543, 0.0
        %v11561 = vunpack.c.l.s4 1934713408
        %v11562 = vunpack.c.0.s8 %v11561
        %v11563 = vlaneseq
        %v11564 = vshrl.u32 %v11563, 7
        %v11565 = vsub.s32 %v11562, %v11564
        %v11566 = vrot.slane %v11543, %v11565
        %v11568 = vunpack.c.l.s4 1934713408
        %v11569 = vunpack.c.0.s8 %v11568
        %v11570 = vlaneseq
        %v11571 = vshrl.u32 %v11570, 7
        %v11572 = vsub.s32 %v11569, %v11571
        %v11573 = vrot.slane %v11559, %v11572
        %v11574 = vcombine.high %v11551, 0.0
        %v11575 = vcombine.high %v11558, 0.0
        %v11576 = vcombine.high %v11566, 0.0
        %v11577 = vcombine.high %v11573, 0.0
        %v11578 = vcombine.high %v7802, 0.0
        %v11580 = vunpack.c.l.s4 1983009808
        %v11581 = vunpack.c.0.s8 %v11580
        %v11582 = vlaneseq
        %v11583 = vshrl.u32 %v11582, 7
        %v11584 = vsub.s32 %v11581, %v11583
        %v11585 = vrot.slane %v7802, %v11584
        %v11587 = vunpack.c.l.s4 1983009808
        %v11588 = vunpack.c.0.s8 %v11587
        %v11589 = vlaneseq
        %v11590 = vshrl.u32 %v11589, 7
        %v11591 = vsub.s32 %v11588, %v11590
        %v11592 = vrot.slane %v11578, %v11591
        %v11593 = vcombine.high %v11585, 0.0
        %v11595 = vunpack.c.l.s4 1934713408
        %v11596 = vunpack.c.0.s8 %v11595
        %v11597 = vlaneseq
        %v11598 = vshrl.u32 %v11597, 7
        %v11599 = vsub.s32 %v11596, %v11598
        %v11600 = vrot.slane %v11585, %v11599
        %v11602 = vunpack.c.l.s4 1934713408
        %v11603 = vunpack.c.0.s8 %v11602
        %v11604 = vlaneseq
        %v11605 = vshrl.u32 %v11604, 7
        %v11606 = vsub.s32 %v11603, %v11605
        %v11607 = vrot.slane %v11593, %v11606
        %v11608 = vcombine.high %v11592, 0.0
        %v11610 = vunpack.c.l.s4 1934713408
        %v11611 = vunpack.c.0.s8 %v11610
        %v11612 = vlaneseq
        %v11613 = vshrl.u32 %v11612, 7
        %v11614 = vsub.s32 %v11611, %v11613
        %v11615 = vrot.slane %v11592, %v11614
        %v11617 = vunpack.c.l.s4 1934713408
        %v11618 = vunpack.c.0.s8 %v11617
        %v11619 = vlaneseq
        %v11620 = vshrl.u32 %v11619, 7
        %v11621 = vsub.s32 %v11618, %v11620
        %v11622 = vrot.slane %v11608, %v11621
        %v11623 = vcombine.high %v11600, 0.0
        %v11624 = vcombine.high %v11607, 0.0
        %v11625 = vcombine.high %v11615, 0.0
        %v11626 = vcombine.high %v11622, 0.0
        %v11627 = vcombine.high %v7803, 0.0
        %v11629 = vunpack.c.l.s4 1983009808
        %v11630 = vunpack.c.0.s8 %v11629
        %v11631 = vlaneseq
        %v11632 = vshrl.u32 %v11631, 7
        %v11633 = vsub.s32 %v11630, %v11632
        %v11634 = vrot.slane %v7803, %v11633
        %v11636 = vunpack.c.l.s4 1983009808
        %v11637 = vunpack.c.0.s8 %v11636
        %v11638 = vlaneseq
        %v11639 = vshrl.u32 %v11638, 7
        %v11640 = vsub.s32 %v11637, %v11639
        %v11641 = vrot.slane %v11627, %v11640
        %v11642 = vcombine.high %v11634, 0.0
        %v11644 = vunpack.c.l.s4 1934713408
        %v11645 = vunpack.c.0.s8 %v11644
        %v11646 = vlaneseq
        %v11647 = vshrl.u32 %v11646, 7
        %v11648 = vsub.s32 %v11645, %v11647
        %v11649 = vrot.slane %v11634, %v11648
        %v11651 = vunpack.c.l.s4 1934713408
        %v11652 = vunpack.c.0.s8 %v11651
        %v11653 = vlaneseq
        %v11654 = vshrl.u32 %v11653, 7
        %v11655 = vsub.s32 %v11652, %v11654
        %v11656 = vrot.slane %v11642, %v11655
        %v11657 = vcombine.high %v11641, 0.0
        %v11659 = vunpack.c.l.s4 1934713408
        %v11660 = vunpack.c.0.s8 %v11659
        %v11661 = vlaneseq
        %v11662 = vshrl.u32 %v11661, 7
        %v11663 = vsub.s32 %v11660, %v11662
        %v11664 = vrot.slane %v11641, %v11663
        %v11666 = vunpack.c.l.s4 1934713408
        %v11667 = vunpack.c.0.s8 %v11666
        %v11668 = vlaneseq
        %v11669 = vshrl.u32 %v11668, 7
        %v11670 = vsub.s32 %v11667, %v11669
        %v11671 = vrot.slane %v11657, %v11670
        %v11672 = vcombine.high %v11649, 0.0
        %v11673 = vcombine.high %v11656, 0.0
        %v11674 = vcombine.high %v11664, 0.0
        %v11675 = vcombine.high %v11671, 0.0
        %v11676 = vcombine.high %v7804, 0.0
        %v11678 = vunpack.c.l.s4 1983009808
        %v11679 = vunpack.c.0.s8 %v11678
        %v11680 = vlaneseq
        %v11681 = vshrl.u32 %v11680, 7
        %v11682 = vsub.s32 %v11679, %v11681
        %v11683 = vrot.slane %v7804, %v11682
        %v11685 = vunpack.c.l.s4 1983009808
        %v11686 = vunpack.c.0.s8 %v11685
        %v11687 = vlaneseq
        %v11688 = vshrl.u32 %v11687, 7
        %v11689 = vsub.s32 %v11686, %v11688
        %v11690 = vrot.slane %v11676, %v11689
        %v11691 = vcombine.high %v11683, 0.0
        %v11693 = vunpack.c.l.s4 1934713408
        %v11694 = vunpack.c.0.s8 %v11693
        %v11695 = vlaneseq
        %v11696 = vshrl.u32 %v11695, 7
        %v11697 = vsub.s32 %v11694, %v11696
        %v11698 = vrot.slane %v11683, %v11697
        %v11700 = vunpack.c.l.s4 1934713408
        %v11701 = vunpack.c.0.s8 %v11700
        %v11702 = vlaneseq
        %v11703 = vshrl.u32 %v11702, 7
        %v11704 = vsub.s32 %v11701, %v11703
        %v11705 = vrot.slane %v11691, %v11704
        %v11706 = vcombine.high %v11690, 0.0
        %v11708 = vunpack.c.l.s4 1934713408
        %v11709 = vunpack.c.0.s8 %v11708
        %v11710 = vlaneseq
        %v11711 = vshrl.u32 %v11710, 7
        %v11712 = vsub.s32 %v11709, %v11711
        %v11713 = vrot.slane %v11690, %v11712
        %v11715 = vunpack.c.l.s4 1934713408
        %v11716 = vunpack.c.0.s8 %v11715
        %v11717 = vlaneseq
        %v11718 = vshrl.u32 %v11717, 7
        %v11719 = vsub.s32 %v11716, %v11718
        %v11720 = vrot.slane %v11706, %v11719
        %v11721 = vcombine.high %v11698, 0.0
        %v11722 = vcombine.high %v11705, 0.0
        %v11723 = vcombine.high %v11713, 0.0
        %v11724 = vcombine.high %v11720, 0.0
        %v11725 = vcombine.high %v7805, 0.0
        %v11727 = vunpack.c.l.s4 1983009808
        %v11728 = vunpack.c.0.s8 %v11727
        %v11729 = vlaneseq
        %v11730 = vshrl.u32 %v11729, 7
        %v11731 = vsub.s32 %v11728, %v11730
        %v11732 = vrot.slane %v7805, %v11731
        %v11734 = vunpack.c.l.s4 1983009808
        %v11735 = vunpack.c.0.s8 %v11734
        %v11736 = vlaneseq
        %v11737 = vshrl.u32 %v11736, 7
        %v11738 = vsub.s32 %v11735, %v11737
        %v11739 = vrot.slane %v11725, %v11738
        %v11740 = vcombine.high %v11732, 0.0
        %v11742 = vunpack.c.l.s4 1934713408
        %v11743 = vunpack.c.0.s8 %v11742
        %v11744 = vlaneseq
        %v11745 = vshrl.u32 %v11744, 7
        %v11746 = vsub.s32 %v11743, %v11745
        %v11747 = vrot.slane %v11732, %v11746
        %v11749 = vunpack.c.l.s4 1934713408
        %v11750 = vunpack.c.0.s8 %v11749
        %v11751 = vlaneseq
        %v11752 = vshrl.u32 %v11751, 7
        %v11753 = vsub.s32 %v11750, %v11752
        %v11754 = vrot.slane %v11740, %v11753
        %v11755 = vcombine.high %v11739, 0.0
        %v11757 = vunpack.c.l.s4 1934713408
        %v11758 = vunpack.c.0.s8 %v11757
        %v11759 = vlaneseq
        %v11760 = vshrl.u32 %v11759, 7
        %v11761 = vsub.s32 %v11758, %v11760
        %v11762 = vrot.slane %v11739, %v11761
        %v11764 = vunpack.c.l.s4 1934713408
        %v11765 = vunpack.c.0.s8 %v11764
        %v11766 = vlaneseq
        %v11767 = vshrl.u32 %v11766, 7
        %v11768 = vsub.s32 %v11765, %v11767
        %v11769 = vrot.slane %v11755, %v11768
        %v11770 = vcombine.high %v11747, 0.0
        %v11771 = vcombine.high %v11754, 0.0
        %v11772 = vcombine.high %v11762, 0.0
        %v11773 = vcombine.high %v11769, 0.0
        %v11774 = vcombine.high %v7806, 0.0
        %v11776 = vunpack.c.l.s4 1983009808
        %v11777 = vunpack.c.0.s8 %v11776
        %v11778 = vlaneseq
        %v11779 = vshrl.u32 %v11778, 7
        %v11780 = vsub.s32 %v11777, %v11779
        %v11781 = vrot.slane %v7806, %v11780
        %v11783 = vunpack.c.l.s4 1983009808
        %v11784 = vunpack.c.0.s8 %v11783
        %v11785 = vlaneseq
        %v11786 = vshrl.u32 %v11785, 7
        %v11787 = vsub.s32 %v11784, %v11786
        %v11788 = vrot.slane %v11774, %v11787
        %v11789 = vcombine.high %v11781, 0.0
        %v11791 = vunpack.c.l.s4 1934713408
        %v11792 = vunpack.c.0.s8 %v11791
        %v11793 = vlaneseq
        %v11794 = vshrl.u32 %v11793, 7
        %v11795 = vsub.s32 %v11792, %v11794
        %v11796 = vrot.slane %v11781, %v11795
        %v11798 = vunpack.c.l.s4 1934713408
        %v11799 = vunpack.c.0.s8 %v11798
        %v11800 = vlaneseq
        %v11801 = vshrl.u32 %v11800, 7
        %v11802 = vsub.s32 %v11799, %v11801
        %v11803 = vrot.slane %v11789, %v11802
        %v11804 = vcombine.high %v11788, 0.0
        %v11806 = vunpack.c.l.s4 1934713408
        %v11807 = vunpack.c.0.s8 %v11806
        %v11808 = vlaneseq
        %v11809 = vshrl.u32 %v11808, 7
        %v11810 = vsub.s32 %v11807, %v11809
        %v11811 = vrot.slane %v11788, %v11810
        %v11813 = vunpack.c.l.s4 1934713408
        %v11814 = vunpack.c.0.s8 %v11813
        %v11815 = vlaneseq
        %v11816 = vshrl.u32 %v11815, 7
        %v11817 = vsub.s32 %v11814, %v11816
        %v11818 = vrot.slane %v11804, %v11817
        %v11819 = vcombine.high %v11796, 0.0
        %v11820 = vcombine.high %v11803, 0.0
        %v11821 = vcombine.high %v11811, 0.0
        %v11822 = vcombine.high %v11818, 0.0
        %v11823 = vcombine.high %v7807, 0.0
        %v11825 = vunpack.c.l.s4 1983009808
        %v11826 = vunpack.c.0.s8 %v11825
        %v11827 = vlaneseq
        %v11828 = vshrl.u32 %v11827, 7
        %v11829 = vsub.s32 %v11826, %v11828
        %v11830 = vrot.slane %v7807, %v11829
        %v11832 = vunpack.c.l.s4 1983009808
        %v11833 = vunpack.c.0.s8 %v11832
        %v11834 = vlaneseq
        %v11835 = vshrl.u32 %v11834, 7
        %v11836 = vsub.s32 %v11833, %v11835
        %v11837 = vrot.slane %v11823, %v11836
        %v11838 = vcombine.high %v11830, 0.0
        %v11840 = vunpack.c.l.s4 1934713408
        %v11841 = vunpack.c.0.s8 %v11840
        %v11842 = vlaneseq
        %v11843 = vshrl.u32 %v11842, 7
        %v11844 = vsub.s32 %v11841, %v11843
        %v11845 = vrot.slane %v11830, %v11844
        %v11847 = vunpack.c.l.s4 1934713408
        %v11848 = vunpack.c.0.s8 %v11847
        %v11849 = vlaneseq
        %v11850 = vshrl.u32 %v11849, 7
        %v11851 = vsub.s32 %v11848, %v11850
        %v11852 = vrot.slane %v11838, %v11851
        %v11853 = vcombine.high %v11837, 0.0
        %v11855 = vunpack.c.l.s4 1934713408
        %v11856 = vunpack.c.0.s8 %v11855
        %v11857 = vlaneseq
        %v11858 = vshrl.u32 %v11857, 7
        %v11859 = vsub.s32 %v11856, %v11858
        %v11860 = vrot.slane %v11837, %v11859
        %v11862 = vunpack.c.l.s4 1934713408
        %v11863 = vunpack.c.0.s8 %v11862
        %v11864 = vlaneseq
        %v11865 = vshrl.u32 %v11864, 7
        %v11866 = vsub.s32 %v11863, %v11865
        %v11867 = vrot.slane %v11853, %v11866
        %v11868 = vcombine.high %v11845, 0.0
        %v11869 = vcombine.high %v11852, 0.0
        %v11870 = vcombine.high %v11860, 0.0
        %v11871 = vcombine.high %v11867, 0.0
        %v11872 = vcombine.high %v7808, 0.0
        %v11874 = vunpack.c.l.s4 1983009808
        %v11875 = vunpack.c.0.s8 %v11874
        %v11876 = vlaneseq
        %v11877 = vshrl.u32 %v11876, 7
        %v11878 = vsub.s32 %v11875, %v11877
        %v11879 = vrot.slane %v7808, %v11878
        %v11881 = vunpack.c.l.s4 1983009808
        %v11882 = vunpack.c.0.s8 %v11881
        %v11883 = vlaneseq
        %v11884 = vshrl.u32 %v11883, 7
        %v11885 = vsub.s32 %v11882, %v11884
        %v11886 = vrot.slane %v11872, %v11885
        %v11887 = vcombine.high %v11879, 0.0
        %v11889 = vunpack.c.l.s4 1934713408
        %v11890 = vunpack.c.0.s8 %v11889
        %v11891 = vlaneseq
        %v11892 = vshrl.u32 %v11891, 7
        %v11893 = vsub.s32 %v11890, %v11892
        %v11894 = vrot.slane %v11879, %v11893
        %v11896 = vunpack.c.l.s4 1934713408
        %v11897 = vunpack.c.0.s8 %v11896
        %v11898 = vlaneseq
        %v11899 = vshrl.u32 %v11898, 7
        %v11900 = vsub.s32 %v11897, %v11899
        %v11901 = vrot.slane %v11887, %v11900
        %v11902 = vcombine.high %v11886, 0.0
        %v11904 = vunpack.c.l.s4 1934713408
        %v11905 = vunpack.c.0.s8 %v11904
        %v11906 = vlaneseq
        %v11907 = vshrl.u32 %v11906, 7
        %v11908 = vsub.s32 %v11905, %v11907
        %v11909 = vrot.slane %v11886, %v11908
        %v11911 = vunpack.c.l.s4 1934713408
        %v11912 = vunpack.c.0.s8 %v11911
        %v11913 = vlaneseq
        %v11914 = vshrl.u32 %v11913, 7
        %v11915 = vsub.s32 %v11912, %v11914
        %v11916 = vrot.slane %v11902, %v11915
        %v11917 = vcombine.high %v11894, 0.0
        %v11918 = vcombine.high %v11901, 0.0
        %v11919 = vcombine.high %v11909, 0.0
        %v11920 = vcombine.high %v11916, 0.0
        %v11921 = vcombine.high %v7809, 0.0
        %v11923 = vunpack.c.l.s4 1983009808
        %v11924 = vunpack.c.0.s8 %v11923
        %v11925 = vlaneseq
        %v11926 = vshrl.u32 %v11925, 7
        %v11927 = vsub.s32 %v11924, %v11926
        %v11928 = vrot.slane %v7809, %v11927
        %v11930 = vunpack.c.l.s4 1983009808
        %v11931 = vunpack.c.0.s8 %v11930
        %v11932 = vlaneseq
        %v11933 = vshrl.u32 %v11932, 7
        %v11934 = vsub.s32 %v11931, %v11933
        %v11935 = vrot.slane %v11921, %v11934
        %v11936 = vcombine.high %v11928, 0.0
        %v11938 = vunpack.c.l.s4 1934713408
        %v11939 = vunpack.c.0.s8 %v11938
        %v11940 = vlaneseq
        %v11941 = vshrl.u32 %v11940, 7
        %v11942 = vsub.s32 %v11939, %v11941
        %v11943 = vrot.slane %v11928, %v11942
        %v11945 = vunpack.c.l.s4 1934713408
        %v11946 = vunpack.c.0.s8 %v11945
        %v11947 = vlaneseq
        %v11948 = vshrl.u32 %v11947, 7
        %v11949 = vsub.s32 %v11946, %v11948
        %v11950 = vrot.slane %v11936, %v11949
        %v11951 = vcombine.high %v11935, 0.0
        %v11953 = vunpack.c.l.s4 1934713408
        %v11954 = vunpack.c.0.s8 %v11953
        %v11955 = vlaneseq
        %v11956 = vshrl.u32 %v11955, 7
        %v11957 = vsub.s32 %v11954, %v11956
        %v11958 = vrot.slane %v11935, %v11957
        %v11960 = vunpack.c.l.s4 1934713408
        %v11961 = vunpack.c.0.s8 %v11960
        %v11962 = vlaneseq
        %v11963 = vshrl.u32 %v11962, 7
        %v11964 = vsub.s32 %v11961, %v11963
        %v11965 = vrot.slane %v11951, %v11964
        %v11966 = vcombine.high %v11943, 0.0
        %v11967 = vcombine.high %v11950, 0.0
        %v11968 = vcombine.high %v11958, 0.0
        %v11969 = vcombine.high %v11965, 0.0
        %v11970 = vcombine.high %v7810, 0.0
        %v11972 = vunpack.c.l.s4 1983009808
        %v11973 = vunpack.c.0.s8 %v11972
        %v11974 = vlaneseq
        %v11975 = vshrl.u32 %v11974, 7
        %v11976 = vsub.s32 %v11973, %v11975
        %v11977 = vrot.slane %v7810, %v11976
        %v11979 = vunpack.c.l.s4 1983009808
        %v11980 = vunpack.c.0.s8 %v11979
        %v11981 = vlaneseq
        %v11982 = vshrl.u32 %v11981, 7
        %v11983 = vsub.s32 %v11980, %v11982
        %v11984 = vrot.slane %v11970, %v11983
        %v11985 = vcombine.high %v11977, 0.0
        %v11987 = vunpack.c.l.s4 1934713408
        %v11988 = vunpack.c.0.s8 %v11987
        %v11989 = vlaneseq
        %v11990 = vshrl.u32 %v11989, 7
        %v11991 = vsub.s32 %v11988, %v11990
        %v11992 = vrot.slane %v11977, %v11991
        %v11994 = vunpack.c.l.s4 1934713408
        %v11995 = vunpack.c.0.s8 %v11994
        %v11996 = vlaneseq
        %v11997 = vshrl.u32 %v11996, 7
        %v11998 = vsub.s32 %v11995, %v11997
        %v11999 = vrot.slane %v11985, %v11998
        %v12000 = vcombine.high %v11984, 0.0
        %v12002 = vunpack.c.l.s4 1934713408
        %v12003 = vunpack.c.0.s8 %v12002
        %v12004 = vlaneseq
        %v12005 = vshrl.u32 %v12004, 7
        %v12006 = vsub.s32 %v12003, %v12005
        %v12007 = vrot.slane %v11984, %v12006
        %v12009 = vunpack.c.l.s4 1934713408
        %v12010 = vunpack.c.0.s8 %v12009
        %v12011 = vlaneseq
        %v12012 = vshrl.u32 %v12011, 7
        %v12013 = vsub.s32 %v12010, %v12012
        %v12014 = vrot.slane %v12000, %v12013
        %v12015 = vcombine.high %v11992, 0.0
        %v12016 = vcombine.high %v11999, 0.0
        %v12017 = vcombine.high %v12007, 0.0
        %v12018 = vcombine.high %v12014, 0.0
        %v12019 = vcombine.high %v7811, 0.0
        %v12021 = vunpack.c.l.s4 1983009808
        %v12022 = vunpack.c.0.s8 %v12021
        %v12023 = vlaneseq
        %v12024 = vshrl.u32 %v12023, 7
        %v12025 = vsub.s32 %v12022, %v12024
        %v12026 = vrot.slane %v7811, %v12025
        %v12028 = vunpack.c.l.s4 1983009808
        %v12029 = vunpack.c.0.s8 %v12028
        %v12030 = vlaneseq
        %v12031 = vshrl.u32 %v12030, 7
        %v12032 = vsub.s32 %v12029, %v12031
        %v12033 = vrot.slane %v12019, %v12032
        %v12034 = vcombine.high %v12026, 0.0
        %v12036 = vunpack.c.l.s4 1934713408
        %v12037 = vunpack.c.0.s8 %v12036
        %v12038 = vlaneseq
        %v12039 = vshrl.u32 %v12038, 7
        %v12040 = vsub.s32 %v12037, %v12039
        %v12041 = vrot.slane %v12026, %v12040
        %v12043 = vunpack.c.l.s4 1934713408
        %v12044 = vunpack.c.0.s8 %v12043
        %v12045 = vlaneseq
        %v12046 = vshrl.u32 %v12045, 7
        %v12047 = vsub.s32 %v12044, %v12046
        %v12048 = vrot.slane %v12034, %v12047
        %v12049 = vcombine.high %v12033, 0.0
        %v12051 = vunpack.c.l.s4 1934713408
        %v12052 = vunpack.c.0.s8 %v12051
        %v12053 = vlaneseq
        %v12054 = vshrl.u32 %v12053, 7
        %v12055 = vsub.s32 %v12052, %v12054
        %v12056 = vrot.slane %v12033, %v12055
        %v12058 = vunpack.c.l.s4 1934713408
        %v12059 = vunpack.c.0.s8 %v12058
        %v12060 = vlaneseq
        %v12061 = vshrl.u32 %v12060, 7
        %v12062 = vsub.s32 %v12059, %v12061
        %v12063 = vrot.slane %v12049, %v12062
        %v12064 = vcombine.high %v12041, 0.0
        %v12065 = vcombine.high %v12048, 0.0
        %v12066 = vcombine.high %v12056, 0.0
        %v12067 = vcombine.high %v12063, 0.0
        %12100 = vrot.lane.b32.xlu0 %v10545, 2
        %v12101 = vpop.permute.xlu0 %12100
        %12102 = vrot.lane.b32.xlu0 %v10594, 2
        %v12103 = vpop.permute.xlu0 %12102
        %12104 = vrot.lane.b32.xlu0 %v10643, 2
        %v12105 = vpop.permute.xlu0 %12104
        %12106 = vrot.lane.b32.xlu0 %v10692, 2
        %v12107 = vpop.permute.xlu0 %12106
        %12108 = vrot.lane.b32.xlu0 %v10741, 2
        %v12109 = vpop.permute.xlu0 %12108
        %12110 = vrot.lane.b32.xlu0 %v10790, 2
        %v12111 = vpop.permute.xlu0 %12110
        %12112 = vrot.lane.b32.xlu0 %v10839, 2
        %v12113 = vpop.permute.xlu0 %12112
        %12114 = vrot.lane.b32.xlu0 %v10888, 2
        %v12115 = vpop.permute.xlu0 %12114
        %12116 = vrot.lane.b32.xlu0 %v10937, 2
        %v12117 = vpop.permute.xlu0 %12116
        %12118 = vrot.lane.b32.xlu0 %v10986, 2
        %v12119 = vpop.permute.xlu0 %12118
        %12120 = vrot.lane.b32.xlu0 %v11035, 2
        %v12121 = vpop.permute.xlu0 %12120
        %12122 = vrot.lane.b32.xlu0 %v11084, 2
        %v12123 = vpop.permute.xlu0 %12122
        %12124 = vrot.lane.b32.xlu0 %v11133, 2
        %v12125 = vpop.permute.xlu0 %12124
        %12126 = vrot.lane.b32.xlu0 %v11182, 2
        %v12127 = vpop.permute.xlu0 %12126
        %12128 = vrot.lane.b32.xlu0 %v11231, 2
        %v12129 = vpop.permute.xlu0 %12128
        %12130 = vrot.lane.b32.xlu0 %v11280, 2
        %v12131 = vpop.permute.xlu0 %12130
        %12132 = vrot.lane.b32.xlu0 %v11329, 2
        %v12133 = vpop.permute.xlu0 %12132
        %12134 = vrot.lane.b32.xlu0 %v11378, 2
        %v12135 = vpop.permute.xlu0 %12134
        %12136 = vrot.lane.b32.xlu0 %v11427, 2
        %v12137 = vpop.permute.xlu0 %12136
        %12138 = vrot.lane.b32.xlu0 %v11476, 2
        %v12139 = vpop.permute.xlu0 %12138
        %12140 = vrot.lane.b32.xlu0 %v11525, 2
        %v12141 = vpop.permute.xlu0 %12140
        %12142 = vrot.lane.b32.xlu0 %v11574, 2
        %v12143 = vpop.permute.xlu0 %12142
        %12144 = vrot.lane.b32.xlu0 %v11623, 2
        %v12145 = vpop.permute.xlu0 %12144
        %12146 = vrot.lane.b32.xlu0 %v11672, 2
        %v12147 = vpop.permute.xlu0 %12146
        %12148 = vrot.lane.b32.xlu0 %v11721, 2
        %v12149 = vpop.permute.xlu0 %12148
        %12150 = vrot.lane.b32.xlu0 %v11770, 2
        %v12151 = vpop.permute.xlu0 %12150
        %12152 = vrot.lane.b32.xlu0 %v11819, 2
        %v12153 = vpop.permute.xlu0 %12152
        %12154 = vrot.lane.b32.xlu0 %v11868, 2
        %v12155 = vpop.permute.xlu0 %12154
        %12156 = vrot.lane.b32.xlu0 %v11917, 2
        %v12157 = vpop.permute.xlu0 %12156
        %12158 = vrot.lane.b32.xlu0 %v11966, 2
        %v12159 = vpop.permute.xlu0 %12158
        %12160 = vrot.lane.b32.xlu0 %v12015, 2
        %v12161 = vpop.permute.xlu0 %12160
        %12162 = vrot.lane.b32.xlu0 %v12064, 2
        %v12163 = vpop.permute.xlu0 %12162
        %12228 = vrot.lane.b32.xlu0 %v10529, 4
        %v12229 = vpop.permute.xlu0 %12228
        %12230 = vrot.lane.b32.xlu0 %v10578, 4
        %v12231 = vpop.permute.xlu0 %12230
        %12232 = vrot.lane.b32.xlu0 %v10627, 4
        %v12233 = vpop.permute.xlu0 %12232
        %12234 = vrot.lane.b32.xlu0 %v10676, 4
        %v12235 = vpop.permute.xlu0 %12234
        %12236 = vrot.lane.b32.xlu0 %v10725, 4
        %v12237 = vpop.permute.xlu0 %12236
        %12238 = vrot.lane.b32.xlu0 %v10774, 4
        %v12239 = vpop.permute.xlu0 %12238
        %12240 = vrot.lane.b32.xlu0 %v10823, 4
        %v12241 = vpop.permute.xlu0 %12240
        %12242 = vrot.lane.b32.xlu0 %v10872, 4
        %v12243 = vpop.permute.xlu0 %12242
        %12244 = vrot.lane.b32.xlu0 %v10921, 4
        %v12245 = vpop.permute.xlu0 %12244
        %12246 = vrot.lane.b32.xlu0 %v10970, 4
        %v12247 = vpop.permute.xlu0 %12246
        %12248 = vrot.lane.b32.xlu0 %v11019, 4
        %v12249 = vpop.permute.xlu0 %12248
        %12250 = vrot.lane.b32.xlu0 %v11068, 4
        %v12251 = vpop.permute.xlu0 %12250
        %12252 = vrot.lane.b32.xlu0 %v11117, 4
        %v12253 = vpop.permute.xlu0 %12252
        %12254 = vrot.lane.b32.xlu0 %v11166, 4
        %v12255 = vpop.permute.xlu0 %12254
        %12256 = vrot.lane.b32.xlu0 %v11215, 4
        %v12257 = vpop.permute.xlu0 %12256
        %12258 = vrot.lane.b32.xlu0 %v11264, 4
        %v12259 = vpop.permute.xlu0 %12258
        %12260 = vrot.lane.b32.xlu0 %v11313, 4
        %v12261 = vpop.permute.xlu0 %12260
        %12262 = vrot.lane.b32.xlu0 %v11362, 4
        %v12263 = vpop.permute.xlu0 %12262
        %12264 = vrot.lane.b32.xlu0 %v11411, 4
        %v12265 = vpop.permute.xlu0 %12264
        %12266 = vrot.lane.b32.xlu0 %v11460, 4
        %v12267 = vpop.permute.xlu0 %12266
        %12268 = vrot.lane.b32.xlu0 %v11509, 4
        %v12269 = vpop.permute.xlu0 %12268
        %12270 = vrot.lane.b32.xlu0 %v11558, 4
        %v12271 = vpop.permute.xlu0 %12270
        %12272 = vrot.lane.b32.xlu0 %v11607, 4
        %v12273 = vpop.permute.xlu0 %12272
        %12274 = vrot.lane.b32.xlu0 %v11656, 4
        %v12275 = vpop.permute.xlu0 %12274
        %12276 = vrot.lane.b32.xlu0 %v11705, 4
        %v12277 = vpop.permute.xlu0 %12276
        %12278 = vrot.lane.b32.xlu0 %v11754, 4
        %v12279 = vpop.permute.xlu0 %12278
        %12280 = vrot.lane.b32.xlu0 %v11803, 4
        %v12281 = vpop.permute.xlu0 %12280
        %12282 = vrot.lane.b32.xlu0 %v11852, 4
        %v12283 = vpop.permute.xlu0 %12282
        %12284 = vrot.lane.b32.xlu0 %v11901, 4
        %v12285 = vpop.permute.xlu0 %12284
        %12286 = vrot.lane.b32.xlu0 %v11950, 4
        %v12287 = vpop.permute.xlu0 %12286
        %12288 = vrot.lane.b32.xlu0 %v11999, 4
        %v12289 = vpop.permute.xlu0 %12288
        %12290 = vrot.lane.b32.xlu0 %v12048, 4
        %v12291 = vpop.permute.xlu0 %12290
        %12356 = vrot.lane.b32.xlu0 %v10546, 6
        %v12357 = vpop.permute.xlu0 %12356
        %12358 = vrot.lane.b32.xlu0 %v10595, 6
        %v12359 = vpop.permute.xlu0 %12358
        %12360 = vrot.lane.b32.xlu0 %v10644, 6
        %v12361 = vpop.permute.xlu0 %12360
        %12362 = vrot.lane.b32.xlu0 %v10693, 6
        %v12363 = vpop.permute.xlu0 %12362
        %12364 = vrot.lane.b32.xlu0 %v10742, 6
        %v12365 = vpop.permute.xlu0 %12364
        %12366 = vrot.lane.b32.xlu0 %v10791, 6
        %v12367 = vpop.permute.xlu0 %12366
        %12368 = vrot.lane.b32.xlu0 %v10840, 6
        %v12369 = vpop.permute.xlu0 %12368
        %12370 = vrot.lane.b32.xlu0 %v10889, 6
        %v12371 = vpop.permute.xlu0 %12370
        %12372 = vrot.lane.b32.xlu0 %v10938, 6
        %v12373 = vpop.permute.xlu0 %12372
        %12374 = vrot.lane.b32.xlu0 %v10987, 6
        %v12375 = vpop.permute.xlu0 %12374
        %12376 = vrot.lane.b32.xlu0 %v11036, 6
        %v12377 = vpop.permute.xlu0 %12376
        %12378 = vrot.lane.b32.xlu0 %v11085, 6
        %v12379 = vpop.permute.xlu0 %12378
        %12380 = vrot.lane.b32.xlu0 %v11134, 6
        %v12381 = vpop.permute.xlu0 %12380
        %12382 = vrot.lane.b32.xlu0 %v11183, 6
        %v12383 = vpop.permute.xlu0 %12382
        %12384 = vrot.lane.b32.xlu0 %v11232, 6
        %v12385 = vpop.permute.xlu0 %12384
        %12386 = vrot.lane.b32.xlu0 %v11281, 6
        %v12387 = vpop.permute.xlu0 %12386
        %12388 = vrot.lane.b32.xlu0 %v11330, 6
        %v12389 = vpop.permute.xlu0 %12388
        %12390 = vrot.lane.b32.xlu0 %v11379, 6
        %v12391 = vpop.permute.xlu0 %12390
        %12392 = vrot.lane.b32.xlu0 %v11428, 6
        %v12393 = vpop.permute.xlu0 %12392
        %12394 = vrot.lane.b32.xlu0 %v11477, 6
        %v12395 = vpop.permute.xlu0 %12394
        %12396 = vrot.lane.b32.xlu0 %v11526, 6
        %v12397 = vpop.permute.xlu0 %12396
        %12398 = vrot.lane.b32.xlu0 %v11575, 6
        %v12399 = vpop.permute.xlu0 %12398
        %12400 = vrot.lane.b32.xlu0 %v11624, 6
        %v12401 = vpop.permute.xlu0 %12400
        %12402 = vrot.lane.b32.xlu0 %v11673, 6
        %v12403 = vpop.permute.xlu0 %12402
        %12404 = vrot.lane.b32.xlu0 %v11722, 6
        %v12405 = vpop.permute.xlu0 %12404
        %12406 = vrot.lane.b32.xlu0 %v11771, 6
        %v12407 = vpop.permute.xlu0 %12406
        %12408 = vrot.lane.b32.xlu0 %v11820, 6
        %v12409 = vpop.permute.xlu0 %12408
        %12410 = vrot.lane.b32.xlu0 %v11869, 6
        %v12411 = vpop.permute.xlu0 %12410
        %12412 = vrot.lane.b32.xlu0 %v11918, 6
        %v12413 = vpop.permute.xlu0 %12412
        %12414 = vrot.lane.b32.xlu0 %v11967, 6
        %v12415 = vpop.permute.xlu0 %12414
        %12416 = vrot.lane.b32.xlu0 %v12016, 6
        %v12417 = vpop.permute.xlu0 %12416
        %12418 = vrot.lane.b32.xlu0 %v12065, 6
        %v12419 = vpop.permute.xlu0 %12418
        %12484 = vrot.lane.b32.xlu0 %v10537, 8
        %v12485 = vpop.permute.xlu0 %12484
        %12486 = vrot.lane.b32.xlu0 %v10586, 8
        %v12487 = vpop.permute.xlu0 %12486
        %12488 = vrot.lane.b32.xlu0 %v10635, 8
        %v12489 = vpop.permute.xlu0 %12488
        %12490 = vrot.lane.b32.xlu0 %v10684, 8
        %v12491 = vpop.permute.xlu0 %12490
        %12492 = vrot.lane.b32.xlu0 %v10733, 8
        %v12493 = vpop.permute.xlu0 %12492
        %12494 = vrot.lane.b32.xlu0 %v10782, 8
        %v12495 = vpop.permute.xlu0 %12494
        %12496 = vrot.lane.b32.xlu0 %v10831, 8
        %v12497 = vpop.permute.xlu0 %12496
        %12498 = vrot.lane.b32.xlu0 %v10880, 8
        %v12499 = vpop.permute.xlu0 %12498
        %12500 = vrot.lane.b32.xlu0 %v10929, 8
        %v12501 = vpop.permute.xlu0 %12500
        %12502 = vrot.lane.b32.xlu0 %v10978, 8
        %v12503 = vpop.permute.xlu0 %12502
        %12504 = vrot.lane.b32.xlu0 %v11027, 8
        %v12505 = vpop.permute.xlu0 %12504
        %12506 = vrot.lane.b32.xlu0 %v11076, 8
        %v12507 = vpop.permute.xlu0 %12506
        %12508 = vrot.lane.b32.xlu0 %v11125, 8
        %v12509 = vpop.permute.xlu0 %12508
        %12510 = vrot.lane.b32.xlu0 %v11174, 8
        %v12511 = vpop.permute.xlu0 %12510
        %12512 = vrot.lane.b32.xlu0 %v11223, 8
        %v12513 = vpop.permute.xlu0 %12512
        %12514 = vrot.lane.b32.xlu0 %v11272, 8
        %v12515 = vpop.permute.xlu0 %12514
        %12516 = vrot.lane.b32.xlu0 %v11321, 8
        %v12517 = vpop.permute.xlu0 %12516
        %12518 = vrot.lane.b32.xlu0 %v11370, 8
        %v12519 = vpop.permute.xlu0 %12518
        %12520 = vrot.lane.b32.xlu0 %v11419, 8
        %v12521 = vpop.permute.xlu0 %12520
        %12522 = vrot.lane.b32.xlu0 %v11468, 8
        %v12523 = vpop.permute.xlu0 %12522
        %12524 = vrot.lane.b32.xlu0 %v11517, 8
        %v12525 = vpop.permute.xlu0 %12524
        %12526 = vrot.lane.b32.xlu0 %v11566, 8
        %v12527 = vpop.permute.xlu0 %12526
        %12528 = vrot.lane.b32.xlu0 %v11615, 8
        %v12529 = vpop.permute.xlu0 %12528
        %12530 = vrot.lane.b32.xlu0 %v11664, 8
        %v12531 = vpop.permute.xlu0 %12530
        %12532 = vrot.lane.b32.xlu0 %v11713, 8
        %v12533 = vpop.permute.xlu0 %12532
        %12534 = vrot.lane.b32.xlu0 %v11762, 8
        %v12535 = vpop.permute.xlu0 %12534
        %12536 = vrot.lane.b32.xlu0 %v11811, 8
        %v12537 = vpop.permute.xlu0 %12536
        %12538 = vrot.lane.b32.xlu0 %v11860, 8
        %v12539 = vpop.permute.xlu0 %12538
        %12540 = vrot.lane.b32.xlu0 %v11909, 8
        %v12541 = vpop.permute.xlu0 %12540
        %12542 = vrot.lane.b32.xlu0 %v11958, 8
        %v12543 = vpop.permute.xlu0 %12542
        %12544 = vrot.lane.b32.xlu0 %v12007, 8
        %v12545 = vpop.permute.xlu0 %12544
        %12546 = vrot.lane.b32.xlu0 %v12056, 8
        %v12547 = vpop.permute.xlu0 %12546
        %12612 = vrot.lane.b32.xlu0 %v10547, 10
        %v12613 = vpop.permute.xlu0 %12612
        %12614 = vrot.lane.b32.xlu0 %v10596, 10
        %v12615 = vpop.permute.xlu0 %12614
        %12616 = vrot.lane.b32.xlu0 %v10645, 10
        %v12617 = vpop.permute.xlu0 %12616
        %12618 = vrot.lane.b32.xlu0 %v10694, 10
        %v12619 = vpop.permute.xlu0 %12618
        %12620 = vrot.lane.b32.xlu0 %v10743, 10
        %v12621 = vpop.permute.xlu0 %12620
        %12622 = vrot.lane.b32.xlu0 %v10792, 10
        %v12623 = vpop.permute.xlu0 %12622
        %12624 = vrot.lane.b32.xlu0 %v10841, 10
        %v12625 = vpop.permute.xlu0 %12624
        %12626 = vrot.lane.b32.xlu0 %v10890, 10
        %v12627 = vpop.permute.xlu0 %12626
        %12628 = vrot.lane.b32.xlu0 %v10939, 10
        %v12629 = vpop.permute.xlu0 %12628
        %12630 = vrot.lane.b32.xlu0 %v10988, 10
        %v12631 = vpop.permute.xlu0 %12630
        %12632 = vrot.lane.b32.xlu0 %v11037, 10
        %v12633 = vpop.permute.xlu0 %12632
        %12634 = vrot.lane.b32.xlu0 %v11086, 10
        %v12635 = vpop.permute.xlu0 %12634
        %12636 = vrot.lane.b32.xlu0 %v11135, 10
        %v12637 = vpop.permute.xlu0 %12636
        %12638 = vrot.lane.b32.xlu0 %v11184, 10
        %v12639 = vpop.permute.xlu0 %12638
        %12640 = vrot.lane.b32.xlu0 %v11233, 10
        %v12641 = vpop.permute.xlu0 %12640
        %12642 = vrot.lane.b32.xlu0 %v11282, 10
        %v12643 = vpop.permute.xlu0 %12642
        %12644 = vrot.lane.b32.xlu0 %v11331, 10
        %v12645 = vpop.permute.xlu0 %12644
        %12646 = vrot.lane.b32.xlu0 %v11380, 10
        %v12647 = vpop.permute.xlu0 %12646
        %12648 = vrot.lane.b32.xlu0 %v11429, 10
        %v12649 = vpop.permute.xlu0 %12648
        %12650 = vrot.lane.b32.xlu0 %v11478, 10
        %v12651 = vpop.permute.xlu0 %12650
        %12652 = vrot.lane.b32.xlu0 %v11527, 10
        %v12653 = vpop.permute.xlu0 %12652
        %12654 = vrot.lane.b32.xlu0 %v11576, 10
        %v12655 = vpop.permute.xlu0 %12654
        %12656 = vrot.lane.b32.xlu0 %v11625, 10
        %v12657 = vpop.permute.xlu0 %12656
        %12658 = vrot.lane.b32.xlu0 %v11674, 10
        %v12659 = vpop.permute.xlu0 %12658
        %12660 = vrot.lane.b32.xlu0 %v11723, 10
        %v12661 = vpop.permute.xlu0 %12660
        %12662 = vrot.lane.b32.xlu0 %v11772, 10
        %v12663 = vpop.permute.xlu0 %12662
        %12664 = vrot.lane.b32.xlu0 %v11821, 10
        %v12665 = vpop.permute.xlu0 %12664
        %12666 = vrot.lane.b32.xlu0 %v11870, 10
        %v12667 = vpop.permute.xlu0 %12666
        %12668 = vrot.lane.b32.xlu0 %v11919, 10
        %v12669 = vpop.permute.xlu0 %12668
        %12670 = vrot.lane.b32.xlu0 %v11968, 10
        %v12671 = vpop.permute.xlu0 %12670
        %12672 = vrot.lane.b32.xlu0 %v12017, 10
        %v12673 = vpop.permute.xlu0 %12672
        %12674 = vrot.lane.b32.xlu0 %v12066, 10
        %v12675 = vpop.permute.xlu0 %12674
        %12740 = vrot.lane.b32.xlu0 %v10544, 12
        %v12741 = vpop.permute.xlu0 %12740
        %12742 = vrot.lane.b32.xlu0 %v10593, 12
        %v12743 = vpop.permute.xlu0 %12742
        %12744 = vrot.lane.b32.xlu0 %v10642, 12
        %v12745 = vpop.permute.xlu0 %12744
        %12746 = vrot.lane.b32.xlu0 %v10691, 12
        %v12747 = vpop.permute.xlu0 %12746
        %12748 = vrot.lane.b32.xlu0 %v10740, 12
        %v12749 = vpop.permute.xlu0 %12748
        %12750 = vrot.lane.b32.xlu0 %v10789, 12
        %v12751 = vpop.permute.xlu0 %12750
        %12752 = vrot.lane.b32.xlu0 %v10838, 12
        %v12753 = vpop.permute.xlu0 %12752
        %12754 = vrot.lane.b32.xlu0 %v10887, 12
        %v12755 = vpop.permute.xlu0 %12754
        %12756 = vrot.lane.b32.xlu0 %v10936, 12
        %v12757 = vpop.permute.xlu0 %12756
        %12758 = vrot.lane.b32.xlu0 %v10985, 12
        %v12759 = vpop.permute.xlu0 %12758
        %12760 = vrot.lane.b32.xlu0 %v11034, 12
        %v12761 = vpop.permute.xlu0 %12760
        %12762 = vrot.lane.b32.xlu0 %v11083, 12
        %v12763 = vpop.permute.xlu0 %12762
        %12764 = vrot.lane.b32.xlu0 %v11132, 12
        %v12765 = vpop.permute.xlu0 %12764
        %12766 = vrot.lane.b32.xlu0 %v11181, 12
        %v12767 = vpop.permute.xlu0 %12766
        %12768 = vrot.lane.b32.xlu0 %v11230, 12
        %v12769 = vpop.permute.xlu0 %12768
        %12770 = vrot.lane.b32.xlu0 %v11279, 12
        %v12771 = vpop.permute.xlu0 %12770
        %12772 = vrot.lane.b32.xlu0 %v11328, 12
        %v12773 = vpop.permute.xlu0 %12772
        %12774 = vrot.lane.b32.xlu0 %v11377, 12
        %v12775 = vpop.permute.xlu0 %12774
        %12776 = vrot.lane.b32.xlu0 %v11426, 12
        %v12777 = vpop.permute.xlu0 %12776
        %12778 = vrot.lane.b32.xlu0 %v11475, 12
        %v12779 = vpop.permute.xlu0 %12778
        %12780 = vrot.lane.b32.xlu0 %v11524, 12
        %v12781 = vpop.permute.xlu0 %12780
        %12782 = vrot.lane.b32.xlu0 %v11573, 12
        %v12783 = vpop.permute.xlu0 %12782
        %12784 = vrot.lane.b32.xlu0 %v11622, 12
        %v12785 = vpop.permute.xlu0 %12784
        %12786 = vrot.lane.b32.xlu0 %v11671, 12
        %v12787 = vpop.permute.xlu0 %12786
        %12788 = vrot.lane.b32.xlu0 %v11720, 12
        %v12789 = vpop.permute.xlu0 %12788
        %12790 = vrot.lane.b32.xlu0 %v11769, 12
        %v12791 = vpop.permute.xlu0 %12790
        %12792 = vrot.lane.b32.xlu0 %v11818, 12
        %v12793 = vpop.permute.xlu0 %12792
        %12794 = vrot.lane.b32.xlu0 %v11867, 12
        %v12795 = vpop.permute.xlu0 %12794
        %12796 = vrot.lane.b32.xlu0 %v11916, 12
        %v12797 = vpop.permute.xlu0 %12796
        %12798 = vrot.lane.b32.xlu0 %v11965, 12
        %v12799 = vpop.permute.xlu0 %12798
        %12800 = vrot.lane.b32.xlu0 %v12014, 12
        %v12801 = vpop.permute.xlu0 %12800
        %12802 = vrot.lane.b32.xlu0 %v12063, 12
        %v12803 = vpop.permute.xlu0 %12802
        %12868 = vrot.lane.b32.xlu0 %v10548, 14
        %v12869 = vpop.permute.xlu0 %12868
        %12870 = vrot.lane.b32.xlu0 %v10597, 14
        %v12871 = vpop.permute.xlu0 %12870
        %12872 = vrot.lane.b32.xlu0 %v10646, 14
        %v12873 = vpop.permute.xlu0 %12872
        %12874 = vrot.lane.b32.xlu0 %v10695, 14
        %v12875 = vpop.permute.xlu0 %12874
        %12876 = vrot.lane.b32.xlu0 %v10744, 14
        %v12877 = vpop.permute.xlu0 %12876
        %12878 = vrot.lane.b32.xlu0 %v10793, 14
        %v12879 = vpop.permute.xlu0 %12878
        %12880 = vrot.lane.b32.xlu0 %v10842, 14
        %v12881 = vpop.permute.xlu0 %12880
        %12882 = vrot.lane.b32.xlu0 %v10891, 14
        %v12883 = vpop.permute.xlu0 %12882
        %12884 = vrot.lane.b32.xlu0 %v10940, 14
        %v12885 = vpop.permute.xlu0 %12884
        %12886 = vrot.lane.b32.xlu0 %v10989, 14
        %v12887 = vpop.permute.xlu0 %12886
        %12888 = vrot.lane.b32.xlu0 %v11038, 14
        %v12889 = vpop.permute.xlu0 %12888
        %12890 = vrot.lane.b32.xlu0 %v11087, 14
        %v12891 = vpop.permute.xlu0 %12890
        %12892 = vrot.lane.b32.xlu0 %v11136, 14
        %v12893 = vpop.permute.xlu0 %12892
        %12894 = vrot.lane.b32.xlu0 %v11185, 14
        %v12895 = vpop.permute.xlu0 %12894
        %12896 = vrot.lane.b32.xlu0 %v11234, 14
        %v12897 = vpop.permute.xlu0 %12896
        %12898 = vrot.lane.b32.xlu0 %v11283, 14
        %v12899 = vpop.permute.xlu0 %12898
        %12900 = vrot.lane.b32.xlu0 %v11332, 14
        %v12901 = vpop.permute.xlu0 %12900
        %12902 = vrot.lane.b32.xlu0 %v11381, 14
        %v12903 = vpop.permute.xlu0 %12902
        %12904 = vrot.lane.b32.xlu0 %v11430, 14
        %v12905 = vpop.permute.xlu0 %12904
        %12906 = vrot.lane.b32.xlu0 %v11479, 14
        %v12907 = vpop.permute.xlu0 %12906
        %12908 = vrot.lane.b32.xlu0 %v11528, 14
        %v12909 = vpop.permute.xlu0 %12908
        %12910 = vrot.lane.b32.xlu0 %v11577, 14
        %v12911 = vpop.permute.xlu0 %12910
        %12912 = vrot.lane.b32.xlu0 %v11626, 14
        %v12913 = vpop.permute.xlu0 %12912
        %12914 = vrot.lane.b32.xlu0 %v11675, 14
        %v12915 = vpop.permute.xlu0 %12914
        %12916 = vrot.lane.b32.xlu0 %v11724, 14
        %v12917 = vpop.permute.xlu0 %12916
        %12918 = vrot.lane.b32.xlu0 %v11773, 14
        %v12919 = vpop.permute.xlu0 %12918
        %12920 = vrot.lane.b32.xlu0 %v11822, 14
        %v12921 = vpop.permute.xlu0 %12920
        %12922 = vrot.lane.b32.xlu0 %v11871, 14
        %v12923 = vpop.permute.xlu0 %12922
        %12924 = vrot.lane.b32.xlu0 %v11920, 14
        %v12925 = vpop.permute.xlu0 %12924
        %12926 = vrot.lane.b32.xlu0 %v11969, 14
        %v12927 = vpop.permute.xlu0 %12926
        %12928 = vrot.lane.b32.xlu0 %v12018, 14
        %v12929 = vpop.permute.xlu0 %12928
        %12930 = vrot.lane.b32.xlu0 %v12067, 14
        %v12931 = vpop.permute.xlu0 %12930
        %v12964 = vsel %vm3599, %v10522, %v12101
        %v12965 = vsel %vm3599, %v10571, %v12103
        %v12966 = vsel %vm3599, %v10620, %v12105
        %v12967 = vsel %vm3599, %v10669, %v12107
        %v12968 = vsel %vm3599, %v10718, %v12109
        %v12969 = vsel %vm3599, %v10767, %v12111
        %v12970 = vsel %vm3599, %v10816, %v12113
        %v12971 = vsel %vm3599, %v10865, %v12115
        %v12972 = vsel %vm3599, %v10914, %v12117
        %v12973 = vsel %vm3599, %v10963, %v12119
        %v12974 = vsel %vm3599, %v11012, %v12121
        %v12975 = vsel %vm3599, %v11061, %v12123
        %v12976 = vsel %vm3599, %v11110, %v12125
        %v12977 = vsel %vm3599, %v11159, %v12127
        %v12978 = vsel %vm3599, %v11208, %v12129
        %v12979 = vsel %vm3599, %v11257, %v12131
        %v12980 = vsel %vm3599, %v11306, %v12133
        %v12981 = vsel %vm3599, %v11355, %v12135
        %v12982 = vsel %vm3599, %v11404, %v12137
        %v12983 = vsel %vm3599, %v11453, %v12139
        %v12984 = vsel %vm3599, %v11502, %v12141
        %v12985 = vsel %vm3599, %v11551, %v12143
        %v12986 = vsel %vm3599, %v11600, %v12145
        %v12987 = vsel %vm3599, %v11649, %v12147
        %v12988 = vsel %vm3599, %v11698, %v12149
        %v12989 = vsel %vm3599, %v11747, %v12151
        %v12990 = vsel %vm3599, %v11796, %v12153
        %v12991 = vsel %vm3599, %v11845, %v12155
        %v12992 = vsel %vm3599, %v11894, %v12157
        %v12993 = vsel %vm3599, %v11943, %v12159
        %v12994 = vsel %vm3599, %v11992, %v12161
        %v12995 = vsel %vm3599, %v12041, %v12163
        %v12996 = vsel %vm3632, %v12964, %v12229
        %v12997 = vsel %vm3632, %v12965, %v12231
        %v12998 = vsel %vm3632, %v12966, %v12233
        %v12999 = vsel %vm3632, %v12967, %v12235
        %v13000 = vsel %vm3632, %v12968, %v12237
        %v13001 = vsel %vm3632, %v12969, %v12239
        %v13002 = vsel %vm3632, %v12970, %v12241
        %v13003 = vsel %vm3632, %v12971, %v12243
        %v13004 = vsel %vm3632, %v12972, %v12245
        %v13005 = vsel %vm3632, %v12973, %v12247
        %v13006 = vsel %vm3632, %v12974, %v12249
        %v13007 = vsel %vm3632, %v12975, %v12251
        %v13008 = vsel %vm3632, %v12976, %v12253
        %v13009 = vsel %vm3632, %v12977, %v12255
        %v13010 = vsel %vm3632, %v12978, %v12257
        %v13011 = vsel %vm3632, %v12979, %v12259
        %v13012 = vsel %vm3632, %v12980, %v12261
        %v13013 = vsel %vm3632, %v12981, %v12263
        %v13014 = vsel %vm3632, %v12982, %v12265
        %v13015 = vsel %vm3632, %v12983, %v12267
        %v13016 = vsel %vm3632, %v12984, %v12269
        %v13017 = vsel %vm3632, %v12985, %v12271
        %v13018 = vsel %vm3632, %v12986, %v12273
        %v13019 = vsel %vm3632, %v12987, %v12275
        %v13020 = vsel %vm3632, %v12988, %v12277
        %v13021 = vsel %vm3632, %v12989, %v12279
        %v13022 = vsel %vm3632, %v12990, %v12281
        %v13023 = vsel %vm3632, %v12991, %v12283
        %v13024 = vsel %vm3632, %v12992, %v12285
        %v13025 = vsel %vm3632, %v12993, %v12287
        %v13026 = vsel %vm3632, %v12994, %v12289
        %v13027 = vsel %vm3632, %v12995, %v12291
        %v13028 = vsel %vm3665, %v12996, %v12357
        %v13029 = vsel %vm3665, %v12997, %v12359
        %v13030 = vsel %vm3665, %v12998, %v12361
        %v13031 = vsel %vm3665, %v12999, %v12363
        %v13032 = vsel %vm3665, %v13000, %v12365
        %v13033 = vsel %vm3665, %v13001, %v12367
        %v13034 = vsel %vm3665, %v13002, %v12369
        %v13035 = vsel %vm3665, %v13003, %v12371
        %v13036 = vsel %vm3665, %v13004, %v12373
        %v13037 = vsel %vm3665, %v13005, %v12375
        %v13038 = vsel %vm3665, %v13006, %v12377
        %v13039 = vsel %vm3665, %v13007, %v12379
        %v13040 = vsel %vm3665, %v13008, %v12381
        %v13041 = vsel %vm3665, %v13009, %v12383
        %v13042 = vsel %vm3665, %v13010, %v12385
        %v13043 = vsel %vm3665, %v13011, %v12387
        %v13044 = vsel %vm3665, %v13012, %v12389
        %v13045 = vsel %vm3665, %v13013, %v12391
        %v13046 = vsel %vm3665, %v13014, %v12393
        %v13047 = vsel %vm3665, %v13015, %v12395
        %v13048 = vsel %vm3665, %v13016, %v12397
        %v13049 = vsel %vm3665, %v13017, %v12399
        %v13050 = vsel %vm3665, %v13018, %v12401
        %v13051 = vsel %vm3665, %v13019, %v12403
        %v13052 = vsel %vm3665, %v13020, %v12405
        %v13053 = vsel %vm3665, %v13021, %v12407
        %v13054 = vsel %vm3665, %v13022, %v12409
        %v13055 = vsel %vm3665, %v13023, %v12411
        %v13056 = vsel %vm3665, %v13024, %v12413
        %v13057 = vsel %vm3665, %v13025, %v12415
        %v13058 = vsel %vm3665, %v13026, %v12417
        %v13059 = vsel %vm3665, %v13027, %v12419
        %v13060 = vsel %vm3698, %v13028, %v12485
        %v13061 = vsel %vm3698, %v13029, %v12487
        %v13062 = vsel %vm3698, %v13030, %v12489
        %v13063 = vsel %vm3698, %v13031, %v12491
        %v13064 = vsel %vm3698, %v13032, %v12493
        %v13065 = vsel %vm3698, %v13033, %v12495
        %v13066 = vsel %vm3698, %v13034, %v12497
        %v13067 = vsel %vm3698, %v13035, %v12499
        %v13068 = vsel %vm3698, %v13036, %v12501
        %v13069 = vsel %vm3698, %v13037, %v12503
        %v13070 = vsel %vm3698, %v13038, %v12505
        %v13071 = vsel %vm3698, %v13039, %v12507
        %v13072 = vsel %vm3698, %v13040, %v12509
        %v13073 = vsel %vm3698, %v13041, %v12511
        %v13074 = vsel %vm3698, %v13042, %v12513
        %v13075 = vsel %vm3698, %v13043, %v12515
        %v13076 = vsel %vm3698, %v13044, %v12517
        %v13077 = vsel %vm3698, %v13045, %v12519
        %v13078 = vsel %vm3698, %v13046, %v12521
        %v13079 = vsel %vm3698, %v13047, %v12523
        %v13080 = vsel %vm3698, %v13048, %v12525
        %v13081 = vsel %vm3698, %v13049, %v12527
        %v13082 = vsel %vm3698, %v13050, %v12529
        %v13083 = vsel %vm3698, %v13051, %v12531
        %v13084 = vsel %vm3698, %v13052, %v12533
        %v13085 = vsel %vm3698, %v13053, %v12535
        %v13086 = vsel %vm3698, %v13054, %v12537
        %v13087 = vsel %vm3698, %v13055, %v12539
        %v13088 = vsel %vm3698, %v13056, %v12541
        %v13089 = vsel %vm3698, %v13057, %v12543
        %v13090 = vsel %vm3698, %v13058, %v12545
        %v13091 = vsel %vm3698, %v13059, %v12547
        %v13092 = vsel %vm3731, %v13060, %v12613
        %v13093 = vsel %vm3731, %v13061, %v12615
        %v13094 = vsel %vm3731, %v13062, %v12617
        %v13095 = vsel %vm3731, %v13063, %v12619
        %v13096 = vsel %vm3731, %v13064, %v12621
        %v13097 = vsel %vm3731, %v13065, %v12623
        %v13098 = vsel %vm3731, %v13066, %v12625
        %v13099 = vsel %vm3731, %v13067, %v12627
        %v13100 = vsel %vm3731, %v13068, %v12629
        %v13101 = vsel %vm3731, %v13069, %v12631
        %v13102 = vsel %vm3731, %v13070, %v12633
        %v13103 = vsel %vm3731, %v13071, %v12635
        %v13104 = vsel %vm3731, %v13072, %v12637
        %v13105 = vsel %vm3731, %v13073, %v12639
        %v13106 = vsel %vm3731, %v13074, %v12641
        %v13107 = vsel %vm3731, %v13075, %v12643
        %v13108 = vsel %vm3731, %v13076, %v12645
        %v13109 = vsel %vm3731, %v13077, %v12647
        %v13110 = vsel %vm3731, %v13078, %v12649
        %v13111 = vsel %vm3731, %v13079, %v12651
        %v13112 = vsel %vm3731, %v13080, %v12653
        %v13113 = vsel %vm3731, %v13081, %v12655
        %v13114 = vsel %vm3731, %v13082, %v12657
        %v13115 = vsel %vm3731, %v13083, %v12659
        %v13116 = vsel %vm3731, %v13084, %v12661
        %v13117 = vsel %vm3731, %v13085, %v12663
        %v13118 = vsel %vm3731, %v13086, %v12665
        %v13119 = vsel %vm3731, %v13087, %v12667
        %v13120 = vsel %vm3731, %v13088, %v12669
        %v13121 = vsel %vm3731, %v13089, %v12671
        %v13122 = vsel %vm3731, %v13090, %v12673
        %v13123 = vsel %vm3731, %v13091, %v12675
        %v13124 = vsel %vm3764, %v13092, %v12741
        %v13125 = vsel %vm3764, %v13093, %v12743
        %v13126 = vsel %vm3764, %v13094, %v12745
        %v13127 = vsel %vm3764, %v13095, %v12747
        %v13128 = vsel %vm3764, %v13096, %v12749
        %v13129 = vsel %vm3764, %v13097, %v12751
        %v13130 = vsel %vm3764, %v13098, %v12753
        %v13131 = vsel %vm3764, %v13099, %v12755
        %v13132 = vsel %vm3764, %v13100, %v12757
        %v13133 = vsel %vm3764, %v13101, %v12759
        %v13134 = vsel %vm3764, %v13102, %v12761
        %v13135 = vsel %vm3764, %v13103, %v12763
        %v13136 = vsel %vm3764, %v13104, %v12765
        %v13137 = vsel %vm3764, %v13105, %v12767
        %v13138 = vsel %vm3764, %v13106, %v12769
        %v13139 = vsel %vm3764, %v13107, %v12771
        %v13140 = vsel %vm3764, %v13108, %v12773
        %v13141 = vsel %vm3764, %v13109, %v12775
        %v13142 = vsel %vm3764, %v13110, %v12777
        %v13143 = vsel %vm3764, %v13111, %v12779
        %v13144 = vsel %vm3764, %v13112, %v12781
        %v13145 = vsel %vm3764, %v13113, %v12783
        %v13146 = vsel %vm3764, %v13114, %v12785
        %v13147 = vsel %vm3764, %v13115, %v12787
        %v13148 = vsel %vm3764, %v13116, %v12789
        %v13149 = vsel %vm3764, %v13117, %v12791
        %v13150 = vsel %vm3764, %v13118, %v12793
        %v13151 = vsel %vm3764, %v13119, %v12795
        %v13152 = vsel %vm3764, %v13120, %v12797
        %v13153 = vsel %vm3764, %v13121, %v12799
        %v13154 = vsel %vm3764, %v13122, %v12801
        %v13155 = vsel %vm3764, %v13123, %v12803
        %v13156 = vsel %vm3797, %v13124, %v12869
        %v13157 = vsel %vm3797, %v13125, %v12871
        %v13158 = vsel %vm3797, %v13126, %v12873
        %v13159 = vsel %vm3797, %v13127, %v12875
        %v13160 = vsel %vm3797, %v13128, %v12877
        %v13161 = vsel %vm3797, %v13129, %v12879
        %v13162 = vsel %vm3797, %v13130, %v12881
        %v13163 = vsel %vm3797, %v13131, %v12883
        %v13164 = vsel %vm3797, %v13132, %v12885
        %v13165 = vsel %vm3797, %v13133, %v12887
        %v13166 = vsel %vm3797, %v13134, %v12889
        %v13167 = vsel %vm3797, %v13135, %v12891
        %v13168 = vsel %vm3797, %v13136, %v12893
        %v13169 = vsel %vm3797, %v13137, %v12895
        %v13170 = vsel %vm3797, %v13138, %v12897
        %v13171 = vsel %vm3797, %v13139, %v12899
        %v13172 = vsel %vm3797, %v13140, %v12901
        %v13173 = vsel %vm3797, %v13141, %v12903
        %v13174 = vsel %vm3797, %v13142, %v12905
        %v13175 = vsel %vm3797, %v13143, %v12907
        %v13176 = vsel %vm3797, %v13144, %v12909
        %v13177 = vsel %vm3797, %v13145, %v12911
        %v13178 = vsel %vm3797, %v13146, %v12913
        %v13179 = vsel %vm3797, %v13147, %v12915
        %v13180 = vsel %vm3797, %v13148, %v12917
        %v13181 = vsel %vm3797, %v13149, %v12919
        %v13182 = vsel %vm3797, %v13150, %v12921
        %v13183 = vsel %vm3797, %v13151, %v12923
        %v13184 = vsel %vm3797, %v13152, %v12925
        %v13185 = vsel %vm3797, %v13153, %v12927
        %v13186 = vsel %vm3797, %v13154, %v12929
        %v13187 = vsel %vm3797, %v13155, %v12931
        %v13220 = vrot.slane %v13156, 7
        %v13221 = vrot.slane %v13157, 7
        %v13222 = vrot.slane %v13158, 7
        %v13223 = vrot.slane %v13159, 7
        %v13224 = vrot.slane %v13160, 7
        %v13225 = vrot.slane %v13161, 7
        %v13226 = vrot.slane %v13162, 7
        %v13227 = vrot.slane %v13163, 7
        %v13228 = vrot.slane %v13164, 7
        %v13229 = vrot.slane %v13165, 7
        %v13230 = vrot.slane %v13166, 7
        %v13231 = vrot.slane %v13167, 7
        %v13232 = vrot.slane %v13168, 7
        %v13233 = vrot.slane %v13169, 7
        %v13234 = vrot.slane %v13170, 7
        %v13235 = vrot.slane %v13171, 7
        %v13236 = vrot.slane %v13172, 7
        %v13237 = vrot.slane %v13173, 7
        %v13238 = vrot.slane %v13174, 7
        %v13239 = vrot.slane %v13175, 7
        %v13240 = vrot.slane %v13176, 7
        %v13241 = vrot.slane %v13177, 7
        %v13242 = vrot.slane %v13178, 7
        %v13243 = vrot.slane %v13179, 7
        %v13244 = vrot.slane %v13180, 7
        %v13245 = vrot.slane %v13181, 7
        %v13246 = vrot.slane %v13182, 7
        %v13247 = vrot.slane %v13183, 7
        %v13248 = vrot.slane %v13184, 7
        %v13249 = vrot.slane %v13185, 7
        %v13250 = vrot.slane %v13186, 7
        %v13251 = vrot.slane %v13187, 7
        %v13284 = vsel %vm6614, %v10468, %v13220
        %v13285 = vsel %vm6614, %v10469, %v13221
        %v13286 = vsel %vm6614, %v10470, %v13222
        %v13287 = vsel %vm6614, %v10471, %v13223
        %v13288 = vsel %vm6614, %v10472, %v13224
        %v13289 = vsel %vm6614, %v10473, %v13225
        %v13290 = vsel %vm6614, %v10474, %v13226
        %v13291 = vsel %vm6614, %v10475, %v13227
        %v13292 = vsel %vm6614, %v10476, %v13228
        %v13293 = vsel %vm6614, %v10477, %v13229
        %v13294 = vsel %vm6614, %v10478, %v13230
        %v13295 = vsel %vm6614, %v10479, %v13231
        %v13296 = vsel %vm6614, %v10480, %v13232
        %v13297 = vsel %vm6614, %v10481, %v13233
        %v13298 = vsel %vm6614, %v10482, %v13234
        %v13299 = vsel %vm6614, %v10483, %v13235
        %v13300 = vsel %vm6614, %v10484, %v13236
        %v13301 = vsel %vm6614, %v10485, %v13237
        %v13302 = vsel %vm6614, %v10486, %v13238
        %v13303 = vsel %vm6614, %v10487, %v13239
        %v13304 = vsel %vm6614, %v10488, %v13240
        %v13305 = vsel %vm6614, %v10489, %v13241
        %v13306 = vsel %vm6614, %v10490, %v13242
        %v13307 = vsel %vm6614, %v10491, %v13243
        %v13308 = vsel %vm6614, %v10492, %v13244
        %v13309 = vsel %vm6614, %v10493, %v13245
        %v13310 = vsel %vm6614, %v10494, %v13246
        %v13311 = vsel %vm6614, %v10495, %v13247
        %v13312 = vsel %vm6614, %v10496, %v13248
        %v13313 = vsel %vm6614, %v10497, %v13249
        %v13314 = vsel %vm6614, %v10498, %v13250
        %v13315 = vsel %vm6614, %v10499, %v13251
        %v13348 = vcombine.low %v13284, %v13285
        %v13349 = vcombine.low %v13286, %v13287
        %v13351 = vunpack.c.l.s4 1983009808
        %v13352 = vunpack.c.0.s8 %v13351
        %v13353 = vlaneseq
        %v13354 = vshrl.u32 %v13353, 7
        %v13355 = vsub.s32 %v13352, %v13354
        %v13356 = vrot.slane %v13348, %v13355
        %v13358 = vunpack.c.l.s4 1983009808
        %v13359 = vunpack.c.0.s8 %v13358
        %v13360 = vlaneseq
        %v13361 = vshrl.u32 %v13360, 7
        %v13362 = vsub.s32 %v13359, %v13361
        %v13363 = vrot.slane %v13349, %v13362
        %v13364 = vcombine.low %v13356, %v13363
        %v13365 = vcombine.low %v13288, %v13289
        %v13366 = vcombine.low %v13290, %v13291
        %v13368 = vunpack.c.l.s4 1983009808
        %v13369 = vunpack.c.0.s8 %v13368
        %v13370 = vlaneseq
        %v13371 = vshrl.u32 %v13370, 7
        %v13372 = vsub.s32 %v13369, %v13371
        %v13373 = vrot.slane %v13365, %v13372
        %v13375 = vunpack.c.l.s4 1983009808
        %v13376 = vunpack.c.0.s8 %v13375
        %v13377 = vlaneseq
        %v13378 = vshrl.u32 %v13377, 7
        %v13379 = vsub.s32 %v13376, %v13378
        %v13380 = vrot.slane %v13366, %v13379
        %v13381 = vcombine.low %v13373, %v13380
        %v13382 = vcombine.low %v13292, %v13293
        %v13383 = vcombine.low %v13294, %v13295
        %v13385 = vunpack.c.l.s4 1983009808
        %v13386 = vunpack.c.0.s8 %v13385
        %v13387 = vlaneseq
        %v13388 = vshrl.u32 %v13387, 7
        %v13389 = vsub.s32 %v13386, %v13388
        %v13390 = vrot.slane %v13382, %v13389
        %v13392 = vunpack.c.l.s4 1983009808
        %v13393 = vunpack.c.0.s8 %v13392
        %v13394 = vlaneseq
        %v13395 = vshrl.u32 %v13394, 7
        %v13396 = vsub.s32 %v13393, %v13395
        %v13397 = vrot.slane %v13383, %v13396
        %v13398 = vcombine.low %v13390, %v13397
        %v13399 = vcombine.low %v13296, %v13297
        %v13400 = vcombine.low %v13298, %v13299
        %v13402 = vunpack.c.l.s4 1983009808
        %v13403 = vunpack.c.0.s8 %v13402
        %v13404 = vlaneseq
        %v13405 = vshrl.u32 %v13404, 7
        %v13406 = vsub.s32 %v13403, %v13405
        %v13407 = vrot.slane %v13399, %v13406
        %v13409 = vunpack.c.l.s4 1983009808
        %v13410 = vunpack.c.0.s8 %v13409
        %v13411 = vlaneseq
        %v13412 = vshrl.u32 %v13411, 7
        %v13413 = vsub.s32 %v13410, %v13412
        %v13414 = vrot.slane %v13400, %v13413
        %v13415 = vcombine.low %v13407, %v13414
        %v13416 = vcombine.low %v13300, %v13301
        %v13417 = vcombine.low %v13302, %v13303
        %v13419 = vunpack.c.l.s4 1983009808
        %v13420 = vunpack.c.0.s8 %v13419
        %v13421 = vlaneseq
        %v13422 = vshrl.u32 %v13421, 7
        %v13423 = vsub.s32 %v13420, %v13422
        %v13424 = vrot.slane %v13416, %v13423
        %v13426 = vunpack.c.l.s4 1983009808
        %v13427 = vunpack.c.0.s8 %v13426
        %v13428 = vlaneseq
        %v13429 = vshrl.u32 %v13428, 7
        %v13430 = vsub.s32 %v13427, %v13429
        %v13431 = vrot.slane %v13417, %v13430
        %v13432 = vcombine.low %v13424, %v13431
        %v13433 = vcombine.low %v13304, %v13305
        %v13434 = vcombine.low %v13306, %v13307
        %v13436 = vunpack.c.l.s4 1983009808
        %v13437 = vunpack.c.0.s8 %v13436
        %v13438 = vlaneseq
        %v13439 = vshrl.u32 %v13438, 7
        %v13440 = vsub.s32 %v13437, %v13439
        %v13441 = vrot.slane %v13433, %v13440
        %v13443 = vunpack.c.l.s4 1983009808
        %v13444 = vunpack.c.0.s8 %v13443
        %v13445 = vlaneseq
        %v13446 = vshrl.u32 %v13445, 7
        %v13447 = vsub.s32 %v13444, %v13446
        %v13448 = vrot.slane %v13434, %v13447
        %v13449 = vcombine.low %v13441, %v13448
        %v13450 = vcombine.low %v13308, %v13309
        %v13451 = vcombine.low %v13310, %v13311
        %v13453 = vunpack.c.l.s4 1983009808
        %v13454 = vunpack.c.0.s8 %v13453
        %v13455 = vlaneseq
        %v13456 = vshrl.u32 %v13455, 7
        %v13457 = vsub.s32 %v13454, %v13456
        %v13458 = vrot.slane %v13450, %v13457
        %v13460 = vunpack.c.l.s4 1983009808
        %v13461 = vunpack.c.0.s8 %v13460
        %v13462 = vlaneseq
        %v13463 = vshrl.u32 %v13462, 7
        %v13464 = vsub.s32 %v13461, %v13463
        %v13465 = vrot.slane %v13451, %v13464
        %v13466 = vcombine.low %v13458, %v13465
        %v13467 = vcombine.low %v13312, %v13313
        %v13468 = vcombine.low %v13314, %v13315
        %v13470 = vunpack.c.l.s4 1983009808
        %v13471 = vunpack.c.0.s8 %v13470
        %v13472 = vlaneseq
        %v13473 = vshrl.u32 %v13472, 7
        %v13474 = vsub.s32 %v13471, %v13473
        %v13475 = vrot.slane %v13467, %v13474
        %v13477 = vunpack.c.l.s4 1983009808
        %v13478 = vunpack.c.0.s8 %v13477
        %v13479 = vlaneseq
        %v13480 = vshrl.u32 %v13479, 7
        %v13481 = vsub.s32 %v13478, %v13480
        %v13482 = vrot.slane %v13468, %v13481
        %v13483 = vcombine.low %v13475, %v13482
        %s13492 = scalar_lea.vmem %s152, 16 [#allocation5]
        %13493 = vst.msk [vmem:[%s13492] sm:$0xff] %vm6823, %v13364
        %13494 = vst.msk [vmem:[%s13492 + $0x8] sm:$0xff] %vm6823, %v13381
        %13495 = vst.msk [vmem:[%s13492 + $0x20] sm:$0xff] %vm6823, %v13398
        %13496 = vst.msk [vmem:[%s13492 + $0x28] sm:$0xff] %vm6823, %v13415
        %13497 = vst.msk [vmem:[%s13492 + $0x40] sm:$0xff] %vm6823, %v13432
        %13498 = vst.msk [vmem:[%s13492 + $0x48] sm:$0xff] %vm6823, %v13449
        %13499 = vst.msk [vmem:[%s13492 + $0x60] sm:$0xff] %vm6823, %v13466
        %13500 = vst.msk [vmem:[%s13492 + $0x68] sm:$0xff] %vm6823, %v13483
        %s13501 = sand.u32 %s68, 1
        %s13502 = scalar_lea.sflag [#allocation4], %s13501
        %s13503 = sand.u32 %s68, 1
        %s13504 = smul.addr %s13503, 128
        %s13505 = scalar_lea.vmem [#allocation5], %s13504
        // Predicated region
        $region29: #{tpu_custom_call.1} parent=23 // pred_check
          %p13506 = pneg %p78
        $region30: #{tpu_custom_call.1} parent=23 // pred_check_branch
          %13508 = sbr.rel (%p13506) target = $region32
        $region31: #{tpu_custom_call.1} parent=23 // pred_region
          %s13509 = smul.u32 4, %s23
          %s13511 = ssub.s32 2048, 2048
          %13512 = vsyncadd %s13502, %s13511
          %s13513 = smul.addr %s13509, 4
          %s13514 = smul.addr %s22, 16
          %s13515 = sadd.s32 %s13513, %s13514
          %s13516 = smul.addr %s13515, 128
          %s13517 = scalar_lea.hbm %s1, %s13516
          %s13518 = sshll.u32 %s13505, 4
          %s13519 = int_to_ptr.vmem [resolvable:$true] %s13518
          %13524 = dma.vmem_to_hbm [thread:$0]  %s13519, 2048, %s13517, %s13502, 128, 128, 8
        $region32: #{tpu_custom_call.1} parent=23 // pred_fallthru
          _
      $region24: #{tpu_custom_call.1} parent=5 // pred_fallthru
        _
      %p13525 = scmp.le.s32.totalorder 2, %s13
      // Predicated region
      $region33: #{tpu_custom_call.1} parent=5 // pred_check
        %p13526 = pneg %p13525
      $region34: #{tpu_custom_call.1} parent=5 // pred_check_branch
        %13528 = sbr.rel (%p13526) target = $region36
      $region35: #{tpu_custom_call.1} parent=5 // pred_region
        %s13529 = ssub.s32 %s13, 2
        // Predicated region
        $region37: #{tpu_custom_call.1} parent=35 // pred_check
          %p13530 = pneg %p84
        $region38: #{tpu_custom_call.1} parent=35 // pred_check_branch
          %13532 = sbr.rel (%p13530) target = $region40
        $region39: #{tpu_custom_call.1} parent=35 // pred_region
          %s13533 = sand.u32 %s69, 1
          %s13534 = scalar_lea.sflag [#allocation4], %s13533
          %s13535 = sand.u32 %s69, 1
          %s13536 = smul.addr %s13535, 128
          %s13537 = scalar_lea.vmem [#allocation5], %s13536
          %13538 = dma.done %s13534, 2048
        $region40: #{tpu_custom_call.1} parent=35 // pred_fallthru
          _
      $region36: #{tpu_custom_call.1} parent=5 // pred_fallthru
        _
    $region6: #{tpu_custom_call.1} parent=1 // loop_footer
      %s17 = sadd.s32 1, %s13
    $region7: #{tpu_custom_call.1} parent=1 // loop_footer_branch
      %12 = sbr.rel target = $region3
    $region8: #{tpu_custom_call.1} parent=1 // loop_exit
      _
    %13539 = vsyncpa [#allocation3], 1
    %s13540 = scalar_lea.sflag [#allocation3], 1
    %13541 = vsyncpa %s13540, 1
    %13542 = vsyncpa [#allocation4], 1
    %s13543 = scalar_lea.sflag [#allocation4], 1
    %13544 = vsyncpa %s13543, 1

</llo_original>
